<compile_context>
chip_gen: v6e
topology: v6e:2x2x1
jax: 0.10.0
libtpu: 0.0.40
codegen_flags: <defaults>
</compile_context>

<pallas_src>
import math
import numpy as np
import jax
import jax.numpy as jnp
from jax import lax
from jax.experimental import pallas as pl
from jax.experimental.pallas import tpu as pltpu

LANE = 128
SUBLANE = 8


def round_up(n, m):
    return ((n + m - 1) // m) * m


# ------------------------- reference-order embedder --------------------------
def positional_embed(xyz, multires=10):
    """Embedder(include_input=True, log_sampling=True, band_width=1) ordering."""
    freqs = 2.0 ** jnp.arange(multires, dtype=jnp.float32)
    parts = [xyz]
    for f in freqs:
        parts.append(jnp.sin(xyz * f))
        parts.append(jnp.cos(xyz * f))
    return jnp.concatenate(parts, axis=-1)


# --------------------------- parameter construction --------------------------
def init_params(key, latent_dim, d_in, d_out, feature_vector_size,
                DIMS, SKIP_IN, multires):
    """Synthetic init; weight_norm at init equals the underlying linear weights."""
    input_ch = d_in * (1 + 2 * multires)
    dims = [input_ch + latent_dim] + list(DIMS) + [d_out + feature_vector_size]
    num_layers = len(dims)
    params = []
    for l in range(num_layers - 1):
        out_dim = dims[l + 1] - dims[0] if (l + 1) in SKIP_IN else dims[l + 1]
        in_dim = dims[l]
        key, kw, kb = jax.random.split(key, 3)
        bound = 1.0 / math.sqrt(in_dim)
        W = jax.random.uniform(kw, (in_dim, out_dim), jnp.float32, -bound, bound)
        b = jax.random.uniform(kb, (out_dim,), jnp.float32, -bound, bound)
        params.append((W, b))
    return params, dims, num_layers


# --------------------------- weight / embed plumbing --------------------------
def _permute_embed_rows(W, latent_dim, d_in, multires):
    """Reorder rows from [latent, xyz, sin f0, cos f0, sin f1, cos f1, ...]
    to the kernel column layout [latent, xyz, sin f0..fM, cos f0..fM]."""
    d_raw = latent_dim + d_in
    head = W[:d_raw]
    tail = W[d_raw:].reshape(multires, 2, d_in, W.shape[1])
    sin_rows = tail[:, 0].reshape(multires * d_in, W.shape[1])
    cos_rows = tail[:, 1].reshape(multires * d_in, W.shape[1])
    return jnp.concatenate([head, sin_rows, cos_rows], axis=0)


def _pad2(W, rows, cols):
    return jnp.pad(W, ((0, rows - W.shape[0]), (0, cols - W.shape[1])))


def _embed_matrix(latent_dim, d_in, multires, rows, cols):
    """Constant E so that raw_pad @ E = [latent, xyz, xyz*f (sin blk),
    xyz*f + pi/2 (cos blk), 0-pad].  The +pi/2 phase rides on a constant-1 raw
    column so a single in-kernel sin() yields both sin and cos."""
    d_raw = latent_dim + d_in
    freqs = 2.0 ** np.arange(multires, dtype=np.float64)
    E = np.zeros((rows, cols), np.float32)
    E[np.arange(d_raw), np.arange(d_raw)] = 1.0
    for f in range(multires):
        for j in range(d_in):
            E[latent_dim + j, d_raw + f * d_in + j] = freqs[f]
            E[latent_dim + j, d_raw + (multires + f) * d_in + j] = freqs[f]
    cos_lo = d_raw + multires * d_in
    cos_hi = d_raw + 2 * multires * d_in
    E[d_raw, cos_lo:cos_hi] = np.pi / 2.0       # phase row, driven by const-1 column
    return jnp.asarray(E)


def _embed_kernel_layout(raw, latent_dim, d_in, multires, width):
    """XLA-side embedding (fallback path) in the kernel's permuted, padded layout."""
    d_raw = latent_dim + d_in
    xyz = raw[:, latent_dim:d_raw]
    freqs = 2.0 ** jnp.arange(multires, dtype=jnp.float32)
    ang = (xyz[:, None, :] * freqs[None, :, None]).reshape(raw.shape[0], -1)
    emb = jnp.concatenate([raw[:, :d_raw], jnp.sin(ang), jnp.cos(ang)], axis=1)
    return jnp.pad(emb, ((0, 0), (0, width - emb.shape[1])))


# ------------------------ one-time sin/cos capability probe -------------------
_FUSED_SINCOS = None


def _fused_sincos_supported():
    """One-time, narrowly-scoped probe: can Mosaic lower jnp.sin inside a kernel?"""
    global _FUSED_SINCOS
    if _FUSED_SINCOS is None:
        def k(x_ref, o_ref):
            o_ref[...] = jnp.sin(x_ref[...])
        try:
            x = jnp.zeros((8, 128), jnp.float32)
            jax.block_until_ready(pl.pallas_call(
                k, out_shape=jax.ShapeDtypeStruct((8, 128), jnp.float32))(x))
            _FUSED_SINCOS = True
        except Exception:
            # Narrow scope: only the tiny probe kernel; the real kernel never
            # sits under a silent except.
            _FUSED_SINCOS = False
    return _FUSED_SINCOS


# ------------------------------- Pallas kernel --------------------------------
def _make_kernel(fused, num_layers, skip_in, latent_dim, d_in, multires,
                 apprx_dist, out_store):
    d_raw = latent_dim + d_in
    sin_lo = d_raw

    def kernel(x_ref, *refs):
        if fused:
            e_ref, w_ref, b_ref, out_ref = refs
        else:
            w_ref, b_ref, out_ref = refs
        xin = x_ref[...]
        if fused:
            # angles + passthrough + pi/2 cos-phase in one small K=16 f32 MXU
            # pass, then a SINGLE EUP sin over all lanes:
            #   sin(a)        -> sin block
            #   sin(a + pi/2) -> cos block
            #   sin(0) = 0    -> pad lanes (also killed by zero weight rows)
            pre = jnp.dot(xin, e_ref[...], preferred_element_type=jnp.float32)
            col = lax.broadcasted_iota(jnp.int32, pre.shape, 1)
            inp = jnp.where(col < sin_lo, pre, jnp.sin(pre))
        else:
            inp = xin

        x = inp
        wi = 0
        for l in range(num_layers - 1):
            b = b_ref[l]
            if l in skip_in:
                wa = w_ref[wi]
                wb = w_ref[wi + 1]
                wi += 2
                # cat([x, input], 1)/sqrt(2) then Linear; the 1/sqrt(2) is
                # pre-folded into wa/wb at slab-construction time.
                x = (jnp.dot(x.astype(wa.dtype), wa, preferred_element_type=jnp.float32)
                     + jnp.dot(inp.astype(wb.dtype), wb, preferred_element_type=jnp.float32)
                     + b)
            else:
                w = w_ref[wi]
                wi += 1
                x = jnp.dot(x.astype(w.dtype), w, preferred_element_type=jnp.float32) + b
            if l < num_layers - 2:
                # Softplus(beta=100) with PyTorch threshold=20 semantics (f32)
                sp = jnp.log1p(jnp.exp(jnp.minimum(x, 0.2) * 100.0)) * 0.01
                x = jnp.where(x > 0.2, x, sp)

        # within_cube: |sin|,|cos| <= 1 always, so the embedded-xyz test reduces
        # exactly to the raw-xyz test.
        xyz = xin[:, latent_dim:latent_dim + d_in]
        inside = jnp.where(jnp.abs(xyz) <= 1.0, 1.0, 0.0)
        within = jnp.min(inside, axis=-1, keepdims=True)
        out_ref[...] = within * x[:, :out_store] + (1.0 - within) * apprx_dist

    return kernel


# -------------------------- forward builder (one-time) ------------------------
def _pick_tile_b(B, max_tile=1024, align=128):
    # Biggest tile that still leaves >= 2 grid steps when possible (v7x dual-TC
    # "parallel" sharding), capped at max_tile; grid = cdiv(B, tile).
    half = round_up(max(-(-B // 2), align), align)
    return int(min(max_tile, half))


def make_implicit_network_forward(params, dims, num_layers, skip_in, latent_dim,
                                  d_in, multires, apprx_dist=0.3,
                                  tile_b=None, max_tile_b=1024,
                                  compute_dtype=jnp.bfloat16):
    """Builds padded VMEM weight slabs ONCE and returns a jitted forward(raw)."""
    skip_in = tuple(skip_in)
    inv_sqrt2 = 1.0 / math.sqrt(2.0)
    d_raw = latent_dim + d_in
    in_w = round_up(dims[0], LANE)              # embedded width, 71 -> 128
    out_real = dims[-1]
    out_store = round_up(out_real, SUBLANE)     # narrow lane-packed output, 1 -> 8
    d_raw_pad = round_up(d_raw + 1, SUBLANE)    # +1 constant-one column (cos phase)

    # ---- fold the (weight_norm'd at init) linears into padded kernel-layout slabs ----
    w_list, b_list = [], []
    kw = in_w
    for l in range(num_layers - 1):
        W, b = params[l]
        out_dim = W.shape[1]
        kw_out = round_up(out_dim, LANE)
        if l in skip_in:
            split = W.shape[0] - dims[0]
            w_list.append(_pad2(W[:split, :] * inv_sqrt2, kw, kw_out))        # x part
            w_list.append(_pad2(_permute_embed_rows(W[split:, :] * inv_sqrt2,
                                                    latent_dim, d_in, multires),
                                in_w, kw_out))                                # input part
        elif l == 0:
            w_list.append(_pad2(_permute_embed_rows(W, latent_dim, d_in, multires),
                                in_w, kw_out))
        else:
            w_list.append(_pad2(W, kw, kw_out))
        b_list.append(jnp.pad(b, (0, kw_out - out_dim)).reshape(1, kw_out))
        kw = kw_out
    assert len({tuple(w.shape) for w in w_list}) == 1, "hidden widths must pad equal"
    w_slab = jnp.stack(w_list).astype(compute_dtype)   # (n_mats, 128, 128), VMEM-resident
    b_slab = jnp.stack(b_list).astype(jnp.float32)     # (n_layers-1, 1, 128)
    E = _embed_matrix(latent_dim, d_in, multires, d_raw_pad, in_w)  # f32 (exact freqs)

    fused = _fused_sincos_supported()
    kern = _make_kernel(fused, num_layers, skip_in, latent_dim, d_in, multires,
                        apprx_dist, out_store)

    cp = pltpu.CompilerParams(dimension_semantics=("parallel",),
                              vmem_limit_bytes=32 * 1024 * 1024)
    wb_specs = [pl.BlockSpec(w_slab.shape, lambda i: (0, 0, 0)),
                pl.BlockSpec(b_slab.shape, lambda i: (0, 0, 0))]

    @jax.jit
    def forward(raw_inp):
        B, d_raw_in = raw_inp.shape
        assert d_raw_in == d_raw
        tb = tile_b if tile_b is not None else _pick_tile_b(B, max_tile_b)
        grid_b = pl.cdiv(B, tb)
        B_pad = grid_b * tb
        out_spec = pl.BlockSpec((tb, out_store), lambda i: (i, 0))
        out_shape = jax.ShapeDtypeStruct((B_pad, out_store), jnp.float32)
        if fused:
            raw_p = jnp.pad(raw_inp, ((0, B_pad - B), (0, d_raw_pad - d_raw)))
            raw_p = raw_p.at[:, d_raw].set(1.0)   # drives the pi/2 phase row of E
            in_specs = [pl.BlockSpec((tb, d_raw_pad), lambda i: (i, 0)),
                        pl.BlockSpec(E.shape, lambda i: (0, 0))] + wb_specs
            args = (raw_p, E, w_slab, b_slab)
        else:
            # Fallback: XLA-side embedding feeding the identical padded MLP kernel.
            raw_p = jnp.pad(raw_inp, ((0, B_pad - B), (0, 0)))
            x_emb = _embed_kernel_layout(raw_p, latent_dim, d_in, multires, in_w)
            in_specs = [pl.BlockSpec((tb, in_w), lambda i: (i, 0))] + wb_specs
            args = (x_emb, w_slab, b_slab)
        out = pl.pallas_call(kern, out_shape=out_shape, grid=(grid_b,),
                             in_specs=in_specs, out_specs=out_spec,
                             compiler_params=cp)(*args)
        return out[:B, :out_real]

    return forward


# ----------------------------- pure-JAX reference -----------------------------
def reference_forward(inp_full, params, dims, num_layers, skip_in, latent_dim,
                      apprx_dist=0.3):
    x = inp_full
    for l in range(num_layers - 1):
        W, b = params[l]
        if l in skip_in:
            x = jnp.concatenate([x, inp_full], axis=1) / np.sqrt(2)
        x = x @ W + b
        if l < num_layers - 2:
            z = 100.0 * x
            x = jnp.where(z > 20.0, x,
                          jnp.log1p(jnp.exp(jnp.minimum(z, 20.0))) / 100.0)
    xyz_emb = inp_full[:, latent_dim:]
    within = jnp.all(jnp.abs(xyz_emb) <= 1.0, axis=-1, keepdims=True).astype(jnp.float32)
    return within * x + (1.0 - within) * apprx_dist


# ------------------------------------ main -------------------------------------
if __name__ == "__main__":
    # Small but structurally faithful config: 9 linear layers, skip at 4,
    # multires=10 NeRF embedding, softplus(beta=100), within-cube blend.
    latent_dim = 8
    d_in, d_out, feature_vector_size = 3, 1, 0
    DIMS = (128,) * 8
    SKIP_IN = (4,)
    multires = 10
    B = 300            # not a multiple of the tile -> exercises cdiv + tail padding

    key = jax.random.PRNGKey(0)
    kp, kx, kz = jax.random.split(key, 3)
    params, dims, num_layers = init_params(
        kp, latent_dim, d_in, d_out, feature_vector_size, DIMS, SKIP_IN, multires)

    # Module input: (B, latent_dim + d_in); some xyz intentionally outside the cube.
    xyz = jax.random.uniform(kx, (B, d_in), jnp.float32, -1.2, 1.2)
    latent = jax.random.normal(kz, (B, latent_dim), jnp.float32)
    raw_input = jnp.concatenate([latent, xyz], axis=1)

    # Reference: original-order embedding + f32 MLP (no padding/permutation).
    inp_full = jnp.concatenate([latent, positional_embed(xyz, multires)], axis=1)
    ref = reference_forward(inp_full, params, dims, num_layers, SKIP_IN, latent_dim)

    # f32 compute path: tight numeric check (EUP sin/cos of |arg|~600 and the
    # pi/2-phase trick differ from XLA at ~1e-4 before 9-layer propagation).
    fwd_f32 = make_implicit_network_forward(params, dims, num_layers, SKIP_IN,
                                            latent_dim, d_in, multires,
                                            compute_dtype=jnp.float32)
    out_f32 = jax.block_until_ready(fwd_f32(raw_input))
    assert out_f32.shape == (B, dims[-1])
    np.testing.assert_allclose(np.asarray(out_f32), np.asarray(ref),
                               rtol=1e-3, atol=1e-3)

    # bf16 perf path (default): bf16 weight slab + bf16 dot operands, f32 MXU
    # accumulation, f32 softplus/bias.  Looser tolerance for bf16 operand
    # rounding accumulated through 9 layers.
    fwd_bf16 = make_implicit_network_forward(params, dims, num_layers, SKIP_IN,
                                             latent_dim, d_in, multires,
                                             compute_dtype=jnp.bfloat16)
    out_bf16 = jax.block_until_ready(fwd_bf16(raw_input))
    assert out_bf16.shape == (B, dims[-1])
    np.testing.assert_allclose(np.asarray(out_bf16), np.asarray(ref),
                               rtol=5e-2, atol=5e-2)

    print("KERNEL_OK")
</pallas_src>

<mosaic_0001>
module attributes {stable_mosaic.version = 11 : i64} {
  func.func @k(%arg0: memref<8x128xf32, #tpu.memory_space<vmem>>, %arg1: memref<8x128xf32, #tpu.memory_space<vmem>>) attributes {dimension_semantics = [], scalar_prefetch = 0 : i64, scratch_operands = 0 : i64, tpu.core_type = #tpu.core_type<tc>} {
    %c0 = arith.constant 0 : index
    %c0_0 = arith.constant 0 : index
    %0 = vector.load %arg0[%c0, %c0_0] : memref<8x128xf32, #tpu.memory_space<vmem>>, vector<8x128xf32>
    %1 = math.sin %0 : vector<8x128xf32>
    %c0_1 = arith.constant 0 : index
    %c0_2 = arith.constant 0 : index
    %2 = vector.load %arg1[%c0_1, %c0_2] : memref<8x128xf32, #tpu.memory_space<vmem>>, vector<8x128xf32>
    tpu.vector_store %arg1[%c0_1, %c0_2], %1 {strides = array<i32>} : memref<8x128xf32, #tpu.memory_space<vmem>>, vector<8x128xf32>,
    return
  }
}

module attributes {stable_mosaic.version = 11 : i64} {
  func.func @kernel(%arg0: i32, %arg1: memref<256x128xf32, #tpu.memory_space<vmem>>, %arg2: memref<10x128x128xf32, #tpu.memory_space<vmem>>, %arg3: memref<9x1x128xf32, #tpu.memory_space<vmem>>, %arg4: memref<256x8xf32, #tpu.memory_space<vmem>>) attributes {dimension_semantics = [#tpu.dimension_semantics<parallel>], iteration_bounds = array<i64: 2>, scalar_prefetch = 0 : i64, scratch_operands = 0 : i64, tpu.core_type = #tpu.core_type<tc>, window_params = [{transform_indices = @transform_0, window_bounds = array<i64: 256, 128>}, {pipeline_mode = #tpu.pipeline_mode<synchronous>, transform_indices = @transform_1, window_bounds = array<i64: 10, 128, 128>}, {pipeline_mode = #tpu.pipeline_mode<synchronous>, transform_indices = @transform_2, window_bounds = array<i64: 9, 1, 128>}, {transform_indices = @transform_3, window_bounds = array<i64: 256, 8>}]} {
    %c0 = arith.constant 0 : index
    %c0_0 = arith.constant 0 : index
    %0 = vector.load %arg1[%c0, %c0_0] : memref<256x128xf32, #tpu.memory_space<vmem>>, vector<256x128xf32>
    %c0_1 = arith.constant 0 : index
    %c0_2 = arith.constant 0 : index
    %c0_3 = arith.constant 0 : index
    %1 = vector.load %arg3[%c0_1, %c0_2, %c0_3] : memref<9x1x128xf32, #tpu.memory_space<vmem>>, vector<1x1x128xf32>
    %2 = vector.shape_cast %1 : vector<1x1x128xf32> to vector<1x128xf32>
    %c0_4 = arith.constant 0 : index
    %c0_5 = arith.constant 0 : index
    %c0_6 = arith.constant 0 : index
    %3 = vector.load %arg2[%c0_4, %c0_5, %c0_6] : memref<10x128x128xf32, #tpu.memory_space<vmem>>, vector<1x128x128xf32>
    %4 = vector.shape_cast %3 : vector<1x128x128xf32> to vector<128x128xf32>
    %cst = arith.constant dense<0.000000e+00> : vector<256x128xf32>
    %5 = tpu.matmul %0, %4, %cst {dimension_numbers = #tpu.dot_dimension_numbers<[1], [0], [0], [1], [0, 0, 1, 1], [], []>} : vector<256x128xf32>, vector<128x128xf32>, vector<256x128xf32> -> vector<256x128xf32>
    %6 = vector.broadcast %2 : vector<1x128xf32> to vector<256x128xf32>
    %7 = arith.addf %5, %6 : vector<256x128xf32>
    %cst_7 = arith.constant 2.000000e-01 : f32
    %8 = vector.broadcast %cst_7 : f32 to vector<256x128xf32>
    %9 = arith.minimumf %7, %8 : vector<256x128xf32>
    %cst_8 = arith.constant 1.000000e+02 : f32
    %10 = vector.broadcast %cst_8 : f32 to vector<256x128xf32>
    %11 = arith.mulf %9, %10 : vector<256x128xf32>
    %12 = math.exp %11 : vector<256x128xf32>
    %13 = math.log1p %12 : vector<256x128xf32>
    %cst_9 = arith.constant 0.00999999977 : f32
    %14 = vector.broadcast %cst_9 : f32 to vector<256x128xf32>
    %15 = arith.mulf %13, %14 : vector<256x128xf32>
    %cst_10 = arith.constant 2.000000e-01 : f32
    %16 = vector.broadcast %cst_10 : f32 to vector<256x128xf32>
    %17 = arith.cmpf ogt, %7, %16 : vector<256x128xf32>
    %18 = arith.select %17, %7, %15 : vector<256x128xi1>, vector<256x128xf32>
    %c1 = arith.constant 1 : index
    %c0_11 = arith.constant 0 : index
    %c0_12 = arith.constant 0 : index
    %19 = vector.load %arg3[%c1, %c0_11, %c0_12] : memref<9x1x128xf32, #tpu.memory_space<vmem>>, vector<1x1x128xf32>
    %20 = vector.shape_cast %19 : vector<1x1x128xf32> to vector<1x128xf32>
    %c1_13 = arith.constant 1 : index
    %c0_14 = arith.constant 0 : index
    %c0_15 = arith.constant 0 : index
    %21 = vector.load %arg2[%c1_13, %c0_14, %c0_15] : memref<10x128x128xf32, #tpu.memory_space<vmem>>, vector<1x128x128xf32>
    %22 = vector.shape_cast %21 : vector<1x128x128xf32> to vector<128x128xf32>
    %cst_16 = arith.constant dense<0.000000e+00> : vector<256x128xf32>
    %23 = tpu.matmul %18, %22, %cst_16 {dimension_numbers = #tpu.dot_dimension_numbers<[1], [0], [0], [1], [0, 0, 1, 1], [], []>} : vector<256x128xf32>, vector<128x128xf32>, vector<256x128xf32> -> vector<256x128xf32>
    %24 = vector.broadcast %20 : vector<1x128xf32> to vector<256x128xf32>
    %25 = arith.addf %23, %24 : vector<256x128xf32>
    %cst_17 = arith.constant 2.000000e-01 : f32
    %26 = vector.broadcast %cst_17 : f32 to vector<256x128xf32>
    %27 = arith.minimumf %25, %26 : vector<256x128xf32>
    %cst_18 = arith.constant 1.000000e+02 : f32
    %28 = vector.broadcast %cst_18 : f32 to vector<256x128xf32>
    %29 = arith.mulf %27, %28 : vector<256x128xf32>
    %30 = math.exp %29 : vector<256x128xf32>
    %31 = math.log1p %30 : vector<256x128xf32>
    %cst_19 = arith.constant 0.00999999977 : f32
    %32 = vector.broadcast %cst_19 : f32 to vector<256x128xf32>
    %33 = arith.mulf %31, %32 : vector<256x128xf32>
    %cst_20 = arith.constant 2.000000e-01 : f32
    %34 = vector.broadcast %cst_20 : f32 to vector<256x128xf32>
    %35 = arith.cmpf ogt, %25, %34 : vector<256x128xf32>
    %36 = arith.select %35, %25, %33 : vector<256x128xi1>, vector<256x128xf32>
    %c2 = arith.constant 2 : index
    %c0_21 = arith.constant 0 : index
    %c0_22 = arith.constant 0 : index
    %37 = vector.load %arg3[%c2, %c0_21, %c0_22] : memref<9x1x128xf32, #tpu.memory_space<vmem>>, vector<1x1x128xf32>
    %38 = vector.shape_cast %37 : vector<1x1x128xf32> to vector<1x128xf32>
    %c2_23 = arith.constant 2 : index
    %c0_24 = arith.constant 0 : index
    %c0_25 = arith.constant 0 : index
    %39 = vector.load %arg2[%c2_23, %c0_24, %c0_25] : memref<10x128x128xf32, #tpu.memory_space<vmem>>, vector<1x128x128xf32>
    %40 = vector.shape_cast %39 : vector<1x128x128xf32> to vector<128x128xf32>
    %cst_26 = arith.constant dense<0.000000e+00> : vector<256x128xf32>
    %41 = tpu.matmul %36, %40, %cst_26 {dimension_numbers = #tpu.dot_dimension_numbers<[1], [0], [0], [1], [0, 0, 1, 1], [], []>} : vector<256x128xf32>, vector<128x128xf32>, vector<256x128xf32> -> vector<256x128xf32>
    %42 = vector.broadcast %38 : vector<1x128xf32> to vector<256x128xf32>
    %43 = arith.addf %41, %42 : vector<256x128xf32>
    %cst_27 = arith.constant 2.000000e-01 : f32
    %44 = vector.broadcast %cst_27 : f32 to vector<256x128xf32>
    %45 = arith.minimumf %43, %44 : vector<256x128xf32>
    %cst_28 = arith.constant 1.000000e+02 : f32
    %46 = vector.broadcast %cst_28 : f32 to vector<256x128xf32>
    %47 = arith.mulf %45, %46 : vector<256x128xf32>
    %48 = math.exp %47 : vector<256x128xf32>
    %49 = math.log1p %48 : vector<256x128xf32>
    %cst_29 = arith.constant 0.00999999977 : f32
    %50 = vector.broadcast %cst_29 : f32 to vector<256x128xf32>
    %51 = arith.mulf %49, %50 : vector<256x128xf32>
    %cst_30 = arith.constant 2.000000e-01 : f32
    %52 = vector.broadcast %cst_30 : f32 to vector<256x128xf32>
    %53 = arith.cmpf ogt, %43, %52 : vector<256x128xf32>
    %54 = arith.select %53, %43, %51 : vector<256x128xi1>, vector<256x128xf32>
    %c3 = arith.constant 3 : index
    %c0_31 = arith.constant 0 : index
    %c0_32 = arith.constant 0 : index
    %55 = vector.load %arg3[%c3, %c0_31, %c0_32] : memref<9x1x128xf32, #tpu.memory_space<vmem>>, vector<1x1x128xf32>
    %56 = vector.shape_cast %55 : vector<1x1x128xf32> to vector<1x128xf32>
    %c3_33 = arith.constant 3 : index
    %c0_34 = arith.constant 0 : index
    %c0_35 = arith.constant 0 : index
    %57 = vector.load %arg2[%c3_33, %c0_34, %c0_35] : memref<10x128x128xf32, #tpu.memory_space<vmem>>, vector<1x128x128xf32>
    %58 = vector.shape_cast %57 : vector<1x128x128xf32> to vector<128x128xf32>
    %cst_36 = arith.constant dense<0.000000e+00> : vector<256x128xf32>
    %59 = tpu.matmul %54, %58, %cst_36 {dimension_numbers = #tpu.dot_dimension_numbers<[1], [0], [0], [1], [0, 0, 1, 1], [], []>} : vector<256x128xf32>, vector<128x128xf32>, vector<256x128xf32> -> vector<256x128xf32>
    %60 = vector.broadcast %56 : vector<1x128xf32> to vector<256x128xf32>
    %61 = arith.addf %59, %60 : vector<256x128xf32>
    %cst_37 = arith.constant 2.000000e-01 : f32
    %62 = vector.broadcast %cst_37 : f32 to vector<256x128xf32>
    %63 = arith.minimumf %61, %62 : vector<256x128xf32>
    %cst_38 = arith.constant 1.000000e+02 : f32
    %64 = vector.broadcast %cst_38 : f32 to vector<256x128xf32>
    %65 = arith.mulf %63, %64 : vector<256x128xf32>
    %66 = math.exp %65 : vector<256x128xf32>
    %67 = math.log1p %66 : vector<256x128xf32>
    %cst_39 = arith.constant 0.00999999977 : f32
    %68 = vector.broadcast %cst_39 : f32 to vector<256x128xf32>
    %69 = arith.mulf %67, %68 : vector<256x128xf32>
    %cst_40 = arith.constant 2.000000e-01 : f32
    %70 = vector.broadcast %cst_40 : f32 to vector<256x128xf32>
    %71 = arith.cmpf ogt, %61, %70 : vector<256x128xf32>
    %72 = arith.select %71, %61, %69 : vector<256x128xi1>, vector<256x128xf32>
    %c4 = arith.constant 4 : index
    %c0_41 = arith.constant 0 : index
    %c0_42 = arith.constant 0 : index
    %73 = vector.load %arg3[%c4, %c0_41, %c0_42] : memref<9x1x128xf32, #tpu.memory_space<vmem>>, vector<1x1x128xf32>
    %74 = vector.shape_cast %73 : vector<1x1x128xf32> to vector<1x128xf32>
    %c4_43 = arith.constant 4 : index
    %c0_44 = arith.constant 0 : index
    %c0_45 = arith.constant 0 : index
    %75 = vector.load %arg2[%c4_43, %c0_44, %c0_45] : memref<10x128x128xf32, #tpu.memory_space<vmem>>, vector<1x128x128xf32>
    %76 = vector.shape_cast %75 : vector<1x128x128xf32> to vector<128x128xf32>
    %c5 = arith.constant 5 : index
    %c0_46 = arith.constant 0 : index
    %c0_47 = arith.constant 0 : index
    %77 = vector.load %arg2[%c5, %c0_46, %c0_47] : memref<10x128x128xf32, #tpu.memory_space<vmem>>, vector<1x128x128xf32>
    %78 = vector.shape_cast %77 : vector<1x128x128xf32> to vector<128x128xf32>
    %cst_48 = arith.constant dense<0.000000e+00> : vector<256x128xf32>
    %79 = tpu.matmul %72, %76, %cst_48 {dimension_numbers = #tpu.dot_dimension_numbers<[1], [0], [0], [1], [0, 0, 1, 1], [], []>} : vector<256x128xf32>, vector<128x128xf32>, vector<256x128xf32> -> vector<256x128xf32>
    %cst_49 = arith.constant dense<0.000000e+00> : vector<256x128xf32>
    %80 = tpu.matmul %0, %78, %cst_49 {dimension_numbers = #tpu.dot_dimension_numbers<[1], [0], [0], [1], [0, 0, 1, 1], [], []>} : vector<256x128xf32>, vector<128x128xf32>, vector<256x128xf32> -> vector<256x128xf32>
    %81 = arith.addf %79, %80 : vector<256x128xf32>
    %82 = vector.broadcast %74 : vector<1x128xf32> to vector<256x128xf32>
    %83 = arith.addf %81, %82 : vector<256x128xf32>
    %cst_50 = arith.constant 2.000000e-01 : f32
    %84 = vector.broadcast %cst_50 : f32 to vector<256x128xf32>
    %85 = arith.minimumf %83, %84 : vector<256x128xf32>
    %cst_51 = arith.constant 1.000000e+02 : f32
    %86 = vector.broadcast %cst_51 : f32 to vector<256x128xf32>
    %87 = arith.mulf %85, %86 : vector<256x128xf32>
    %88 = math.exp %87 : vector<256x128xf32>
    %89 = math.log1p %88 : vector<256x128xf32>
    %cst_52 = arith.constant 0.00999999977 : f32
    %90 = vector.broadcast %cst_52 : f32 to vector<256x128xf32>
    %91 = arith.mulf %89, %90 : vector<256x128xf32>
    %cst_53 = arith.constant 2.000000e-01 : f32
    %92 = vector.broadcast %cst_53 : f32 to vector<256x128xf32>
    %93 = arith.cmpf ogt, %83, %92 : vector<256x128xf32>
    %94 = arith.select %93, %83, %91 : vector<256x128xi1>, vector<256x128xf32>
    %c5_54 = arith.constant 5 : index
    %c0_55 = arith.constant 0 : index
    %c0_56 = arith.constant 0 : index
    %95 = vector.load %arg3[%c5_54, %c0_55, %c0_56] : memref<9x1x128xf32, #tpu.memory_space<vmem>>, vector<1x1x128xf32>
    %96 = vector.shape_cast %95 : vector<1x1x128xf32> to vector<1x128xf32>
    %c6 = arith.constant 6 : index
    %c0_57 = arith.constant 0 : index
    %c0_58 = arith.constant 0 : index
    %97 = vector.load %arg2[%c6, %c0_57, %c0_58] : memref<10x128x128xf32, #tpu.memory_space<vmem>>, vector<1x128x128xf32>
    %98 = vector.shape_cast %97 : vector<1x128x128xf32> to vector<128x128xf32>
    %cst_59 = arith.constant dense<0.000000e+00> : vector<256x128xf32>
    %99 = tpu.matmul %94, %98, %cst_59 {dimension_numbers = #tpu.dot_dimension_numbers<[1], [0], [0], [1], [0, 0, 1, 1], [], []>} : vector<256x128xf32>, vector<128x128xf32>, vector<256x128xf32> -> vector<256x128xf32>
    %100 = vector.broadcast %96 : vector<1x128xf32> to vector<256x128xf32>
    %101 = arith.addf %99, %100 : vector<256x128xf32>
    %cst_60 = arith.constant 2.000000e-01 : f32
    %102 = vector.broadcast %cst_60 : f32 to vector<256x128xf32>
    %103 = arith.minimumf %101, %102 : vector<256x128xf32>
    %cst_61 = arith.constant 1.000000e+02 : f32
    %104 = vector.broadcast %cst_61 : f32 to vector<256x128xf32>
    %105 = arith.mulf %103, %104 : vector<256x128xf32>
    %106 = math.exp %105 : vector<256x128xf32>
    %107 = math.log1p %106 : vector<256x128xf32>
    %cst_62 = arith.constant 0.00999999977 : f32
    %108 = vector.broadcast %cst_62 : f32 to vector<256x128xf32>
    %109 = arith.mulf %107, %108 : vector<256x128xf32>
    %cst_63 = arith.constant 2.000000e-01 : f32
    %110 = vector.broadcast %cst_63 : f32 to vector<256x128xf32>
    %111 = arith.cmpf ogt, %101, %110 : vector<256x128xf32>
    %112 = arith.select %111, %101, %109 : vector<256x128xi1>, vector<256x128xf32>
    %c6_64 = arith.constant 6 : index
    %c0_65 = arith.constant 0 : index
    %c0_66 = arith.constant 0 : index
    %113 = vector.load %arg3[%c6_64, %c0_65, %c0_66] : memref<9x1x128xf32, #tpu.memory_space<vmem>>, vector<1x1x128xf32>
    %114 = vector.shape_cast %113 : vector<1x1x128xf32> to vector<1x128xf32>
    %c7 = arith.constant 7 : index
    %c0_67 = arith.constant 0 : index
    %c0_68 = arith.constant 0 : index
    %115 = vector.load %arg2[%c7, %c0_67, %c0_68] : memref<10x128x128xf32, #tpu.memory_space<vmem>>, vector<1x128x128xf32>
    %116 = vector.shape_cast %115 : vector<1x128x128xf32> to vector<128x128xf32>
    %cst_69 = arith.constant dense<0.000000e+00> : vector<256x128xf32>
    %117 = tpu.matmul %112, %116, %cst_69 {dimension_numbers = #tpu.dot_dimension_numbers<[1], [0], [0], [1], [0, 0, 1, 1], [], []>} : vector<256x128xf32>, vector<128x128xf32>, vector<256x128xf32> -> vector<256x128xf32>
    %118 = vector.broadcast %114 : vector<1x128xf32> to vector<256x128xf32>
    %119 = arith.addf %117, %118 : vector<256x128xf32>
    %cst_70 = arith.constant 2.000000e-01 : f32
    %120 = vector.broadcast %cst_70 : f32 to vector<256x128xf32>
    %121 = arith.minimumf %119, %120 : vector<256x128xf32>
    %cst_71 = arith.constant 1.000000e+02 : f32
    %122 = vector.broadcast %cst_71 : f32 to vector<256x128xf32>
    %123 = arith.mulf %121, %122 : vector<256x128xf32>
    %124 = math.exp %123 : vector<256x128xf32>
    %125 = math.log1p %124 : vector<256x128xf32>
    %cst_72 = arith.constant 0.00999999977 : f32
    %126 = vector.broadcast %cst_72 : f32 to vector<256x128xf32>
    %127 = arith.mulf %125, %126 : vector<256x128xf32>
    %cst_73 = arith.constant 2.000000e-01 : f32
    %128 = vector.broadcast %cst_73 : f32 to vector<256x128xf32>
    %129 = arith.cmpf ogt, %119, %128 : vector<256x128xf32>
    %130 = arith.select %129, %119, %127 : vector<256x128xi1>, vector<256x128xf32>
    %c7_74 = arith.constant 7 : index
    %c0_75 = arith.constant 0 : index
    %c0_76 = arith.constant 0 : index
    %131 = vector.load %arg3[%c7_74, %c0_75, %c0_76] : memref<9x1x128xf32, #tpu.memory_space<vmem>>, vector<1x1x128xf32>
    %132 = vector.shape_cast %131 : vector<1x1x128xf32> to vector<1x128xf32>
    %c8 = arith.constant 8 : index
    %c0_77 = arith.constant 0 : index
    %c0_78 = arith.constant 0 : index
    %133 = vector.load %arg2[%c8, %c0_77, %c0_78] : memref<10x128x128xf32, #tpu.memory_space<vmem>>, vector<1x128x128xf32>
    %134 = vector.shape_cast %133 : vector<1x128x128xf32> to vector<128x128xf32>
    %cst_79 = arith.constant dense<0.000000e+00> : vector<256x128xf32>
    %135 = tpu.matmul %130, %134, %cst_79 {dimension_numbers = #tpu.dot_dimension_numbers<[1], [0], [0], [1], [0, 0, 1, 1], [], []>} : vector<256x128xf32>, vector<128x128xf32>, vector<256x128xf32> -> vector<256x128xf32>
    %136 = vector.broadcast %132 : vector<1x128xf32> to vector<256x128xf32>
    %137 = arith.addf %135, %136 : vector<256x128xf32>
    %cst_80 = arith.constant 2.000000e-01 : f32
    %138 = vector.broadcast %cst_80 : f32 to vector<256x128xf32>
    %139 = arith.minimumf %137, %138 : vector<256x128xf32>
    %cst_81 = arith.constant 1.000000e+02 : f32
    %140 = vector.broadcast %cst_81 : f32 to vector<256x128xf32>
    %141 = arith.mulf %139, %140 : vector<256x128xf32>
    %142 = math.exp %141 : vector<256x128xf32>
    %143 = math.log1p %142 : vector<256x128xf32>
    %cst_82 = arith.constant 0.00999999977 : f32
    %144 = vector.broadcast %cst_82 : f32 to vector<256x128xf32>
    %145 = arith.mulf %143, %144 : vector<256x128xf32>
    %cst_83 = arith.constant 2.000000e-01 : f32
    %146 = vector.broadcast %cst_83 : f32 to vector<256x128xf32>
    %147 = arith.cmpf ogt, %137, %146 : vector<256x128xf32>
    %148 = arith.select %147, %137, %145 : vector<256x128xi1>, vector<256x128xf32>
    %c8_84 = arith.constant 8 : index
    %c0_85 = arith.constant 0 : index
    %c0_86 = arith.constant 0 : index
    %149 = vector.load %arg3[%c8_84, %c0_85, %c0_86] : memref<9x1x128xf32, #tpu.memory_space<vmem>>, vector<1x1x128xf32>
    %150 = vector.shape_cast %149 : vector<1x1x128xf32> to vector<1x128xf32>
    %c9 = arith.constant 9 : index
    %c0_87 = arith.constant 0 : index
    %c0_88 = arith.constant 0 : index
    %151 = vector.load %arg2[%c9, %c0_87, %c0_88] : memref<10x128x128xf32, #tpu.memory_space<vmem>>, vector<1x128x128xf32>
    %152 = vector.shape_cast %151 : vector<1x128x128xf32> to vector<128x128xf32>
    %cst_89 = arith.constant dense<0.000000e+00> : vector<256x128xf32>
    %153 = tpu.matmul %148, %152, %cst_89 {dimension_numbers = #tpu.dot_dimension_numbers<[1], [0], [0], [1], [0, 0, 1, 1], [], []>} : vector<256x128xf32>, vector<128x128xf32>, vector<256x128xf32> -> vector<256x128xf32>
    %154 = vector.broadcast %150 : vector<1x128xf32> to vector<256x128xf32>
    %155 = arith.addf %153, %154 : vector<256x128xf32>
    %156 = vector.extract_strided_slice %0 {offsets = [0, 8], sizes = [256, 3], strides = [1, 1]} : vector<256x128xf32> to vector<256x3xf32>
    %157 = math.absf %156 : vector<256x3xf32>
    %cst_90 = arith.constant 1.000000e+00 : f32
    %158 = vector.broadcast %cst_90 : f32 to vector<256x3xf32>
    %159 = arith.cmpf ole, %157, %158 : vector<256x3xf32>
    %cst_91 = arith.constant 1.000000e+00 : f32
    %cst_92 = arith.constant 0.000000e+00 : f32
    %160 = vector.broadcast %cst_91 : f32 to vector<256x3xf32>
    %161 = vector.broadcast %cst_92 : f32 to vector<256x3xf32>
    %162 = arith.select %159, %160, %161 : vector<256x3xi1>, vector<256x3xf32>
    %cst_93 = arith.constant dense<0x7F800000> : vector<256xf32>
    %163 = vector.multi_reduction <minimumf>, %162, %cst_93 [1] : vector<256x3xf32> to vector<256xf32>
    %164 = vector.shape_cast %163 : vector<256xf32> to vector<256x1xf32>
    %165 = vector.extract_strided_slice %155 {offsets = [0, 0], sizes = [256, 8], strides = [1, 1]} : vector<256x128xf32> to vector<256x8xf32>
    %166 = vector.broadcast %164 : vector<256x1xf32> to vector<256x8xf32>
    %167 = arith.mulf %166, %165 : vector<256x8xf32>
    %cst_94 = arith.constant 1.000000e+00 : f32
    %168 = vector.broadcast %cst_94 : f32 to vector<256x1xf32>
    %169 = arith.subf %168, %164 : vector<256x1xf32>
    %cst_95 = arith.constant 3.000000e-01 : f32
    %170 = vector.broadcast %cst_95 : f32 to vector<256x1xf32>
    %171 = arith.mulf %169, %170 : vector<256x1xf32>
    %172 = vector.broadcast %171 : vector<256x1xf32> to vector<256x8xf32>
    %173 = arith.addf %167, %172 : vector<256x8xf32>
    %c0_96 = arith.constant 0 : index
    %c0_97 = arith.constant 0 : index
    %174 = vector.load %arg4[%c0_96, %c0_97] : memref<256x8xf32, #tpu.memory_space<vmem>>, vector<256x8xf32>
    tpu.vector_store %arg4[%c0_96, %c0_97], %173 {strides = array<i32>} : memref<256x8xf32, #tpu.memory_space<vmem>>, vector<256x8xf32>,
    return
  }
  func.func @transform_0(%arg0: i32) -> (i32, i32) {
    %c0_i32 = arith.constant 0 : i32
    %c0_i32_0 = arith.constant 0 : i32
    return %arg0, %c0_i32 : i32, i32
  }
  func.func @transform_1(%arg0: i32) -> (i32, i32, i32) {
    %c0_i32 = arith.constant 0 : i32
    %c0_i32_0 = arith.constant 0 : i32
    %c0_i32_1 = arith.constant 0 : i32
    %c0_i32_2 = arith.constant 0 : i32
    return %c0_i32, %c0_i32_0, %c0_i32_1 : i32, i32, i32
  }
  func.func @transform_2(%arg0: i32) -> (i32, i32, i32) {
    %c0_i32 = arith.constant 0 : i32
    %c0_i32_0 = arith.constant 0 : i32
    %c0_i32_1 = arith.constant 0 : i32
    %c0_i32_2 = arith.constant 0 : i32
    return %c0_i32, %c0_i32_0, %c0_i32_1 : i32, i32, i32
  }
  func.func @transform_3(%arg0: i32) -> (i32, i32) {
    %c0_i32 = arith.constant 0 : i32
    %c0_i32_0 = arith.constant 0 : i32
    return %arg0, %c0_i32 : i32, i32
  }
}

</mosaic_0001>

<llo_original>
// kernel: tpu_custom_call.1
$region0: #{tpu_custom_call.1}
  #allocation0 [shape = 'u32[]', space=smem, size = 0x4, offset = 0x4, fixed_abs, tag = 'smem constant byte address 0x4 - core index']
  #allocation1 [shape = 'u32[144,128]{1,0:T(1,128)}', space=vmem, size = 0x12000, scoped, tag = 'internal scratch']
  %s0 = inlined_call_operand.hbm [shape: f32[8,128], index: 0, kind: input, shape index: {}]
  %s1 = inlined_call_operand.hbm [shape: f32[8,128], index: 1, kind: output, shape index: {}]
  %s2 = sld [smem:[#allocation0]]
  $region18: #{tpu_custom_call.1} parent=0
    _
  %s4 = ssub.s32 1, %s2
  %s5 = scalar_select 0, %s4, %s2
  $region1: #{tpu_custom_call.1} parent=0
    #allocation2 [shape = 'u8[4096]{0}', space=vmem, size = 0x1000, scoped, tag = 'input window, operand 0, single buffered']
    #allocation3 [shape = 's32[1]{0}', space=sflag, size = 0x4, scoped, tag = 'scoped memory for tpu_custom_call.1']
    #allocation4 [shape = 's32[1]{0}', space=sflag, size = 0x4, scoped, tag = 'scoped memory for tpu_custom_call.1']
    #allocation5 [shape = 'u8[4096]{0}', space=vmem, size = 0x1000, scoped, tag = 'output window, operand 0, single buffered']
    %6 = vsyncpa [#allocation3], 0
    %7 = vsyncpa [#allocation4], 0
    // Predicated region
    $region2: #{tpu_custom_call.1} parent=1 // pred_check
      _
    $region3: #{tpu_custom_call.1} parent=1 // pred_check_branch
      %9 = sbr.rel (0) target = $region5
    $region4: #{tpu_custom_call.1} parent=1 // pred_region
      %s11 = ssub.s32 128, 128
      %12 = vsyncadd [#allocation3], %s11
      %s14 = sshll.u32 [#allocation2], 4
      %s15 = int_to_ptr.vmem [resolvable:$true] %s14
      %17 = dma.hbm_to_vmem [thread:$0]  %s0, 128, %s15, [#allocation3]
    $region5: #{tpu_custom_call.1} parent=1 // pred_fallthru
      _
    // Predicated region
    $region6: #{tpu_custom_call.1} parent=1 // pred_check
      _
    $region7: #{tpu_custom_call.1} parent=1 // pred_check_branch
      %19 = sbr.rel (0) target = $region9
    $region8: #{tpu_custom_call.1} parent=1 // pred_region
      %20 = dma.done [#allocation3], 128
    $region9: #{tpu_custom_call.1} parent=1 // pred_fallthru
      _
    %v21 = vld [vmem:[#allocation2] sm:$0xff]
    %v22 = vand.u32 2147483647, %v21
    %vm23 = vcmp.le.f32.partialorder %v22, 0.7853982
    %vm24 = vcmp.lt.s32.totalorder %v21, 0
    %v25 = vand.u32 %v21, 2139095040
    %v26 = vshrl.u32 %v25, 23
    %v27 = vsub.s32 %v26, 127
    %v28 = vand.u32 2147483647, %v21
    %v29 = vand.u32 %v28, 8388607
    %v30 = vor.u32 %v29, 8388608
    %v31 = vsub.s32 0, %v30
    %v32 = vadd.s32 %v27, 1
    %vm33 = vcmp.gt.s32.totalorder %v32, 0
    %v34 = vsel %vm33, %v32, 0
    %v35 = vshrl.u32 %v34, 5
    %v36 = vand.u32 %v34, 31
    %v37 = vsub.s32 32, %v36
    %v38 = vshrl.u32 683565275, %v37
    %v39 = vshll.u32 683565275, %v36
    %v40 = vshrl.u32 2475754826, %v37
    %v41 = vor.u32 %v39, %v40
    %v42 = vshll.u32 2475754826, %v36
    %v43 = vshrl.u32 2131351028, %v37
    %v44 = vor.u32 %v42, %v43
    %v45 = vshll.u32 2131351028, %v36
    %v46 = vshrl.u32 2102212464, %v37
    %v47 = vor.u32 %v45, %v46
    %v48 = vshll.u32 2102212464, %v36
    %v49 = vshrl.u32 920167782, %v37
    %v50 = vor.u32 %v48, %v49
    %v51 = vshll.u32 920167782, %v36
    %v52 = vshrl.u32 1326507024, %v37
    %v53 = vor.u32 %v51, %v52
    %vm54 = vcmp.lt.s32.totalorder %v35, 1
    %vm55 = vcmp.lt.s32.totalorder %v35, 2
    %vm56 = vcmp.lt.s32.totalorder %v35, 3
    %vm57 = vcmp.lt.s32.totalorder %v35, 4
    %v58 = vsel %vm54, %v38, %v41
    %v59 = vsel %vm57, %v47, 2102212464
    %v60 = vsel %vm56, %v44, %v59
    %v61 = vsel %vm55, %v58, %v60
    %v62 = vsel %vm54, %v41, %v44
    %v63 = vsel %vm57, %v50, 920167782
    %v64 = vsel %vm56, %v47, %v63
    %v65 = vsel %vm55, %v62, %v64
    %v66 = vsel %vm54, %v44, %v47
    %v67 = vsel %vm57, %v53, 1326507024
    %v68 = vsel %vm56, %v50, %v67
    %v69 = vsel %vm55, %v66, %v68
    %v70 = vshll.u32 %v30, 8
    %v71 = vmul.u32.u64.compose %v70, %v69
    %v72 = vextract.low.u32 %v71
    %v73 = vextract.high.u32 %v71
    %v74 = vmul.u32.u64.compose %v70, %v65
    %v75 = vextract.low.u32 %v74
    %v76 = vextract.high.u32 %v74
    %v77 = vmul.u32 %v70, %v61
    %v78 = vadd.s32 %v73, %v75
    %vm79 = vc.u32 %v73, %v75
    %v80 = vadd.s32 %v76, 1
    %v81 = vsel %vm79, %v80, %v76
    %v82 = vadd.s32 %v77, %v81
    %v83 = vadd.s32 %v82, 536870912
    %v84 = vshrl.u32 %v83, 30
    %v85 = vshll.u32 %v84, 30
    %v86 = vsub.s32 %v82, %v85
    %vm87 = vcmp.lt.s32.totalorder %v86, 0
    %v88 = vsub.s32 0, %v86
    %v89 = vsel %vm87, %v88, %v86
    %v90 = vclz %v89
    %v91 = vsub.s32 %v90, 2
    %vm92 = vcmp.gt.s32.totalorder 0, %v91
    %v93 = vsel %vm92, 0, %v91
    %v94 = vsub.s32 32, %v93
    %v95 = vshll.u32 %v86, %v93
    %v96 = vshrl.u32 %v78, %v94
    %v97 = vor.u32 %v95, %v96
    %v98 = vsub.s32 4294967266, %v93
    %v99 = vadd.s32 %v98, 127
    %v100 = vshll.u32 %v99, 23
    %v101 = vor.u32 4788187, %v100
    %v102 = vand.u32 2147483647, %v101
    %v104 = vcvt.s32.f32 %v97
    %v105 = vmul.f32 %v104, %v102
    %v106 = vxor.u32 %v105, 2147483648
    %v107 = vsel %vm24, %v106, %v105
    %v108 = vsub.s32 4, %v84
    %v109 = vsel %vm24, %v108, %v84
    %v110 = vsel %vm23, %v21, %v107
    %v111 = vsel %vm23, 0, %v109
    %v112 = vcosq.f32.pop %v110
    %v113 = vsinq.f32.pop %v110
    %vm114 = vweird.f32 %v21
    %v115 = vadd.s32 %v111, 3
    %v116 = vand.u32 %v115, 3
    %vm117 = vcmp.lt.s32.totalorder %v116, 2
    %vm118 = vcmp.eq.s32.totalorder %v116, 0
    %v119 = vxor.u32 %v113, 2147483648
    %v120 = vsel %vm118, %v112, %v119
    %vm121 = vcmp.eq.s32.totalorder %v116, 2
    %v122 = vxor.u32 %v112, 2147483648
    %v123 = vsel %vm121, %v122, %v113
    %v124 = vsel %vm117, %v120, %v123
    %v125 = vsel %vm114, nan, %v124
    %126 = vst [vmem:[#allocation5] sm:$0xff] %v125
    // Predicated region
    $region10: #{tpu_custom_call.1} parent=1 // pred_check
      _
    $region11: #{tpu_custom_call.1} parent=1 // pred_check_branch
      %128 = sbr.rel (0) target = $region13
    $region12: #{tpu_custom_call.1} parent=1 // pred_region
      %s130 = ssub.s32 128, 128
      %131 = vsyncadd [#allocation4], %s130
      %s133 = sshll.u32 [#allocation5], 4
      %s134 = int_to_ptr.vmem [resolvable:$true] %s133
      %136 = dma.vmem_to_hbm [thread:$0]  %s134, 128, %s1, [#allocation4]
    $region13: #{tpu_custom_call.1} parent=1 // pred_fallthru
      _
    // Predicated region
    $region14: #{tpu_custom_call.1} parent=1 // pred_check
      _
    $region15: #{tpu_custom_call.1} parent=1 // pred_check_branch
      %138 = sbr.rel (0) target = $region17
    $region16: #{tpu_custom_call.1} parent=1 // pred_region
      %139 = dma.done [#allocation4], 128
    $region17: #{tpu_custom_call.1} parent=1 // pred_fallthru
      _
    %140 = vsyncpa [#allocation3], 1
    %141 = vsyncpa [#allocation4], 1

// kernel: forward.1
$region0: #{forward.1}
  #allocation0 [shape = 'u32[]', space=smem, size = 0x4, offset = 0x4, fixed_abs, tag = 'smem constant byte address 0x4 - core index']
  #allocation1 [shape = 'u32[144,128]{1,0:T(1,128)}', space=vmem, size = 0x12000, scoped, tag = 'internal scratch']
  %s0 = inlined_call_operand.vmem [shape: f32[512,128], index: 0, kind: input, shape index: {}]
  %s1 = inlined_call_operand.vmem [shape: f32[10,128,128], index: 1, kind: input, shape index: {}]
  %s2 = inlined_call_operand.vmem [shape: f32[9,1,128], index: 2, kind: input, shape index: {}]
  %s3 = inlined_call_operand.vmem [shape: f32[512,8], index: 3, kind: output, shape index: {}]
  %s4 = sld [smem:[#allocation0]]
  $region45: #{forward.1} parent=0
    _
  %s6 = ssub.s32 1, %s4
  %s7 = scalar_select 0, %s6, %s4
  loop: start=0, step=1, limit=4
  $region2: #{forward.1} parent=0 // loop_pre_header
    _
  $region3: #{forward.1} parent=0 // loop_header
    %s9 = sphi 0, %s13
    %p10 = scmp.ge.s32.totalorder %s9, 4
    %s19 = sphi 0, %s21
    %s22 = sphi 0, %s19
    %s23 = sphi 0, %s22
    %s39 = sphi 0, %s23
    %s43 = sphi 0, %s43
    %s45 = sphi 0, %s43
    %s46 = sphi 0, %s45
    %s60 = sphi 0, %s46
    %s64 = sphi 0, %s64
    %s66 = sphi 0, %s64
    %s67 = sphi 0, %s66
    %s81 = sphi 0, %s67
    %s87 = sphi 0, %s89
    %s90 = sphi 0, %s87
    %s91 = sphi 0, %s90
    %s107 = sphi 0, %s91
  $region4: #{forward.1} parent=0 // loop_header_branch
    %12 = sbr.rel (%p10) target = $region8
  $region5: #{forward.1} parent=0 // loop_body
    %s14 = ssub.s32 %s9, 1
    %s15 = ssub.s32 %s9, 2
    %s16 = sadd.s32 %s9, 1
    %s17 = ssub.s32 %s9, %s16
    %p18 = scmp.eq.s32.totalorder %s17, 0
    %s20 = sadd.s32 %s19, 1
    %s21 = scalar_select %p18, %s19, %s20
    %p24 = pneg %p18
    %p25 = scmp.eq.s32.totalorder %s9, 1
    %p26 = por %p24, %p25
    %p27 = scmp.ne.s32.totalorder %s19, %s22
    %p28 = scmp.eq.s32.totalorder %s9, 0
    %p29 = por %p27, %p28
    %p30 = scmp.ne.s32.totalorder %s19, %s22
    %p31 = scmp.eq.s32.totalorder %s14, 1
    %p32 = por %p30, %p31
    %p33 = scmp.ne.s32.totalorder %s22, %s23
    %p34 = scmp.eq.s32.totalorder %s14, 0
    %p35 = por %p33, %p34
    %p36 = scmp.ne.s32.totalorder %s22, %s23
    %p37 = scmp.eq.s32.totalorder %s15, 1
    %p38 = por %p36, %p37
    %p40 = scmp.ne.s32.totalorder %s23, %s39
    %p41 = scmp.eq.s32.totalorder %s15, 0
    %p42 = por %p40, %p41
    %s44 = sadd.s32 %s43, 1
    %p47 = scmp.eq.s32.totalorder %s9, 1
    %p48 = scmp.ne.s32.totalorder %s43, %s45
    %p49 = scmp.eq.s32.totalorder %s9, 0
    %p50 = por %p48, %p49
    %p51 = scmp.ne.s32.totalorder %s43, %s45
    %p52 = scmp.eq.s32.totalorder %s14, 1
    %p53 = por %p51, %p52
    %p54 = scmp.ne.s32.totalorder %s45, %s46
    %p55 = scmp.eq.s32.totalorder %s14, 0
    %p56 = por %p54, %p55
    %p57 = scmp.ne.s32.totalorder %s45, %s46
    %p58 = scmp.eq.s32.totalorder %s15, 1
    %p59 = por %p57, %p58
    %p61 = scmp.ne.s32.totalorder %s46, %s60
    %p62 = scmp.eq.s32.totalorder %s15, 0
    %p63 = por %p61, %p62
    %s65 = sadd.s32 %s64, 1
    %p68 = scmp.eq.s32.totalorder %s9, 1
    %p69 = scmp.ne.s32.totalorder %s64, %s66
    %p70 = scmp.eq.s32.totalorder %s9, 0
    %p71 = por %p69, %p70
    %p72 = scmp.ne.s32.totalorder %s64, %s66
    %p73 = scmp.eq.s32.totalorder %s14, 1
    %p74 = por %p72, %p73
    %p75 = scmp.ne.s32.totalorder %s66, %s67
    %p76 = scmp.eq.s32.totalorder %s14, 0
    %p77 = por %p75, %p76
    %p78 = scmp.ne.s32.totalorder %s66, %s67
    %p79 = scmp.eq.s32.totalorder %s15, 1
    %p80 = por %p78, %p79
    %p82 = scmp.ne.s32.totalorder %s67, %s81
    %p83 = scmp.eq.s32.totalorder %s15, 0
    %p84 = por %p82, %p83
    %s85 = ssub.s32 %s9, %s16
    %p86 = scmp.eq.s32.totalorder %s85, 0
    %s88 = sadd.s32 %s87, 1
    %s89 = scalar_select %p86, %s87, %s88
    %p92 = pneg %p86
    %p93 = scmp.eq.s32.totalorder %s9, 1
    %p94 = por %p92, %p93
    %p95 = scmp.ne.s32.totalorder %s87, %s90
    %p96 = scmp.eq.s32.totalorder %s9, 0
    %p97 = por %p95, %p96
    %p98 = scmp.ne.s32.totalorder %s87, %s90
    %p99 = scmp.eq.s32.totalorder %s14, 1
    %p100 = por %p98, %p99
    %p101 = scmp.ne.s32.totalorder %s90, %s91
    %p102 = scmp.eq.s32.totalorder %s14, 0
    %p103 = por %p101, %p102
    %p104 = scmp.ne.s32.totalorder %s90, %s91
    %p105 = scmp.eq.s32.totalorder %s15, 1
    %p106 = por %p104, %p105
    %p108 = scmp.ne.s32.totalorder %s91, %s107
    %p109 = scmp.eq.s32.totalorder %s15, 0
    %p110 = por %p108, %p109
    %p111 = scmp.le.s32.totalorder 1, %s9
    %p112 = scmp.lt.s32.totalorder %s9, 3
    %p113 = pnand %p111, %p112
    %p114 = pneg %p113
    // Predicated region
    $region9: #{forward.1} parent=5 // pred_check
      _
    $region10: #{forward.1} parent=5 // pred_check_branch
      %116 = sbr.rel (%p113) target = $region12
    $region11: #{forward.1} parent=5 // pred_region
      %s117 = ssub.s32 %s9, 1
      // Predicated region
      $region13: #{forward.1} parent=11 // pred_check
        %p118 = pneg %p56
      $region14: #{forward.1} parent=11 // pred_check_branch
        %120 = sbr.rel (%p118) target = $region16
      $region15: #{forward.1} parent=11 // pred_region
        _
      $region16: #{forward.1} parent=11 // pred_fallthru
        _
      // Predicated region
      $region17: #{forward.1} parent=11 // pred_check
        %p121 = pneg %p77
      $region18: #{forward.1} parent=11 // pred_check_branch
        %123 = sbr.rel (%p121) target = $region20
      $region19: #{forward.1} parent=11 // pred_region
        _
      $region20: #{forward.1} parent=11 // pred_fallthru
        _
    $region12: #{forward.1} parent=5 // pred_fallthru
      _
    %p124 = scmp.lt.s32.totalorder %s9, 2
    // Predicated region
    $region21: #{forward.1} parent=5 // pred_check
      %p125 = pneg %p124
    $region22: #{forward.1} parent=5 // pred_check_branch
      %127 = sbr.rel (%p125) target = $region24
    $region23: #{forward.1} parent=5 // pred_region
      // Predicated region
      $region25: #{forward.1} parent=23 // pred_check
        %p128 = pneg %p29
      $region26: #{forward.1} parent=23 // pred_check_branch
        %130 = sbr.rel (%p128) target = $region28
      $region27: #{forward.1} parent=23 // pred_region
        %s131 = smul.u32 32, %s9
        %p132 = scmp.lt.s32.totalorder %s131, 63
        %s133 = scalar_select %p132, %s131, 63
        %s134 = smul.addr %s133, 8
        %s135 = scalar_lea.vmem %s0, %s134
        %s136 = smul.u32 32, %s9
      $region28: #{forward.1} parent=23 // pred_fallthru
        _
    $region24: #{forward.1} parent=5 // pred_fallthru
      _
    %p137 = scmp.le.s32.totalorder 1, %s9
    %p138 = scmp.lt.s32.totalorder %s9, 3
    %p139 = pnand %p137, %p138
    %p140 = pneg %p139
    // Predicated region
    $region29: #{forward.1} parent=5 // pred_check
      _
    $region30: #{forward.1} parent=5 // pred_check_branch
      %142 = sbr.rel (%p139) target = $region32
    $region31: #{forward.1} parent=5 // pred_region
      %s143 = ssub.s32 %s9, 1
      %s144 = smul.u32 32, %s14
      %p145 = scmp.lt.s32.totalorder %s144, 63
      %s146 = scalar_select %p145, %s144, 63
      %s147 = smul.addr %s146, 8
      %s148 = scalar_lea.vmem %s0, %s147
      %p149 = pneg %p35
      %p150 = pneg %p32
      %p151 = pneg %p56
      %p152 = pneg %p53
      %p153 = pneg %p77
      %p154 = pneg %p74
      %p155 = pneg %p103
      %p156 = pneg %p100
      %s157 = smul.u32 32, %s14
      %p158 = scmp.lt.s32.totalorder %s157, 63
      %s159 = scalar_select %p158, %s157, 63
      %s160 = smul.addr %s159, 8
      %s161 = scalar_lea.vmem %s3, %s160
      %s162 = smul.u32 32, %s14
      %p163 = scmp.lt.s32.totalorder %s162, 63
      %s164 = scalar_select %p163, %s162, 63
      %s165 = smul.addr %s164, 8
      %s166 = scalar_lea.vmem %s0, %s165
      %s167 = smul.u32 32, %s14
      %s168 = smul.u32 32, %s14
      %p169 = scmp.lt.s32.totalorder %s168, 63
      %s170 = scalar_select %p169, %s168, 63
      %s171 = smul.addr %s170, 8
      %s172 = scalar_lea.vmem %s3, %s171
      %s173 = smul.u32 32, %s14
      %v174 = vld [vmem:[%s166] sm:$0xff]
      %v175 = vld [vmem:[%s166 + $0x8] sm:$0xff]
      %v176 = vld [vmem:[%s166 + $0x10] sm:$0xff]
      %v177 = vld [vmem:[%s166 + $0x18] sm:$0xff]
      %v178 = vld [vmem:[%s166 + $0x20] sm:$0xff]
      %v179 = vld [vmem:[%s166 + $0x28] sm:$0xff]
      %v180 = vld [vmem:[%s166 + $0x30] sm:$0xff]
      %v181 = vld [vmem:[%s166 + $0x38] sm:$0xff]
      %v182 = vld [vmem:[%s166 + $0x40] sm:$0xff]
      %v183 = vld [vmem:[%s166 + $0x48] sm:$0xff]
      %v184 = vld [vmem:[%s166 + $0x50] sm:$0xff]
      %v185 = vld [vmem:[%s166 + $0x58] sm:$0xff]
      %v186 = vld [vmem:[%s166 + $0x60] sm:$0xff]
      %v187 = vld [vmem:[%s166 + $0x68] sm:$0xff]
      %v188 = vld [vmem:[%s166 + $0x70] sm:$0xff]
      %v189 = vld [vmem:[%s166 + $0x78] sm:$0xff]
      %v190 = vld [vmem:[%s166 + $0x80] sm:$0xff]
      %v191 = vld [vmem:[%s166 + $0x88] sm:$0xff]
      %v192 = vld [vmem:[%s166 + $0x90] sm:$0xff]
      %v193 = vld [vmem:[%s166 + $0x98] sm:$0xff]
      %v194 = vld [vmem:[%s166 + $0xa0] sm:$0xff]
      %v195 = vld [vmem:[%s166 + $0xa8] sm:$0xff]
      %v196 = vld [vmem:[%s166 + $0xb0] sm:$0xff]
      %v197 = vld [vmem:[%s166 + $0xb8] sm:$0xff]
      %v198 = vld [vmem:[%s166 + $0xc0] sm:$0xff]
      %v199 = vld [vmem:[%s166 + $0xc8] sm:$0xff]
      %v200 = vld [vmem:[%s166 + $0xd0] sm:$0xff]
      %v201 = vld [vmem:[%s166 + $0xd8] sm:$0xff]
      %v202 = vld [vmem:[%s166 + $0xe0] sm:$0xff]
      %v203 = vld [vmem:[%s166 + $0xe8] sm:$0xff]
      %v204 = vld [vmem:[%s166 + $0xf0] sm:$0xff]
      %v205 = vld [vmem:[%s166 + $0xf8] sm:$0xff]
      %v206 = vld [vmem:[%s2] sm:$0x1]
      %v207 = vld [vmem:[%s1] sm:$0xff]
      %v208 = vld [vmem:[%s1 + $0x8] sm:$0xff]
      %v209 = vld [vmem:[%s1 + $0x10] sm:$0xff]
      %v210 = vld [vmem:[%s1 + $0x18] sm:$0xff]
      %v211 = vld [vmem:[%s1 + $0x20] sm:$0xff]
      %v212 = vld [vmem:[%s1 + $0x28] sm:$0xff]
      %v213 = vld [vmem:[%s1 + $0x30] sm:$0xff]
      %v214 = vld [vmem:[%s1 + $0x38] sm:$0xff]
      %v215 = vld [vmem:[%s1 + $0x40] sm:$0xff]
      %v216 = vld [vmem:[%s1 + $0x48] sm:$0xff]
      %v217 = vld [vmem:[%s1 + $0x50] sm:$0xff]
      %v218 = vld [vmem:[%s1 + $0x58] sm:$0xff]
      %v219 = vld [vmem:[%s1 + $0x60] sm:$0xff]
      %v220 = vld [vmem:[%s1 + $0x68] sm:$0xff]
      %v221 = vld [vmem:[%s1 + $0x70] sm:$0xff]
      %v222 = vld [vmem:[%s1 + $0x78] sm:$0xff]
      %v224 = vlaneseq
      %v225 = vshrl.u32 %v224, 7
      %v226 = vsub.s32 0, %v225
      %v227 = vrot.slane %v206, %v226
      %229 = vmatprep.subr.mxu0 0.0
      %230 = vmatpush1.msra.mxu0 %v222
      %231 = vmatprep.subr.mxu0 0.0
      %232 = vmatpush1.msra.mxu0 %v221
      %233 = vmatprep.subr.mxu0 0.0
      %234 = vmatpush1.msra.mxu0 %v220
      %235 = vmatprep.subr.mxu0 0.0
      %236 = vmatpush1.msra.mxu0 %v219
      %237 = vmatprep.subr.mxu0 0.0
      %238 = vmatpush1.msra.mxu0 %v218
      %239 = vmatprep.subr.mxu0 0.0
      %240 = vmatpush1.msra.mxu0 %v217
      %241 = vmatprep.subr.mxu0 0.0
      %242 = vmatpush1.msra.mxu0 %v216
      %243 = vmatprep.subr.mxu0 0.0
      %244 = vmatpush1.msra.mxu0 %v215
      %245 = vmatprep.subr.mxu0 0.0
      %246 = vmatpush1.msra.mxu0 %v214
      %247 = vmatprep.subr.mxu0 0.0
      %248 = vmatpush1.msra.mxu0 %v213
      %249 = vmatprep.subr.mxu0 0.0
      %250 = vmatpush1.msra.mxu0 %v212
      %251 = vmatprep.subr.mxu0 0.0
      %252 = vmatpush1.msra.mxu0 %v211
      %253 = vmatprep.subr.mxu0 0.0
      %254 = vmatpush1.msra.mxu0 %v210
      %255 = vmatprep.subr.mxu0 0.0
      %256 = vmatpush1.msra.mxu0 %v209
      %257 = vmatprep.subr.mxu0 0.0
      %258 = vmatpush1.msra.mxu0 %v208
      %259 = vmatprep.subr.mxu0 0.0
      %260 = vmatpush1.msra.mxu0 %v207
      %261 = vmatprep.subr.mxu0 0.0
      %262 = vmatpush2.msra.mxu0 0.0
      %263 = vmatprep.subr.mxu0 0.0
      %264 = vmatpush2.msra.mxu0 0.0
      %265 = vmatprep.subr.mxu0 0.0
      %266 = vmatpush2.msra.mxu0 0.0
      %267 = vmatprep.subr.mxu0 0.0
      %268 = vmatpush2.msra.mxu0 0.0
      %269 = vmatprep.subr.mxu0 0.0
      %270 = vmatpush2.msra.mxu0 0.0
      %271 = vmatprep.subr.mxu0 0.0
      %272 = vmatpush2.msra.mxu0 0.0
      %273 = vmatprep.subr.mxu0 0.0
      %274 = vmatpush2.msra.mxu0 0.0
      %275 = vmatprep.subr.mxu0 0.0
      %276 = vmatpush2.msra.mxu0 0.0
      %277 = vmatprep.subr.mxu0 0.0
      %278 = vmatpush2.msra.mxu0 0.0
      %279 = vmatprep.subr.mxu0 0.0
      %280 = vmatpush2.msra.mxu0 0.0
      %281 = vmatprep.subr.mxu0 0.0
      %282 = vmatpush2.msra.mxu0 0.0
      %283 = vmatprep.subr.mxu0 0.0
      %284 = vmatpush2.msra.mxu0 0.0
      %285 = vmatprep.subr.mxu0 0.0
      %286 = vmatpush2.msra.mxu0 0.0
      %287 = vmatprep.subr.mxu0 0.0
      %288 = vmatpush2.msra.mxu0 0.0
      %289 = vmatprep.subr.mxu0 0.0
      %290 = vmatpush2.msra.mxu0 0.0
      %291 = vmatprep.subr.mxu0 0.0
      %292 = vmatpush2.msra.mxu0 0.0
      %293 = vmatprep.mubr.f32.mxu0 0.0
      %294 = vmatmul.mubr.f32.gmra.mxu0 %v174
      %v295 = vpop.f32.mrf.mxu0
      %v296 = vadd.f32 %v227, %v295
      %v297 = vpop.f32.mrf.mxu0
      %298 = vmatprep.mubr.f32.mxu0 0.0
      %299 = vmatmul.mubr.f32.gmra.mxu0 %v175
      %v300 = vpop.f32.mrf.mxu0
      %v301 = vadd.f32 %v227, %v300
      %v302 = vpop.f32.mrf.mxu0
      %303 = vmatprep.mubr.f32.mxu0 0.0
      %304 = vmatmul.mubr.f32.gmra.mxu0 %v176
      %v305 = vpop.f32.mrf.mxu0
      %v306 = vadd.f32 %v227, %v305
      %v307 = vpop.f32.mrf.mxu0
      %308 = vmatprep.mubr.f32.mxu0 0.0
      %309 = vmatmul.mubr.f32.gmra.mxu0 %v177
      %v310 = vpop.f32.mrf.mxu0
      %v311 = vadd.f32 %v227, %v310
      %v312 = vpop.f32.mrf.mxu0
      %313 = vmatprep.mubr.f32.mxu0 0.0
      %314 = vmatmul.mubr.f32.gmra.mxu0 %v178
      %v315 = vpop.f32.mrf.mxu0
      %v316 = vadd.f32 %v227, %v315
      %v317 = vpop.f32.mrf.mxu0
      %318 = vmatprep.mubr.f32.mxu0 0.0
      %319 = vmatmul.mubr.f32.gmra.mxu0 %v179
      %v320 = vpop.f32.mrf.mxu0
      %v321 = vadd.f32 %v227, %v320
      %v322 = vpop.f32.mrf.mxu0
      %323 = vmatprep.mubr.f32.mxu0 0.0
      %324 = vmatmul.mubr.f32.gmra.mxu0 %v180
      %v325 = vpop.f32.mrf.mxu0
      %v326 = vadd.f32 %v227, %v325
      %v327 = vpop.f32.mrf.mxu0
      %328 = vmatprep.mubr.f32.mxu0 0.0
      %329 = vmatmul.mubr.f32.gmra.mxu0 %v181
      %v330 = vpop.f32.mrf.mxu0
      %v331 = vadd.f32 %v227, %v330
      %v332 = vpop.f32.mrf.mxu0
      %333 = vmatprep.mubr.f32.mxu0 0.0
      %334 = vmatmul.mubr.f32.gmra.mxu0 %v182
      %v335 = vpop.f32.mrf.mxu0
      %v336 = vadd.f32 %v227, %v335
      %v337 = vpop.f32.mrf.mxu0
      %338 = vmatprep.mubr.f32.mxu0 0.0
      %339 = vmatmul.mubr.f32.gmra.mxu0 %v183
      %v340 = vpop.f32.mrf.mxu0
      %v341 = vadd.f32 %v227, %v340
      %v342 = vpop.f32.mrf.mxu0
      %343 = vmatprep.mubr.f32.mxu0 0.0
      %344 = vmatmul.mubr.f32.gmra.mxu0 %v184
      %v345 = vpop.f32.mrf.mxu0
      %v346 = vadd.f32 %v227, %v345
      %v347 = vpop.f32.mrf.mxu0
      %348 = vmatprep.mubr.f32.mxu0 0.0
      %349 = vmatmul.mubr.f32.gmra.mxu0 %v185
      %v350 = vpop.f32.mrf.mxu0
      %v351 = vadd.f32 %v227, %v350
      %v352 = vpop.f32.mrf.mxu0
      %353 = vmatprep.mubr.f32.mxu0 0.0
      %354 = vmatmul.mubr.f32.gmra.mxu0 %v186
      %v355 = vpop.f32.mrf.mxu0
      %v356 = vadd.f32 %v227, %v355
      %v357 = vpop.f32.mrf.mxu0
      %358 = vmatprep.mubr.f32.mxu0 0.0
      %359 = vmatmul.mubr.f32.gmra.mxu0 %v187
      %v360 = vpop.f32.mrf.mxu0
      %v361 = vadd.f32 %v227, %v360
      %v362 = vpop.f32.mrf.mxu0
      %363 = vmatprep.mubr.f32.mxu0 0.0
      %364 = vmatmul.mubr.f32.gmra.mxu0 %v188
      %v365 = vpop.f32.mrf.mxu0
      %v366 = vadd.f32 %v227, %v365
      %v367 = vpop.f32.mrf.mxu0
      %368 = vmatprep.mubr.f32.mxu0 0.0
      %369 = vmatmul.mubr.f32.gmra.mxu0 %v189
      %v370 = vpop.f32.mrf.mxu0
      %v371 = vadd.f32 %v227, %v370
      %v372 = vpop.f32.mrf.mxu0
      %373 = vmatprep.mubr.f32.mxu0 0.0
      %374 = vmatmul.mubr.f32.gmra.mxu0 %v190
      %v375 = vpop.f32.mrf.mxu0
      %v376 = vadd.f32 %v227, %v375
      %v377 = vpop.f32.mrf.mxu0
      %378 = vmatprep.mubr.f32.mxu0 0.0
      %379 = vmatmul.mubr.f32.gmra.mxu0 %v191
      %v380 = vpop.f32.mrf.mxu0
      %v381 = vadd.f32 %v227, %v380
      %v382 = vpop.f32.mrf.mxu0
      %383 = vmatprep.mubr.f32.mxu0 0.0
      %384 = vmatmul.mubr.f32.gmra.mxu0 %v192
      %v385 = vpop.f32.mrf.mxu0
      %v386 = vadd.f32 %v227, %v385
      %v387 = vpop.f32.mrf.mxu0
      %388 = vmatprep.mubr.f32.mxu0 0.0
      %389 = vmatmul.mubr.f32.gmra.mxu0 %v193
      %v390 = vpop.f32.mrf.mxu0
      %v391 = vadd.f32 %v227, %v390
      %v392 = vpop.f32.mrf.mxu0
      %393 = vmatprep.mubr.f32.mxu0 0.0
      %394 = vmatmul.mubr.f32.gmra.mxu0 %v194
      %v395 = vpop.f32.mrf.mxu0
      %v396 = vadd.f32 %v227, %v395
      %v397 = vpop.f32.mrf.mxu0
      %398 = vmatprep.mubr.f32.mxu0 0.0
      %399 = vmatmul.mubr.f32.gmra.mxu0 %v195
      %v400 = vpop.f32.mrf.mxu0
      %v401 = vadd.f32 %v227, %v400
      %v402 = vpop.f32.mrf.mxu0
      %403 = vmatprep.mubr.f32.mxu0 0.0
      %404 = vmatmul.mubr.f32.gmra.mxu0 %v196
      %v405 = vpop.f32.mrf.mxu0
      %v406 = vadd.f32 %v227, %v405
      %v407 = vpop.f32.mrf.mxu0
      %408 = vmatprep.mubr.f32.mxu0 0.0
      %409 = vmatmul.mubr.f32.gmra.mxu0 %v197
      %v410 = vpop.f32.mrf.mxu0
      %v411 = vadd.f32 %v227, %v410
      %v412 = vpop.f32.mrf.mxu0
      %413 = vmatprep.mubr.f32.mxu0 0.0
      %414 = vmatmul.mubr.f32.gmra.mxu0 %v198
      %v415 = vpop.f32.mrf.mxu0
      %v416 = vadd.f32 %v227, %v415
      %v417 = vpop.f32.mrf.mxu0
      %418 = vmatprep.mubr.f32.mxu0 0.0
      %419 = vmatmul.mubr.f32.gmra.mxu0 %v199
      %v420 = vpop.f32.mrf.mxu0
      %v421 = vadd.f32 %v227, %v420
      %v422 = vpop.f32.mrf.mxu0
      %423 = vmatprep.mubr.f32.mxu0 0.0
      %424 = vmatmul.mubr.f32.gmra.mxu0 %v200
      %v425 = vpop.f32.mrf.mxu0
      %v426 = vadd.f32 %v227, %v425
      %v427 = vpop.f32.mrf.mxu0
      %428 = vmatprep.mubr.f32.mxu0 0.0
      %429 = vmatmul.mubr.f32.gmra.mxu0 %v201
      %v430 = vpop.f32.mrf.mxu0
      %v431 = vadd.f32 %v227, %v430
      %v432 = vpop.f32.mrf.mxu0
      %433 = vmatprep.mubr.f32.mxu0 0.0
      %434 = vmatmul.mubr.f32.gmra.mxu0 %v202
      %v435 = vpop.f32.mrf.mxu0
      %v436 = vadd.f32 %v227, %v435
      %v437 = vpop.f32.mrf.mxu0
      %438 = vmatprep.mubr.f32.mxu0 0.0
      %439 = vmatmul.mubr.f32.gmra.mxu0 %v203
      %v440 = vpop.f32.mrf.mxu0
      %v441 = vadd.f32 %v227, %v440
      %v442 = vpop.f32.mrf.mxu0
      %443 = vmatprep.mubr.f32.mxu0 0.0
      %444 = vmatmul.mubr.f32.gmra.mxu0 %v204
      %v445 = vpop.f32.mrf.mxu0
      %v446 = vadd.f32 %v227, %v445
      %v447 = vpop.f32.mrf.mxu0
      %448 = vmatprep.mubr.f32.mxu0 0.0
      %449 = vmatmul.mubr.f32.gmra.mxu0 %v205
      %v450 = vpop.f32.mrf.mxu0
      %v451 = vadd.f32 %v227, %v450
      %v452 = vpop.f32.mrf.mxu0
      %453 = vdwg.mxu0
      %v454 = vmin.f32 %v296, 0.2
      %v455 = vmin.f32 %v301, 0.2
      %v456 = vmin.f32 %v306, 0.2
      %v457 = vmin.f32 %v311, 0.2
      %v458 = vmin.f32 %v316, 0.2
      %v459 = vmin.f32 %v321, 0.2
      %v460 = vmin.f32 %v326, 0.2
      %v461 = vmin.f32 %v331, 0.2
      %v462 = vmin.f32 %v336, 0.2
      %v463 = vmin.f32 %v341, 0.2
      %v464 = vmin.f32 %v346, 0.2
      %v465 = vmin.f32 %v351, 0.2
      %v466 = vmin.f32 %v356, 0.2
      %v467 = vmin.f32 %v361, 0.2
      %v468 = vmin.f32 %v366, 0.2
      %v469 = vmin.f32 %v371, 0.2
      %v470 = vmin.f32 %v376, 0.2
      %v471 = vmin.f32 %v381, 0.2
      %v472 = vmin.f32 %v386, 0.2
      %v473 = vmin.f32 %v391, 0.2
      %v474 = vmin.f32 %v396, 0.2
      %v475 = vmin.f32 %v401, 0.2
      %v476 = vmin.f32 %v406, 0.2
      %v477 = vmin.f32 %v411, 0.2
      %v478 = vmin.f32 %v416, 0.2
      %v479 = vmin.f32 %v421, 0.2
      %v480 = vmin.f32 %v426, 0.2
      %v481 = vmin.f32 %v431, 0.2
      %v482 = vmin.f32 %v436, 0.2
      %v483 = vmin.f32 %v441, 0.2
      %v484 = vmin.f32 %v446, 0.2
      %v485 = vmin.f32 %v451, 0.2
      %v486 = vmul.f32 %v454, 100.0
      %v487 = vmul.f32 %v455, 100.0
      %v488 = vmul.f32 %v456, 100.0
      %v489 = vmul.f32 %v457, 100.0
      %v490 = vmul.f32 %v458, 100.0
      %v491 = vmul.f32 %v459, 100.0
      %v492 = vmul.f32 %v460, 100.0
      %v493 = vmul.f32 %v461, 100.0
      %v494 = vmul.f32 %v462, 100.0
      %v495 = vmul.f32 %v463, 100.0
      %v496 = vmul.f32 %v464, 100.0
      %v497 = vmul.f32 %v465, 100.0
      %v498 = vmul.f32 %v466, 100.0
      %v499 = vmul.f32 %v467, 100.0
      %v500 = vmul.f32 %v468, 100.0
      %v501 = vmul.f32 %v469, 100.0
      %v502 = vmul.f32 %v470, 100.0
      %v503 = vmul.f32 %v471, 100.0
      %v504 = vmul.f32 %v472, 100.0
      %v505 = vmul.f32 %v473, 100.0
      %v506 = vmul.f32 %v474, 100.0
      %v507 = vmul.f32 %v475, 100.0
      %v508 = vmul.f32 %v476, 100.0
      %v509 = vmul.f32 %v477, 100.0
      %v510 = vmul.f32 %v478, 100.0
      %v511 = vmul.f32 %v479, 100.0
      %v512 = vmul.f32 %v480, 100.0
      %v513 = vmul.f32 %v481, 100.0
      %v514 = vmul.f32 %v482, 100.0
      %v515 = vmul.f32 %v483, 100.0
      %v516 = vmul.f32 %v484, 100.0
      %v517 = vmul.f32 %v485, 100.0
      %v518 = vmul.f32 %v486, 1.442695
      %v519 = vpow.pop %v518
      %v520 = vmul.f32 %v487, 1.442695
      %v521 = vpow.pop %v520
      %v522 = vmul.f32 %v488, 1.442695
      %v523 = vpow.pop %v522
      %v524 = vmul.f32 %v489, 1.442695
      %v525 = vpow.pop %v524
      %v526 = vmul.f32 %v490, 1.442695
      %v527 = vpow.pop %v526
      %v528 = vmul.f32 %v491, 1.442695
      %v529 = vpow.pop %v528
      %v530 = vmul.f32 %v492, 1.442695
      %v531 = vpow.pop %v530
      %v532 = vmul.f32 %v493, 1.442695
      %v533 = vpow.pop %v532
      %v534 = vmul.f32 %v494, 1.442695
      %v535 = vpow.pop %v534
      %v536 = vmul.f32 %v495, 1.442695
      %v537 = vpow.pop %v536
      %v538 = vmul.f32 %v496, 1.442695
      %v539 = vpow.pop %v538
      %v540 = vmul.f32 %v497, 1.442695
      %v541 = vpow.pop %v540
      %v542 = vmul.f32 %v498, 1.442695
      %v543 = vpow.pop %v542
      %v544 = vmul.f32 %v499, 1.442695
      %v545 = vpow.pop %v544
      %v546 = vmul.f32 %v500, 1.442695
      %v547 = vpow.pop %v546
      %v548 = vmul.f32 %v501, 1.442695
      %v549 = vpow.pop %v548
      %v550 = vmul.f32 %v502, 1.442695
      %v551 = vpow.pop %v550
      %v552 = vmul.f32 %v503, 1.442695
      %v553 = vpow.pop %v552
      %v554 = vmul.f32 %v504, 1.442695
      %v555 = vpow.pop %v554
      %v556 = vmul.f32 %v505, 1.442695
      %v557 = vpow.pop %v556
      %v558 = vmul.f32 %v506, 1.442695
      %v559 = vpow.pop %v558
      %v560 = vmul.f32 %v507, 1.442695
      %v561 = vpow.pop %v560
      %v562 = vmul.f32 %v508, 1.442695
      %v563 = vpow.pop %v562
      %v564 = vmul.f32 %v509, 1.442695
      %v565 = vpow.pop %v564
      %v566 = vmul.f32 %v510, 1.442695
      %v567 = vpow.pop %v566
      %v568 = vmul.f32 %v511, 1.442695
      %v569 = vpow.pop %v568
      %v570 = vmul.f32 %v512, 1.442695
      %v571 = vpow.pop %v570
      %v572 = vmul.f32 %v513, 1.442695
      %v573 = vpow.pop %v572
      %v574 = vmul.f32 %v514, 1.442695
      %v575 = vpow.pop %v574
      %v576 = vmul.f32 %v515, 1.442695
      %v577 = vpow.pop %v576
      %v578 = vmul.f32 %v516, 1.442695
      %v579 = vpow.pop %v578
      %v580 = vmul.f32 %v517, 1.442695
      %v581 = vpow.pop %v580
      %v582 = vadd.f32 %v519, 1.0
      %v583 = vlog2.pop %v582
      %v584 = vmul.f32 %v583, 0.6931472
      %v585 = vmul.f32 -0.5, %v519
      %v586 = vadd.f32 %v585, 1.0
      %v587 = vmul.f32 %v586, %v519
      %v588 = vand.u32 2147483647, %v519
      %vm589 = vcmp.lt.f32.partialorder %v588, 0.0004427343
      %v590 = vsel %vm589, %v587, %v584
      %v591 = vadd.f32 %v521, 1.0
      %v592 = vlog2.pop %v591
      %v593 = vmul.f32 %v592, 0.6931472
      %v594 = vmul.f32 -0.5, %v521
      %v595 = vadd.f32 %v594, 1.0
      %v596 = vmul.f32 %v595, %v521
      %v597 = vand.u32 2147483647, %v521
      %vm598 = vcmp.lt.f32.partialorder %v597, 0.0004427343
      %v599 = vsel %vm598, %v596, %v593
      %v600 = vadd.f32 %v523, 1.0
      %v601 = vlog2.pop %v600
      %v602 = vmul.f32 %v601, 0.6931472
      %v603 = vmul.f32 -0.5, %v523
      %v604 = vadd.f32 %v603, 1.0
      %v605 = vmul.f32 %v604, %v523
      %v606 = vand.u32 2147483647, %v523
      %vm607 = vcmp.lt.f32.partialorder %v606, 0.0004427343
      %v608 = vsel %vm607, %v605, %v602
      %v609 = vadd.f32 %v525, 1.0
      %v610 = vlog2.pop %v609
      %v611 = vmul.f32 %v610, 0.6931472
      %v612 = vmul.f32 -0.5, %v525
      %v613 = vadd.f32 %v612, 1.0
      %v614 = vmul.f32 %v613, %v525
      %v615 = vand.u32 2147483647, %v525
      %vm616 = vcmp.lt.f32.partialorder %v615, 0.0004427343
      %v617 = vsel %vm616, %v614, %v611
      %v618 = vadd.f32 %v527, 1.0
      %v619 = vlog2.pop %v618
      %v620 = vmul.f32 %v619, 0.6931472
      %v621 = vmul.f32 -0.5, %v527
      %v622 = vadd.f32 %v621, 1.0
      %v623 = vmul.f32 %v622, %v527
      %v624 = vand.u32 2147483647, %v527
      %vm625 = vcmp.lt.f32.partialorder %v624, 0.0004427343
      %v626 = vsel %vm625, %v623, %v620
      %v627 = vadd.f32 %v529, 1.0
      %v628 = vlog2.pop %v627
      %v629 = vmul.f32 %v628, 0.6931472
      %v630 = vmul.f32 -0.5, %v529
      %v631 = vadd.f32 %v630, 1.0
      %v632 = vmul.f32 %v631, %v529
      %v633 = vand.u32 2147483647, %v529
      %vm634 = vcmp.lt.f32.partialorder %v633, 0.0004427343
      %v635 = vsel %vm634, %v632, %v629
      %v636 = vadd.f32 %v531, 1.0
      %v637 = vlog2.pop %v636
      %v638 = vmul.f32 %v637, 0.6931472
      %v639 = vmul.f32 -0.5, %v531
      %v640 = vadd.f32 %v639, 1.0
      %v641 = vmul.f32 %v640, %v531
      %v642 = vand.u32 2147483647, %v531
      %vm643 = vcmp.lt.f32.partialorder %v642, 0.0004427343
      %v644 = vsel %vm643, %v641, %v638
      %v645 = vadd.f32 %v533, 1.0
      %v646 = vlog2.pop %v645
      %v647 = vmul.f32 %v646, 0.6931472
      %v648 = vmul.f32 -0.5, %v533
      %v649 = vadd.f32 %v648, 1.0
      %v650 = vmul.f32 %v649, %v533
      %v651 = vand.u32 2147483647, %v533
      %vm652 = vcmp.lt.f32.partialorder %v651, 0.0004427343
      %v653 = vsel %vm652, %v650, %v647
      %v654 = vadd.f32 %v535, 1.0
      %v655 = vlog2.pop %v654
      %v656 = vmul.f32 %v655, 0.6931472
      %v657 = vmul.f32 -0.5, %v535
      %v658 = vadd.f32 %v657, 1.0
      %v659 = vmul.f32 %v658, %v535
      %v660 = vand.u32 2147483647, %v535
      %vm661 = vcmp.lt.f32.partialorder %v660, 0.0004427343
      %v662 = vsel %vm661, %v659, %v656
      %v663 = vadd.f32 %v537, 1.0
      %v664 = vlog2.pop %v663
      %v665 = vmul.f32 %v664, 0.6931472
      %v666 = vmul.f32 -0.5, %v537
      %v667 = vadd.f32 %v666, 1.0
      %v668 = vmul.f32 %v667, %v537
      %v669 = vand.u32 2147483647, %v537
      %vm670 = vcmp.lt.f32.partialorder %v669, 0.0004427343
      %v671 = vsel %vm670, %v668, %v665
      %v672 = vadd.f32 %v539, 1.0
      %v673 = vlog2.pop %v672
      %v674 = vmul.f32 %v673, 0.6931472
      %v675 = vmul.f32 -0.5, %v539
      %v676 = vadd.f32 %v675, 1.0
      %v677 = vmul.f32 %v676, %v539
      %v678 = vand.u32 2147483647, %v539
      %vm679 = vcmp.lt.f32.partialorder %v678, 0.0004427343
      %v680 = vsel %vm679, %v677, %v674
      %v681 = vadd.f32 %v541, 1.0
      %v682 = vlog2.pop %v681
      %v683 = vmul.f32 %v682, 0.6931472
      %v684 = vmul.f32 -0.5, %v541
      %v685 = vadd.f32 %v684, 1.0
      %v686 = vmul.f32 %v685, %v541
      %v687 = vand.u32 2147483647, %v541
      %vm688 = vcmp.lt.f32.partialorder %v687, 0.0004427343
      %v689 = vsel %vm688, %v686, %v683
      %v690 = vadd.f32 %v543, 1.0
      %v691 = vlog2.pop %v690
      %v692 = vmul.f32 %v691, 0.6931472
      %v693 = vmul.f32 -0.5, %v543
      %v694 = vadd.f32 %v693, 1.0
      %v695 = vmul.f32 %v694, %v543
      %v696 = vand.u32 2147483647, %v543
      %vm697 = vcmp.lt.f32.partialorder %v696, 0.0004427343
      %v698 = vsel %vm697, %v695, %v692
      %v699 = vadd.f32 %v545, 1.0
      %v700 = vlog2.pop %v699
      %v701 = vmul.f32 %v700, 0.6931472
      %v702 = vmul.f32 -0.5, %v545
      %v703 = vadd.f32 %v702, 1.0
      %v704 = vmul.f32 %v703, %v545
      %v705 = vand.u32 2147483647, %v545
      %vm706 = vcmp.lt.f32.partialorder %v705, 0.0004427343
      %v707 = vsel %vm706, %v704, %v701
      %v708 = vadd.f32 %v547, 1.0
      %v709 = vlog2.pop %v708
      %v710 = vmul.f32 %v709, 0.6931472
      %v711 = vmul.f32 -0.5, %v547
      %v712 = vadd.f32 %v711, 1.0
      %v713 = vmul.f32 %v712, %v547
      %v714 = vand.u32 2147483647, %v547
      %vm715 = vcmp.lt.f32.partialorder %v714, 0.0004427343
      %v716 = vsel %vm715, %v713, %v710
      %v717 = vadd.f32 %v549, 1.0
      %v718 = vlog2.pop %v717
      %v719 = vmul.f32 %v718, 0.6931472
      %v720 = vmul.f32 -0.5, %v549
      %v721 = vadd.f32 %v720, 1.0
      %v722 = vmul.f32 %v721, %v549
      %v723 = vand.u32 2147483647, %v549
      %vm724 = vcmp.lt.f32.partialorder %v723, 0.0004427343
      %v725 = vsel %vm724, %v722, %v719
      %v726 = vadd.f32 %v551, 1.0
      %v727 = vlog2.pop %v726
      %v728 = vmul.f32 %v727, 0.6931472
      %v729 = vmul.f32 -0.5, %v551
      %v730 = vadd.f32 %v729, 1.0
      %v731 = vmul.f32 %v730, %v551
      %v732 = vand.u32 2147483647, %v551
      %vm733 = vcmp.lt.f32.partialorder %v732, 0.0004427343
      %v734 = vsel %vm733, %v731, %v728
      %v735 = vadd.f32 %v553, 1.0
      %v736 = vlog2.pop %v735
      %v737 = vmul.f32 %v736, 0.6931472
      %v738 = vmul.f32 -0.5, %v553
      %v739 = vadd.f32 %v738, 1.0
      %v740 = vmul.f32 %v739, %v553
      %v741 = vand.u32 2147483647, %v553
      %vm742 = vcmp.lt.f32.partialorder %v741, 0.0004427343
      %v743 = vsel %vm742, %v740, %v737
      %v744 = vadd.f32 %v555, 1.0
      %v745 = vlog2.pop %v744
      %v746 = vmul.f32 %v745, 0.6931472
      %v747 = vmul.f32 -0.5, %v555
      %v748 = vadd.f32 %v747, 1.0
      %v749 = vmul.f32 %v748, %v555
      %v750 = vand.u32 2147483647, %v555
      %vm751 = vcmp.lt.f32.partialorder %v750, 0.0004427343
      %v752 = vsel %vm751, %v749, %v746
      %v753 = vadd.f32 %v557, 1.0
      %v754 = vlog2.pop %v753
      %v755 = vmul.f32 %v754, 0.6931472
      %v756 = vmul.f32 -0.5, %v557
      %v757 = vadd.f32 %v756, 1.0
      %v758 = vmul.f32 %v757, %v557
      %v759 = vand.u32 2147483647, %v557
      %vm760 = vcmp.lt.f32.partialorder %v759, 0.0004427343
      %v761 = vsel %vm760, %v758, %v755
      %v762 = vadd.f32 %v559, 1.0
      %v763 = vlog2.pop %v762
      %v764 = vmul.f32 %v763, 0.6931472
      %v765 = vmul.f32 -0.5, %v559
      %v766 = vadd.f32 %v765, 1.0
      %v767 = vmul.f32 %v766, %v559
      %v768 = vand.u32 2147483647, %v559
      %vm769 = vcmp.lt.f32.partialorder %v768, 0.0004427343
      %v770 = vsel %vm769, %v767, %v764
      %v771 = vadd.f32 %v561, 1.0
      %v772 = vlog2.pop %v771
      %v773 = vmul.f32 %v772, 0.6931472
      %v774 = vmul.f32 -0.5, %v561
      %v775 = vadd.f32 %v774, 1.0
      %v776 = vmul.f32 %v775, %v561
      %v777 = vand.u32 2147483647, %v561
      %vm778 = vcmp.lt.f32.partialorder %v777, 0.0004427343
      %v779 = vsel %vm778, %v776, %v773
      %v780 = vadd.f32 %v563, 1.0
      %v781 = vlog2.pop %v780
      %v782 = vmul.f32 %v781, 0.6931472
      %v783 = vmul.f32 -0.5, %v563
      %v784 = vadd.f32 %v783, 1.0
      %v785 = vmul.f32 %v784, %v563
      %v786 = vand.u32 2147483647, %v563
      %vm787 = vcmp.lt.f32.partialorder %v786, 0.0004427343
      %v788 = vsel %vm787, %v785, %v782
      %v789 = vadd.f32 %v565, 1.0
      %v790 = vlog2.pop %v789
      %v791 = vmul.f32 %v790, 0.6931472
      %v792 = vmul.f32 -0.5, %v565
      %v793 = vadd.f32 %v792, 1.0
      %v794 = vmul.f32 %v793, %v565
      %v795 = vand.u32 2147483647, %v565
      %vm796 = vcmp.lt.f32.partialorder %v795, 0.0004427343
      %v797 = vsel %vm796, %v794, %v791
      %v798 = vadd.f32 %v567, 1.0
      %v799 = vlog2.pop %v798
      %v800 = vmul.f32 %v799, 0.6931472
      %v801 = vmul.f32 -0.5, %v567
      %v802 = vadd.f32 %v801, 1.0
      %v803 = vmul.f32 %v802, %v567
      %v804 = vand.u32 2147483647, %v567
      %vm805 = vcmp.lt.f32.partialorder %v804, 0.0004427343
      %v806 = vsel %vm805, %v803, %v800
      %v807 = vadd.f32 %v569, 1.0
      %v808 = vlog2.pop %v807
      %v809 = vmul.f32 %v808, 0.6931472
      %v810 = vmul.f32 -0.5, %v569
      %v811 = vadd.f32 %v810, 1.0
      %v812 = vmul.f32 %v811, %v569
      %v813 = vand.u32 2147483647, %v569
      %vm814 = vcmp.lt.f32.partialorder %v813, 0.0004427343
      %v815 = vsel %vm814, %v812, %v809
      %v816 = vadd.f32 %v571, 1.0
      %v817 = vlog2.pop %v816
      %v818 = vmul.f32 %v817, 0.6931472
      %v819 = vmul.f32 -0.5, %v571
      %v820 = vadd.f32 %v819, 1.0
      %v821 = vmul.f32 %v820, %v571
      %v822 = vand.u32 2147483647, %v571
      %vm823 = vcmp.lt.f32.partialorder %v822, 0.0004427343
      %v824 = vsel %vm823, %v821, %v818
      %v825 = vadd.f32 %v573, 1.0
      %v826 = vlog2.pop %v825
      %v827 = vmul.f32 %v826, 0.6931472
      %v828 = vmul.f32 -0.5, %v573
      %v829 = vadd.f32 %v828, 1.0
      %v830 = vmul.f32 %v829, %v573
      %v831 = vand.u32 2147483647, %v573
      %vm832 = vcmp.lt.f32.partialorder %v831, 0.0004427343
      %v833 = vsel %vm832, %v830, %v827
      %v834 = vadd.f32 %v575, 1.0
      %v835 = vlog2.pop %v834
      %v836 = vmul.f32 %v835, 0.6931472
      %v837 = vmul.f32 -0.5, %v575
      %v838 = vadd.f32 %v837, 1.0
      %v839 = vmul.f32 %v838, %v575
      %v840 = vand.u32 2147483647, %v575
      %vm841 = vcmp.lt.f32.partialorder %v840, 0.0004427343
      %v842 = vsel %vm841, %v839, %v836
      %v843 = vadd.f32 %v577, 1.0
      %v844 = vlog2.pop %v843
      %v845 = vmul.f32 %v844, 0.6931472
      %v846 = vmul.f32 -0.5, %v577
      %v847 = vadd.f32 %v846, 1.0
      %v848 = vmul.f32 %v847, %v577
      %v849 = vand.u32 2147483647, %v577
      %vm850 = vcmp.lt.f32.partialorder %v849, 0.0004427343
      %v851 = vsel %vm850, %v848, %v845
      %v852 = vadd.f32 %v579, 1.0
      %v853 = vlog2.pop %v852
      %v854 = vmul.f32 %v853, 0.6931472
      %v855 = vmul.f32 -0.5, %v579
      %v856 = vadd.f32 %v855, 1.0
      %v857 = vmul.f32 %v856, %v579
      %v858 = vand.u32 2147483647, %v579
      %vm859 = vcmp.lt.f32.partialorder %v858, 0.0004427343
      %v860 = vsel %vm859, %v857, %v854
      %v861 = vadd.f32 %v581, 1.0
      %v862 = vlog2.pop %v861
      %v863 = vmul.f32 %v862, 0.6931472
      %v864 = vmul.f32 -0.5, %v581
      %v865 = vadd.f32 %v864, 1.0
      %v866 = vmul.f32 %v865, %v581
      %v867 = vand.u32 2147483647, %v581
      %vm868 = vcmp.lt.f32.partialorder %v867, 0.0004427343
      %v869 = vsel %vm868, %v866, %v863
      %v870 = vmul.f32 %v590, 0.01
      %v871 = vmul.f32 %v599, 0.01
      %v872 = vmul.f32 %v608, 0.01
      %v873 = vmul.f32 %v617, 0.01
      %v874 = vmul.f32 %v626, 0.01
      %v875 = vmul.f32 %v635, 0.01
      %v876 = vmul.f32 %v644, 0.01
      %v877 = vmul.f32 %v653, 0.01
      %v878 = vmul.f32 %v662, 0.01
      %v879 = vmul.f32 %v671, 0.01
      %v880 = vmul.f32 %v680, 0.01
      %v881 = vmul.f32 %v689, 0.01
      %v882 = vmul.f32 %v698, 0.01
      %v883 = vmul.f32 %v707, 0.01
      %v884 = vmul.f32 %v716, 0.01
      %v885 = vmul.f32 %v725, 0.01
      %v886 = vmul.f32 %v734, 0.01
      %v887 = vmul.f32 %v743, 0.01
      %v888 = vmul.f32 %v752, 0.01
      %v889 = vmul.f32 %v761, 0.01
      %v890 = vmul.f32 %v770, 0.01
      %v891 = vmul.f32 %v779, 0.01
      %v892 = vmul.f32 %v788, 0.01
      %v893 = vmul.f32 %v797, 0.01
      %v894 = vmul.f32 %v806, 0.01
      %v895 = vmul.f32 %v815, 0.01
      %v896 = vmul.f32 %v824, 0.01
      %v897 = vmul.f32 %v833, 0.01
      %v898 = vmul.f32 %v842, 0.01
      %v899 = vmul.f32 %v851, 0.01
      %v900 = vmul.f32 %v860, 0.01
      %v901 = vmul.f32 %v869, 0.01
      %vm902 = vcmp.gt.f32.partialorder %v296, 0.2
      %vm903 = vcmp.gt.f32.partialorder %v301, 0.2
      %vm904 = vcmp.gt.f32.partialorder %v306, 0.2
      %vm905 = vcmp.gt.f32.partialorder %v311, 0.2
      %vm906 = vcmp.gt.f32.partialorder %v316, 0.2
      %vm907 = vcmp.gt.f32.partialorder %v321, 0.2
      %vm908 = vcmp.gt.f32.partialorder %v326, 0.2
      %vm909 = vcmp.gt.f32.partialorder %v331, 0.2
      %vm910 = vcmp.gt.f32.partialorder %v336, 0.2
      %vm911 = vcmp.gt.f32.partialorder %v341, 0.2
      %vm912 = vcmp.gt.f32.partialorder %v346, 0.2
      %vm913 = vcmp.gt.f32.partialorder %v351, 0.2
      %vm914 = vcmp.gt.f32.partialorder %v356, 0.2
      %vm915 = vcmp.gt.f32.partialorder %v361, 0.2
      %vm916 = vcmp.gt.f32.partialorder %v366, 0.2
      %vm917 = vcmp.gt.f32.partialorder %v371, 0.2
      %vm918 = vcmp.gt.f32.partialorder %v376, 0.2
      %vm919 = vcmp.gt.f32.partialorder %v381, 0.2
      %vm920 = vcmp.gt.f32.partialorder %v386, 0.2
      %vm921 = vcmp.gt.f32.partialorder %v391, 0.2
      %vm922 = vcmp.gt.f32.partialorder %v396, 0.2
      %vm923 = vcmp.gt.f32.partialorder %v401, 0.2
      %vm924 = vcmp.gt.f32.partialorder %v406, 0.2
      %vm925 = vcmp.gt.f32.partialorder %v411, 0.2
      %vm926 = vcmp.gt.f32.partialorder %v416, 0.2
      %vm927 = vcmp.gt.f32.partialorder %v421, 0.2
      %vm928 = vcmp.gt.f32.partialorder %v426, 0.2
      %vm929 = vcmp.gt.f32.partialorder %v431, 0.2
      %vm930 = vcmp.gt.f32.partialorder %v436, 0.2
      %vm931 = vcmp.gt.f32.partialorder %v441, 0.2
      %vm932 = vcmp.gt.f32.partialorder %v446, 0.2
      %vm933 = vcmp.gt.f32.partialorder %v451, 0.2
      %v934 = vsel %vm902, %v296, %v870
      %v935 = vsel %vm903, %v301, %v871
      %v936 = vsel %vm904, %v306, %v872
      %v937 = vsel %vm905, %v311, %v873
      %v938 = vsel %vm906, %v316, %v874
      %v939 = vsel %vm907, %v321, %v875
      %v940 = vsel %vm908, %v326, %v876
      %v941 = vsel %vm909, %v331, %v877
      %v942 = vsel %vm910, %v336, %v878
      %v943 = vsel %vm911, %v341, %v879
      %v944 = vsel %vm912, %v346, %v880
      %v945 = vsel %vm913, %v351, %v881
      %v946 = vsel %vm914, %v356, %v882
      %v947 = vsel %vm915, %v361, %v883
      %v948 = vsel %vm916, %v366, %v884
      %v949 = vsel %vm917, %v371, %v885
      %v950 = vsel %vm918, %v376, %v886
      %v951 = vsel %vm919, %v381, %v887
      %v952 = vsel %vm920, %v386, %v888
      %v953 = vsel %vm921, %v391, %v889
      %v954 = vsel %vm922, %v396, %v890
      %v955 = vsel %vm923, %v401, %v891
      %v956 = vsel %vm924, %v406, %v892
      %v957 = vsel %vm925, %v411, %v893
      %v958 = vsel %vm926, %v416, %v894
      %v959 = vsel %vm927, %v421, %v895
      %v960 = vsel %vm928, %v426, %v896
      %v961 = vsel %vm929, %v431, %v897
      %v962 = vsel %vm930, %v436, %v898
      %v963 = vsel %vm931, %v441, %v899
      %v964 = vsel %vm932, %v446, %v900
      %v965 = vsel %vm933, %v451, %v901
      %s966 = scalar_lea.vmem %s2, 1
      %v967 = vld [vmem:[%s966] sm:$0x1]
      %s968 = scalar_lea.vmem %s1, 128
      %v969 = vld [vmem:[%s968] sm:$0xff]
      %v970 = vld [vmem:[%s968 + $0x8] sm:$0xff]
      %v971 = vld [vmem:[%s968 + $0x10] sm:$0xff]
      %v972 = vld [vmem:[%s968 + $0x18] sm:$0xff]
      %v973 = vld [vmem:[%s968 + $0x20] sm:$0xff]
      %v974 = vld [vmem:[%s968 + $0x28] sm:$0xff]
      %v975 = vld [vmem:[%s968 + $0x30] sm:$0xff]
      %v976 = vld [vmem:[%s968 + $0x38] sm:$0xff]
      %v977 = vld [vmem:[%s968 + $0x40] sm:$0xff]
      %v978 = vld [vmem:[%s968 + $0x48] sm:$0xff]
      %v979 = vld [vmem:[%s968 + $0x50] sm:$0xff]
      %v980 = vld [vmem:[%s968 + $0x58] sm:$0xff]
      %v981 = vld [vmem:[%s968 + $0x60] sm:$0xff]
      %v982 = vld [vmem:[%s968 + $0x68] sm:$0xff]
      %v983 = vld [vmem:[%s968 + $0x70] sm:$0xff]
      %v984 = vld [vmem:[%s968 + $0x78] sm:$0xff]
      %v986 = vlaneseq
      %v987 = vshrl.u32 %v986, 7
      %v988 = vsub.s32 0, %v987
      %v989 = vrot.slane %v967, %v988
      %991 = vmatprep.subr.mxu0 0.0
      %992 = vmatpush1.msra.mxu0 %v984
      %993 = vmatprep.subr.mxu0 0.0
      %994 = vmatpush1.msra.mxu0 %v983
      %995 = vmatprep.subr.mxu0 0.0
      %996 = vmatpush1.msra.mxu0 %v982
      %997 = vmatprep.subr.mxu0 0.0
      %998 = vmatpush1.msra.mxu0 %v981
      %999 = vmatprep.subr.mxu0 0.0
      %1000 = vmatpush1.msra.mxu0 %v980
      %1001 = vmatprep.subr.mxu0 0.0
      %1002 = vmatpush1.msra.mxu0 %v979
      %1003 = vmatprep.subr.mxu0 0.0
      %1004 = vmatpush1.msra.mxu0 %v978
      %1005 = vmatprep.subr.mxu0 0.0
      %1006 = vmatpush1.msra.mxu0 %v977
      %1007 = vmatprep.subr.mxu0 0.0
      %1008 = vmatpush1.msra.mxu0 %v976
      %1009 = vmatprep.subr.mxu0 0.0
      %1010 = vmatpush1.msra.mxu0 %v975
      %1011 = vmatprep.subr.mxu0 0.0
      %1012 = vmatpush1.msra.mxu0 %v974
      %1013 = vmatprep.subr.mxu0 0.0
      %1014 = vmatpush1.msra.mxu0 %v973
      %1015 = vmatprep.subr.mxu0 0.0
      %1016 = vmatpush1.msra.mxu0 %v972
      %1017 = vmatprep.subr.mxu0 0.0
      %1018 = vmatpush1.msra.mxu0 %v971
      %1019 = vmatprep.subr.mxu0 0.0
      %1020 = vmatpush1.msra.mxu0 %v970
      %1021 = vmatprep.subr.mxu0 0.0
      %1022 = vmatpush1.msra.mxu0 %v969
      %1023 = vmatprep.subr.mxu0 0.0
      %1024 = vmatpush2.msra.mxu0 0.0
      %1025 = vmatprep.subr.mxu0 0.0
      %1026 = vmatpush2.msra.mxu0 0.0
      %1027 = vmatprep.subr.mxu0 0.0
      %1028 = vmatpush2.msra.mxu0 0.0
      %1029 = vmatprep.subr.mxu0 0.0
      %1030 = vmatpush2.msra.mxu0 0.0
      %1031 = vmatprep.subr.mxu0 0.0
      %1032 = vmatpush2.msra.mxu0 0.0
      %1033 = vmatprep.subr.mxu0 0.0
      %1034 = vmatpush2.msra.mxu0 0.0
      %1035 = vmatprep.subr.mxu0 0.0
      %1036 = vmatpush2.msra.mxu0 0.0
      %1037 = vmatprep.subr.mxu0 0.0
      %1038 = vmatpush2.msra.mxu0 0.0
      %1039 = vmatprep.subr.mxu0 0.0
      %1040 = vmatpush2.msra.mxu0 0.0
      %1041 = vmatprep.subr.mxu0 0.0
      %1042 = vmatpush2.msra.mxu0 0.0
      %1043 = vmatprep.subr.mxu0 0.0
      %1044 = vmatpush2.msra.mxu0 0.0
      %1045 = vmatprep.subr.mxu0 0.0
      %1046 = vmatpush2.msra.mxu0 0.0
      %1047 = vmatprep.subr.mxu0 0.0
      %1048 = vmatpush2.msra.mxu0 0.0
      %1049 = vmatprep.subr.mxu0 0.0
      %1050 = vmatpush2.msra.mxu0 0.0
      %1051 = vmatprep.subr.mxu0 0.0
      %1052 = vmatpush2.msra.mxu0 0.0
      %1053 = vmatprep.subr.mxu0 0.0
      %1054 = vmatpush2.msra.mxu0 0.0
      %1055 = vmatprep.mubr.f32.mxu0 0.0
      %1056 = vmatmul.mubr.f32.gmra.mxu0 %v934
      %v1057 = vpop.f32.mrf.mxu0
      %v1058 = vadd.f32 %v989, %v1057
      %v1059 = vpop.f32.mrf.mxu0
      %1060 = vmatprep.mubr.f32.mxu0 0.0
      %1061 = vmatmul.mubr.f32.gmra.mxu0 %v935
      %v1062 = vpop.f32.mrf.mxu0
      %v1063 = vadd.f32 %v989, %v1062
      %v1064 = vpop.f32.mrf.mxu0
      %1065 = vmatprep.mubr.f32.mxu0 0.0
      %1066 = vmatmul.mubr.f32.gmra.mxu0 %v936
      %v1067 = vpop.f32.mrf.mxu0
      %v1068 = vadd.f32 %v989, %v1067
      %v1069 = vpop.f32.mrf.mxu0
      %1070 = vmatprep.mubr.f32.mxu0 0.0
      %1071 = vmatmul.mubr.f32.gmra.mxu0 %v937
      %v1072 = vpop.f32.mrf.mxu0
      %v1073 = vadd.f32 %v989, %v1072
      %v1074 = vpop.f32.mrf.mxu0
      %1075 = vmatprep.mubr.f32.mxu0 0.0
      %1076 = vmatmul.mubr.f32.gmra.mxu0 %v938
      %v1077 = vpop.f32.mrf.mxu0
      %v1078 = vadd.f32 %v989, %v1077
      %v1079 = vpop.f32.mrf.mxu0
      %1080 = vmatprep.mubr.f32.mxu0 0.0
      %1081 = vmatmul.mubr.f32.gmra.mxu0 %v939
      %v1082 = vpop.f32.mrf.mxu0
      %v1083 = vadd.f32 %v989, %v1082
      %v1084 = vpop.f32.mrf.mxu0
      %1085 = vmatprep.mubr.f32.mxu0 0.0
      %1086 = vmatmul.mubr.f32.gmra.mxu0 %v940
      %v1087 = vpop.f32.mrf.mxu0
      %v1088 = vadd.f32 %v989, %v1087
      %v1089 = vpop.f32.mrf.mxu0
      %1090 = vmatprep.mubr.f32.mxu0 0.0
      %1091 = vmatmul.mubr.f32.gmra.mxu0 %v941
      %v1092 = vpop.f32.mrf.mxu0
      %v1093 = vadd.f32 %v989, %v1092
      %v1094 = vpop.f32.mrf.mxu0
      %1095 = vmatprep.mubr.f32.mxu0 0.0
      %1096 = vmatmul.mubr.f32.gmra.mxu0 %v942
      %v1097 = vpop.f32.mrf.mxu0
      %v1098 = vadd.f32 %v989, %v1097
      %v1099 = vpop.f32.mrf.mxu0
      %1100 = vmatprep.mubr.f32.mxu0 0.0
      %1101 = vmatmul.mubr.f32.gmra.mxu0 %v943
      %v1102 = vpop.f32.mrf.mxu0
      %v1103 = vadd.f32 %v989, %v1102
      %v1104 = vpop.f32.mrf.mxu0
      %1105 = vmatprep.mubr.f32.mxu0 0.0
      %1106 = vmatmul.mubr.f32.gmra.mxu0 %v944
      %v1107 = vpop.f32.mrf.mxu0
      %v1108 = vadd.f32 %v989, %v1107
      %v1109 = vpop.f32.mrf.mxu0
      %1110 = vmatprep.mubr.f32.mxu0 0.0
      %1111 = vmatmul.mubr.f32.gmra.mxu0 %v945
      %v1112 = vpop.f32.mrf.mxu0
      %v1113 = vadd.f32 %v989, %v1112
      %v1114 = vpop.f32.mrf.mxu0
      %1115 = vmatprep.mubr.f32.mxu0 0.0
      %1116 = vmatmul.mubr.f32.gmra.mxu0 %v946
      %v1117 = vpop.f32.mrf.mxu0
      %v1118 = vadd.f32 %v989, %v1117
      %v1119 = vpop.f32.mrf.mxu0
      %1120 = vmatprep.mubr.f32.mxu0 0.0
      %1121 = vmatmul.mubr.f32.gmra.mxu0 %v947
      %v1122 = vpop.f32.mrf.mxu0
      %v1123 = vadd.f32 %v989, %v1122
      %v1124 = vpop.f32.mrf.mxu0
      %1125 = vmatprep.mubr.f32.mxu0 0.0
      %1126 = vmatmul.mubr.f32.gmra.mxu0 %v948
      %v1127 = vpop.f32.mrf.mxu0
      %v1128 = vadd.f32 %v989, %v1127
      %v1129 = vpop.f32.mrf.mxu0
      %1130 = vmatprep.mubr.f32.mxu0 0.0
      %1131 = vmatmul.mubr.f32.gmra.mxu0 %v949
      %v1132 = vpop.f32.mrf.mxu0
      %v1133 = vadd.f32 %v989, %v1132
      %v1134 = vpop.f32.mrf.mxu0
      %1135 = vmatprep.mubr.f32.mxu0 0.0
      %1136 = vmatmul.mubr.f32.gmra.mxu0 %v950
      %v1137 = vpop.f32.mrf.mxu0
      %v1138 = vadd.f32 %v989, %v1137
      %v1139 = vpop.f32.mrf.mxu0
      %1140 = vmatprep.mubr.f32.mxu0 0.0
      %1141 = vmatmul.mubr.f32.gmra.mxu0 %v951
      %v1142 = vpop.f32.mrf.mxu0
      %v1143 = vadd.f32 %v989, %v1142
      %v1144 = vpop.f32.mrf.mxu0
      %1145 = vmatprep.mubr.f32.mxu0 0.0
      %1146 = vmatmul.mubr.f32.gmra.mxu0 %v952
      %v1147 = vpop.f32.mrf.mxu0
      %v1148 = vadd.f32 %v989, %v1147
      %v1149 = vpop.f32.mrf.mxu0
      %1150 = vmatprep.mubr.f32.mxu0 0.0
      %1151 = vmatmul.mubr.f32.gmra.mxu0 %v953
      %v1152 = vpop.f32.mrf.mxu0
      %v1153 = vadd.f32 %v989, %v1152
      %v1154 = vpop.f32.mrf.mxu0
      %1155 = vmatprep.mubr.f32.mxu0 0.0
      %1156 = vmatmul.mubr.f32.gmra.mxu0 %v954
      %v1157 = vpop.f32.mrf.mxu0
      %v1158 = vadd.f32 %v989, %v1157
      %v1159 = vpop.f32.mrf.mxu0
      %1160 = vmatprep.mubr.f32.mxu0 0.0
      %1161 = vmatmul.mubr.f32.gmra.mxu0 %v955
      %v1162 = vpop.f32.mrf.mxu0
      %v1163 = vadd.f32 %v989, %v1162
      %v1164 = vpop.f32.mrf.mxu0
      %1165 = vmatprep.mubr.f32.mxu0 0.0
      %1166 = vmatmul.mubr.f32.gmra.mxu0 %v956
      %v1167 = vpop.f32.mrf.mxu0
      %v1168 = vadd.f32 %v989, %v1167
      %v1169 = vpop.f32.mrf.mxu0
      %1170 = vmatprep.mubr.f32.mxu0 0.0
      %1171 = vmatmul.mubr.f32.gmra.mxu0 %v957
      %v1172 = vpop.f32.mrf.mxu0
      %v1173 = vadd.f32 %v989, %v1172
      %v1174 = vpop.f32.mrf.mxu0
      %1175 = vmatprep.mubr.f32.mxu0 0.0
      %1176 = vmatmul.mubr.f32.gmra.mxu0 %v958
      %v1177 = vpop.f32.mrf.mxu0
      %v1178 = vadd.f32 %v989, %v1177
      %v1179 = vpop.f32.mrf.mxu0
      %1180 = vmatprep.mubr.f32.mxu0 0.0
      %1181 = vmatmul.mubr.f32.gmra.mxu0 %v959
      %v1182 = vpop.f32.mrf.mxu0
      %v1183 = vadd.f32 %v989, %v1182
      %v1184 = vpop.f32.mrf.mxu0
      %1185 = vmatprep.mubr.f32.mxu0 0.0
      %1186 = vmatmul.mubr.f32.gmra.mxu0 %v960
      %v1187 = vpop.f32.mrf.mxu0
      %v1188 = vadd.f32 %v989, %v1187
      %v1189 = vpop.f32.mrf.mxu0
      %1190 = vmatprep.mubr.f32.mxu0 0.0
      %1191 = vmatmul.mubr.f32.gmra.mxu0 %v961
      %v1192 = vpop.f32.mrf.mxu0
      %v1193 = vadd.f32 %v989, %v1192
      %v1194 = vpop.f32.mrf.mxu0
      %1195 = vmatprep.mubr.f32.mxu0 0.0
      %1196 = vmatmul.mubr.f32.gmra.mxu0 %v962
      %v1197 = vpop.f32.mrf.mxu0
      %v1198 = vadd.f32 %v989, %v1197
      %v1199 = vpop.f32.mrf.mxu0
      %1200 = vmatprep.mubr.f32.mxu0 0.0
      %1201 = vmatmul.mubr.f32.gmra.mxu0 %v963
      %v1202 = vpop.f32.mrf.mxu0
      %v1203 = vadd.f32 %v989, %v1202
      %v1204 = vpop.f32.mrf.mxu0
      %1205 = vmatprep.mubr.f32.mxu0 0.0
      %1206 = vmatmul.mubr.f32.gmra.mxu0 %v964
      %v1207 = vpop.f32.mrf.mxu0
      %v1208 = vadd.f32 %v989, %v1207
      %v1209 = vpop.f32.mrf.mxu0
      %1210 = vmatprep.mubr.f32.mxu0 0.0
      %1211 = vmatmul.mubr.f32.gmra.mxu0 %v965
      %v1212 = vpop.f32.mrf.mxu0
      %v1213 = vadd.f32 %v989, %v1212
      %v1214 = vpop.f32.mrf.mxu0
      %1215 = vdwg.mxu0
      %v1216 = vmin.f32 %v1058, 0.2
      %v1217 = vmin.f32 %v1063, 0.2
      %v1218 = vmin.f32 %v1068, 0.2
      %v1219 = vmin.f32 %v1073, 0.2
      %v1220 = vmin.f32 %v1078, 0.2
      %v1221 = vmin.f32 %v1083, 0.2
      %v1222 = vmin.f32 %v1088, 0.2
      %v1223 = vmin.f32 %v1093, 0.2
      %v1224 = vmin.f32 %v1098, 0.2
      %v1225 = vmin.f32 %v1103, 0.2
      %v1226 = vmin.f32 %v1108, 0.2
      %v1227 = vmin.f32 %v1113, 0.2
      %v1228 = vmin.f32 %v1118, 0.2
      %v1229 = vmin.f32 %v1123, 0.2
      %v1230 = vmin.f32 %v1128, 0.2
      %v1231 = vmin.f32 %v1133, 0.2
      %v1232 = vmin.f32 %v1138, 0.2
      %v1233 = vmin.f32 %v1143, 0.2
      %v1234 = vmin.f32 %v1148, 0.2
      %v1235 = vmin.f32 %v1153, 0.2
      %v1236 = vmin.f32 %v1158, 0.2
      %v1237 = vmin.f32 %v1163, 0.2
      %v1238 = vmin.f32 %v1168, 0.2
      %v1239 = vmin.f32 %v1173, 0.2
      %v1240 = vmin.f32 %v1178, 0.2
      %v1241 = vmin.f32 %v1183, 0.2
      %v1242 = vmin.f32 %v1188, 0.2
      %v1243 = vmin.f32 %v1193, 0.2
      %v1244 = vmin.f32 %v1198, 0.2
      %v1245 = vmin.f32 %v1203, 0.2
      %v1246 = vmin.f32 %v1208, 0.2
      %v1247 = vmin.f32 %v1213, 0.2
      %v1248 = vmul.f32 %v1216, 100.0
      %v1249 = vmul.f32 %v1217, 100.0
      %v1250 = vmul.f32 %v1218, 100.0
      %v1251 = vmul.f32 %v1219, 100.0
      %v1252 = vmul.f32 %v1220, 100.0
      %v1253 = vmul.f32 %v1221, 100.0
      %v1254 = vmul.f32 %v1222, 100.0
      %v1255 = vmul.f32 %v1223, 100.0
      %v1256 = vmul.f32 %v1224, 100.0
      %v1257 = vmul.f32 %v1225, 100.0
      %v1258 = vmul.f32 %v1226, 100.0
      %v1259 = vmul.f32 %v1227, 100.0
      %v1260 = vmul.f32 %v1228, 100.0
      %v1261 = vmul.f32 %v1229, 100.0
      %v1262 = vmul.f32 %v1230, 100.0
      %v1263 = vmul.f32 %v1231, 100.0
      %v1264 = vmul.f32 %v1232, 100.0
      %v1265 = vmul.f32 %v1233, 100.0
      %v1266 = vmul.f32 %v1234, 100.0
      %v1267 = vmul.f32 %v1235, 100.0
      %v1268 = vmul.f32 %v1236, 100.0
      %v1269 = vmul.f32 %v1237, 100.0
      %v1270 = vmul.f32 %v1238, 100.0
      %v1271 = vmul.f32 %v1239, 100.0
      %v1272 = vmul.f32 %v1240, 100.0
      %v1273 = vmul.f32 %v1241, 100.0
      %v1274 = vmul.f32 %v1242, 100.0
      %v1275 = vmul.f32 %v1243, 100.0
      %v1276 = vmul.f32 %v1244, 100.0
      %v1277 = vmul.f32 %v1245, 100.0
      %v1278 = vmul.f32 %v1246, 100.0
      %v1279 = vmul.f32 %v1247, 100.0
      %v1280 = vmul.f32 %v1248, 1.442695
      %v1281 = vpow.pop %v1280
      %v1282 = vmul.f32 %v1249, 1.442695
      %v1283 = vpow.pop %v1282
      %v1284 = vmul.f32 %v1250, 1.442695
      %v1285 = vpow.pop %v1284
      %v1286 = vmul.f32 %v1251, 1.442695
      %v1287 = vpow.pop %v1286
      %v1288 = vmul.f32 %v1252, 1.442695
      %v1289 = vpow.pop %v1288
      %v1290 = vmul.f32 %v1253, 1.442695
      %v1291 = vpow.pop %v1290
      %v1292 = vmul.f32 %v1254, 1.442695
      %v1293 = vpow.pop %v1292
      %v1294 = vmul.f32 %v1255, 1.442695
      %v1295 = vpow.pop %v1294
      %v1296 = vmul.f32 %v1256, 1.442695
      %v1297 = vpow.pop %v1296
      %v1298 = vmul.f32 %v1257, 1.442695
      %v1299 = vpow.pop %v1298
      %v1300 = vmul.f32 %v1258, 1.442695
      %v1301 = vpow.pop %v1300
      %v1302 = vmul.f32 %v1259, 1.442695
      %v1303 = vpow.pop %v1302
      %v1304 = vmul.f32 %v1260, 1.442695
      %v1305 = vpow.pop %v1304
      %v1306 = vmul.f32 %v1261, 1.442695
      %v1307 = vpow.pop %v1306
      %v1308 = vmul.f32 %v1262, 1.442695
      %v1309 = vpow.pop %v1308
      %v1310 = vmul.f32 %v1263, 1.442695
      %v1311 = vpow.pop %v1310
      %v1312 = vmul.f32 %v1264, 1.442695
      %v1313 = vpow.pop %v1312
      %v1314 = vmul.f32 %v1265, 1.442695
      %v1315 = vpow.pop %v1314
      %v1316 = vmul.f32 %v1266, 1.442695
      %v1317 = vpow.pop %v1316
      %v1318 = vmul.f32 %v1267, 1.442695
      %v1319 = vpow.pop %v1318
      %v1320 = vmul.f32 %v1268, 1.442695
      %v1321 = vpow.pop %v1320
      %v1322 = vmul.f32 %v1269, 1.442695
      %v1323 = vpow.pop %v1322
      %v1324 = vmul.f32 %v1270, 1.442695
      %v1325 = vpow.pop %v1324
      %v1326 = vmul.f32 %v1271, 1.442695
      %v1327 = vpow.pop %v1326
      %v1328 = vmul.f32 %v1272, 1.442695
      %v1329 = vpow.pop %v1328
      %v1330 = vmul.f32 %v1273, 1.442695
      %v1331 = vpow.pop %v1330
      %v1332 = vmul.f32 %v1274, 1.442695
      %v1333 = vpow.pop %v1332
      %v1334 = vmul.f32 %v1275, 1.442695
      %v1335 = vpow.pop %v1334
      %v1336 = vmul.f32 %v1276, 1.442695
      %v1337 = vpow.pop %v1336
      %v1338 = vmul.f32 %v1277, 1.442695
      %v1339 = vpow.pop %v1338
      %v1340 = vmul.f32 %v1278, 1.442695
      %v1341 = vpow.pop %v1340
      %v1342 = vmul.f32 %v1279, 1.442695
      %v1343 = vpow.pop %v1342
      %v1344 = vadd.f32 %v1281, 1.0
      %v1345 = vlog2.pop %v1344
      %v1346 = vmul.f32 %v1345, 0.6931472
      %v1347 = vmul.f32 -0.5, %v1281
      %v1348 = vadd.f32 %v1347, 1.0
      %v1349 = vmul.f32 %v1348, %v1281
      %v1350 = vand.u32 2147483647, %v1281
      %vm1351 = vcmp.lt.f32.partialorder %v1350, 0.0004427343
      %v1352 = vsel %vm1351, %v1349, %v1346
      %v1353 = vadd.f32 %v1283, 1.0
      %v1354 = vlog2.pop %v1353
      %v1355 = vmul.f32 %v1354, 0.6931472
      %v1356 = vmul.f32 -0.5, %v1283
      %v1357 = vadd.f32 %v1356, 1.0
      %v1358 = vmul.f32 %v1357, %v1283
      %v1359 = vand.u32 2147483647, %v1283
      %vm1360 = vcmp.lt.f32.partialorder %v1359, 0.0004427343
      %v1361 = vsel %vm1360, %v1358, %v1355
      %v1362 = vadd.f32 %v1285, 1.0
      %v1363 = vlog2.pop %v1362
      %v1364 = vmul.f32 %v1363, 0.6931472
      %v1365 = vmul.f32 -0.5, %v1285
      %v1366 = vadd.f32 %v1365, 1.0
      %v1367 = vmul.f32 %v1366, %v1285
      %v1368 = vand.u32 2147483647, %v1285
      %vm1369 = vcmp.lt.f32.partialorder %v1368, 0.0004427343
      %v1370 = vsel %vm1369, %v1367, %v1364
      %v1371 = vadd.f32 %v1287, 1.0
      %v1372 = vlog2.pop %v1371
      %v1373 = vmul.f32 %v1372, 0.6931472
      %v1374 = vmul.f32 -0.5, %v1287
      %v1375 = vadd.f32 %v1374, 1.0
      %v1376 = vmul.f32 %v1375, %v1287
      %v1377 = vand.u32 2147483647, %v1287
      %vm1378 = vcmp.lt.f32.partialorder %v1377, 0.0004427343
      %v1379 = vsel %vm1378, %v1376, %v1373
      %v1380 = vadd.f32 %v1289, 1.0
      %v1381 = vlog2.pop %v1380
      %v1382 = vmul.f32 %v1381, 0.6931472
      %v1383 = vmul.f32 -0.5, %v1289
      %v1384 = vadd.f32 %v1383, 1.0
      %v1385 = vmul.f32 %v1384, %v1289
      %v1386 = vand.u32 2147483647, %v1289
      %vm1387 = vcmp.lt.f32.partialorder %v1386, 0.0004427343
      %v1388 = vsel %vm1387, %v1385, %v1382
      %v1389 = vadd.f32 %v1291, 1.0
      %v1390 = vlog2.pop %v1389
      %v1391 = vmul.f32 %v1390, 0.6931472
      %v1392 = vmul.f32 -0.5, %v1291
      %v1393 = vadd.f32 %v1392, 1.0
      %v1394 = vmul.f32 %v1393, %v1291
      %v1395 = vand.u32 2147483647, %v1291
      %vm1396 = vcmp.lt.f32.partialorder %v1395, 0.0004427343
      %v1397 = vsel %vm1396, %v1394, %v1391
      %v1398 = vadd.f32 %v1293, 1.0
      %v1399 = vlog2.pop %v1398
      %v1400 = vmul.f32 %v1399, 0.6931472
      %v1401 = vmul.f32 -0.5, %v1293
      %v1402 = vadd.f32 %v1401, 1.0
      %v1403 = vmul.f32 %v1402, %v1293
      %v1404 = vand.u32 2147483647, %v1293
      %vm1405 = vcmp.lt.f32.partialorder %v1404, 0.0004427343
      %v1406 = vsel %vm1405, %v1403, %v1400
      %v1407 = vadd.f32 %v1295, 1.0
      %v1408 = vlog2.pop %v1407
      %v1409 = vmul.f32 %v1408, 0.6931472
      %v1410 = vmul.f32 -0.5, %v1295
      %v1411 = vadd.f32 %v1410, 1.0
      %v1412 = vmul.f32 %v1411, %v1295
      %v1413 = vand.u32 2147483647, %v1295
      %vm1414 = vcmp.lt.f32.partialorder %v1413, 0.0004427343
      %v1415 = vsel %vm1414, %v1412, %v1409
      %v1416 = vadd.f32 %v1297, 1.0
      %v1417 = vlog2.pop %v1416
      %v1418 = vmul.f32 %v1417, 0.6931472
      %v1419 = vmul.f32 -0.5, %v1297
      %v1420 = vadd.f32 %v1419, 1.0
      %v1421 = vmul.f32 %v1420, %v1297
      %v1422 = vand.u32 2147483647, %v1297
      %vm1423 = vcmp.lt.f32.partialorder %v1422, 0.0004427343
      %v1424 = vsel %vm1423, %v1421, %v1418
      %v1425 = vadd.f32 %v1299, 1.0
      %v1426 = vlog2.pop %v1425
      %v1427 = vmul.f32 %v1426, 0.6931472
      %v1428 = vmul.f32 -0.5, %v1299
      %v1429 = vadd.f32 %v1428, 1.0
      %v1430 = vmul.f32 %v1429, %v1299
      %v1431 = vand.u32 2147483647, %v1299
      %vm1432 = vcmp.lt.f32.partialorder %v1431, 0.0004427343
      %v1433 = vsel %vm1432, %v1430, %v1427
      %v1434 = vadd.f32 %v1301, 1.0
      %v1435 = vlog2.pop %v1434
      %v1436 = vmul.f32 %v1435, 0.6931472
      %v1437 = vmul.f32 -0.5, %v1301
      %v1438 = vadd.f32 %v1437, 1.0
      %v1439 = vmul.f32 %v1438, %v1301
      %v1440 = vand.u32 2147483647, %v1301
      %vm1441 = vcmp.lt.f32.partialorder %v1440, 0.0004427343
      %v1442 = vsel %vm1441, %v1439, %v1436
      %v1443 = vadd.f32 %v1303, 1.0
      %v1444 = vlog2.pop %v1443
      %v1445 = vmul.f32 %v1444, 0.6931472
      %v1446 = vmul.f32 -0.5, %v1303
      %v1447 = vadd.f32 %v1446, 1.0
      %v1448 = vmul.f32 %v1447, %v1303
      %v1449 = vand.u32 2147483647, %v1303
      %vm1450 = vcmp.lt.f32.partialorder %v1449, 0.0004427343
      %v1451 = vsel %vm1450, %v1448, %v1445
      %v1452 = vadd.f32 %v1305, 1.0
      %v1453 = vlog2.pop %v1452
      %v1454 = vmul.f32 %v1453, 0.6931472
      %v1455 = vmul.f32 -0.5, %v1305
      %v1456 = vadd.f32 %v1455, 1.0
      %v1457 = vmul.f32 %v1456, %v1305
      %v1458 = vand.u32 2147483647, %v1305
      %vm1459 = vcmp.lt.f32.partialorder %v1458, 0.0004427343
      %v1460 = vsel %vm1459, %v1457, %v1454
      %v1461 = vadd.f32 %v1307, 1.0
      %v1462 = vlog2.pop %v1461
      %v1463 = vmul.f32 %v1462, 0.6931472
      %v1464 = vmul.f32 -0.5, %v1307
      %v1465 = vadd.f32 %v1464, 1.0
      %v1466 = vmul.f32 %v1465, %v1307
      %v1467 = vand.u32 2147483647, %v1307
      %vm1468 = vcmp.lt.f32.partialorder %v1467, 0.0004427343
      %v1469 = vsel %vm1468, %v1466, %v1463
      %v1470 = vadd.f32 %v1309, 1.0
      %v1471 = vlog2.pop %v1470
      %v1472 = vmul.f32 %v1471, 0.6931472
      %v1473 = vmul.f32 -0.5, %v1309
      %v1474 = vadd.f32 %v1473, 1.0
      %v1475 = vmul.f32 %v1474, %v1309
      %v1476 = vand.u32 2147483647, %v1309
      %vm1477 = vcmp.lt.f32.partialorder %v1476, 0.0004427343
      %v1478 = vsel %vm1477, %v1475, %v1472
      %v1479 = vadd.f32 %v1311, 1.0
      %v1480 = vlog2.pop %v1479
      %v1481 = vmul.f32 %v1480, 0.6931472
      %v1482 = vmul.f32 -0.5, %v1311
      %v1483 = vadd.f32 %v1482, 1.0
      %v1484 = vmul.f32 %v1483, %v1311
      %v1485 = vand.u32 2147483647, %v1311
      %vm1486 = vcmp.lt.f32.partialorder %v1485, 0.0004427343
      %v1487 = vsel %vm1486, %v1484, %v1481
      %v1488 = vadd.f32 %v1313, 1.0
      %v1489 = vlog2.pop %v1488
      %v1490 = vmul.f32 %v1489, 0.6931472
      %v1491 = vmul.f32 -0.5, %v1313
      %v1492 = vadd.f32 %v1491, 1.0
      %v1493 = vmul.f32 %v1492, %v1313
      %v1494 = vand.u32 2147483647, %v1313
      %vm1495 = vcmp.lt.f32.partialorder %v1494, 0.0004427343
      %v1496 = vsel %vm1495, %v1493, %v1490
      %v1497 = vadd.f32 %v1315, 1.0
      %v1498 = vlog2.pop %v1497
      %v1499 = vmul.f32 %v1498, 0.6931472
      %v1500 = vmul.f32 -0.5, %v1315
      %v1501 = vadd.f32 %v1500, 1.0
      %v1502 = vmul.f32 %v1501, %v1315
      %v1503 = vand.u32 2147483647, %v1315
      %vm1504 = vcmp.lt.f32.partialorder %v1503, 0.0004427343
      %v1505 = vsel %vm1504, %v1502, %v1499
      %v1506 = vadd.f32 %v1317, 1.0
      %v1507 = vlog2.pop %v1506
      %v1508 = vmul.f32 %v1507, 0.6931472
      %v1509 = vmul.f32 -0.5, %v1317
      %v1510 = vadd.f32 %v1509, 1.0
      %v1511 = vmul.f32 %v1510, %v1317
      %v1512 = vand.u32 2147483647, %v1317
      %vm1513 = vcmp.lt.f32.partialorder %v1512, 0.0004427343
      %v1514 = vsel %vm1513, %v1511, %v1508
      %v1515 = vadd.f32 %v1319, 1.0
      %v1516 = vlog2.pop %v1515
      %v1517 = vmul.f32 %v1516, 0.6931472
      %v1518 = vmul.f32 -0.5, %v1319
      %v1519 = vadd.f32 %v1518, 1.0
      %v1520 = vmul.f32 %v1519, %v1319
      %v1521 = vand.u32 2147483647, %v1319
      %vm1522 = vcmp.lt.f32.partialorder %v1521, 0.0004427343
      %v1523 = vsel %vm1522, %v1520, %v1517
      %v1524 = vadd.f32 %v1321, 1.0
      %v1525 = vlog2.pop %v1524
      %v1526 = vmul.f32 %v1525, 0.6931472
      %v1527 = vmul.f32 -0.5, %v1321
      %v1528 = vadd.f32 %v1527, 1.0
      %v1529 = vmul.f32 %v1528, %v1321
      %v1530 = vand.u32 2147483647, %v1321
      %vm1531 = vcmp.lt.f32.partialorder %v1530, 0.0004427343
      %v1532 = vsel %vm1531, %v1529, %v1526
      %v1533 = vadd.f32 %v1323, 1.0
      %v1534 = vlog2.pop %v1533
      %v1535 = vmul.f32 %v1534, 0.6931472
      %v1536 = vmul.f32 -0.5, %v1323
      %v1537 = vadd.f32 %v1536, 1.0
      %v1538 = vmul.f32 %v1537, %v1323
      %v1539 = vand.u32 2147483647, %v1323
      %vm1540 = vcmp.lt.f32.partialorder %v1539, 0.0004427343
      %v1541 = vsel %vm1540, %v1538, %v1535
      %v1542 = vadd.f32 %v1325, 1.0
      %v1543 = vlog2.pop %v1542
      %v1544 = vmul.f32 %v1543, 0.6931472
      %v1545 = vmul.f32 -0.5, %v1325
      %v1546 = vadd.f32 %v1545, 1.0
      %v1547 = vmul.f32 %v1546, %v1325
      %v1548 = vand.u32 2147483647, %v1325
      %vm1549 = vcmp.lt.f32.partialorder %v1548, 0.0004427343
      %v1550 = vsel %vm1549, %v1547, %v1544
      %v1551 = vadd.f32 %v1327, 1.0
      %v1552 = vlog2.pop %v1551
      %v1553 = vmul.f32 %v1552, 0.6931472
      %v1554 = vmul.f32 -0.5, %v1327
      %v1555 = vadd.f32 %v1554, 1.0
      %v1556 = vmul.f32 %v1555, %v1327
      %v1557 = vand.u32 2147483647, %v1327
      %vm1558 = vcmp.lt.f32.partialorder %v1557, 0.0004427343
      %v1559 = vsel %vm1558, %v1556, %v1553
      %v1560 = vadd.f32 %v1329, 1.0
      %v1561 = vlog2.pop %v1560
      %v1562 = vmul.f32 %v1561, 0.6931472
      %v1563 = vmul.f32 -0.5, %v1329
      %v1564 = vadd.f32 %v1563, 1.0
      %v1565 = vmul.f32 %v1564, %v1329
      %v1566 = vand.u32 2147483647, %v1329
      %vm1567 = vcmp.lt.f32.partialorder %v1566, 0.0004427343
      %v1568 = vsel %vm1567, %v1565, %v1562
      %v1569 = vadd.f32 %v1331, 1.0
      %v1570 = vlog2.pop %v1569
      %v1571 = vmul.f32 %v1570, 0.6931472
      %v1572 = vmul.f32 -0.5, %v1331
      %v1573 = vadd.f32 %v1572, 1.0
      %v1574 = vmul.f32 %v1573, %v1331
      %v1575 = vand.u32 2147483647, %v1331
      %vm1576 = vcmp.lt.f32.partialorder %v1575, 0.0004427343
      %v1577 = vsel %vm1576, %v1574, %v1571
      %v1578 = vadd.f32 %v1333, 1.0
      %v1579 = vlog2.pop %v1578
      %v1580 = vmul.f32 %v1579, 0.6931472
      %v1581 = vmul.f32 -0.5, %v1333
      %v1582 = vadd.f32 %v1581, 1.0
      %v1583 = vmul.f32 %v1582, %v1333
      %v1584 = vand.u32 2147483647, %v1333
      %vm1585 = vcmp.lt.f32.partialorder %v1584, 0.0004427343
      %v1586 = vsel %vm1585, %v1583, %v1580
      %v1587 = vadd.f32 %v1335, 1.0
      %v1588 = vlog2.pop %v1587
      %v1589 = vmul.f32 %v1588, 0.6931472
      %v1590 = vmul.f32 -0.5, %v1335
      %v1591 = vadd.f32 %v1590, 1.0
      %v1592 = vmul.f32 %v1591, %v1335
      %v1593 = vand.u32 2147483647, %v1335
      %vm1594 = vcmp.lt.f32.partialorder %v1593, 0.0004427343
      %v1595 = vsel %vm1594, %v1592, %v1589
      %v1596 = vadd.f32 %v1337, 1.0
      %v1597 = vlog2.pop %v1596
      %v1598 = vmul.f32 %v1597, 0.6931472
      %v1599 = vmul.f32 -0.5, %v1337
      %v1600 = vadd.f32 %v1599, 1.0
      %v1601 = vmul.f32 %v1600, %v1337
      %v1602 = vand.u32 2147483647, %v1337
      %vm1603 = vcmp.lt.f32.partialorder %v1602, 0.0004427343
      %v1604 = vsel %vm1603, %v1601, %v1598
      %v1605 = vadd.f32 %v1339, 1.0
      %v1606 = vlog2.pop %v1605
      %v1607 = vmul.f32 %v1606, 0.6931472
      %v1608 = vmul.f32 -0.5, %v1339
      %v1609 = vadd.f32 %v1608, 1.0
      %v1610 = vmul.f32 %v1609, %v1339
      %v1611 = vand.u32 2147483647, %v1339
      %vm1612 = vcmp.lt.f32.partialorder %v1611, 0.0004427343
      %v1613 = vsel %vm1612, %v1610, %v1607
      %v1614 = vadd.f32 %v1341, 1.0
      %v1615 = vlog2.pop %v1614
      %v1616 = vmul.f32 %v1615, 0.6931472
      %v1617 = vmul.f32 -0.5, %v1341
      %v1618 = vadd.f32 %v1617, 1.0
      %v1619 = vmul.f32 %v1618, %v1341
      %v1620 = vand.u32 2147483647, %v1341
      %vm1621 = vcmp.lt.f32.partialorder %v1620, 0.0004427343
      %v1622 = vsel %vm1621, %v1619, %v1616
      %v1623 = vadd.f32 %v1343, 1.0
      %v1624 = vlog2.pop %v1623
      %v1625 = vmul.f32 %v1624, 0.6931472
      %v1626 = vmul.f32 -0.5, %v1343
      %v1627 = vadd.f32 %v1626, 1.0
      %v1628 = vmul.f32 %v1627, %v1343
      %v1629 = vand.u32 2147483647, %v1343
      %vm1630 = vcmp.lt.f32.partialorder %v1629, 0.0004427343
      %v1631 = vsel %vm1630, %v1628, %v1625
      %v1632 = vmul.f32 %v1352, 0.01
      %v1633 = vmul.f32 %v1361, 0.01
      %v1634 = vmul.f32 %v1370, 0.01
      %v1635 = vmul.f32 %v1379, 0.01
      %v1636 = vmul.f32 %v1388, 0.01
      %v1637 = vmul.f32 %v1397, 0.01
      %v1638 = vmul.f32 %v1406, 0.01
      %v1639 = vmul.f32 %v1415, 0.01
      %v1640 = vmul.f32 %v1424, 0.01
      %v1641 = vmul.f32 %v1433, 0.01
      %v1642 = vmul.f32 %v1442, 0.01
      %v1643 = vmul.f32 %v1451, 0.01
      %v1644 = vmul.f32 %v1460, 0.01
      %v1645 = vmul.f32 %v1469, 0.01
      %v1646 = vmul.f32 %v1478, 0.01
      %v1647 = vmul.f32 %v1487, 0.01
      %v1648 = vmul.f32 %v1496, 0.01
      %v1649 = vmul.f32 %v1505, 0.01
      %v1650 = vmul.f32 %v1514, 0.01
      %v1651 = vmul.f32 %v1523, 0.01
      %v1652 = vmul.f32 %v1532, 0.01
      %v1653 = vmul.f32 %v1541, 0.01
      %v1654 = vmul.f32 %v1550, 0.01
      %v1655 = vmul.f32 %v1559, 0.01
      %v1656 = vmul.f32 %v1568, 0.01
      %v1657 = vmul.f32 %v1577, 0.01
      %v1658 = vmul.f32 %v1586, 0.01
      %v1659 = vmul.f32 %v1595, 0.01
      %v1660 = vmul.f32 %v1604, 0.01
      %v1661 = vmul.f32 %v1613, 0.01
      %v1662 = vmul.f32 %v1622, 0.01
      %v1663 = vmul.f32 %v1631, 0.01
      %vm1664 = vcmp.gt.f32.partialorder %v1058, 0.2
      %vm1665 = vcmp.gt.f32.partialorder %v1063, 0.2
      %vm1666 = vcmp.gt.f32.partialorder %v1068, 0.2
      %vm1667 = vcmp.gt.f32.partialorder %v1073, 0.2
      %vm1668 = vcmp.gt.f32.partialorder %v1078, 0.2
      %vm1669 = vcmp.gt.f32.partialorder %v1083, 0.2
      %vm1670 = vcmp.gt.f32.partialorder %v1088, 0.2
      %vm1671 = vcmp.gt.f32.partialorder %v1093, 0.2
      %vm1672 = vcmp.gt.f32.partialorder %v1098, 0.2
      %vm1673 = vcmp.gt.f32.partialorder %v1103, 0.2
      %vm1674 = vcmp.gt.f32.partialorder %v1108, 0.2
      %vm1675 = vcmp.gt.f32.partialorder %v1113, 0.2
      %vm1676 = vcmp.gt.f32.partialorder %v1118, 0.2
      %vm1677 = vcmp.gt.f32.partialorder %v1123, 0.2
      %vm1678 = vcmp.gt.f32.partialorder %v1128, 0.2
      %vm1679 = vcmp.gt.f32.partialorder %v1133, 0.2
      %vm1680 = vcmp.gt.f32.partialorder %v1138, 0.2
      %vm1681 = vcmp.gt.f32.partialorder %v1143, 0.2
      %vm1682 = vcmp.gt.f32.partialorder %v1148, 0.2
      %vm1683 = vcmp.gt.f32.partialorder %v1153, 0.2
      %vm1684 = vcmp.gt.f32.partialorder %v1158, 0.2
      %vm1685 = vcmp.gt.f32.partialorder %v1163, 0.2
      %vm1686 = vcmp.gt.f32.partialorder %v1168, 0.2
      %vm1687 = vcmp.gt.f32.partialorder %v1173, 0.2
      %vm1688 = vcmp.gt.f32.partialorder %v1178, 0.2
      %vm1689 = vcmp.gt.f32.partialorder %v1183, 0.2
      %vm1690 = vcmp.gt.f32.partialorder %v1188, 0.2
      %vm1691 = vcmp.gt.f32.partialorder %v1193, 0.2
      %vm1692 = vcmp.gt.f32.partialorder %v1198, 0.2
      %vm1693 = vcmp.gt.f32.partialorder %v1203, 0.2
      %vm1694 = vcmp.gt.f32.partialorder %v1208, 0.2
      %vm1695 = vcmp.gt.f32.partialorder %v1213, 0.2
      %v1696 = vsel %vm1664, %v1058, %v1632
      %v1697 = vsel %vm1665, %v1063, %v1633
      %v1698 = vsel %vm1666, %v1068, %v1634
      %v1699 = vsel %vm1667, %v1073, %v1635
      %v1700 = vsel %vm1668, %v1078, %v1636
      %v1701 = vsel %vm1669, %v1083, %v1637
      %v1702 = vsel %vm1670, %v1088, %v1638
      %v1703 = vsel %vm1671, %v1093, %v1639
      %v1704 = vsel %vm1672, %v1098, %v1640
      %v1705 = vsel %vm1673, %v1103, %v1641
      %v1706 = vsel %vm1674, %v1108, %v1642
      %v1707 = vsel %vm1675, %v1113, %v1643
      %v1708 = vsel %vm1676, %v1118, %v1644
      %v1709 = vsel %vm1677, %v1123, %v1645
      %v1710 = vsel %vm1678, %v1128, %v1646
      %v1711 = vsel %vm1679, %v1133, %v1647
      %v1712 = vsel %vm1680, %v1138, %v1648
      %v1713 = vsel %vm1681, %v1143, %v1649
      %v1714 = vsel %vm1682, %v1148, %v1650
      %v1715 = vsel %vm1683, %v1153, %v1651
      %v1716 = vsel %vm1684, %v1158, %v1652
      %v1717 = vsel %vm1685, %v1163, %v1653
      %v1718 = vsel %vm1686, %v1168, %v1654
      %v1719 = vsel %vm1687, %v1173, %v1655
      %v1720 = vsel %vm1688, %v1178, %v1656
      %v1721 = vsel %vm1689, %v1183, %v1657
      %v1722 = vsel %vm1690, %v1188, %v1658
      %v1723 = vsel %vm1691, %v1193, %v1659
      %v1724 = vsel %vm1692, %v1198, %v1660
      %v1725 = vsel %vm1693, %v1203, %v1661
      %v1726 = vsel %vm1694, %v1208, %v1662
      %v1727 = vsel %vm1695, %v1213, %v1663
      %s1728 = scalar_lea.vmem %s2, 2
      %v1729 = vld [vmem:[%s1728] sm:$0x1]
      %s1730 = scalar_lea.vmem %s1, 256
      %v1731 = vld [vmem:[%s1730] sm:$0xff]
      %v1732 = vld [vmem:[%s1730 + $0x8] sm:$0xff]
      %v1733 = vld [vmem:[%s1730 + $0x10] sm:$0xff]
      %v1734 = vld [vmem:[%s1730 + $0x18] sm:$0xff]
      %v1735 = vld [vmem:[%s1730 + $0x20] sm:$0xff]
      %v1736 = vld [vmem:[%s1730 + $0x28] sm:$0xff]
      %v1737 = vld [vmem:[%s1730 + $0x30] sm:$0xff]
      %v1738 = vld [vmem:[%s1730 + $0x38] sm:$0xff]
      %v1739 = vld [vmem:[%s1730 + $0x40] sm:$0xff]
      %v1740 = vld [vmem:[%s1730 + $0x48] sm:$0xff]
      %v1741 = vld [vmem:[%s1730 + $0x50] sm:$0xff]
      %v1742 = vld [vmem:[%s1730 + $0x58] sm:$0xff]
      %v1743 = vld [vmem:[%s1730 + $0x60] sm:$0xff]
      %v1744 = vld [vmem:[%s1730 + $0x68] sm:$0xff]
      %v1745 = vld [vmem:[%s1730 + $0x70] sm:$0xff]
      %v1746 = vld [vmem:[%s1730 + $0x78] sm:$0xff]
      %v1748 = vlaneseq
      %v1749 = vshrl.u32 %v1748, 7
      %v1750 = vsub.s32 0, %v1749
      %v1751 = vrot.slane %v1729, %v1750
      %1753 = vmatprep.subr.mxu0 0.0
      %1754 = vmatpush1.msra.mxu0 %v1746
      %1755 = vmatprep.subr.mxu0 0.0
      %1756 = vmatpush1.msra.mxu0 %v1745
      %1757 = vmatprep.subr.mxu0 0.0
      %1758 = vmatpush1.msra.mxu0 %v1744
      %1759 = vmatprep.subr.mxu0 0.0
      %1760 = vmatpush1.msra.mxu0 %v1743
      %1761 = vmatprep.subr.mxu0 0.0
      %1762 = vmatpush1.msra.mxu0 %v1742
      %1763 = vmatprep.subr.mxu0 0.0
      %1764 = vmatpush1.msra.mxu0 %v1741
      %1765 = vmatprep.subr.mxu0 0.0
      %1766 = vmatpush1.msra.mxu0 %v1740
      %1767 = vmatprep.subr.mxu0 0.0
      %1768 = vmatpush1.msra.mxu0 %v1739
      %1769 = vmatprep.subr.mxu0 0.0
      %1770 = vmatpush1.msra.mxu0 %v1738
      %1771 = vmatprep.subr.mxu0 0.0
      %1772 = vmatpush1.msra.mxu0 %v1737
      %1773 = vmatprep.subr.mxu0 0.0
      %1774 = vmatpush1.msra.mxu0 %v1736
      %1775 = vmatprep.subr.mxu0 0.0
      %1776 = vmatpush1.msra.mxu0 %v1735
      %1777 = vmatprep.subr.mxu0 0.0
      %1778 = vmatpush1.msra.mxu0 %v1734
      %1779 = vmatprep.subr.mxu0 0.0
      %1780 = vmatpush1.msra.mxu0 %v1733
      %1781 = vmatprep.subr.mxu0 0.0
      %1782 = vmatpush1.msra.mxu0 %v1732
      %1783 = vmatprep.subr.mxu0 0.0
      %1784 = vmatpush1.msra.mxu0 %v1731
      %1785 = vmatprep.subr.mxu0 0.0
      %1786 = vmatpush2.msra.mxu0 0.0
      %1787 = vmatprep.subr.mxu0 0.0
      %1788 = vmatpush2.msra.mxu0 0.0
      %1789 = vmatprep.subr.mxu0 0.0
      %1790 = vmatpush2.msra.mxu0 0.0
      %1791 = vmatprep.subr.mxu0 0.0
      %1792 = vmatpush2.msra.mxu0 0.0
      %1793 = vmatprep.subr.mxu0 0.0
      %1794 = vmatpush2.msra.mxu0 0.0
      %1795 = vmatprep.subr.mxu0 0.0
      %1796 = vmatpush2.msra.mxu0 0.0
      %1797 = vmatprep.subr.mxu0 0.0
      %1798 = vmatpush2.msra.mxu0 0.0
      %1799 = vmatprep.subr.mxu0 0.0
      %1800 = vmatpush2.msra.mxu0 0.0
      %1801 = vmatprep.subr.mxu0 0.0
      %1802 = vmatpush2.msra.mxu0 0.0
      %1803 = vmatprep.subr.mxu0 0.0
      %1804 = vmatpush2.msra.mxu0 0.0
      %1805 = vmatprep.subr.mxu0 0.0
      %1806 = vmatpush2.msra.mxu0 0.0
      %1807 = vmatprep.subr.mxu0 0.0
      %1808 = vmatpush2.msra.mxu0 0.0
      %1809 = vmatprep.subr.mxu0 0.0
      %1810 = vmatpush2.msra.mxu0 0.0
      %1811 = vmatprep.subr.mxu0 0.0
      %1812 = vmatpush2.msra.mxu0 0.0
      %1813 = vmatprep.subr.mxu0 0.0
      %1814 = vmatpush2.msra.mxu0 0.0
      %1815 = vmatprep.subr.mxu0 0.0
      %1816 = vmatpush2.msra.mxu0 0.0
      %1817 = vmatprep.mubr.f32.mxu0 0.0
      %1818 = vmatmul.mubr.f32.gmra.mxu0 %v1696
      %v1819 = vpop.f32.mrf.mxu0
      %v1820 = vadd.f32 %v1751, %v1819
      %v1821 = vpop.f32.mrf.mxu0
      %1822 = vmatprep.mubr.f32.mxu0 0.0
      %1823 = vmatmul.mubr.f32.gmra.mxu0 %v1697
      %v1824 = vpop.f32.mrf.mxu0
      %v1825 = vadd.f32 %v1751, %v1824
      %v1826 = vpop.f32.mrf.mxu0
      %1827 = vmatprep.mubr.f32.mxu0 0.0
      %1828 = vmatmul.mubr.f32.gmra.mxu0 %v1698
      %v1829 = vpop.f32.mrf.mxu0
      %v1830 = vadd.f32 %v1751, %v1829
      %v1831 = vpop.f32.mrf.mxu0
      %1832 = vmatprep.mubr.f32.mxu0 0.0
      %1833 = vmatmul.mubr.f32.gmra.mxu0 %v1699
      %v1834 = vpop.f32.mrf.mxu0
      %v1835 = vadd.f32 %v1751, %v1834
      %v1836 = vpop.f32.mrf.mxu0
      %1837 = vmatprep.mubr.f32.mxu0 0.0
      %1838 = vmatmul.mubr.f32.gmra.mxu0 %v1700
      %v1839 = vpop.f32.mrf.mxu0
      %v1840 = vadd.f32 %v1751, %v1839
      %v1841 = vpop.f32.mrf.mxu0
      %1842 = vmatprep.mubr.f32.mxu0 0.0
      %1843 = vmatmul.mubr.f32.gmra.mxu0 %v1701
      %v1844 = vpop.f32.mrf.mxu0
      %v1845 = vadd.f32 %v1751, %v1844
      %v1846 = vpop.f32.mrf.mxu0
      %1847 = vmatprep.mubr.f32.mxu0 0.0
      %1848 = vmatmul.mubr.f32.gmra.mxu0 %v1702
      %v1849 = vpop.f32.mrf.mxu0
      %v1850 = vadd.f32 %v1751, %v1849
      %v1851 = vpop.f32.mrf.mxu0
      %1852 = vmatprep.mubr.f32.mxu0 0.0
      %1853 = vmatmul.mubr.f32.gmra.mxu0 %v1703
      %v1854 = vpop.f32.mrf.mxu0
      %v1855 = vadd.f32 %v1751, %v1854
      %v1856 = vpop.f32.mrf.mxu0
      %1857 = vmatprep.mubr.f32.mxu0 0.0
      %1858 = vmatmul.mubr.f32.gmra.mxu0 %v1704
      %v1859 = vpop.f32.mrf.mxu0
      %v1860 = vadd.f32 %v1751, %v1859
      %v1861 = vpop.f32.mrf.mxu0
      %1862 = vmatprep.mubr.f32.mxu0 0.0
      %1863 = vmatmul.mubr.f32.gmra.mxu0 %v1705
      %v1864 = vpop.f32.mrf.mxu0
      %v1865 = vadd.f32 %v1751, %v1864
      %v1866 = vpop.f32.mrf.mxu0
      %1867 = vmatprep.mubr.f32.mxu0 0.0
      %1868 = vmatmul.mubr.f32.gmra.mxu0 %v1706
      %v1869 = vpop.f32.mrf.mxu0
      %v1870 = vadd.f32 %v1751, %v1869
      %v1871 = vpop.f32.mrf.mxu0
      %1872 = vmatprep.mubr.f32.mxu0 0.0
      %1873 = vmatmul.mubr.f32.gmra.mxu0 %v1707
      %v1874 = vpop.f32.mrf.mxu0
      %v1875 = vadd.f32 %v1751, %v1874
      %v1876 = vpop.f32.mrf.mxu0
      %1877 = vmatprep.mubr.f32.mxu0 0.0
      %1878 = vmatmul.mubr.f32.gmra.mxu0 %v1708
      %v1879 = vpop.f32.mrf.mxu0
      %v1880 = vadd.f32 %v1751, %v1879
      %v1881 = vpop.f32.mrf.mxu0
      %1882 = vmatprep.mubr.f32.mxu0 0.0
      %1883 = vmatmul.mubr.f32.gmra.mxu0 %v1709
      %v1884 = vpop.f32.mrf.mxu0
      %v1885 = vadd.f32 %v1751, %v1884
      %v1886 = vpop.f32.mrf.mxu0
      %1887 = vmatprep.mubr.f32.mxu0 0.0
      %1888 = vmatmul.mubr.f32.gmra.mxu0 %v1710
      %v1889 = vpop.f32.mrf.mxu0
      %v1890 = vadd.f32 %v1751, %v1889
      %v1891 = vpop.f32.mrf.mxu0
      %1892 = vmatprep.mubr.f32.mxu0 0.0
      %1893 = vmatmul.mubr.f32.gmra.mxu0 %v1711
      %v1894 = vpop.f32.mrf.mxu0
      %v1895 = vadd.f32 %v1751, %v1894
      %v1896 = vpop.f32.mrf.mxu0
      %1897 = vmatprep.mubr.f32.mxu0 0.0
      %1898 = vmatmul.mubr.f32.gmra.mxu0 %v1712
      %v1899 = vpop.f32.mrf.mxu0
      %v1900 = vadd.f32 %v1751, %v1899
      %v1901 = vpop.f32.mrf.mxu0
      %1902 = vmatprep.mubr.f32.mxu0 0.0
      %1903 = vmatmul.mubr.f32.gmra.mxu0 %v1713
      %v1904 = vpop.f32.mrf.mxu0
      %v1905 = vadd.f32 %v1751, %v1904
      %v1906 = vpop.f32.mrf.mxu0
      %1907 = vmatprep.mubr.f32.mxu0 0.0
      %1908 = vmatmul.mubr.f32.gmra.mxu0 %v1714
      %v1909 = vpop.f32.mrf.mxu0
      %v1910 = vadd.f32 %v1751, %v1909
      %v1911 = vpop.f32.mrf.mxu0
      %1912 = vmatprep.mubr.f32.mxu0 0.0
      %1913 = vmatmul.mubr.f32.gmra.mxu0 %v1715
      %v1914 = vpop.f32.mrf.mxu0
      %v1915 = vadd.f32 %v1751, %v1914
      %v1916 = vpop.f32.mrf.mxu0
      %1917 = vmatprep.mubr.f32.mxu0 0.0
      %1918 = vmatmul.mubr.f32.gmra.mxu0 %v1716
      %v1919 = vpop.f32.mrf.mxu0
      %v1920 = vadd.f32 %v1751, %v1919
      %v1921 = vpop.f32.mrf.mxu0
      %1922 = vmatprep.mubr.f32.mxu0 0.0
      %1923 = vmatmul.mubr.f32.gmra.mxu0 %v1717
      %v1924 = vpop.f32.mrf.mxu0
      %v1925 = vadd.f32 %v1751, %v1924
      %v1926 = vpop.f32.mrf.mxu0
      %1927 = vmatprep.mubr.f32.mxu0 0.0
      %1928 = vmatmul.mubr.f32.gmra.mxu0 %v1718
      %v1929 = vpop.f32.mrf.mxu0
      %v1930 = vadd.f32 %v1751, %v1929
      %v1931 = vpop.f32.mrf.mxu0
      %1932 = vmatprep.mubr.f32.mxu0 0.0
      %1933 = vmatmul.mubr.f32.gmra.mxu0 %v1719
      %v1934 = vpop.f32.mrf.mxu0
      %v1935 = vadd.f32 %v1751, %v1934
      %v1936 = vpop.f32.mrf.mxu0
      %1937 = vmatprep.mubr.f32.mxu0 0.0
      %1938 = vmatmul.mubr.f32.gmra.mxu0 %v1720
      %v1939 = vpop.f32.mrf.mxu0
      %v1940 = vadd.f32 %v1751, %v1939
      %v1941 = vpop.f32.mrf.mxu0
      %1942 = vmatprep.mubr.f32.mxu0 0.0
      %1943 = vmatmul.mubr.f32.gmra.mxu0 %v1721
      %v1944 = vpop.f32.mrf.mxu0
      %v1945 = vadd.f32 %v1751, %v1944
      %v1946 = vpop.f32.mrf.mxu0
      %1947 = vmatprep.mubr.f32.mxu0 0.0
      %1948 = vmatmul.mubr.f32.gmra.mxu0 %v1722
      %v1949 = vpop.f32.mrf.mxu0
      %v1950 = vadd.f32 %v1751, %v1949
      %v1951 = vpop.f32.mrf.mxu0
      %1952 = vmatprep.mubr.f32.mxu0 0.0
      %1953 = vmatmul.mubr.f32.gmra.mxu0 %v1723
      %v1954 = vpop.f32.mrf.mxu0
      %v1955 = vadd.f32 %v1751, %v1954
      %v1956 = vpop.f32.mrf.mxu0
      %1957 = vmatprep.mubr.f32.mxu0 0.0
      %1958 = vmatmul.mubr.f32.gmra.mxu0 %v1724
      %v1959 = vpop.f32.mrf.mxu0
      %v1960 = vadd.f32 %v1751, %v1959
      %v1961 = vpop.f32.mrf.mxu0
      %1962 = vmatprep.mubr.f32.mxu0 0.0
      %1963 = vmatmul.mubr.f32.gmra.mxu0 %v1725
      %v1964 = vpop.f32.mrf.mxu0
      %v1965 = vadd.f32 %v1751, %v1964
      %v1966 = vpop.f32.mrf.mxu0
      %1967 = vmatprep.mubr.f32.mxu0 0.0
      %1968 = vmatmul.mubr.f32.gmra.mxu0 %v1726
      %v1969 = vpop.f32.mrf.mxu0
      %v1970 = vadd.f32 %v1751, %v1969
      %v1971 = vpop.f32.mrf.mxu0
      %1972 = vmatprep.mubr.f32.mxu0 0.0
      %1973 = vmatmul.mubr.f32.gmra.mxu0 %v1727
      %v1974 = vpop.f32.mrf.mxu0
      %v1975 = vadd.f32 %v1751, %v1974
      %v1976 = vpop.f32.mrf.mxu0
      %1977 = vdwg.mxu0
      %v1978 = vmin.f32 %v1820, 0.2
      %v1979 = vmin.f32 %v1825, 0.2
      %v1980 = vmin.f32 %v1830, 0.2
      %v1981 = vmin.f32 %v1835, 0.2
      %v1982 = vmin.f32 %v1840, 0.2
      %v1983 = vmin.f32 %v1845, 0.2
      %v1984 = vmin.f32 %v1850, 0.2
      %v1985 = vmin.f32 %v1855, 0.2
      %v1986 = vmin.f32 %v1860, 0.2
      %v1987 = vmin.f32 %v1865, 0.2
      %v1988 = vmin.f32 %v1870, 0.2
      %v1989 = vmin.f32 %v1875, 0.2
      %v1990 = vmin.f32 %v1880, 0.2
      %v1991 = vmin.f32 %v1885, 0.2
      %v1992 = vmin.f32 %v1890, 0.2
      %v1993 = vmin.f32 %v1895, 0.2
      %v1994 = vmin.f32 %v1900, 0.2
      %v1995 = vmin.f32 %v1905, 0.2
      %v1996 = vmin.f32 %v1910, 0.2
      %v1997 = vmin.f32 %v1915, 0.2
      %v1998 = vmin.f32 %v1920, 0.2
      %v1999 = vmin.f32 %v1925, 0.2
      %v2000 = vmin.f32 %v1930, 0.2
      %v2001 = vmin.f32 %v1935, 0.2
      %v2002 = vmin.f32 %v1940, 0.2
      %v2003 = vmin.f32 %v1945, 0.2
      %v2004 = vmin.f32 %v1950, 0.2
      %v2005 = vmin.f32 %v1955, 0.2
      %v2006 = vmin.f32 %v1960, 0.2
      %v2007 = vmin.f32 %v1965, 0.2
      %v2008 = vmin.f32 %v1970, 0.2
      %v2009 = vmin.f32 %v1975, 0.2
      %v2010 = vmul.f32 %v1978, 100.0
      %v2011 = vmul.f32 %v1979, 100.0
      %v2012 = vmul.f32 %v1980, 100.0
      %v2013 = vmul.f32 %v1981, 100.0
      %v2014 = vmul.f32 %v1982, 100.0
      %v2015 = vmul.f32 %v1983, 100.0
      %v2016 = vmul.f32 %v1984, 100.0
      %v2017 = vmul.f32 %v1985, 100.0
      %v2018 = vmul.f32 %v1986, 100.0
      %v2019 = vmul.f32 %v1987, 100.0
      %v2020 = vmul.f32 %v1988, 100.0
      %v2021 = vmul.f32 %v1989, 100.0
      %v2022 = vmul.f32 %v1990, 100.0
      %v2023 = vmul.f32 %v1991, 100.0
      %v2024 = vmul.f32 %v1992, 100.0
      %v2025 = vmul.f32 %v1993, 100.0
      %v2026 = vmul.f32 %v1994, 100.0
      %v2027 = vmul.f32 %v1995, 100.0
      %v2028 = vmul.f32 %v1996, 100.0
      %v2029 = vmul.f32 %v1997, 100.0
      %v2030 = vmul.f32 %v1998, 100.0
      %v2031 = vmul.f32 %v1999, 100.0
      %v2032 = vmul.f32 %v2000, 100.0
      %v2033 = vmul.f32 %v2001, 100.0
      %v2034 = vmul.f32 %v2002, 100.0
      %v2035 = vmul.f32 %v2003, 100.0
      %v2036 = vmul.f32 %v2004, 100.0
      %v2037 = vmul.f32 %v2005, 100.0
      %v2038 = vmul.f32 %v2006, 100.0
      %v2039 = vmul.f32 %v2007, 100.0
      %v2040 = vmul.f32 %v2008, 100.0
      %v2041 = vmul.f32 %v2009, 100.0
      %v2042 = vmul.f32 %v2010, 1.442695
      %v2043 = vpow.pop %v2042
      %v2044 = vmul.f32 %v2011, 1.442695
      %v2045 = vpow.pop %v2044
      %v2046 = vmul.f32 %v2012, 1.442695
      %v2047 = vpow.pop %v2046
      %v2048 = vmul.f32 %v2013, 1.442695
      %v2049 = vpow.pop %v2048
      %v2050 = vmul.f32 %v2014, 1.442695
      %v2051 = vpow.pop %v2050
      %v2052 = vmul.f32 %v2015, 1.442695
      %v2053 = vpow.pop %v2052
      %v2054 = vmul.f32 %v2016, 1.442695
      %v2055 = vpow.pop %v2054
      %v2056 = vmul.f32 %v2017, 1.442695
      %v2057 = vpow.pop %v2056
      %v2058 = vmul.f32 %v2018, 1.442695
      %v2059 = vpow.pop %v2058
      %v2060 = vmul.f32 %v2019, 1.442695
      %v2061 = vpow.pop %v2060
      %v2062 = vmul.f32 %v2020, 1.442695
      %v2063 = vpow.pop %v2062
      %v2064 = vmul.f32 %v2021, 1.442695
      %v2065 = vpow.pop %v2064
      %v2066 = vmul.f32 %v2022, 1.442695
      %v2067 = vpow.pop %v2066
      %v2068 = vmul.f32 %v2023, 1.442695
      %v2069 = vpow.pop %v2068
      %v2070 = vmul.f32 %v2024, 1.442695
      %v2071 = vpow.pop %v2070
      %v2072 = vmul.f32 %v2025, 1.442695
      %v2073 = vpow.pop %v2072
      %v2074 = vmul.f32 %v2026, 1.442695
      %v2075 = vpow.pop %v2074
      %v2076 = vmul.f32 %v2027, 1.442695
      %v2077 = vpow.pop %v2076
      %v2078 = vmul.f32 %v2028, 1.442695
      %v2079 = vpow.pop %v2078
      %v2080 = vmul.f32 %v2029, 1.442695
      %v2081 = vpow.pop %v2080
      %v2082 = vmul.f32 %v2030, 1.442695
      %v2083 = vpow.pop %v2082
      %v2084 = vmul.f32 %v2031, 1.442695
      %v2085 = vpow.pop %v2084
      %v2086 = vmul.f32 %v2032, 1.442695
      %v2087 = vpow.pop %v2086
      %v2088 = vmul.f32 %v2033, 1.442695
      %v2089 = vpow.pop %v2088
      %v2090 = vmul.f32 %v2034, 1.442695
      %v2091 = vpow.pop %v2090
      %v2092 = vmul.f32 %v2035, 1.442695
      %v2093 = vpow.pop %v2092
      %v2094 = vmul.f32 %v2036, 1.442695
      %v2095 = vpow.pop %v2094
      %v2096 = vmul.f32 %v2037, 1.442695
      %v2097 = vpow.pop %v2096
      %v2098 = vmul.f32 %v2038, 1.442695
      %v2099 = vpow.pop %v2098
      %v2100 = vmul.f32 %v2039, 1.442695
      %v2101 = vpow.pop %v2100
      %v2102 = vmul.f32 %v2040, 1.442695
      %v2103 = vpow.pop %v2102
      %v2104 = vmul.f32 %v2041, 1.442695
      %v2105 = vpow.pop %v2104
      %v2106 = vadd.f32 %v2043, 1.0
      %v2107 = vlog2.pop %v2106
      %v2108 = vmul.f32 %v2107, 0.6931472
      %v2109 = vmul.f32 -0.5, %v2043
      %v2110 = vadd.f32 %v2109, 1.0
      %v2111 = vmul.f32 %v2110, %v2043
      %v2112 = vand.u32 2147483647, %v2043
      %vm2113 = vcmp.lt.f32.partialorder %v2112, 0.0004427343
      %v2114 = vsel %vm2113, %v2111, %v2108
      %v2115 = vadd.f32 %v2045, 1.0
      %v2116 = vlog2.pop %v2115
      %v2117 = vmul.f32 %v2116, 0.6931472
      %v2118 = vmul.f32 -0.5, %v2045
      %v2119 = vadd.f32 %v2118, 1.0
      %v2120 = vmul.f32 %v2119, %v2045
      %v2121 = vand.u32 2147483647, %v2045
      %vm2122 = vcmp.lt.f32.partialorder %v2121, 0.0004427343
      %v2123 = vsel %vm2122, %v2120, %v2117
      %v2124 = vadd.f32 %v2047, 1.0
      %v2125 = vlog2.pop %v2124
      %v2126 = vmul.f32 %v2125, 0.6931472
      %v2127 = vmul.f32 -0.5, %v2047
      %v2128 = vadd.f32 %v2127, 1.0
      %v2129 = vmul.f32 %v2128, %v2047
      %v2130 = vand.u32 2147483647, %v2047
      %vm2131 = vcmp.lt.f32.partialorder %v2130, 0.0004427343
      %v2132 = vsel %vm2131, %v2129, %v2126
      %v2133 = vadd.f32 %v2049, 1.0
      %v2134 = vlog2.pop %v2133
      %v2135 = vmul.f32 %v2134, 0.6931472
      %v2136 = vmul.f32 -0.5, %v2049
      %v2137 = vadd.f32 %v2136, 1.0
      %v2138 = vmul.f32 %v2137, %v2049
      %v2139 = vand.u32 2147483647, %v2049
      %vm2140 = vcmp.lt.f32.partialorder %v2139, 0.0004427343
      %v2141 = vsel %vm2140, %v2138, %v2135
      %v2142 = vadd.f32 %v2051, 1.0
      %v2143 = vlog2.pop %v2142
      %v2144 = vmul.f32 %v2143, 0.6931472
      %v2145 = vmul.f32 -0.5, %v2051
      %v2146 = vadd.f32 %v2145, 1.0
      %v2147 = vmul.f32 %v2146, %v2051
      %v2148 = vand.u32 2147483647, %v2051
      %vm2149 = vcmp.lt.f32.partialorder %v2148, 0.0004427343
      %v2150 = vsel %vm2149, %v2147, %v2144
      %v2151 = vadd.f32 %v2053, 1.0
      %v2152 = vlog2.pop %v2151
      %v2153 = vmul.f32 %v2152, 0.6931472
      %v2154 = vmul.f32 -0.5, %v2053
      %v2155 = vadd.f32 %v2154, 1.0
      %v2156 = vmul.f32 %v2155, %v2053
      %v2157 = vand.u32 2147483647, %v2053
      %vm2158 = vcmp.lt.f32.partialorder %v2157, 0.0004427343
      %v2159 = vsel %vm2158, %v2156, %v2153
      %v2160 = vadd.f32 %v2055, 1.0
      %v2161 = vlog2.pop %v2160
      %v2162 = vmul.f32 %v2161, 0.6931472
      %v2163 = vmul.f32 -0.5, %v2055
      %v2164 = vadd.f32 %v2163, 1.0
      %v2165 = vmul.f32 %v2164, %v2055
      %v2166 = vand.u32 2147483647, %v2055
      %vm2167 = vcmp.lt.f32.partialorder %v2166, 0.0004427343
      %v2168 = vsel %vm2167, %v2165, %v2162
      %v2169 = vadd.f32 %v2057, 1.0
      %v2170 = vlog2.pop %v2169
      %v2171 = vmul.f32 %v2170, 0.6931472
      %v2172 = vmul.f32 -0.5, %v2057
      %v2173 = vadd.f32 %v2172, 1.0
      %v2174 = vmul.f32 %v2173, %v2057
      %v2175 = vand.u32 2147483647, %v2057
      %vm2176 = vcmp.lt.f32.partialorder %v2175, 0.0004427343
      %v2177 = vsel %vm2176, %v2174, %v2171
      %v2178 = vadd.f32 %v2059, 1.0
      %v2179 = vlog2.pop %v2178
      %v2180 = vmul.f32 %v2179, 0.6931472
      %v2181 = vmul.f32 -0.5, %v2059
      %v2182 = vadd.f32 %v2181, 1.0
      %v2183 = vmul.f32 %v2182, %v2059
      %v2184 = vand.u32 2147483647, %v2059
      %vm2185 = vcmp.lt.f32.partialorder %v2184, 0.0004427343
      %v2186 = vsel %vm2185, %v2183, %v2180
      %v2187 = vadd.f32 %v2061, 1.0
      %v2188 = vlog2.pop %v2187
      %v2189 = vmul.f32 %v2188, 0.6931472
      %v2190 = vmul.f32 -0.5, %v2061
      %v2191 = vadd.f32 %v2190, 1.0
      %v2192 = vmul.f32 %v2191, %v2061
      %v2193 = vand.u32 2147483647, %v2061
      %vm2194 = vcmp.lt.f32.partialorder %v2193, 0.0004427343
      %v2195 = vsel %vm2194, %v2192, %v2189
      %v2196 = vadd.f32 %v2063, 1.0
      %v2197 = vlog2.pop %v2196
      %v2198 = vmul.f32 %v2197, 0.6931472
      %v2199 = vmul.f32 -0.5, %v2063
      %v2200 = vadd.f32 %v2199, 1.0
      %v2201 = vmul.f32 %v2200, %v2063
      %v2202 = vand.u32 2147483647, %v2063
      %vm2203 = vcmp.lt.f32.partialorder %v2202, 0.0004427343
      %v2204 = vsel %vm2203, %v2201, %v2198
      %v2205 = vadd.f32 %v2065, 1.0
      %v2206 = vlog2.pop %v2205
      %v2207 = vmul.f32 %v2206, 0.6931472
      %v2208 = vmul.f32 -0.5, %v2065
      %v2209 = vadd.f32 %v2208, 1.0
      %v2210 = vmul.f32 %v2209, %v2065
      %v2211 = vand.u32 2147483647, %v2065
      %vm2212 = vcmp.lt.f32.partialorder %v2211, 0.0004427343
      %v2213 = vsel %vm2212, %v2210, %v2207
      %v2214 = vadd.f32 %v2067, 1.0
      %v2215 = vlog2.pop %v2214
      %v2216 = vmul.f32 %v2215, 0.6931472
      %v2217 = vmul.f32 -0.5, %v2067
      %v2218 = vadd.f32 %v2217, 1.0
      %v2219 = vmul.f32 %v2218, %v2067
      %v2220 = vand.u32 2147483647, %v2067
      %vm2221 = vcmp.lt.f32.partialorder %v2220, 0.0004427343
      %v2222 = vsel %vm2221, %v2219, %v2216
      %v2223 = vadd.f32 %v2069, 1.0
      %v2224 = vlog2.pop %v2223
      %v2225 = vmul.f32 %v2224, 0.6931472
      %v2226 = vmul.f32 -0.5, %v2069
      %v2227 = vadd.f32 %v2226, 1.0
      %v2228 = vmul.f32 %v2227, %v2069
      %v2229 = vand.u32 2147483647, %v2069
      %vm2230 = vcmp.lt.f32.partialorder %v2229, 0.0004427343
      %v2231 = vsel %vm2230, %v2228, %v2225
      %v2232 = vadd.f32 %v2071, 1.0
      %v2233 = vlog2.pop %v2232
      %v2234 = vmul.f32 %v2233, 0.6931472
      %v2235 = vmul.f32 -0.5, %v2071
      %v2236 = vadd.f32 %v2235, 1.0
      %v2237 = vmul.f32 %v2236, %v2071
      %v2238 = vand.u32 2147483647, %v2071
      %vm2239 = vcmp.lt.f32.partialorder %v2238, 0.0004427343
      %v2240 = vsel %vm2239, %v2237, %v2234
      %v2241 = vadd.f32 %v2073, 1.0
      %v2242 = vlog2.pop %v2241
      %v2243 = vmul.f32 %v2242, 0.6931472
      %v2244 = vmul.f32 -0.5, %v2073
      %v2245 = vadd.f32 %v2244, 1.0
      %v2246 = vmul.f32 %v2245, %v2073
      %v2247 = vand.u32 2147483647, %v2073
      %vm2248 = vcmp.lt.f32.partialorder %v2247, 0.0004427343
      %v2249 = vsel %vm2248, %v2246, %v2243
      %v2250 = vadd.f32 %v2075, 1.0
      %v2251 = vlog2.pop %v2250
      %v2252 = vmul.f32 %v2251, 0.6931472
      %v2253 = vmul.f32 -0.5, %v2075
      %v2254 = vadd.f32 %v2253, 1.0
      %v2255 = vmul.f32 %v2254, %v2075
      %v2256 = vand.u32 2147483647, %v2075
      %vm2257 = vcmp.lt.f32.partialorder %v2256, 0.0004427343
      %v2258 = vsel %vm2257, %v2255, %v2252
      %v2259 = vadd.f32 %v2077, 1.0
      %v2260 = vlog2.pop %v2259
      %v2261 = vmul.f32 %v2260, 0.6931472
      %v2262 = vmul.f32 -0.5, %v2077
      %v2263 = vadd.f32 %v2262, 1.0
      %v2264 = vmul.f32 %v2263, %v2077
      %v2265 = vand.u32 2147483647, %v2077
      %vm2266 = vcmp.lt.f32.partialorder %v2265, 0.0004427343
      %v2267 = vsel %vm2266, %v2264, %v2261
      %v2268 = vadd.f32 %v2079, 1.0
      %v2269 = vlog2.pop %v2268
      %v2270 = vmul.f32 %v2269, 0.6931472
      %v2271 = vmul.f32 -0.5, %v2079
      %v2272 = vadd.f32 %v2271, 1.0
      %v2273 = vmul.f32 %v2272, %v2079
      %v2274 = vand.u32 2147483647, %v2079
      %vm2275 = vcmp.lt.f32.partialorder %v2274, 0.0004427343
      %v2276 = vsel %vm2275, %v2273, %v2270
      %v2277 = vadd.f32 %v2081, 1.0
      %v2278 = vlog2.pop %v2277
      %v2279 = vmul.f32 %v2278, 0.6931472
      %v2280 = vmul.f32 -0.5, %v2081
      %v2281 = vadd.f32 %v2280, 1.0
      %v2282 = vmul.f32 %v2281, %v2081
      %v2283 = vand.u32 2147483647, %v2081
      %vm2284 = vcmp.lt.f32.partialorder %v2283, 0.0004427343
      %v2285 = vsel %vm2284, %v2282, %v2279
      %v2286 = vadd.f32 %v2083, 1.0
      %v2287 = vlog2.pop %v2286
      %v2288 = vmul.f32 %v2287, 0.6931472
      %v2289 = vmul.f32 -0.5, %v2083
      %v2290 = vadd.f32 %v2289, 1.0
      %v2291 = vmul.f32 %v2290, %v2083
      %v2292 = vand.u32 2147483647, %v2083
      %vm2293 = vcmp.lt.f32.partialorder %v2292, 0.0004427343
      %v2294 = vsel %vm2293, %v2291, %v2288
      %v2295 = vadd.f32 %v2085, 1.0
      %v2296 = vlog2.pop %v2295
      %v2297 = vmul.f32 %v2296, 0.6931472
      %v2298 = vmul.f32 -0.5, %v2085
      %v2299 = vadd.f32 %v2298, 1.0
      %v2300 = vmul.f32 %v2299, %v2085
      %v2301 = vand.u32 2147483647, %v2085
      %vm2302 = vcmp.lt.f32.partialorder %v2301, 0.0004427343
      %v2303 = vsel %vm2302, %v2300, %v2297
      %v2304 = vadd.f32 %v2087, 1.0
      %v2305 = vlog2.pop %v2304
      %v2306 = vmul.f32 %v2305, 0.6931472
      %v2307 = vmul.f32 -0.5, %v2087
      %v2308 = vadd.f32 %v2307, 1.0
      %v2309 = vmul.f32 %v2308, %v2087
      %v2310 = vand.u32 2147483647, %v2087
      %vm2311 = vcmp.lt.f32.partialorder %v2310, 0.0004427343
      %v2312 = vsel %vm2311, %v2309, %v2306
      %v2313 = vadd.f32 %v2089, 1.0
      %v2314 = vlog2.pop %v2313
      %v2315 = vmul.f32 %v2314, 0.6931472
      %v2316 = vmul.f32 -0.5, %v2089
      %v2317 = vadd.f32 %v2316, 1.0
      %v2318 = vmul.f32 %v2317, %v2089
      %v2319 = vand.u32 2147483647, %v2089
      %vm2320 = vcmp.lt.f32.partialorder %v2319, 0.0004427343
      %v2321 = vsel %vm2320, %v2318, %v2315
      %v2322 = vadd.f32 %v2091, 1.0
      %v2323 = vlog2.pop %v2322
      %v2324 = vmul.f32 %v2323, 0.6931472
      %v2325 = vmul.f32 -0.5, %v2091
      %v2326 = vadd.f32 %v2325, 1.0
      %v2327 = vmul.f32 %v2326, %v2091
      %v2328 = vand.u32 2147483647, %v2091
      %vm2329 = vcmp.lt.f32.partialorder %v2328, 0.0004427343
      %v2330 = vsel %vm2329, %v2327, %v2324
      %v2331 = vadd.f32 %v2093, 1.0
      %v2332 = vlog2.pop %v2331
      %v2333 = vmul.f32 %v2332, 0.6931472
      %v2334 = vmul.f32 -0.5, %v2093
      %v2335 = vadd.f32 %v2334, 1.0
      %v2336 = vmul.f32 %v2335, %v2093
      %v2337 = vand.u32 2147483647, %v2093
      %vm2338 = vcmp.lt.f32.partialorder %v2337, 0.0004427343
      %v2339 = vsel %vm2338, %v2336, %v2333
      %v2340 = vadd.f32 %v2095, 1.0
      %v2341 = vlog2.pop %v2340
      %v2342 = vmul.f32 %v2341, 0.6931472
      %v2343 = vmul.f32 -0.5, %v2095
      %v2344 = vadd.f32 %v2343, 1.0
      %v2345 = vmul.f32 %v2344, %v2095
      %v2346 = vand.u32 2147483647, %v2095
      %vm2347 = vcmp.lt.f32.partialorder %v2346, 0.0004427343
      %v2348 = vsel %vm2347, %v2345, %v2342
      %v2349 = vadd.f32 %v2097, 1.0
      %v2350 = vlog2.pop %v2349
      %v2351 = vmul.f32 %v2350, 0.6931472
      %v2352 = vmul.f32 -0.5, %v2097
      %v2353 = vadd.f32 %v2352, 1.0
      %v2354 = vmul.f32 %v2353, %v2097
      %v2355 = vand.u32 2147483647, %v2097
      %vm2356 = vcmp.lt.f32.partialorder %v2355, 0.0004427343
      %v2357 = vsel %vm2356, %v2354, %v2351
      %v2358 = vadd.f32 %v2099, 1.0
      %v2359 = vlog2.pop %v2358
      %v2360 = vmul.f32 %v2359, 0.6931472
      %v2361 = vmul.f32 -0.5, %v2099
      %v2362 = vadd.f32 %v2361, 1.0
      %v2363 = vmul.f32 %v2362, %v2099
      %v2364 = vand.u32 2147483647, %v2099
      %vm2365 = vcmp.lt.f32.partialorder %v2364, 0.0004427343
      %v2366 = vsel %vm2365, %v2363, %v2360
      %v2367 = vadd.f32 %v2101, 1.0
      %v2368 = vlog2.pop %v2367
      %v2369 = vmul.f32 %v2368, 0.6931472
      %v2370 = vmul.f32 -0.5, %v2101
      %v2371 = vadd.f32 %v2370, 1.0
      %v2372 = vmul.f32 %v2371, %v2101
      %v2373 = vand.u32 2147483647, %v2101
      %vm2374 = vcmp.lt.f32.partialorder %v2373, 0.0004427343
      %v2375 = vsel %vm2374, %v2372, %v2369
      %v2376 = vadd.f32 %v2103, 1.0
      %v2377 = vlog2.pop %v2376
      %v2378 = vmul.f32 %v2377, 0.6931472
      %v2379 = vmul.f32 -0.5, %v2103
      %v2380 = vadd.f32 %v2379, 1.0
      %v2381 = vmul.f32 %v2380, %v2103
      %v2382 = vand.u32 2147483647, %v2103
      %vm2383 = vcmp.lt.f32.partialorder %v2382, 0.0004427343
      %v2384 = vsel %vm2383, %v2381, %v2378
      %v2385 = vadd.f32 %v2105, 1.0
      %v2386 = vlog2.pop %v2385
      %v2387 = vmul.f32 %v2386, 0.6931472
      %v2388 = vmul.f32 -0.5, %v2105
      %v2389 = vadd.f32 %v2388, 1.0
      %v2390 = vmul.f32 %v2389, %v2105
      %v2391 = vand.u32 2147483647, %v2105
      %vm2392 = vcmp.lt.f32.partialorder %v2391, 0.0004427343
      %v2393 = vsel %vm2392, %v2390, %v2387
      %v2394 = vmul.f32 %v2114, 0.01
      %v2395 = vmul.f32 %v2123, 0.01
      %v2396 = vmul.f32 %v2132, 0.01
      %v2397 = vmul.f32 %v2141, 0.01
      %v2398 = vmul.f32 %v2150, 0.01
      %v2399 = vmul.f32 %v2159, 0.01
      %v2400 = vmul.f32 %v2168, 0.01
      %v2401 = vmul.f32 %v2177, 0.01
      %v2402 = vmul.f32 %v2186, 0.01
      %v2403 = vmul.f32 %v2195, 0.01
      %v2404 = vmul.f32 %v2204, 0.01
      %v2405 = vmul.f32 %v2213, 0.01
      %v2406 = vmul.f32 %v2222, 0.01
      %v2407 = vmul.f32 %v2231, 0.01
      %v2408 = vmul.f32 %v2240, 0.01
      %v2409 = vmul.f32 %v2249, 0.01
      %v2410 = vmul.f32 %v2258, 0.01
      %v2411 = vmul.f32 %v2267, 0.01
      %v2412 = vmul.f32 %v2276, 0.01
      %v2413 = vmul.f32 %v2285, 0.01
      %v2414 = vmul.f32 %v2294, 0.01
      %v2415 = vmul.f32 %v2303, 0.01
      %v2416 = vmul.f32 %v2312, 0.01
      %v2417 = vmul.f32 %v2321, 0.01
      %v2418 = vmul.f32 %v2330, 0.01
      %v2419 = vmul.f32 %v2339, 0.01
      %v2420 = vmul.f32 %v2348, 0.01
      %v2421 = vmul.f32 %v2357, 0.01
      %v2422 = vmul.f32 %v2366, 0.01
      %v2423 = vmul.f32 %v2375, 0.01
      %v2424 = vmul.f32 %v2384, 0.01
      %v2425 = vmul.f32 %v2393, 0.01
      %vm2426 = vcmp.gt.f32.partialorder %v1820, 0.2
      %vm2427 = vcmp.gt.f32.partialorder %v1825, 0.2
      %vm2428 = vcmp.gt.f32.partialorder %v1830, 0.2
      %vm2429 = vcmp.gt.f32.partialorder %v1835, 0.2
      %vm2430 = vcmp.gt.f32.partialorder %v1840, 0.2
      %vm2431 = vcmp.gt.f32.partialorder %v1845, 0.2
      %vm2432 = vcmp.gt.f32.partialorder %v1850, 0.2
      %vm2433 = vcmp.gt.f32.partialorder %v1855, 0.2
      %vm2434 = vcmp.gt.f32.partialorder %v1860, 0.2
      %vm2435 = vcmp.gt.f32.partialorder %v1865, 0.2
      %vm2436 = vcmp.gt.f32.partialorder %v1870, 0.2
      %vm2437 = vcmp.gt.f32.partialorder %v1875, 0.2
      %vm2438 = vcmp.gt.f32.partialorder %v1880, 0.2
      %vm2439 = vcmp.gt.f32.partialorder %v1885, 0.2
      %vm2440 = vcmp.gt.f32.partialorder %v1890, 0.2
      %vm2441 = vcmp.gt.f32.partialorder %v1895, 0.2
      %vm2442 = vcmp.gt.f32.partialorder %v1900, 0.2
      %vm2443 = vcmp.gt.f32.partialorder %v1905, 0.2
      %vm2444 = vcmp.gt.f32.partialorder %v1910, 0.2
      %vm2445 = vcmp.gt.f32.partialorder %v1915, 0.2
      %vm2446 = vcmp.gt.f32.partialorder %v1920, 0.2
      %vm2447 = vcmp.gt.f32.partialorder %v1925, 0.2
      %vm2448 = vcmp.gt.f32.partialorder %v1930, 0.2
      %vm2449 = vcmp.gt.f32.partialorder %v1935, 0.2
      %vm2450 = vcmp.gt.f32.partialorder %v1940, 0.2
      %vm2451 = vcmp.gt.f32.partialorder %v1945, 0.2
      %vm2452 = vcmp.gt.f32.partialorder %v1950, 0.2
      %vm2453 = vcmp.gt.f32.partialorder %v1955, 0.2
      %vm2454 = vcmp.gt.f32.partialorder %v1960, 0.2
      %vm2455 = vcmp.gt.f32.partialorder %v1965, 0.2
      %vm2456 = vcmp.gt.f32.partialorder %v1970, 0.2
      %vm2457 = vcmp.gt.f32.partialorder %v1975, 0.2
      %v2458 = vsel %vm2426, %v1820, %v2394
      %v2459 = vsel %vm2427, %v1825, %v2395
      %v2460 = vsel %vm2428, %v1830, %v2396
      %v2461 = vsel %vm2429, %v1835, %v2397
      %v2462 = vsel %vm2430, %v1840, %v2398
      %v2463 = vsel %vm2431, %v1845, %v2399
      %v2464 = vsel %vm2432, %v1850, %v2400
      %v2465 = vsel %vm2433, %v1855, %v2401
      %v2466 = vsel %vm2434, %v1860, %v2402
      %v2467 = vsel %vm2435, %v1865, %v2403
      %v2468 = vsel %vm2436, %v1870, %v2404
      %v2469 = vsel %vm2437, %v1875, %v2405
      %v2470 = vsel %vm2438, %v1880, %v2406
      %v2471 = vsel %vm2439, %v1885, %v2407
      %v2472 = vsel %vm2440, %v1890, %v2408
      %v2473 = vsel %vm2441, %v1895, %v2409
      %v2474 = vsel %vm2442, %v1900, %v2410
      %v2475 = vsel %vm2443, %v1905, %v2411
      %v2476 = vsel %vm2444, %v1910, %v2412
      %v2477 = vsel %vm2445, %v1915, %v2413
      %v2478 = vsel %vm2446, %v1920, %v2414
      %v2479 = vsel %vm2447, %v1925, %v2415
      %v2480 = vsel %vm2448, %v1930, %v2416
      %v2481 = vsel %vm2449, %v1935, %v2417
      %v2482 = vsel %vm2450, %v1940, %v2418
      %v2483 = vsel %vm2451, %v1945, %v2419
      %v2484 = vsel %vm2452, %v1950, %v2420
      %v2485 = vsel %vm2453, %v1955, %v2421
      %v2486 = vsel %vm2454, %v1960, %v2422
      %v2487 = vsel %vm2455, %v1965, %v2423
      %v2488 = vsel %vm2456, %v1970, %v2424
      %v2489 = vsel %vm2457, %v1975, %v2425
      %s2490 = scalar_lea.vmem %s2, 3
      %v2491 = vld [vmem:[%s2490] sm:$0x1]
      %s2492 = scalar_lea.vmem %s1, 384
      %v2493 = vld [vmem:[%s2492] sm:$0xff]
      %v2494 = vld [vmem:[%s2492 + $0x8] sm:$0xff]
      %v2495 = vld [vmem:[%s2492 + $0x10] sm:$0xff]
      %v2496 = vld [vmem:[%s2492 + $0x18] sm:$0xff]
      %v2497 = vld [vmem:[%s2492 + $0x20] sm:$0xff]
      %v2498 = vld [vmem:[%s2492 + $0x28] sm:$0xff]
      %v2499 = vld [vmem:[%s2492 + $0x30] sm:$0xff]
      %v2500 = vld [vmem:[%s2492 + $0x38] sm:$0xff]
      %v2501 = vld [vmem:[%s2492 + $0x40] sm:$0xff]
      %v2502 = vld [vmem:[%s2492 + $0x48] sm:$0xff]
      %v2503 = vld [vmem:[%s2492 + $0x50] sm:$0xff]
      %v2504 = vld [vmem:[%s2492 + $0x58] sm:$0xff]
      %v2505 = vld [vmem:[%s2492 + $0x60] sm:$0xff]
      %v2506 = vld [vmem:[%s2492 + $0x68] sm:$0xff]
      %v2507 = vld [vmem:[%s2492 + $0x70] sm:$0xff]
      %v2508 = vld [vmem:[%s2492 + $0x78] sm:$0xff]
      %v2510 = vlaneseq
      %v2511 = vshrl.u32 %v2510, 7
      %v2512 = vsub.s32 0, %v2511
      %v2513 = vrot.slane %v2491, %v2512
      %2515 = vmatprep.subr.mxu0 0.0
      %2516 = vmatpush1.msra.mxu0 %v2508
      %2517 = vmatprep.subr.mxu0 0.0
      %2518 = vmatpush1.msra.mxu0 %v2507
      %2519 = vmatprep.subr.mxu0 0.0
      %2520 = vmatpush1.msra.mxu0 %v2506
      %2521 = vmatprep.subr.mxu0 0.0
      %2522 = vmatpush1.msra.mxu0 %v2505
      %2523 = vmatprep.subr.mxu0 0.0
      %2524 = vmatpush1.msra.mxu0 %v2504
      %2525 = vmatprep.subr.mxu0 0.0
      %2526 = vmatpush1.msra.mxu0 %v2503
      %2527 = vmatprep.subr.mxu0 0.0
      %2528 = vmatpush1.msra.mxu0 %v2502
      %2529 = vmatprep.subr.mxu0 0.0
      %2530 = vmatpush1.msra.mxu0 %v2501
      %2531 = vmatprep.subr.mxu0 0.0
      %2532 = vmatpush1.msra.mxu0 %v2500
      %2533 = vmatprep.subr.mxu0 0.0
      %2534 = vmatpush1.msra.mxu0 %v2499
      %2535 = vmatprep.subr.mxu0 0.0
      %2536 = vmatpush1.msra.mxu0 %v2498
      %2537 = vmatprep.subr.mxu0 0.0
      %2538 = vmatpush1.msra.mxu0 %v2497
      %2539 = vmatprep.subr.mxu0 0.0
      %2540 = vmatpush1.msra.mxu0 %v2496
      %2541 = vmatprep.subr.mxu0 0.0
      %2542 = vmatpush1.msra.mxu0 %v2495
      %2543 = vmatprep.subr.mxu0 0.0
      %2544 = vmatpush1.msra.mxu0 %v2494
      %2545 = vmatprep.subr.mxu0 0.0
      %2546 = vmatpush1.msra.mxu0 %v2493
      %2547 = vmatprep.subr.mxu0 0.0
      %2548 = vmatpush2.msra.mxu0 0.0
      %2549 = vmatprep.subr.mxu0 0.0
      %2550 = vmatpush2.msra.mxu0 0.0
      %2551 = vmatprep.subr.mxu0 0.0
      %2552 = vmatpush2.msra.mxu0 0.0
      %2553 = vmatprep.subr.mxu0 0.0
      %2554 = vmatpush2.msra.mxu0 0.0
      %2555 = vmatprep.subr.mxu0 0.0
      %2556 = vmatpush2.msra.mxu0 0.0
      %2557 = vmatprep.subr.mxu0 0.0
      %2558 = vmatpush2.msra.mxu0 0.0
      %2559 = vmatprep.subr.mxu0 0.0
      %2560 = vmatpush2.msra.mxu0 0.0
      %2561 = vmatprep.subr.mxu0 0.0
      %2562 = vmatpush2.msra.mxu0 0.0
      %2563 = vmatprep.subr.mxu0 0.0
      %2564 = vmatpush2.msra.mxu0 0.0
      %2565 = vmatprep.subr.mxu0 0.0
      %2566 = vmatpush2.msra.mxu0 0.0
      %2567 = vmatprep.subr.mxu0 0.0
      %2568 = vmatpush2.msra.mxu0 0.0
      %2569 = vmatprep.subr.mxu0 0.0
      %2570 = vmatpush2.msra.mxu0 0.0
      %2571 = vmatprep.subr.mxu0 0.0
      %2572 = vmatpush2.msra.mxu0 0.0
      %2573 = vmatprep.subr.mxu0 0.0
      %2574 = vmatpush2.msra.mxu0 0.0
      %2575 = vmatprep.subr.mxu0 0.0
      %2576 = vmatpush2.msra.mxu0 0.0
      %2577 = vmatprep.subr.mxu0 0.0
      %2578 = vmatpush2.msra.mxu0 0.0
      %2579 = vmatprep.mubr.f32.mxu0 0.0
      %2580 = vmatmul.mubr.f32.gmra.mxu0 %v2458
      %v2581 = vpop.f32.mrf.mxu0
      %v2582 = vadd.f32 %v2513, %v2581
      %v2583 = vpop.f32.mrf.mxu0
      %2584 = vmatprep.mubr.f32.mxu0 0.0
      %2585 = vmatmul.mubr.f32.gmra.mxu0 %v2459
      %v2586 = vpop.f32.mrf.mxu0
      %v2587 = vadd.f32 %v2513, %v2586
      %v2588 = vpop.f32.mrf.mxu0
      %2589 = vmatprep.mubr.f32.mxu0 0.0
      %2590 = vmatmul.mubr.f32.gmra.mxu0 %v2460
      %v2591 = vpop.f32.mrf.mxu0
      %v2592 = vadd.f32 %v2513, %v2591
      %v2593 = vpop.f32.mrf.mxu0
      %2594 = vmatprep.mubr.f32.mxu0 0.0
      %2595 = vmatmul.mubr.f32.gmra.mxu0 %v2461
      %v2596 = vpop.f32.mrf.mxu0
      %v2597 = vadd.f32 %v2513, %v2596
      %v2598 = vpop.f32.mrf.mxu0
      %2599 = vmatprep.mubr.f32.mxu0 0.0
      %2600 = vmatmul.mubr.f32.gmra.mxu0 %v2462
      %v2601 = vpop.f32.mrf.mxu0
      %v2602 = vadd.f32 %v2513, %v2601
      %v2603 = vpop.f32.mrf.mxu0
      %2604 = vmatprep.mubr.f32.mxu0 0.0
      %2605 = vmatmul.mubr.f32.gmra.mxu0 %v2463
      %v2606 = vpop.f32.mrf.mxu0
      %v2607 = vadd.f32 %v2513, %v2606
      %v2608 = vpop.f32.mrf.mxu0
      %2609 = vmatprep.mubr.f32.mxu0 0.0
      %2610 = vmatmul.mubr.f32.gmra.mxu0 %v2464
      %v2611 = vpop.f32.mrf.mxu0
      %v2612 = vadd.f32 %v2513, %v2611
      %v2613 = vpop.f32.mrf.mxu0
      %2614 = vmatprep.mubr.f32.mxu0 0.0
      %2615 = vmatmul.mubr.f32.gmra.mxu0 %v2465
      %v2616 = vpop.f32.mrf.mxu0
      %v2617 = vadd.f32 %v2513, %v2616
      %v2618 = vpop.f32.mrf.mxu0
      %2619 = vmatprep.mubr.f32.mxu0 0.0
      %2620 = vmatmul.mubr.f32.gmra.mxu0 %v2466
      %v2621 = vpop.f32.mrf.mxu0
      %v2622 = vadd.f32 %v2513, %v2621
      %v2623 = vpop.f32.mrf.mxu0
      %2624 = vmatprep.mubr.f32.mxu0 0.0
      %2625 = vmatmul.mubr.f32.gmra.mxu0 %v2467
      %v2626 = vpop.f32.mrf.mxu0
      %v2627 = vadd.f32 %v2513, %v2626
      %v2628 = vpop.f32.mrf.mxu0
      %2629 = vmatprep.mubr.f32.mxu0 0.0
      %2630 = vmatmul.mubr.f32.gmra.mxu0 %v2468
      %v2631 = vpop.f32.mrf.mxu0
      %v2632 = vadd.f32 %v2513, %v2631
      %v2633 = vpop.f32.mrf.mxu0
      %2634 = vmatprep.mubr.f32.mxu0 0.0
      %2635 = vmatmul.mubr.f32.gmra.mxu0 %v2469
      %v2636 = vpop.f32.mrf.mxu0
      %v2637 = vadd.f32 %v2513, %v2636
      %v2638 = vpop.f32.mrf.mxu0
      %2639 = vmatprep.mubr.f32.mxu0 0.0
      %2640 = vmatmul.mubr.f32.gmra.mxu0 %v2470
      %v2641 = vpop.f32.mrf.mxu0
      %v2642 = vadd.f32 %v2513, %v2641
      %v2643 = vpop.f32.mrf.mxu0
      %2644 = vmatprep.mubr.f32.mxu0 0.0
      %2645 = vmatmul.mubr.f32.gmra.mxu0 %v2471
      %v2646 = vpop.f32.mrf.mxu0
      %v2647 = vadd.f32 %v2513, %v2646
      %v2648 = vpop.f32.mrf.mxu0
      %2649 = vmatprep.mubr.f32.mxu0 0.0
      %2650 = vmatmul.mubr.f32.gmra.mxu0 %v2472
      %v2651 = vpop.f32.mrf.mxu0
      %v2652 = vadd.f32 %v2513, %v2651
      %v2653 = vpop.f32.mrf.mxu0
      %2654 = vmatprep.mubr.f32.mxu0 0.0
      %2655 = vmatmul.mubr.f32.gmra.mxu0 %v2473
      %v2656 = vpop.f32.mrf.mxu0
      %v2657 = vadd.f32 %v2513, %v2656
      %v2658 = vpop.f32.mrf.mxu0
      %2659 = vmatprep.mubr.f32.mxu0 0.0
      %2660 = vmatmul.mubr.f32.gmra.mxu0 %v2474
      %v2661 = vpop.f32.mrf.mxu0
      %v2662 = vadd.f32 %v2513, %v2661
      %v2663 = vpop.f32.mrf.mxu0
      %2664 = vmatprep.mubr.f32.mxu0 0.0
      %2665 = vmatmul.mubr.f32.gmra.mxu0 %v2475
      %v2666 = vpop.f32.mrf.mxu0
      %v2667 = vadd.f32 %v2513, %v2666
      %v2668 = vpop.f32.mrf.mxu0
      %2669 = vmatprep.mubr.f32.mxu0 0.0
      %2670 = vmatmul.mubr.f32.gmra.mxu0 %v2476
      %v2671 = vpop.f32.mrf.mxu0
      %v2672 = vadd.f32 %v2513, %v2671
      %v2673 = vpop.f32.mrf.mxu0
      %2674 = vmatprep.mubr.f32.mxu0 0.0
      %2675 = vmatmul.mubr.f32.gmra.mxu0 %v2477
      %v2676 = vpop.f32.mrf.mxu0
      %v2677 = vadd.f32 %v2513, %v2676
      %v2678 = vpop.f32.mrf.mxu0
      %2679 = vmatprep.mubr.f32.mxu0 0.0
      %2680 = vmatmul.mubr.f32.gmra.mxu0 %v2478
      %v2681 = vpop.f32.mrf.mxu0
      %v2682 = vadd.f32 %v2513, %v2681
      %v2683 = vpop.f32.mrf.mxu0
      %2684 = vmatprep.mubr.f32.mxu0 0.0
      %2685 = vmatmul.mubr.f32.gmra.mxu0 %v2479
      %v2686 = vpop.f32.mrf.mxu0
      %v2687 = vadd.f32 %v2513, %v2686
      %v2688 = vpop.f32.mrf.mxu0
      %2689 = vmatprep.mubr.f32.mxu0 0.0
      %2690 = vmatmul.mubr.f32.gmra.mxu0 %v2480
      %v2691 = vpop.f32.mrf.mxu0
      %v2692 = vadd.f32 %v2513, %v2691
      %v2693 = vpop.f32.mrf.mxu0
      %2694 = vmatprep.mubr.f32.mxu0 0.0
      %2695 = vmatmul.mubr.f32.gmra.mxu0 %v2481
      %v2696 = vpop.f32.mrf.mxu0
      %v2697 = vadd.f32 %v2513, %v2696
      %v2698 = vpop.f32.mrf.mxu0
      %2699 = vmatprep.mubr.f32.mxu0 0.0
      %2700 = vmatmul.mubr.f32.gmra.mxu0 %v2482
      %v2701 = vpop.f32.mrf.mxu0
      %v2702 = vadd.f32 %v2513, %v2701
      %v2703 = vpop.f32.mrf.mxu0
      %2704 = vmatprep.mubr.f32.mxu0 0.0
      %2705 = vmatmul.mubr.f32.gmra.mxu0 %v2483
      %v2706 = vpop.f32.mrf.mxu0
      %v2707 = vadd.f32 %v2513, %v2706
      %v2708 = vpop.f32.mrf.mxu0
      %2709 = vmatprep.mubr.f32.mxu0 0.0
      %2710 = vmatmul.mubr.f32.gmra.mxu0 %v2484
      %v2711 = vpop.f32.mrf.mxu0
      %v2712 = vadd.f32 %v2513, %v2711
      %v2713 = vpop.f32.mrf.mxu0
      %2714 = vmatprep.mubr.f32.mxu0 0.0
      %2715 = vmatmul.mubr.f32.gmra.mxu0 %v2485
      %v2716 = vpop.f32.mrf.mxu0
      %v2717 = vadd.f32 %v2513, %v2716
      %v2718 = vpop.f32.mrf.mxu0
      %2719 = vmatprep.mubr.f32.mxu0 0.0
      %2720 = vmatmul.mubr.f32.gmra.mxu0 %v2486
      %v2721 = vpop.f32.mrf.mxu0
      %v2722 = vadd.f32 %v2513, %v2721
      %v2723 = vpop.f32.mrf.mxu0
      %2724 = vmatprep.mubr.f32.mxu0 0.0
      %2725 = vmatmul.mubr.f32.gmra.mxu0 %v2487
      %v2726 = vpop.f32.mrf.mxu0
      %v2727 = vadd.f32 %v2513, %v2726
      %v2728 = vpop.f32.mrf.mxu0
      %2729 = vmatprep.mubr.f32.mxu0 0.0
      %2730 = vmatmul.mubr.f32.gmra.mxu0 %v2488
      %v2731 = vpop.f32.mrf.mxu0
      %v2732 = vadd.f32 %v2513, %v2731
      %v2733 = vpop.f32.mrf.mxu0
      %2734 = vmatprep.mubr.f32.mxu0 0.0
      %2735 = vmatmul.mubr.f32.gmra.mxu0 %v2489
      %v2736 = vpop.f32.mrf.mxu0
      %v2737 = vadd.f32 %v2513, %v2736
      %v2738 = vpop.f32.mrf.mxu0
      %2739 = vdwg.mxu0
      %v2740 = vmin.f32 %v2582, 0.2
      %v2741 = vmin.f32 %v2587, 0.2
      %v2742 = vmin.f32 %v2592, 0.2
      %v2743 = vmin.f32 %v2597, 0.2
      %v2744 = vmin.f32 %v2602, 0.2
      %v2745 = vmin.f32 %v2607, 0.2
      %v2746 = vmin.f32 %v2612, 0.2
      %v2747 = vmin.f32 %v2617, 0.2
      %v2748 = vmin.f32 %v2622, 0.2
      %v2749 = vmin.f32 %v2627, 0.2
      %v2750 = vmin.f32 %v2632, 0.2
      %v2751 = vmin.f32 %v2637, 0.2
      %v2752 = vmin.f32 %v2642, 0.2
      %v2753 = vmin.f32 %v2647, 0.2
      %v2754 = vmin.f32 %v2652, 0.2
      %v2755 = vmin.f32 %v2657, 0.2
      %v2756 = vmin.f32 %v2662, 0.2
      %v2757 = vmin.f32 %v2667, 0.2
      %v2758 = vmin.f32 %v2672, 0.2
      %v2759 = vmin.f32 %v2677, 0.2
      %v2760 = vmin.f32 %v2682, 0.2
      %v2761 = vmin.f32 %v2687, 0.2
      %v2762 = vmin.f32 %v2692, 0.2
      %v2763 = vmin.f32 %v2697, 0.2
      %v2764 = vmin.f32 %v2702, 0.2
      %v2765 = vmin.f32 %v2707, 0.2
      %v2766 = vmin.f32 %v2712, 0.2
      %v2767 = vmin.f32 %v2717, 0.2
      %v2768 = vmin.f32 %v2722, 0.2
      %v2769 = vmin.f32 %v2727, 0.2
      %v2770 = vmin.f32 %v2732, 0.2
      %v2771 = vmin.f32 %v2737, 0.2
      %v2772 = vmul.f32 %v2740, 100.0
      %v2773 = vmul.f32 %v2741, 100.0
      %v2774 = vmul.f32 %v2742, 100.0
      %v2775 = vmul.f32 %v2743, 100.0
      %v2776 = vmul.f32 %v2744, 100.0
      %v2777 = vmul.f32 %v2745, 100.0
      %v2778 = vmul.f32 %v2746, 100.0
      %v2779 = vmul.f32 %v2747, 100.0
      %v2780 = vmul.f32 %v2748, 100.0
      %v2781 = vmul.f32 %v2749, 100.0
      %v2782 = vmul.f32 %v2750, 100.0
      %v2783 = vmul.f32 %v2751, 100.0
      %v2784 = vmul.f32 %v2752, 100.0
      %v2785 = vmul.f32 %v2753, 100.0
      %v2786 = vmul.f32 %v2754, 100.0
      %v2787 = vmul.f32 %v2755, 100.0
      %v2788 = vmul.f32 %v2756, 100.0
      %v2789 = vmul.f32 %v2757, 100.0
      %v2790 = vmul.f32 %v2758, 100.0
      %v2791 = vmul.f32 %v2759, 100.0
      %v2792 = vmul.f32 %v2760, 100.0
      %v2793 = vmul.f32 %v2761, 100.0
      %v2794 = vmul.f32 %v2762, 100.0
      %v2795 = vmul.f32 %v2763, 100.0
      %v2796 = vmul.f32 %v2764, 100.0
      %v2797 = vmul.f32 %v2765, 100.0
      %v2798 = vmul.f32 %v2766, 100.0
      %v2799 = vmul.f32 %v2767, 100.0
      %v2800 = vmul.f32 %v2768, 100.0
      %v2801 = vmul.f32 %v2769, 100.0
      %v2802 = vmul.f32 %v2770, 100.0
      %v2803 = vmul.f32 %v2771, 100.0
      %v2804 = vmul.f32 %v2772, 1.442695
      %v2805 = vpow.pop %v2804
      %v2806 = vmul.f32 %v2773, 1.442695
      %v2807 = vpow.pop %v2806
      %v2808 = vmul.f32 %v2774, 1.442695
      %v2809 = vpow.pop %v2808
      %v2810 = vmul.f32 %v2775, 1.442695
      %v2811 = vpow.pop %v2810
      %v2812 = vmul.f32 %v2776, 1.442695
      %v2813 = vpow.pop %v2812
      %v2814 = vmul.f32 %v2777, 1.442695
      %v2815 = vpow.pop %v2814
      %v2816 = vmul.f32 %v2778, 1.442695
      %v2817 = vpow.pop %v2816
      %v2818 = vmul.f32 %v2779, 1.442695
      %v2819 = vpow.pop %v2818
      %v2820 = vmul.f32 %v2780, 1.442695
      %v2821 = vpow.pop %v2820
      %v2822 = vmul.f32 %v2781, 1.442695
      %v2823 = vpow.pop %v2822
      %v2824 = vmul.f32 %v2782, 1.442695
      %v2825 = vpow.pop %v2824
      %v2826 = vmul.f32 %v2783, 1.442695
      %v2827 = vpow.pop %v2826
      %v2828 = vmul.f32 %v2784, 1.442695
      %v2829 = vpow.pop %v2828
      %v2830 = vmul.f32 %v2785, 1.442695
      %v2831 = vpow.pop %v2830
      %v2832 = vmul.f32 %v2786, 1.442695
      %v2833 = vpow.pop %v2832
      %v2834 = vmul.f32 %v2787, 1.442695
      %v2835 = vpow.pop %v2834
      %v2836 = vmul.f32 %v2788, 1.442695
      %v2837 = vpow.pop %v2836
      %v2838 = vmul.f32 %v2789, 1.442695
      %v2839 = vpow.pop %v2838
      %v2840 = vmul.f32 %v2790, 1.442695
      %v2841 = vpow.pop %v2840
      %v2842 = vmul.f32 %v2791, 1.442695
      %v2843 = vpow.pop %v2842
      %v2844 = vmul.f32 %v2792, 1.442695
      %v2845 = vpow.pop %v2844
      %v2846 = vmul.f32 %v2793, 1.442695
      %v2847 = vpow.pop %v2846
      %v2848 = vmul.f32 %v2794, 1.442695
      %v2849 = vpow.pop %v2848
      %v2850 = vmul.f32 %v2795, 1.442695
      %v2851 = vpow.pop %v2850
      %v2852 = vmul.f32 %v2796, 1.442695
      %v2853 = vpow.pop %v2852
      %v2854 = vmul.f32 %v2797, 1.442695
      %v2855 = vpow.pop %v2854
      %v2856 = vmul.f32 %v2798, 1.442695
      %v2857 = vpow.pop %v2856
      %v2858 = vmul.f32 %v2799, 1.442695
      %v2859 = vpow.pop %v2858
      %v2860 = vmul.f32 %v2800, 1.442695
      %v2861 = vpow.pop %v2860
      %v2862 = vmul.f32 %v2801, 1.442695
      %v2863 = vpow.pop %v2862
      %v2864 = vmul.f32 %v2802, 1.442695
      %v2865 = vpow.pop %v2864
      %v2866 = vmul.f32 %v2803, 1.442695
      %v2867 = vpow.pop %v2866
      %v2868 = vadd.f32 %v2805, 1.0
      %v2869 = vlog2.pop %v2868
      %v2870 = vmul.f32 %v2869, 0.6931472
      %v2871 = vmul.f32 -0.5, %v2805
      %v2872 = vadd.f32 %v2871, 1.0
      %v2873 = vmul.f32 %v2872, %v2805
      %v2874 = vand.u32 2147483647, %v2805
      %vm2875 = vcmp.lt.f32.partialorder %v2874, 0.0004427343
      %v2876 = vsel %vm2875, %v2873, %v2870
      %v2877 = vadd.f32 %v2807, 1.0
      %v2878 = vlog2.pop %v2877
      %v2879 = vmul.f32 %v2878, 0.6931472
      %v2880 = vmul.f32 -0.5, %v2807
      %v2881 = vadd.f32 %v2880, 1.0
      %v2882 = vmul.f32 %v2881, %v2807
      %v2883 = vand.u32 2147483647, %v2807
      %vm2884 = vcmp.lt.f32.partialorder %v2883, 0.0004427343
      %v2885 = vsel %vm2884, %v2882, %v2879
      %v2886 = vadd.f32 %v2809, 1.0
      %v2887 = vlog2.pop %v2886
      %v2888 = vmul.f32 %v2887, 0.6931472
      %v2889 = vmul.f32 -0.5, %v2809
      %v2890 = vadd.f32 %v2889, 1.0
      %v2891 = vmul.f32 %v2890, %v2809
      %v2892 = vand.u32 2147483647, %v2809
      %vm2893 = vcmp.lt.f32.partialorder %v2892, 0.0004427343
      %v2894 = vsel %vm2893, %v2891, %v2888
      %v2895 = vadd.f32 %v2811, 1.0
      %v2896 = vlog2.pop %v2895
      %v2897 = vmul.f32 %v2896, 0.6931472
      %v2898 = vmul.f32 -0.5, %v2811
      %v2899 = vadd.f32 %v2898, 1.0
      %v2900 = vmul.f32 %v2899, %v2811
      %v2901 = vand.u32 2147483647, %v2811
      %vm2902 = vcmp.lt.f32.partialorder %v2901, 0.0004427343
      %v2903 = vsel %vm2902, %v2900, %v2897
      %v2904 = vadd.f32 %v2813, 1.0
      %v2905 = vlog2.pop %v2904
      %v2906 = vmul.f32 %v2905, 0.6931472
      %v2907 = vmul.f32 -0.5, %v2813
      %v2908 = vadd.f32 %v2907, 1.0
      %v2909 = vmul.f32 %v2908, %v2813
      %v2910 = vand.u32 2147483647, %v2813
      %vm2911 = vcmp.lt.f32.partialorder %v2910, 0.0004427343
      %v2912 = vsel %vm2911, %v2909, %v2906
      %v2913 = vadd.f32 %v2815, 1.0
      %v2914 = vlog2.pop %v2913
      %v2915 = vmul.f32 %v2914, 0.6931472
      %v2916 = vmul.f32 -0.5, %v2815
      %v2917 = vadd.f32 %v2916, 1.0
      %v2918 = vmul.f32 %v2917, %v2815
      %v2919 = vand.u32 2147483647, %v2815
      %vm2920 = vcmp.lt.f32.partialorder %v2919, 0.0004427343
      %v2921 = vsel %vm2920, %v2918, %v2915
      %v2922 = vadd.f32 %v2817, 1.0
      %v2923 = vlog2.pop %v2922
      %v2924 = vmul.f32 %v2923, 0.6931472
      %v2925 = vmul.f32 -0.5, %v2817
      %v2926 = vadd.f32 %v2925, 1.0
      %v2927 = vmul.f32 %v2926, %v2817
      %v2928 = vand.u32 2147483647, %v2817
      %vm2929 = vcmp.lt.f32.partialorder %v2928, 0.0004427343
      %v2930 = vsel %vm2929, %v2927, %v2924
      %v2931 = vadd.f32 %v2819, 1.0
      %v2932 = vlog2.pop %v2931
      %v2933 = vmul.f32 %v2932, 0.6931472
      %v2934 = vmul.f32 -0.5, %v2819
      %v2935 = vadd.f32 %v2934, 1.0
      %v2936 = vmul.f32 %v2935, %v2819
      %v2937 = vand.u32 2147483647, %v2819
      %vm2938 = vcmp.lt.f32.partialorder %v2937, 0.0004427343
      %v2939 = vsel %vm2938, %v2936, %v2933
      %v2940 = vadd.f32 %v2821, 1.0
      %v2941 = vlog2.pop %v2940
      %v2942 = vmul.f32 %v2941, 0.6931472
      %v2943 = vmul.f32 -0.5, %v2821
      %v2944 = vadd.f32 %v2943, 1.0
      %v2945 = vmul.f32 %v2944, %v2821
      %v2946 = vand.u32 2147483647, %v2821
      %vm2947 = vcmp.lt.f32.partialorder %v2946, 0.0004427343
      %v2948 = vsel %vm2947, %v2945, %v2942
      %v2949 = vadd.f32 %v2823, 1.0
      %v2950 = vlog2.pop %v2949
      %v2951 = vmul.f32 %v2950, 0.6931472
      %v2952 = vmul.f32 -0.5, %v2823
      %v2953 = vadd.f32 %v2952, 1.0
      %v2954 = vmul.f32 %v2953, %v2823
      %v2955 = vand.u32 2147483647, %v2823
      %vm2956 = vcmp.lt.f32.partialorder %v2955, 0.0004427343
      %v2957 = vsel %vm2956, %v2954, %v2951
      %v2958 = vadd.f32 %v2825, 1.0
      %v2959 = vlog2.pop %v2958
      %v2960 = vmul.f32 %v2959, 0.6931472
      %v2961 = vmul.f32 -0.5, %v2825
      %v2962 = vadd.f32 %v2961, 1.0
      %v2963 = vmul.f32 %v2962, %v2825
      %v2964 = vand.u32 2147483647, %v2825
      %vm2965 = vcmp.lt.f32.partialorder %v2964, 0.0004427343
      %v2966 = vsel %vm2965, %v2963, %v2960
      %v2967 = vadd.f32 %v2827, 1.0
      %v2968 = vlog2.pop %v2967
      %v2969 = vmul.f32 %v2968, 0.6931472
      %v2970 = vmul.f32 -0.5, %v2827
      %v2971 = vadd.f32 %v2970, 1.0
      %v2972 = vmul.f32 %v2971, %v2827
      %v2973 = vand.u32 2147483647, %v2827
      %vm2974 = vcmp.lt.f32.partialorder %v2973, 0.0004427343
      %v2975 = vsel %vm2974, %v2972, %v2969
      %v2976 = vadd.f32 %v2829, 1.0
      %v2977 = vlog2.pop %v2976
      %v2978 = vmul.f32 %v2977, 0.6931472
      %v2979 = vmul.f32 -0.5, %v2829
      %v2980 = vadd.f32 %v2979, 1.0
      %v2981 = vmul.f32 %v2980, %v2829
      %v2982 = vand.u32 2147483647, %v2829
      %vm2983 = vcmp.lt.f32.partialorder %v2982, 0.0004427343
      %v2984 = vsel %vm2983, %v2981, %v2978
      %v2985 = vadd.f32 %v2831, 1.0
      %v2986 = vlog2.pop %v2985
      %v2987 = vmul.f32 %v2986, 0.6931472
      %v2988 = vmul.f32 -0.5, %v2831
      %v2989 = vadd.f32 %v2988, 1.0
      %v2990 = vmul.f32 %v2989, %v2831
      %v2991 = vand.u32 2147483647, %v2831
      %vm2992 = vcmp.lt.f32.partialorder %v2991, 0.0004427343
      %v2993 = vsel %vm2992, %v2990, %v2987
      %v2994 = vadd.f32 %v2833, 1.0
      %v2995 = vlog2.pop %v2994
      %v2996 = vmul.f32 %v2995, 0.6931472
      %v2997 = vmul.f32 -0.5, %v2833
      %v2998 = vadd.f32 %v2997, 1.0
      %v2999 = vmul.f32 %v2998, %v2833
      %v3000 = vand.u32 2147483647, %v2833
      %vm3001 = vcmp.lt.f32.partialorder %v3000, 0.0004427343
      %v3002 = vsel %vm3001, %v2999, %v2996
      %v3003 = vadd.f32 %v2835, 1.0
      %v3004 = vlog2.pop %v3003
      %v3005 = vmul.f32 %v3004, 0.6931472
      %v3006 = vmul.f32 -0.5, %v2835
      %v3007 = vadd.f32 %v3006, 1.0
      %v3008 = vmul.f32 %v3007, %v2835
      %v3009 = vand.u32 2147483647, %v2835
      %vm3010 = vcmp.lt.f32.partialorder %v3009, 0.0004427343
      %v3011 = vsel %vm3010, %v3008, %v3005
      %v3012 = vadd.f32 %v2837, 1.0
      %v3013 = vlog2.pop %v3012
      %v3014 = vmul.f32 %v3013, 0.6931472
      %v3015 = vmul.f32 -0.5, %v2837
      %v3016 = vadd.f32 %v3015, 1.0
      %v3017 = vmul.f32 %v3016, %v2837
      %v3018 = vand.u32 2147483647, %v2837
      %vm3019 = vcmp.lt.f32.partialorder %v3018, 0.0004427343
      %v3020 = vsel %vm3019, %v3017, %v3014
      %v3021 = vadd.f32 %v2839, 1.0
      %v3022 = vlog2.pop %v3021
      %v3023 = vmul.f32 %v3022, 0.6931472
      %v3024 = vmul.f32 -0.5, %v2839
      %v3025 = vadd.f32 %v3024, 1.0
      %v3026 = vmul.f32 %v3025, %v2839
      %v3027 = vand.u32 2147483647, %v2839
      %vm3028 = vcmp.lt.f32.partialorder %v3027, 0.0004427343
      %v3029 = vsel %vm3028, %v3026, %v3023
      %v3030 = vadd.f32 %v2841, 1.0
      %v3031 = vlog2.pop %v3030
      %v3032 = vmul.f32 %v3031, 0.6931472
      %v3033 = vmul.f32 -0.5, %v2841
      %v3034 = vadd.f32 %v3033, 1.0
      %v3035 = vmul.f32 %v3034, %v2841
      %v3036 = vand.u32 2147483647, %v2841
      %vm3037 = vcmp.lt.f32.partialorder %v3036, 0.0004427343
      %v3038 = vsel %vm3037, %v3035, %v3032
      %v3039 = vadd.f32 %v2843, 1.0
      %v3040 = vlog2.pop %v3039
      %v3041 = vmul.f32 %v3040, 0.6931472
      %v3042 = vmul.f32 -0.5, %v2843
      %v3043 = vadd.f32 %v3042, 1.0
      %v3044 = vmul.f32 %v3043, %v2843
      %v3045 = vand.u32 2147483647, %v2843
      %vm3046 = vcmp.lt.f32.partialorder %v3045, 0.0004427343
      %v3047 = vsel %vm3046, %v3044, %v3041
      %v3048 = vadd.f32 %v2845, 1.0
      %v3049 = vlog2.pop %v3048
      %v3050 = vmul.f32 %v3049, 0.6931472
      %v3051 = vmul.f32 -0.5, %v2845
      %v3052 = vadd.f32 %v3051, 1.0
      %v3053 = vmul.f32 %v3052, %v2845
      %v3054 = vand.u32 2147483647, %v2845
      %vm3055 = vcmp.lt.f32.partialorder %v3054, 0.0004427343
      %v3056 = vsel %vm3055, %v3053, %v3050
      %v3057 = vadd.f32 %v2847, 1.0
      %v3058 = vlog2.pop %v3057
      %v3059 = vmul.f32 %v3058, 0.6931472
      %v3060 = vmul.f32 -0.5, %v2847
      %v3061 = vadd.f32 %v3060, 1.0
      %v3062 = vmul.f32 %v3061, %v2847
      %v3063 = vand.u32 2147483647, %v2847
      %vm3064 = vcmp.lt.f32.partialorder %v3063, 0.0004427343
      %v3065 = vsel %vm3064, %v3062, %v3059
      %v3066 = vadd.f32 %v2849, 1.0
      %v3067 = vlog2.pop %v3066
      %v3068 = vmul.f32 %v3067, 0.6931472
      %v3069 = vmul.f32 -0.5, %v2849
      %v3070 = vadd.f32 %v3069, 1.0
      %v3071 = vmul.f32 %v3070, %v2849
      %v3072 = vand.u32 2147483647, %v2849
      %vm3073 = vcmp.lt.f32.partialorder %v3072, 0.0004427343
      %v3074 = vsel %vm3073, %v3071, %v3068
      %v3075 = vadd.f32 %v2851, 1.0
      %v3076 = vlog2.pop %v3075
      %v3077 = vmul.f32 %v3076, 0.6931472
      %v3078 = vmul.f32 -0.5, %v2851
      %v3079 = vadd.f32 %v3078, 1.0
      %v3080 = vmul.f32 %v3079, %v2851
      %v3081 = vand.u32 2147483647, %v2851
      %vm3082 = vcmp.lt.f32.partialorder %v3081, 0.0004427343
      %v3083 = vsel %vm3082, %v3080, %v3077
      %v3084 = vadd.f32 %v2853, 1.0
      %v3085 = vlog2.pop %v3084
      %v3086 = vmul.f32 %v3085, 0.6931472
      %v3087 = vmul.f32 -0.5, %v2853
      %v3088 = vadd.f32 %v3087, 1.0
      %v3089 = vmul.f32 %v3088, %v2853
      %v3090 = vand.u32 2147483647, %v2853
      %vm3091 = vcmp.lt.f32.partialorder %v3090, 0.0004427343
      %v3092 = vsel %vm3091, %v3089, %v3086
      %v3093 = vadd.f32 %v2855, 1.0
      %v3094 = vlog2.pop %v3093
      %v3095 = vmul.f32 %v3094, 0.6931472
      %v3096 = vmul.f32 -0.5, %v2855
      %v3097 = vadd.f32 %v3096, 1.0
      %v3098 = vmul.f32 %v3097, %v2855
      %v3099 = vand.u32 2147483647, %v2855
      %vm3100 = vcmp.lt.f32.partialorder %v3099, 0.0004427343
      %v3101 = vsel %vm3100, %v3098, %v3095
      %v3102 = vadd.f32 %v2857, 1.0
      %v3103 = vlog2.pop %v3102
      %v3104 = vmul.f32 %v3103, 0.6931472
      %v3105 = vmul.f32 -0.5, %v2857
      %v3106 = vadd.f32 %v3105, 1.0
      %v3107 = vmul.f32 %v3106, %v2857
      %v3108 = vand.u32 2147483647, %v2857
      %vm3109 = vcmp.lt.f32.partialorder %v3108, 0.0004427343
      %v3110 = vsel %vm3109, %v3107, %v3104
      %v3111 = vadd.f32 %v2859, 1.0
      %v3112 = vlog2.pop %v3111
      %v3113 = vmul.f32 %v3112, 0.6931472
      %v3114 = vmul.f32 -0.5, %v2859
      %v3115 = vadd.f32 %v3114, 1.0
      %v3116 = vmul.f32 %v3115, %v2859
      %v3117 = vand.u32 2147483647, %v2859
      %vm3118 = vcmp.lt.f32.partialorder %v3117, 0.0004427343
      %v3119 = vsel %vm3118, %v3116, %v3113
      %v3120 = vadd.f32 %v2861, 1.0
      %v3121 = vlog2.pop %v3120
      %v3122 = vmul.f32 %v3121, 0.6931472
      %v3123 = vmul.f32 -0.5, %v2861
      %v3124 = vadd.f32 %v3123, 1.0
      %v3125 = vmul.f32 %v3124, %v2861
      %v3126 = vand.u32 2147483647, %v2861
      %vm3127 = vcmp.lt.f32.partialorder %v3126, 0.0004427343
      %v3128 = vsel %vm3127, %v3125, %v3122
      %v3129 = vadd.f32 %v2863, 1.0
      %v3130 = vlog2.pop %v3129
      %v3131 = vmul.f32 %v3130, 0.6931472
      %v3132 = vmul.f32 -0.5, %v2863
      %v3133 = vadd.f32 %v3132, 1.0
      %v3134 = vmul.f32 %v3133, %v2863
      %v3135 = vand.u32 2147483647, %v2863
      %vm3136 = vcmp.lt.f32.partialorder %v3135, 0.0004427343
      %v3137 = vsel %vm3136, %v3134, %v3131
      %v3138 = vadd.f32 %v2865, 1.0
      %v3139 = vlog2.pop %v3138
      %v3140 = vmul.f32 %v3139, 0.6931472
      %v3141 = vmul.f32 -0.5, %v2865
      %v3142 = vadd.f32 %v3141, 1.0
      %v3143 = vmul.f32 %v3142, %v2865
      %v3144 = vand.u32 2147483647, %v2865
      %vm3145 = vcmp.lt.f32.partialorder %v3144, 0.0004427343
      %v3146 = vsel %vm3145, %v3143, %v3140
      %v3147 = vadd.f32 %v2867, 1.0
      %v3148 = vlog2.pop %v3147
      %v3149 = vmul.f32 %v3148, 0.6931472
      %v3150 = vmul.f32 -0.5, %v2867
      %v3151 = vadd.f32 %v3150, 1.0
      %v3152 = vmul.f32 %v3151, %v2867
      %v3153 = vand.u32 2147483647, %v2867
      %vm3154 = vcmp.lt.f32.partialorder %v3153, 0.0004427343
      %v3155 = vsel %vm3154, %v3152, %v3149
      %v3156 = vmul.f32 %v2876, 0.01
      %v3157 = vmul.f32 %v2885, 0.01
      %v3158 = vmul.f32 %v2894, 0.01
      %v3159 = vmul.f32 %v2903, 0.01
      %v3160 = vmul.f32 %v2912, 0.01
      %v3161 = vmul.f32 %v2921, 0.01
      %v3162 = vmul.f32 %v2930, 0.01
      %v3163 = vmul.f32 %v2939, 0.01
      %v3164 = vmul.f32 %v2948, 0.01
      %v3165 = vmul.f32 %v2957, 0.01
      %v3166 = vmul.f32 %v2966, 0.01
      %v3167 = vmul.f32 %v2975, 0.01
      %v3168 = vmul.f32 %v2984, 0.01
      %v3169 = vmul.f32 %v2993, 0.01
      %v3170 = vmul.f32 %v3002, 0.01
      %v3171 = vmul.f32 %v3011, 0.01
      %v3172 = vmul.f32 %v3020, 0.01
      %v3173 = vmul.f32 %v3029, 0.01
      %v3174 = vmul.f32 %v3038, 0.01
      %v3175 = vmul.f32 %v3047, 0.01
      %v3176 = vmul.f32 %v3056, 0.01
      %v3177 = vmul.f32 %v3065, 0.01
      %v3178 = vmul.f32 %v3074, 0.01
      %v3179 = vmul.f32 %v3083, 0.01
      %v3180 = vmul.f32 %v3092, 0.01
      %v3181 = vmul.f32 %v3101, 0.01
      %v3182 = vmul.f32 %v3110, 0.01
      %v3183 = vmul.f32 %v3119, 0.01
      %v3184 = vmul.f32 %v3128, 0.01
      %v3185 = vmul.f32 %v3137, 0.01
      %v3186 = vmul.f32 %v3146, 0.01
      %v3187 = vmul.f32 %v3155, 0.01
      %vm3188 = vcmp.gt.f32.partialorder %v2582, 0.2
      %vm3189 = vcmp.gt.f32.partialorder %v2587, 0.2
      %vm3190 = vcmp.gt.f32.partialorder %v2592, 0.2
      %vm3191 = vcmp.gt.f32.partialorder %v2597, 0.2
      %vm3192 = vcmp.gt.f32.partialorder %v2602, 0.2
      %vm3193 = vcmp.gt.f32.partialorder %v2607, 0.2
      %vm3194 = vcmp.gt.f32.partialorder %v2612, 0.2
      %vm3195 = vcmp.gt.f32.partialorder %v2617, 0.2
      %vm3196 = vcmp.gt.f32.partialorder %v2622, 0.2
      %vm3197 = vcmp.gt.f32.partialorder %v2627, 0.2
      %vm3198 = vcmp.gt.f32.partialorder %v2632, 0.2
      %vm3199 = vcmp.gt.f32.partialorder %v2637, 0.2
      %vm3200 = vcmp.gt.f32.partialorder %v2642, 0.2
      %vm3201 = vcmp.gt.f32.partialorder %v2647, 0.2
      %vm3202 = vcmp.gt.f32.partialorder %v2652, 0.2
      %vm3203 = vcmp.gt.f32.partialorder %v2657, 0.2
      %vm3204 = vcmp.gt.f32.partialorder %v2662, 0.2
      %vm3205 = vcmp.gt.f32.partialorder %v2667, 0.2
      %vm3206 = vcmp.gt.f32.partialorder %v2672, 0.2
      %vm3207 = vcmp.gt.f32.partialorder %v2677, 0.2
      %vm3208 = vcmp.gt.f32.partialorder %v2682, 0.2
      %vm3209 = vcmp.gt.f32.partialorder %v2687, 0.2
      %vm3210 = vcmp.gt.f32.partialorder %v2692, 0.2
      %vm3211 = vcmp.gt.f32.partialorder %v2697, 0.2
      %vm3212 = vcmp.gt.f32.partialorder %v2702, 0.2
      %vm3213 = vcmp.gt.f32.partialorder %v2707, 0.2
      %vm3214 = vcmp.gt.f32.partialorder %v2712, 0.2
      %vm3215 = vcmp.gt.f32.partialorder %v2717, 0.2
      %vm3216 = vcmp.gt.f32.partialorder %v2722, 0.2
      %vm3217 = vcmp.gt.f32.partialorder %v2727, 0.2
      %vm3218 = vcmp.gt.f32.partialorder %v2732, 0.2
      %vm3219 = vcmp.gt.f32.partialorder %v2737, 0.2
      %v3220 = vsel %vm3188, %v2582, %v3156
      %v3221 = vsel %vm3189, %v2587, %v3157
      %v3222 = vsel %vm3190, %v2592, %v3158
      %v3223 = vsel %vm3191, %v2597, %v3159
      %v3224 = vsel %vm3192, %v2602, %v3160
      %v3225 = vsel %vm3193, %v2607, %v3161
      %v3226 = vsel %vm3194, %v2612, %v3162
      %v3227 = vsel %vm3195, %v2617, %v3163
      %v3228 = vsel %vm3196, %v2622, %v3164
      %v3229 = vsel %vm3197, %v2627, %v3165
      %v3230 = vsel %vm3198, %v2632, %v3166
      %v3231 = vsel %vm3199, %v2637, %v3167
      %v3232 = vsel %vm3200, %v2642, %v3168
      %v3233 = vsel %vm3201, %v2647, %v3169
      %v3234 = vsel %vm3202, %v2652, %v3170
      %v3235 = vsel %vm3203, %v2657, %v3171
      %v3236 = vsel %vm3204, %v2662, %v3172
      %v3237 = vsel %vm3205, %v2667, %v3173
      %v3238 = vsel %vm3206, %v2672, %v3174
      %v3239 = vsel %vm3207, %v2677, %v3175
      %v3240 = vsel %vm3208, %v2682, %v3176
      %v3241 = vsel %vm3209, %v2687, %v3177
      %v3242 = vsel %vm3210, %v2692, %v3178
      %v3243 = vsel %vm3211, %v2697, %v3179
      %v3244 = vsel %vm3212, %v2702, %v3180
      %v3245 = vsel %vm3213, %v2707, %v3181
      %v3246 = vsel %vm3214, %v2712, %v3182
      %v3247 = vsel %vm3215, %v2717, %v3183
      %v3248 = vsel %vm3216, %v2722, %v3184
      %v3249 = vsel %vm3217, %v2727, %v3185
      %v3250 = vsel %vm3218, %v2732, %v3186
      %v3251 = vsel %vm3219, %v2737, %v3187
      %s3252 = scalar_lea.vmem %s2, 4
      %v3253 = vld [vmem:[%s3252] sm:$0x1]
      %s3254 = scalar_lea.vmem %s1, 512
      %v3255 = vld [vmem:[%s3254] sm:$0xff]
      %v3256 = vld [vmem:[%s3254 + $0x8] sm:$0xff]
      %v3257 = vld [vmem:[%s3254 + $0x10] sm:$0xff]
      %v3258 = vld [vmem:[%s3254 + $0x18] sm:$0xff]
      %v3259 = vld [vmem:[%s3254 + $0x20] sm:$0xff]
      %v3260 = vld [vmem:[%s3254 + $0x28] sm:$0xff]
      %v3261 = vld [vmem:[%s3254 + $0x30] sm:$0xff]
      %v3262 = vld [vmem:[%s3254 + $0x38] sm:$0xff]
      %v3263 = vld [vmem:[%s3254 + $0x40] sm:$0xff]
      %v3264 = vld [vmem:[%s3254 + $0x48] sm:$0xff]
      %v3265 = vld [vmem:[%s3254 + $0x50] sm:$0xff]
      %v3266 = vld [vmem:[%s3254 + $0x58] sm:$0xff]
      %v3267 = vld [vmem:[%s3254 + $0x60] sm:$0xff]
      %v3268 = vld [vmem:[%s3254 + $0x68] sm:$0xff]
      %v3269 = vld [vmem:[%s3254 + $0x70] sm:$0xff]
      %v3270 = vld [vmem:[%s3254 + $0x78] sm:$0xff]
      %s3271 = scalar_lea.vmem %s1, 640
      %v3272 = vld [vmem:[%s3271] sm:$0xff]
      %v3273 = vld [vmem:[%s3271 + $0x8] sm:$0xff]
      %v3274 = vld [vmem:[%s3271 + $0x10] sm:$0xff]
      %v3275 = vld [vmem:[%s3271 + $0x18] sm:$0xff]
      %v3276 = vld [vmem:[%s3271 + $0x20] sm:$0xff]
      %v3277 = vld [vmem:[%s3271 + $0x28] sm:$0xff]
      %v3278 = vld [vmem:[%s3271 + $0x30] sm:$0xff]
      %v3279 = vld [vmem:[%s3271 + $0x38] sm:$0xff]
      %v3280 = vld [vmem:[%s3271 + $0x40] sm:$0xff]
      %v3281 = vld [vmem:[%s3271 + $0x48] sm:$0xff]
      %v3282 = vld [vmem:[%s3271 + $0x50] sm:$0xff]
      %v3283 = vld [vmem:[%s3271 + $0x58] sm:$0xff]
      %v3284 = vld [vmem:[%s3271 + $0x60] sm:$0xff]
      %v3285 = vld [vmem:[%s3271 + $0x68] sm:$0xff]
      %v3286 = vld [vmem:[%s3271 + $0x70] sm:$0xff]
      %v3287 = vld [vmem:[%s3271 + $0x78] sm:$0xff]
      %3288 = vmatprep.subr.mxu0 0.0
      %3289 = vmatpush1.msra.mxu0 %v3287
      %3290 = vmatprep.subr.mxu0 0.0
      %3291 = vmatpush1.msra.mxu0 %v3286
      %3292 = vmatprep.subr.mxu0 0.0
      %3293 = vmatpush1.msra.mxu0 %v3285
      %3294 = vmatprep.subr.mxu0 0.0
      %3295 = vmatpush1.msra.mxu0 %v3284
      %3296 = vmatprep.subr.mxu0 0.0
      %3297 = vmatpush1.msra.mxu0 %v3283
      %3298 = vmatprep.subr.mxu0 0.0
      %3299 = vmatpush1.msra.mxu0 %v3282
      %3300 = vmatprep.subr.mxu0 0.0
      %3301 = vmatpush1.msra.mxu0 %v3281
      %3302 = vmatprep.subr.mxu0 0.0
      %3303 = vmatpush1.msra.mxu0 %v3280
      %3304 = vmatprep.subr.mxu0 0.0
      %3305 = vmatpush1.msra.mxu0 %v3279
      %3306 = vmatprep.subr.mxu0 0.0
      %3307 = vmatpush1.msra.mxu0 %v3278
      %3308 = vmatprep.subr.mxu0 0.0
      %3309 = vmatpush1.msra.mxu0 %v3277
      %3310 = vmatprep.subr.mxu0 0.0
      %3311 = vmatpush1.msra.mxu0 %v3276
      %3312 = vmatprep.subr.mxu0 0.0
      %3313 = vmatpush1.msra.mxu0 %v3275
      %3314 = vmatprep.subr.mxu0 0.0
      %3315 = vmatpush1.msra.mxu0 %v3274
      %3316 = vmatprep.subr.mxu0 0.0
      %3317 = vmatpush1.msra.mxu0 %v3273
      %3318 = vmatprep.subr.mxu0 0.0
      %3319 = vmatpush1.msra.mxu0 %v3272
      %3320 = vmatprep.subr.mxu0 0.0
      %3321 = vmatpush2.msra.mxu0 0.0
      %3322 = vmatprep.subr.mxu0 0.0
      %3323 = vmatpush2.msra.mxu0 0.0
      %3324 = vmatprep.subr.mxu0 0.0
      %3325 = vmatpush2.msra.mxu0 0.0
      %3326 = vmatprep.subr.mxu0 0.0
      %3327 = vmatpush2.msra.mxu0 0.0
      %3328 = vmatprep.subr.mxu0 0.0
      %3329 = vmatpush2.msra.mxu0 0.0
      %3330 = vmatprep.subr.mxu0 0.0
      %3331 = vmatpush2.msra.mxu0 0.0
      %3332 = vmatprep.subr.mxu0 0.0
      %3333 = vmatpush2.msra.mxu0 0.0
      %3334 = vmatprep.subr.mxu0 0.0
      %3335 = vmatpush2.msra.mxu0 0.0
      %3336 = vmatprep.subr.mxu0 0.0
      %3337 = vmatpush2.msra.mxu0 0.0
      %3338 = vmatprep.subr.mxu0 0.0
      %3339 = vmatpush2.msra.mxu0 0.0
      %3340 = vmatprep.subr.mxu0 0.0
      %3341 = vmatpush2.msra.mxu0 0.0
      %3342 = vmatprep.subr.mxu0 0.0
      %3343 = vmatpush2.msra.mxu0 0.0
      %3344 = vmatprep.subr.mxu0 0.0
      %3345 = vmatpush2.msra.mxu0 0.0
      %3346 = vmatprep.subr.mxu0 0.0
      %3347 = vmatpush2.msra.mxu0 0.0
      %3348 = vmatprep.subr.mxu0 0.0
      %3349 = vmatpush2.msra.mxu0 0.0
      %3350 = vmatprep.subr.mxu0 0.0
      %3351 = vmatpush2.msra.mxu0 0.0
      %3352 = vmatprep.mubr.f32.mxu0 0.0
      %3353 = vmatmul.mubr.f32.gmra.mxu0 %v174
      %v3354 = vpop.f32.mrf.mxu0
      %v3355 = vadd.f32 0.0, %v3354
      %v3356 = vpop.f32.mrf.mxu0
      %3357 = vmatprep.mubr.f32.mxu0 0.0
      %3358 = vmatmul.mubr.f32.gmra.mxu0 %v175
      %v3359 = vpop.f32.mrf.mxu0
      %v3360 = vadd.f32 0.0, %v3359
      %v3361 = vpop.f32.mrf.mxu0
      %3362 = vmatprep.mubr.f32.mxu0 0.0
      %3363 = vmatmul.mubr.f32.gmra.mxu0 %v176
      %v3364 = vpop.f32.mrf.mxu0
      %v3365 = vadd.f32 0.0, %v3364
      %v3366 = vpop.f32.mrf.mxu0
      %3367 = vmatprep.mubr.f32.mxu0 0.0
      %3368 = vmatmul.mubr.f32.gmra.mxu0 %v177
      %v3369 = vpop.f32.mrf.mxu0
      %v3370 = vadd.f32 0.0, %v3369
      %v3371 = vpop.f32.mrf.mxu0
      %3372 = vmatprep.mubr.f32.mxu0 0.0
      %3373 = vmatmul.mubr.f32.gmra.mxu0 %v178
      %v3374 = vpop.f32.mrf.mxu0
      %v3375 = vadd.f32 0.0, %v3374
      %v3376 = vpop.f32.mrf.mxu0
      %3377 = vmatprep.mubr.f32.mxu0 0.0
      %3378 = vmatmul.mubr.f32.gmra.mxu0 %v179
      %v3379 = vpop.f32.mrf.mxu0
      %v3380 = vadd.f32 0.0, %v3379
      %v3381 = vpop.f32.mrf.mxu0
      %3382 = vmatprep.mubr.f32.mxu0 0.0
      %3383 = vmatmul.mubr.f32.gmra.mxu0 %v180
      %v3384 = vpop.f32.mrf.mxu0
      %v3385 = vadd.f32 0.0, %v3384
      %v3386 = vpop.f32.mrf.mxu0
      %3387 = vmatprep.mubr.f32.mxu0 0.0
      %3388 = vmatmul.mubr.f32.gmra.mxu0 %v181
      %v3389 = vpop.f32.mrf.mxu0
      %v3390 = vadd.f32 0.0, %v3389
      %v3391 = vpop.f32.mrf.mxu0
      %3392 = vmatprep.mubr.f32.mxu0 0.0
      %3393 = vmatmul.mubr.f32.gmra.mxu0 %v182
      %v3394 = vpop.f32.mrf.mxu0
      %v3395 = vadd.f32 0.0, %v3394
      %v3396 = vpop.f32.mrf.mxu0
      %3397 = vmatprep.mubr.f32.mxu0 0.0
      %3398 = vmatmul.mubr.f32.gmra.mxu0 %v183
      %v3399 = vpop.f32.mrf.mxu0
      %v3400 = vadd.f32 0.0, %v3399
      %v3401 = vpop.f32.mrf.mxu0
      %3402 = vmatprep.mubr.f32.mxu0 0.0
      %3403 = vmatmul.mubr.f32.gmra.mxu0 %v184
      %v3404 = vpop.f32.mrf.mxu0
      %v3405 = vadd.f32 0.0, %v3404
      %v3406 = vpop.f32.mrf.mxu0
      %3407 = vmatprep.mubr.f32.mxu0 0.0
      %3408 = vmatmul.mubr.f32.gmra.mxu0 %v185
      %v3409 = vpop.f32.mrf.mxu0
      %v3410 = vadd.f32 0.0, %v3409
      %v3411 = vpop.f32.mrf.mxu0
      %3412 = vmatprep.mubr.f32.mxu0 0.0
      %3413 = vmatmul.mubr.f32.gmra.mxu0 %v186
      %v3414 = vpop.f32.mrf.mxu0
      %v3415 = vadd.f32 0.0, %v3414
      %v3416 = vpop.f32.mrf.mxu0
      %3417 = vmatprep.mubr.f32.mxu0 0.0
      %3418 = vmatmul.mubr.f32.gmra.mxu0 %v187
      %v3419 = vpop.f32.mrf.mxu0
      %v3420 = vadd.f32 0.0, %v3419
      %v3421 = vpop.f32.mrf.mxu0
      %3422 = vmatprep.mubr.f32.mxu0 0.0
      %3423 = vmatmul.mubr.f32.gmra.mxu0 %v188
      %v3424 = vpop.f32.mrf.mxu0
      %v3425 = vadd.f32 0.0, %v3424
      %v3426 = vpop.f32.mrf.mxu0
      %3427 = vmatprep.mubr.f32.mxu0 0.0
      %3428 = vmatmul.mubr.f32.gmra.mxu0 %v189
      %v3429 = vpop.f32.mrf.mxu0
      %v3430 = vadd.f32 0.0, %v3429
      %v3431 = vpop.f32.mrf.mxu0
      %3432 = vmatprep.mubr.f32.mxu0 0.0
      %3433 = vmatmul.mubr.f32.gmra.mxu0 %v190
      %v3434 = vpop.f32.mrf.mxu0
      %v3435 = vadd.f32 0.0, %v3434
      %v3436 = vpop.f32.mrf.mxu0
      %3437 = vmatprep.mubr.f32.mxu0 0.0
      %3438 = vmatmul.mubr.f32.gmra.mxu0 %v191
      %v3439 = vpop.f32.mrf.mxu0
      %v3440 = vadd.f32 0.0, %v3439
      %v3441 = vpop.f32.mrf.mxu0
      %3442 = vmatprep.mubr.f32.mxu0 0.0
      %3443 = vmatmul.mubr.f32.gmra.mxu0 %v192
      %v3444 = vpop.f32.mrf.mxu0
      %v3445 = vadd.f32 0.0, %v3444
      %v3446 = vpop.f32.mrf.mxu0
      %3447 = vmatprep.mubr.f32.mxu0 0.0
      %3448 = vmatmul.mubr.f32.gmra.mxu0 %v193
      %v3449 = vpop.f32.mrf.mxu0
      %v3450 = vadd.f32 0.0, %v3449
      %v3451 = vpop.f32.mrf.mxu0
      %3452 = vmatprep.mubr.f32.mxu0 0.0
      %3453 = vmatmul.mubr.f32.gmra.mxu0 %v194
      %v3454 = vpop.f32.mrf.mxu0
      %v3455 = vadd.f32 0.0, %v3454
      %v3456 = vpop.f32.mrf.mxu0
      %3457 = vmatprep.mubr.f32.mxu0 0.0
      %3458 = vmatmul.mubr.f32.gmra.mxu0 %v195
      %v3459 = vpop.f32.mrf.mxu0
      %v3460 = vadd.f32 0.0, %v3459
      %v3461 = vpop.f32.mrf.mxu0
      %3462 = vmatprep.mubr.f32.mxu0 0.0
      %3463 = vmatmul.mubr.f32.gmra.mxu0 %v196
      %v3464 = vpop.f32.mrf.mxu0
      %v3465 = vadd.f32 0.0, %v3464
      %v3466 = vpop.f32.mrf.mxu0
      %3467 = vmatprep.mubr.f32.mxu0 0.0
      %3468 = vmatmul.mubr.f32.gmra.mxu0 %v197
      %v3469 = vpop.f32.mrf.mxu0
      %v3470 = vadd.f32 0.0, %v3469
      %v3471 = vpop.f32.mrf.mxu0
      %3472 = vmatprep.mubr.f32.mxu0 0.0
      %3473 = vmatmul.mubr.f32.gmra.mxu0 %v198
      %v3474 = vpop.f32.mrf.mxu0
      %v3475 = vadd.f32 0.0, %v3474
      %v3476 = vpop.f32.mrf.mxu0
      %3477 = vmatprep.mubr.f32.mxu0 0.0
      %3478 = vmatmul.mubr.f32.gmra.mxu0 %v199
      %v3479 = vpop.f32.mrf.mxu0
      %v3480 = vadd.f32 0.0, %v3479
      %v3481 = vpop.f32.mrf.mxu0
      %3482 = vmatprep.mubr.f32.mxu0 0.0
      %3483 = vmatmul.mubr.f32.gmra.mxu0 %v200
      %v3484 = vpop.f32.mrf.mxu0
      %v3485 = vadd.f32 0.0, %v3484
      %v3486 = vpop.f32.mrf.mxu0
      %3487 = vmatprep.mubr.f32.mxu0 0.0
      %3488 = vmatmul.mubr.f32.gmra.mxu0 %v201
      %v3489 = vpop.f32.mrf.mxu0
      %v3490 = vadd.f32 0.0, %v3489
      %v3491 = vpop.f32.mrf.mxu0
      %3492 = vmatprep.mubr.f32.mxu0 0.0
      %3493 = vmatmul.mubr.f32.gmra.mxu0 %v202
      %v3494 = vpop.f32.mrf.mxu0
      %v3495 = vadd.f32 0.0, %v3494
      %v3496 = vpop.f32.mrf.mxu0
      %3497 = vmatprep.mubr.f32.mxu0 0.0
      %3498 = vmatmul.mubr.f32.gmra.mxu0 %v203
      %v3499 = vpop.f32.mrf.mxu0
      %v3500 = vadd.f32 0.0, %v3499
      %v3501 = vpop.f32.mrf.mxu0
      %3502 = vmatprep.mubr.f32.mxu0 0.0
      %3503 = vmatmul.mubr.f32.gmra.mxu0 %v204
      %v3504 = vpop.f32.mrf.mxu0
      %v3505 = vadd.f32 0.0, %v3504
      %v3506 = vpop.f32.mrf.mxu0
      %3507 = vmatprep.mubr.f32.mxu0 0.0
      %3508 = vmatmul.mubr.f32.gmra.mxu0 %v205
      %v3509 = vpop.f32.mrf.mxu0
      %v3510 = vadd.f32 0.0, %v3509
      %v3511 = vpop.f32.mrf.mxu0
      %3512 = vdwg.mxu0
      %3513 = vmatprep.subr.mxu0 0.0
      %3514 = vmatpush1.msra.mxu0 %v3270
      %3515 = vmatprep.subr.mxu0 0.0
      %3516 = vmatpush1.msra.mxu0 %v3269
      %3517 = vmatprep.subr.mxu0 0.0
      %3518 = vmatpush1.msra.mxu0 %v3268
      %3519 = vmatprep.subr.mxu0 0.0
      %3520 = vmatpush1.msra.mxu0 %v3267
      %3521 = vmatprep.subr.mxu0 0.0
      %3522 = vmatpush1.msra.mxu0 %v3266
      %3523 = vmatprep.subr.mxu0 0.0
      %3524 = vmatpush1.msra.mxu0 %v3265
      %3525 = vmatprep.subr.mxu0 0.0
      %3526 = vmatpush1.msra.mxu0 %v3264
      %3527 = vmatprep.subr.mxu0 0.0
      %3528 = vmatpush1.msra.mxu0 %v3263
      %3529 = vmatprep.subr.mxu0 0.0
      %3530 = vmatpush1.msra.mxu0 %v3262
      %3531 = vmatprep.subr.mxu0 0.0
      %3532 = vmatpush1.msra.mxu0 %v3261
      %3533 = vmatprep.subr.mxu0 0.0
      %3534 = vmatpush1.msra.mxu0 %v3260
      %3535 = vmatprep.subr.mxu0 0.0
      %3536 = vmatpush1.msra.mxu0 %v3259
      %3537 = vmatprep.subr.mxu0 0.0
      %3538 = vmatpush1.msra.mxu0 %v3258
      %3539 = vmatprep.subr.mxu0 0.0
      %3540 = vmatpush1.msra.mxu0 %v3257
      %3541 = vmatprep.subr.mxu0 0.0
      %3542 = vmatpush1.msra.mxu0 %v3256
      %3543 = vmatprep.subr.mxu0 0.0
      %3544 = vmatpush1.msra.mxu0 %v3255
      %3545 = vmatprep.subr.mxu0 0.0
      %3546 = vmatpush2.msra.mxu0 0.0
      %3547 = vmatprep.subr.mxu0 0.0
      %3548 = vmatpush2.msra.mxu0 0.0
      %3549 = vmatprep.subr.mxu0 0.0
      %3550 = vmatpush2.msra.mxu0 0.0
      %3551 = vmatprep.subr.mxu0 0.0
      %3552 = vmatpush2.msra.mxu0 0.0
      %3553 = vmatprep.subr.mxu0 0.0
      %3554 = vmatpush2.msra.mxu0 0.0
      %3555 = vmatprep.subr.mxu0 0.0
      %3556 = vmatpush2.msra.mxu0 0.0
      %3557 = vmatprep.subr.mxu0 0.0
      %3558 = vmatpush2.msra.mxu0 0.0
      %3559 = vmatprep.subr.mxu0 0.0
      %3560 = vmatpush2.msra.mxu0 0.0
      %3561 = vmatprep.subr.mxu0 0.0
      %3562 = vmatpush2.msra.mxu0 0.0
      %3563 = vmatprep.subr.mxu0 0.0
      %3564 = vmatpush2.msra.mxu0 0.0
      %3565 = vmatprep.subr.mxu0 0.0
      %3566 = vmatpush2.msra.mxu0 0.0
      %3567 = vmatprep.subr.mxu0 0.0
      %3568 = vmatpush2.msra.mxu0 0.0
      %3569 = vmatprep.subr.mxu0 0.0
      %3570 = vmatpush2.msra.mxu0 0.0
      %3571 = vmatprep.subr.mxu0 0.0
      %3572 = vmatpush2.msra.mxu0 0.0
      %3573 = vmatprep.subr.mxu0 0.0
      %3574 = vmatpush2.msra.mxu0 0.0
      %3575 = vmatprep.subr.mxu0 0.0
      %3576 = vmatpush2.msra.mxu0 0.0
      %3577 = vmatprep.mubr.f32.mxu0 0.0
      %3578 = vmatmul.mubr.f32.gmra.mxu0 %v3220
      %v3579 = vpop.f32.mrf.mxu0
      %v3580 = vadd.f32 %v3355, %v3579
      %v3581 = vpop.f32.mrf.mxu0
      %3582 = vmatprep.mubr.f32.mxu0 0.0
      %3583 = vmatmul.mubr.f32.gmra.mxu0 %v3221
      %v3584 = vpop.f32.mrf.mxu0
      %v3585 = vadd.f32 %v3360, %v3584
      %v3586 = vpop.f32.mrf.mxu0
      %3587 = vmatprep.mubr.f32.mxu0 0.0
      %3588 = vmatmul.mubr.f32.gmra.mxu0 %v3222
      %v3589 = vpop.f32.mrf.mxu0
      %v3590 = vadd.f32 %v3365, %v3589
      %v3591 = vpop.f32.mrf.mxu0
      %3592 = vmatprep.mubr.f32.mxu0 0.0
      %3593 = vmatmul.mubr.f32.gmra.mxu0 %v3223
      %v3594 = vpop.f32.mrf.mxu0
      %v3595 = vadd.f32 %v3370, %v3594
      %v3596 = vpop.f32.mrf.mxu0
      %3597 = vmatprep.mubr.f32.mxu0 0.0
      %3598 = vmatmul.mubr.f32.gmra.mxu0 %v3224
      %v3599 = vpop.f32.mrf.mxu0
      %v3600 = vadd.f32 %v3375, %v3599
      %v3601 = vpop.f32.mrf.mxu0
      %3602 = vmatprep.mubr.f32.mxu0 0.0
      %3603 = vmatmul.mubr.f32.gmra.mxu0 %v3225
      %v3604 = vpop.f32.mrf.mxu0
      %v3605 = vadd.f32 %v3380, %v3604
      %v3606 = vpop.f32.mrf.mxu0
      %3607 = vmatprep.mubr.f32.mxu0 0.0
      %3608 = vmatmul.mubr.f32.gmra.mxu0 %v3226
      %v3609 = vpop.f32.mrf.mxu0
      %v3610 = vadd.f32 %v3385, %v3609
      %v3611 = vpop.f32.mrf.mxu0
      %3612 = vmatprep.mubr.f32.mxu0 0.0
      %3613 = vmatmul.mubr.f32.gmra.mxu0 %v3227
      %v3614 = vpop.f32.mrf.mxu0
      %v3615 = vadd.f32 %v3390, %v3614
      %v3616 = vpop.f32.mrf.mxu0
      %3617 = vmatprep.mubr.f32.mxu0 0.0
      %3618 = vmatmul.mubr.f32.gmra.mxu0 %v3228
      %v3619 = vpop.f32.mrf.mxu0
      %v3620 = vadd.f32 %v3395, %v3619
      %v3621 = vpop.f32.mrf.mxu0
      %3622 = vmatprep.mubr.f32.mxu0 0.0
      %3623 = vmatmul.mubr.f32.gmra.mxu0 %v3229
      %v3624 = vpop.f32.mrf.mxu0
      %v3625 = vadd.f32 %v3400, %v3624
      %v3626 = vpop.f32.mrf.mxu0
      %3627 = vmatprep.mubr.f32.mxu0 0.0
      %3628 = vmatmul.mubr.f32.gmra.mxu0 %v3230
      %v3629 = vpop.f32.mrf.mxu0
      %v3630 = vadd.f32 %v3405, %v3629
      %v3631 = vpop.f32.mrf.mxu0
      %3632 = vmatprep.mubr.f32.mxu0 0.0
      %3633 = vmatmul.mubr.f32.gmra.mxu0 %v3231
      %v3634 = vpop.f32.mrf.mxu0
      %v3635 = vadd.f32 %v3410, %v3634
      %v3636 = vpop.f32.mrf.mxu0
      %3637 = vmatprep.mubr.f32.mxu0 0.0
      %3638 = vmatmul.mubr.f32.gmra.mxu0 %v3232
      %v3639 = vpop.f32.mrf.mxu0
      %v3640 = vadd.f32 %v3415, %v3639
      %v3641 = vpop.f32.mrf.mxu0
      %3642 = vmatprep.mubr.f32.mxu0 0.0
      %3643 = vmatmul.mubr.f32.gmra.mxu0 %v3233
      %v3644 = vpop.f32.mrf.mxu0
      %v3645 = vadd.f32 %v3420, %v3644
      %v3646 = vpop.f32.mrf.mxu0
      %3647 = vmatprep.mubr.f32.mxu0 0.0
      %3648 = vmatmul.mubr.f32.gmra.mxu0 %v3234
      %v3649 = vpop.f32.mrf.mxu0
      %v3650 = vadd.f32 %v3425, %v3649
      %v3651 = vpop.f32.mrf.mxu0
      %3652 = vmatprep.mubr.f32.mxu0 0.0
      %3653 = vmatmul.mubr.f32.gmra.mxu0 %v3235
      %v3654 = vpop.f32.mrf.mxu0
      %v3655 = vadd.f32 %v3430, %v3654
      %v3656 = vpop.f32.mrf.mxu0
      %3657 = vmatprep.mubr.f32.mxu0 0.0
      %3658 = vmatmul.mubr.f32.gmra.mxu0 %v3236
      %v3659 = vpop.f32.mrf.mxu0
      %v3660 = vadd.f32 %v3435, %v3659
      %v3661 = vpop.f32.mrf.mxu0
      %3662 = vmatprep.mubr.f32.mxu0 0.0
      %3663 = vmatmul.mubr.f32.gmra.mxu0 %v3237
      %v3664 = vpop.f32.mrf.mxu0
      %v3665 = vadd.f32 %v3440, %v3664
      %v3666 = vpop.f32.mrf.mxu0
      %3667 = vmatprep.mubr.f32.mxu0 0.0
      %3668 = vmatmul.mubr.f32.gmra.mxu0 %v3238
      %v3669 = vpop.f32.mrf.mxu0
      %v3670 = vadd.f32 %v3445, %v3669
      %v3671 = vpop.f32.mrf.mxu0
      %3672 = vmatprep.mubr.f32.mxu0 0.0
      %3673 = vmatmul.mubr.f32.gmra.mxu0 %v3239
      %v3674 = vpop.f32.mrf.mxu0
      %v3675 = vadd.f32 %v3450, %v3674
      %v3676 = vpop.f32.mrf.mxu0
      %3677 = vmatprep.mubr.f32.mxu0 0.0
      %3678 = vmatmul.mubr.f32.gmra.mxu0 %v3240
      %v3679 = vpop.f32.mrf.mxu0
      %v3680 = vadd.f32 %v3455, %v3679
      %v3681 = vpop.f32.mrf.mxu0
      %3682 = vmatprep.mubr.f32.mxu0 0.0
      %3683 = vmatmul.mubr.f32.gmra.mxu0 %v3241
      %v3684 = vpop.f32.mrf.mxu0
      %v3685 = vadd.f32 %v3460, %v3684
      %v3686 = vpop.f32.mrf.mxu0
      %3687 = vmatprep.mubr.f32.mxu0 0.0
      %3688 = vmatmul.mubr.f32.gmra.mxu0 %v3242
      %v3689 = vpop.f32.mrf.mxu0
      %v3690 = vadd.f32 %v3465, %v3689
      %v3691 = vpop.f32.mrf.mxu0
      %3692 = vmatprep.mubr.f32.mxu0 0.0
      %3693 = vmatmul.mubr.f32.gmra.mxu0 %v3243
      %v3694 = vpop.f32.mrf.mxu0
      %v3695 = vadd.f32 %v3470, %v3694
      %v3696 = vpop.f32.mrf.mxu0
      %3697 = vmatprep.mubr.f32.mxu0 0.0
      %3698 = vmatmul.mubr.f32.gmra.mxu0 %v3244
      %v3699 = vpop.f32.mrf.mxu0
      %v3700 = vadd.f32 %v3475, %v3699
      %v3701 = vpop.f32.mrf.mxu0
      %3702 = vmatprep.mubr.f32.mxu0 0.0
      %3703 = vmatmul.mubr.f32.gmra.mxu0 %v3245
      %v3704 = vpop.f32.mrf.mxu0
      %v3705 = vadd.f32 %v3480, %v3704
      %v3706 = vpop.f32.mrf.mxu0
      %3707 = vmatprep.mubr.f32.mxu0 0.0
      %3708 = vmatmul.mubr.f32.gmra.mxu0 %v3246
      %v3709 = vpop.f32.mrf.mxu0
      %v3710 = vadd.f32 %v3485, %v3709
      %v3711 = vpop.f32.mrf.mxu0
      %3712 = vmatprep.mubr.f32.mxu0 0.0
      %3713 = vmatmul.mubr.f32.gmra.mxu0 %v3247
      %v3714 = vpop.f32.mrf.mxu0
      %v3715 = vadd.f32 %v3490, %v3714
      %v3716 = vpop.f32.mrf.mxu0
      %3717 = vmatprep.mubr.f32.mxu0 0.0
      %3718 = vmatmul.mubr.f32.gmra.mxu0 %v3248
      %v3719 = vpop.f32.mrf.mxu0
      %v3720 = vadd.f32 %v3495, %v3719
      %v3721 = vpop.f32.mrf.mxu0
      %3722 = vmatprep.mubr.f32.mxu0 0.0
      %3723 = vmatmul.mubr.f32.gmra.mxu0 %v3249
      %v3724 = vpop.f32.mrf.mxu0
      %v3725 = vadd.f32 %v3500, %v3724
      %v3726 = vpop.f32.mrf.mxu0
      %3727 = vmatprep.mubr.f32.mxu0 0.0
      %3728 = vmatmul.mubr.f32.gmra.mxu0 %v3250
      %v3729 = vpop.f32.mrf.mxu0
      %v3730 = vadd.f32 %v3505, %v3729
      %v3731 = vpop.f32.mrf.mxu0
      %3732 = vmatprep.mubr.f32.mxu0 0.0
      %3733 = vmatmul.mubr.f32.gmra.mxu0 %v3251
      %v3734 = vpop.f32.mrf.mxu0
      %v3735 = vadd.f32 %v3510, %v3734
      %v3736 = vpop.f32.mrf.mxu0
      %3737 = vdwg.mxu0
      %v3739 = vlaneseq
      %v3740 = vshrl.u32 %v3739, 7
      %v3741 = vsub.s32 0, %v3740
      %v3742 = vrot.slane %v3253, %v3741
      %v3744 = vadd.f32 %v3580, %v3742
      %v3745 = vadd.f32 %v3585, %v3742
      %v3746 = vadd.f32 %v3590, %v3742
      %v3747 = vadd.f32 %v3595, %v3742
      %v3748 = vadd.f32 %v3600, %v3742
      %v3749 = vadd.f32 %v3605, %v3742
      %v3750 = vadd.f32 %v3610, %v3742
      %v3751 = vadd.f32 %v3615, %v3742
      %v3752 = vadd.f32 %v3620, %v3742
      %v3753 = vadd.f32 %v3625, %v3742
      %v3754 = vadd.f32 %v3630, %v3742
      %v3755 = vadd.f32 %v3635, %v3742
      %v3756 = vadd.f32 %v3640, %v3742
      %v3757 = vadd.f32 %v3645, %v3742
      %v3758 = vadd.f32 %v3650, %v3742
      %v3759 = vadd.f32 %v3655, %v3742
      %v3760 = vadd.f32 %v3660, %v3742
      %v3761 = vadd.f32 %v3665, %v3742
      %v3762 = vadd.f32 %v3670, %v3742
      %v3763 = vadd.f32 %v3675, %v3742
      %v3764 = vadd.f32 %v3680, %v3742
      %v3765 = vadd.f32 %v3685, %v3742
      %v3766 = vadd.f32 %v3690, %v3742
      %v3767 = vadd.f32 %v3695, %v3742
      %v3768 = vadd.f32 %v3700, %v3742
      %v3769 = vadd.f32 %v3705, %v3742
      %v3770 = vadd.f32 %v3710, %v3742
      %v3771 = vadd.f32 %v3715, %v3742
      %v3772 = vadd.f32 %v3720, %v3742
      %v3773 = vadd.f32 %v3725, %v3742
      %v3774 = vadd.f32 %v3730, %v3742
      %v3775 = vadd.f32 %v3735, %v3742
      %v3776 = vmin.f32 %v3744, 0.2
      %v3777 = vmin.f32 %v3745, 0.2
      %v3778 = vmin.f32 %v3746, 0.2
      %v3779 = vmin.f32 %v3747, 0.2
      %v3780 = vmin.f32 %v3748, 0.2
      %v3781 = vmin.f32 %v3749, 0.2
      %v3782 = vmin.f32 %v3750, 0.2
      %v3783 = vmin.f32 %v3751, 0.2
      %v3784 = vmin.f32 %v3752, 0.2
      %v3785 = vmin.f32 %v3753, 0.2
      %v3786 = vmin.f32 %v3754, 0.2
      %v3787 = vmin.f32 %v3755, 0.2
      %v3788 = vmin.f32 %v3756, 0.2
      %v3789 = vmin.f32 %v3757, 0.2
      %v3790 = vmin.f32 %v3758, 0.2
      %v3791 = vmin.f32 %v3759, 0.2
      %v3792 = vmin.f32 %v3760, 0.2
      %v3793 = vmin.f32 %v3761, 0.2
      %v3794 = vmin.f32 %v3762, 0.2
      %v3795 = vmin.f32 %v3763, 0.2
      %v3796 = vmin.f32 %v3764, 0.2
      %v3797 = vmin.f32 %v3765, 0.2
      %v3798 = vmin.f32 %v3766, 0.2
      %v3799 = vmin.f32 %v3767, 0.2
      %v3800 = vmin.f32 %v3768, 0.2
      %v3801 = vmin.f32 %v3769, 0.2
      %v3802 = vmin.f32 %v3770, 0.2
      %v3803 = vmin.f32 %v3771, 0.2
      %v3804 = vmin.f32 %v3772, 0.2
      %v3805 = vmin.f32 %v3773, 0.2
      %v3806 = vmin.f32 %v3774, 0.2
      %v3807 = vmin.f32 %v3775, 0.2
      %v3808 = vmul.f32 %v3776, 100.0
      %v3809 = vmul.f32 %v3777, 100.0
      %v3810 = vmul.f32 %v3778, 100.0
      %v3811 = vmul.f32 %v3779, 100.0
      %v3812 = vmul.f32 %v3780, 100.0
      %v3813 = vmul.f32 %v3781, 100.0
      %v3814 = vmul.f32 %v3782, 100.0
      %v3815 = vmul.f32 %v3783, 100.0
      %v3816 = vmul.f32 %v3784, 100.0
      %v3817 = vmul.f32 %v3785, 100.0
      %v3818 = vmul.f32 %v3786, 100.0
      %v3819 = vmul.f32 %v3787, 100.0
      %v3820 = vmul.f32 %v3788, 100.0
      %v3821 = vmul.f32 %v3789, 100.0
      %v3822 = vmul.f32 %v3790, 100.0
      %v3823 = vmul.f32 %v3791, 100.0
      %v3824 = vmul.f32 %v3792, 100.0
      %v3825 = vmul.f32 %v3793, 100.0
      %v3826 = vmul.f32 %v3794, 100.0
      %v3827 = vmul.f32 %v3795, 100.0
      %v3828 = vmul.f32 %v3796, 100.0
      %v3829 = vmul.f32 %v3797, 100.0
      %v3830 = vmul.f32 %v3798, 100.0
      %v3831 = vmul.f32 %v3799, 100.0
      %v3832 = vmul.f32 %v3800, 100.0
      %v3833 = vmul.f32 %v3801, 100.0
      %v3834 = vmul.f32 %v3802, 100.0
      %v3835 = vmul.f32 %v3803, 100.0
      %v3836 = vmul.f32 %v3804, 100.0
      %v3837 = vmul.f32 %v3805, 100.0
      %v3838 = vmul.f32 %v3806, 100.0
      %v3839 = vmul.f32 %v3807, 100.0
      %v3840 = vmul.f32 %v3808, 1.442695
      %v3841 = vpow.pop %v3840
      %v3842 = vmul.f32 %v3809, 1.442695
      %v3843 = vpow.pop %v3842
      %v3844 = vmul.f32 %v3810, 1.442695
      %v3845 = vpow.pop %v3844
      %v3846 = vmul.f32 %v3811, 1.442695
      %v3847 = vpow.pop %v3846
      %v3848 = vmul.f32 %v3812, 1.442695
      %v3849 = vpow.pop %v3848
      %v3850 = vmul.f32 %v3813, 1.442695
      %v3851 = vpow.pop %v3850
      %v3852 = vmul.f32 %v3814, 1.442695
      %v3853 = vpow.pop %v3852
      %v3854 = vmul.f32 %v3815, 1.442695
      %v3855 = vpow.pop %v3854
      %v3856 = vmul.f32 %v3816, 1.442695
      %v3857 = vpow.pop %v3856
      %v3858 = vmul.f32 %v3817, 1.442695
      %v3859 = vpow.pop %v3858
      %v3860 = vmul.f32 %v3818, 1.442695
      %v3861 = vpow.pop %v3860
      %v3862 = vmul.f32 %v3819, 1.442695
      %v3863 = vpow.pop %v3862
      %v3864 = vmul.f32 %v3820, 1.442695
      %v3865 = vpow.pop %v3864
      %v3866 = vmul.f32 %v3821, 1.442695
      %v3867 = vpow.pop %v3866
      %v3868 = vmul.f32 %v3822, 1.442695
      %v3869 = vpow.pop %v3868
      %v3870 = vmul.f32 %v3823, 1.442695
      %v3871 = vpow.pop %v3870
      %v3872 = vmul.f32 %v3824, 1.442695
      %v3873 = vpow.pop %v3872
      %v3874 = vmul.f32 %v3825, 1.442695
      %v3875 = vpow.pop %v3874
      %v3876 = vmul.f32 %v3826, 1.442695
      %v3877 = vpow.pop %v3876
      %v3878 = vmul.f32 %v3827, 1.442695
      %v3879 = vpow.pop %v3878
      %v3880 = vmul.f32 %v3828, 1.442695
      %v3881 = vpow.pop %v3880
      %v3882 = vmul.f32 %v3829, 1.442695
      %v3883 = vpow.pop %v3882
      %v3884 = vmul.f32 %v3830, 1.442695
      %v3885 = vpow.pop %v3884
      %v3886 = vmul.f32 %v3831, 1.442695
      %v3887 = vpow.pop %v3886
      %v3888 = vmul.f32 %v3832, 1.442695
      %v3889 = vpow.pop %v3888
      %v3890 = vmul.f32 %v3833, 1.442695
      %v3891 = vpow.pop %v3890
      %v3892 = vmul.f32 %v3834, 1.442695
      %v3893 = vpow.pop %v3892
      %v3894 = vmul.f32 %v3835, 1.442695
      %v3895 = vpow.pop %v3894
      %v3896 = vmul.f32 %v3836, 1.442695
      %v3897 = vpow.pop %v3896
      %v3898 = vmul.f32 %v3837, 1.442695
      %v3899 = vpow.pop %v3898
      %v3900 = vmul.f32 %v3838, 1.442695
      %v3901 = vpow.pop %v3900
      %v3902 = vmul.f32 %v3839, 1.442695
      %v3903 = vpow.pop %v3902
      %v3904 = vadd.f32 %v3841, 1.0
      %v3905 = vlog2.pop %v3904
      %v3906 = vmul.f32 %v3905, 0.6931472
      %v3907 = vmul.f32 -0.5, %v3841
      %v3908 = vadd.f32 %v3907, 1.0
      %v3909 = vmul.f32 %v3908, %v3841
      %v3910 = vand.u32 2147483647, %v3841
      %vm3911 = vcmp.lt.f32.partialorder %v3910, 0.0004427343
      %v3912 = vsel %vm3911, %v3909, %v3906
      %v3913 = vadd.f32 %v3843, 1.0
      %v3914 = vlog2.pop %v3913
      %v3915 = vmul.f32 %v3914, 0.6931472
      %v3916 = vmul.f32 -0.5, %v3843
      %v3917 = vadd.f32 %v3916, 1.0
      %v3918 = vmul.f32 %v3917, %v3843
      %v3919 = vand.u32 2147483647, %v3843
      %vm3920 = vcmp.lt.f32.partialorder %v3919, 0.0004427343
      %v3921 = vsel %vm3920, %v3918, %v3915
      %v3922 = vadd.f32 %v3845, 1.0
      %v3923 = vlog2.pop %v3922
      %v3924 = vmul.f32 %v3923, 0.6931472
      %v3925 = vmul.f32 -0.5, %v3845
      %v3926 = vadd.f32 %v3925, 1.0
      %v3927 = vmul.f32 %v3926, %v3845
      %v3928 = vand.u32 2147483647, %v3845
      %vm3929 = vcmp.lt.f32.partialorder %v3928, 0.0004427343
      %v3930 = vsel %vm3929, %v3927, %v3924
      %v3931 = vadd.f32 %v3847, 1.0
      %v3932 = vlog2.pop %v3931
      %v3933 = vmul.f32 %v3932, 0.6931472
      %v3934 = vmul.f32 -0.5, %v3847
      %v3935 = vadd.f32 %v3934, 1.0
      %v3936 = vmul.f32 %v3935, %v3847
      %v3937 = vand.u32 2147483647, %v3847
      %vm3938 = vcmp.lt.f32.partialorder %v3937, 0.0004427343
      %v3939 = vsel %vm3938, %v3936, %v3933
      %v3940 = vadd.f32 %v3849, 1.0
      %v3941 = vlog2.pop %v3940
      %v3942 = vmul.f32 %v3941, 0.6931472
      %v3943 = vmul.f32 -0.5, %v3849
      %v3944 = vadd.f32 %v3943, 1.0
      %v3945 = vmul.f32 %v3944, %v3849
      %v3946 = vand.u32 2147483647, %v3849
      %vm3947 = vcmp.lt.f32.partialorder %v3946, 0.0004427343
      %v3948 = vsel %vm3947, %v3945, %v3942
      %v3949 = vadd.f32 %v3851, 1.0
      %v3950 = vlog2.pop %v3949
      %v3951 = vmul.f32 %v3950, 0.6931472
      %v3952 = vmul.f32 -0.5, %v3851
      %v3953 = vadd.f32 %v3952, 1.0
      %v3954 = vmul.f32 %v3953, %v3851
      %v3955 = vand.u32 2147483647, %v3851
      %vm3956 = vcmp.lt.f32.partialorder %v3955, 0.0004427343
      %v3957 = vsel %vm3956, %v3954, %v3951
      %v3958 = vadd.f32 %v3853, 1.0
      %v3959 = vlog2.pop %v3958
      %v3960 = vmul.f32 %v3959, 0.6931472
      %v3961 = vmul.f32 -0.5, %v3853
      %v3962 = vadd.f32 %v3961, 1.0
      %v3963 = vmul.f32 %v3962, %v3853
      %v3964 = vand.u32 2147483647, %v3853
      %vm3965 = vcmp.lt.f32.partialorder %v3964, 0.0004427343
      %v3966 = vsel %vm3965, %v3963, %v3960
      %v3967 = vadd.f32 %v3855, 1.0
      %v3968 = vlog2.pop %v3967
      %v3969 = vmul.f32 %v3968, 0.6931472
      %v3970 = vmul.f32 -0.5, %v3855
      %v3971 = vadd.f32 %v3970, 1.0
      %v3972 = vmul.f32 %v3971, %v3855
      %v3973 = vand.u32 2147483647, %v3855
      %vm3974 = vcmp.lt.f32.partialorder %v3973, 0.0004427343
      %v3975 = vsel %vm3974, %v3972, %v3969
      %v3976 = vadd.f32 %v3857, 1.0
      %v3977 = vlog2.pop %v3976
      %v3978 = vmul.f32 %v3977, 0.6931472
      %v3979 = vmul.f32 -0.5, %v3857
      %v3980 = vadd.f32 %v3979, 1.0
      %v3981 = vmul.f32 %v3980, %v3857
      %v3982 = vand.u32 2147483647, %v3857
      %vm3983 = vcmp.lt.f32.partialorder %v3982, 0.0004427343
      %v3984 = vsel %vm3983, %v3981, %v3978
      %v3985 = vadd.f32 %v3859, 1.0
      %v3986 = vlog2.pop %v3985
      %v3987 = vmul.f32 %v3986, 0.6931472
      %v3988 = vmul.f32 -0.5, %v3859
      %v3989 = vadd.f32 %v3988, 1.0
      %v3990 = vmul.f32 %v3989, %v3859
      %v3991 = vand.u32 2147483647, %v3859
      %vm3992 = vcmp.lt.f32.partialorder %v3991, 0.0004427343
      %v3993 = vsel %vm3992, %v3990, %v3987
      %v3994 = vadd.f32 %v3861, 1.0
      %v3995 = vlog2.pop %v3994
      %v3996 = vmul.f32 %v3995, 0.6931472
      %v3997 = vmul.f32 -0.5, %v3861
      %v3998 = vadd.f32 %v3997, 1.0
      %v3999 = vmul.f32 %v3998, %v3861
      %v4000 = vand.u32 2147483647, %v3861
      %vm4001 = vcmp.lt.f32.partialorder %v4000, 0.0004427343
      %v4002 = vsel %vm4001, %v3999, %v3996
      %v4003 = vadd.f32 %v3863, 1.0
      %v4004 = vlog2.pop %v4003
      %v4005 = vmul.f32 %v4004, 0.6931472
      %v4006 = vmul.f32 -0.5, %v3863
      %v4007 = vadd.f32 %v4006, 1.0
      %v4008 = vmul.f32 %v4007, %v3863
      %v4009 = vand.u32 2147483647, %v3863
      %vm4010 = vcmp.lt.f32.partialorder %v4009, 0.0004427343
      %v4011 = vsel %vm4010, %v4008, %v4005
      %v4012 = vadd.f32 %v3865, 1.0
      %v4013 = vlog2.pop %v4012
      %v4014 = vmul.f32 %v4013, 0.6931472
      %v4015 = vmul.f32 -0.5, %v3865
      %v4016 = vadd.f32 %v4015, 1.0
      %v4017 = vmul.f32 %v4016, %v3865
      %v4018 = vand.u32 2147483647, %v3865
      %vm4019 = vcmp.lt.f32.partialorder %v4018, 0.0004427343
      %v4020 = vsel %vm4019, %v4017, %v4014
      %v4021 = vadd.f32 %v3867, 1.0
      %v4022 = vlog2.pop %v4021
      %v4023 = vmul.f32 %v4022, 0.6931472
      %v4024 = vmul.f32 -0.5, %v3867
      %v4025 = vadd.f32 %v4024, 1.0
      %v4026 = vmul.f32 %v4025, %v3867
      %v4027 = vand.u32 2147483647, %v3867
      %vm4028 = vcmp.lt.f32.partialorder %v4027, 0.0004427343
      %v4029 = vsel %vm4028, %v4026, %v4023
      %v4030 = vadd.f32 %v3869, 1.0
      %v4031 = vlog2.pop %v4030
      %v4032 = vmul.f32 %v4031, 0.6931472
      %v4033 = vmul.f32 -0.5, %v3869
      %v4034 = vadd.f32 %v4033, 1.0
      %v4035 = vmul.f32 %v4034, %v3869
      %v4036 = vand.u32 2147483647, %v3869
      %vm4037 = vcmp.lt.f32.partialorder %v4036, 0.0004427343
      %v4038 = vsel %vm4037, %v4035, %v4032
      %v4039 = vadd.f32 %v3871, 1.0
      %v4040 = vlog2.pop %v4039
      %v4041 = vmul.f32 %v4040, 0.6931472
      %v4042 = vmul.f32 -0.5, %v3871
      %v4043 = vadd.f32 %v4042, 1.0
      %v4044 = vmul.f32 %v4043, %v3871
      %v4045 = vand.u32 2147483647, %v3871
      %vm4046 = vcmp.lt.f32.partialorder %v4045, 0.0004427343
      %v4047 = vsel %vm4046, %v4044, %v4041
      %v4048 = vadd.f32 %v3873, 1.0
      %v4049 = vlog2.pop %v4048
      %v4050 = vmul.f32 %v4049, 0.6931472
      %v4051 = vmul.f32 -0.5, %v3873
      %v4052 = vadd.f32 %v4051, 1.0
      %v4053 = vmul.f32 %v4052, %v3873
      %v4054 = vand.u32 2147483647, %v3873
      %vm4055 = vcmp.lt.f32.partialorder %v4054, 0.0004427343
      %v4056 = vsel %vm4055, %v4053, %v4050
      %v4057 = vadd.f32 %v3875, 1.0
      %v4058 = vlog2.pop %v4057
      %v4059 = vmul.f32 %v4058, 0.6931472
      %v4060 = vmul.f32 -0.5, %v3875
      %v4061 = vadd.f32 %v4060, 1.0
      %v4062 = vmul.f32 %v4061, %v3875
      %v4063 = vand.u32 2147483647, %v3875
      %vm4064 = vcmp.lt.f32.partialorder %v4063, 0.0004427343
      %v4065 = vsel %vm4064, %v4062, %v4059
      %v4066 = vadd.f32 %v3877, 1.0
      %v4067 = vlog2.pop %v4066
      %v4068 = vmul.f32 %v4067, 0.6931472
      %v4069 = vmul.f32 -0.5, %v3877
      %v4070 = vadd.f32 %v4069, 1.0
      %v4071 = vmul.f32 %v4070, %v3877
      %v4072 = vand.u32 2147483647, %v3877
      %vm4073 = vcmp.lt.f32.partialorder %v4072, 0.0004427343
      %v4074 = vsel %vm4073, %v4071, %v4068
      %v4075 = vadd.f32 %v3879, 1.0
      %v4076 = vlog2.pop %v4075
      %v4077 = vmul.f32 %v4076, 0.6931472
      %v4078 = vmul.f32 -0.5, %v3879
      %v4079 = vadd.f32 %v4078, 1.0
      %v4080 = vmul.f32 %v4079, %v3879
      %v4081 = vand.u32 2147483647, %v3879
      %vm4082 = vcmp.lt.f32.partialorder %v4081, 0.0004427343
      %v4083 = vsel %vm4082, %v4080, %v4077
      %v4084 = vadd.f32 %v3881, 1.0
      %v4085 = vlog2.pop %v4084
      %v4086 = vmul.f32 %v4085, 0.6931472
      %v4087 = vmul.f32 -0.5, %v3881
      %v4088 = vadd.f32 %v4087, 1.0
      %v4089 = vmul.f32 %v4088, %v3881
      %v4090 = vand.u32 2147483647, %v3881
      %vm4091 = vcmp.lt.f32.partialorder %v4090, 0.0004427343
      %v4092 = vsel %vm4091, %v4089, %v4086
      %v4093 = vadd.f32 %v3883, 1.0
      %v4094 = vlog2.pop %v4093
      %v4095 = vmul.f32 %v4094, 0.6931472
      %v4096 = vmul.f32 -0.5, %v3883
      %v4097 = vadd.f32 %v4096, 1.0
      %v4098 = vmul.f32 %v4097, %v3883
      %v4099 = vand.u32 2147483647, %v3883
      %vm4100 = vcmp.lt.f32.partialorder %v4099, 0.0004427343
      %v4101 = vsel %vm4100, %v4098, %v4095
      %v4102 = vadd.f32 %v3885, 1.0
      %v4103 = vlog2.pop %v4102
      %v4104 = vmul.f32 %v4103, 0.6931472
      %v4105 = vmul.f32 -0.5, %v3885
      %v4106 = vadd.f32 %v4105, 1.0
      %v4107 = vmul.f32 %v4106, %v3885
      %v4108 = vand.u32 2147483647, %v3885
      %vm4109 = vcmp.lt.f32.partialorder %v4108, 0.0004427343
      %v4110 = vsel %vm4109, %v4107, %v4104
      %v4111 = vadd.f32 %v3887, 1.0
      %v4112 = vlog2.pop %v4111
      %v4113 = vmul.f32 %v4112, 0.6931472
      %v4114 = vmul.f32 -0.5, %v3887
      %v4115 = vadd.f32 %v4114, 1.0
      %v4116 = vmul.f32 %v4115, %v3887
      %v4117 = vand.u32 2147483647, %v3887
      %vm4118 = vcmp.lt.f32.partialorder %v4117, 0.0004427343
      %v4119 = vsel %vm4118, %v4116, %v4113
      %v4120 = vadd.f32 %v3889, 1.0
      %v4121 = vlog2.pop %v4120
      %v4122 = vmul.f32 %v4121, 0.6931472
      %v4123 = vmul.f32 -0.5, %v3889
      %v4124 = vadd.f32 %v4123, 1.0
      %v4125 = vmul.f32 %v4124, %v3889
      %v4126 = vand.u32 2147483647, %v3889
      %vm4127 = vcmp.lt.f32.partialorder %v4126, 0.0004427343
      %v4128 = vsel %vm4127, %v4125, %v4122
      %v4129 = vadd.f32 %v3891, 1.0
      %v4130 = vlog2.pop %v4129
      %v4131 = vmul.f32 %v4130, 0.6931472
      %v4132 = vmul.f32 -0.5, %v3891
      %v4133 = vadd.f32 %v4132, 1.0
      %v4134 = vmul.f32 %v4133, %v3891
      %v4135 = vand.u32 2147483647, %v3891
      %vm4136 = vcmp.lt.f32.partialorder %v4135, 0.0004427343
      %v4137 = vsel %vm4136, %v4134, %v4131
      %v4138 = vadd.f32 %v3893, 1.0
      %v4139 = vlog2.pop %v4138
      %v4140 = vmul.f32 %v4139, 0.6931472
      %v4141 = vmul.f32 -0.5, %v3893
      %v4142 = vadd.f32 %v4141, 1.0
      %v4143 = vmul.f32 %v4142, %v3893
      %v4144 = vand.u32 2147483647, %v3893
      %vm4145 = vcmp.lt.f32.partialorder %v4144, 0.0004427343
      %v4146 = vsel %vm4145, %v4143, %v4140
      %v4147 = vadd.f32 %v3895, 1.0
      %v4148 = vlog2.pop %v4147
      %v4149 = vmul.f32 %v4148, 0.6931472
      %v4150 = vmul.f32 -0.5, %v3895
      %v4151 = vadd.f32 %v4150, 1.0
      %v4152 = vmul.f32 %v4151, %v3895
      %v4153 = vand.u32 2147483647, %v3895
      %vm4154 = vcmp.lt.f32.partialorder %v4153, 0.0004427343
      %v4155 = vsel %vm4154, %v4152, %v4149
      %v4156 = vadd.f32 %v3897, 1.0
      %v4157 = vlog2.pop %v4156
      %v4158 = vmul.f32 %v4157, 0.6931472
      %v4159 = vmul.f32 -0.5, %v3897
      %v4160 = vadd.f32 %v4159, 1.0
      %v4161 = vmul.f32 %v4160, %v3897
      %v4162 = vand.u32 2147483647, %v3897
      %vm4163 = vcmp.lt.f32.partialorder %v4162, 0.0004427343
      %v4164 = vsel %vm4163, %v4161, %v4158
      %v4165 = vadd.f32 %v3899, 1.0
      %v4166 = vlog2.pop %v4165
      %v4167 = vmul.f32 %v4166, 0.6931472
      %v4168 = vmul.f32 -0.5, %v3899
      %v4169 = vadd.f32 %v4168, 1.0
      %v4170 = vmul.f32 %v4169, %v3899
      %v4171 = vand.u32 2147483647, %v3899
      %vm4172 = vcmp.lt.f32.partialorder %v4171, 0.0004427343
      %v4173 = vsel %vm4172, %v4170, %v4167
      %v4174 = vadd.f32 %v3901, 1.0
      %v4175 = vlog2.pop %v4174
      %v4176 = vmul.f32 %v4175, 0.6931472
      %v4177 = vmul.f32 -0.5, %v3901
      %v4178 = vadd.f32 %v4177, 1.0
      %v4179 = vmul.f32 %v4178, %v3901
      %v4180 = vand.u32 2147483647, %v3901
      %vm4181 = vcmp.lt.f32.partialorder %v4180, 0.0004427343
      %v4182 = vsel %vm4181, %v4179, %v4176
      %v4183 = vadd.f32 %v3903, 1.0
      %v4184 = vlog2.pop %v4183
      %v4185 = vmul.f32 %v4184, 0.6931472
      %v4186 = vmul.f32 -0.5, %v3903
      %v4187 = vadd.f32 %v4186, 1.0
      %v4188 = vmul.f32 %v4187, %v3903
      %v4189 = vand.u32 2147483647, %v3903
      %vm4190 = vcmp.lt.f32.partialorder %v4189, 0.0004427343
      %v4191 = vsel %vm4190, %v4188, %v4185
      %v4192 = vmul.f32 %v3912, 0.01
      %v4193 = vmul.f32 %v3921, 0.01
      %v4194 = vmul.f32 %v3930, 0.01
      %v4195 = vmul.f32 %v3939, 0.01
      %v4196 = vmul.f32 %v3948, 0.01
      %v4197 = vmul.f32 %v3957, 0.01
      %v4198 = vmul.f32 %v3966, 0.01
      %v4199 = vmul.f32 %v3975, 0.01
      %v4200 = vmul.f32 %v3984, 0.01
      %v4201 = vmul.f32 %v3993, 0.01
      %v4202 = vmul.f32 %v4002, 0.01
      %v4203 = vmul.f32 %v4011, 0.01
      %v4204 = vmul.f32 %v4020, 0.01
      %v4205 = vmul.f32 %v4029, 0.01
      %v4206 = vmul.f32 %v4038, 0.01
      %v4207 = vmul.f32 %v4047, 0.01
      %v4208 = vmul.f32 %v4056, 0.01
      %v4209 = vmul.f32 %v4065, 0.01
      %v4210 = vmul.f32 %v4074, 0.01
      %v4211 = vmul.f32 %v4083, 0.01
      %v4212 = vmul.f32 %v4092, 0.01
      %v4213 = vmul.f32 %v4101, 0.01
      %v4214 = vmul.f32 %v4110, 0.01
      %v4215 = vmul.f32 %v4119, 0.01
      %v4216 = vmul.f32 %v4128, 0.01
      %v4217 = vmul.f32 %v4137, 0.01
      %v4218 = vmul.f32 %v4146, 0.01
      %v4219 = vmul.f32 %v4155, 0.01
      %v4220 = vmul.f32 %v4164, 0.01
      %v4221 = vmul.f32 %v4173, 0.01
      %v4222 = vmul.f32 %v4182, 0.01
      %v4223 = vmul.f32 %v4191, 0.01
      %vm4224 = vcmp.gt.f32.partialorder %v3744, 0.2
      %vm4225 = vcmp.gt.f32.partialorder %v3745, 0.2
      %vm4226 = vcmp.gt.f32.partialorder %v3746, 0.2
      %vm4227 = vcmp.gt.f32.partialorder %v3747, 0.2
      %vm4228 = vcmp.gt.f32.partialorder %v3748, 0.2
      %vm4229 = vcmp.gt.f32.partialorder %v3749, 0.2
      %vm4230 = vcmp.gt.f32.partialorder %v3750, 0.2
      %vm4231 = vcmp.gt.f32.partialorder %v3751, 0.2
      %vm4232 = vcmp.gt.f32.partialorder %v3752, 0.2
      %vm4233 = vcmp.gt.f32.partialorder %v3753, 0.2
      %vm4234 = vcmp.gt.f32.partialorder %v3754, 0.2
      %vm4235 = vcmp.gt.f32.partialorder %v3755, 0.2
      %vm4236 = vcmp.gt.f32.partialorder %v3756, 0.2
      %vm4237 = vcmp.gt.f32.partialorder %v3757, 0.2
      %vm4238 = vcmp.gt.f32.partialorder %v3758, 0.2
      %vm4239 = vcmp.gt.f32.partialorder %v3759, 0.2
      %vm4240 = vcmp.gt.f32.partialorder %v3760, 0.2
      %vm4241 = vcmp.gt.f32.partialorder %v3761, 0.2
      %vm4242 = vcmp.gt.f32.partialorder %v3762, 0.2
      %vm4243 = vcmp.gt.f32.partialorder %v3763, 0.2
      %vm4244 = vcmp.gt.f32.partialorder %v3764, 0.2
      %vm4245 = vcmp.gt.f32.partialorder %v3765, 0.2
      %vm4246 = vcmp.gt.f32.partialorder %v3766, 0.2
      %vm4247 = vcmp.gt.f32.partialorder %v3767, 0.2
      %vm4248 = vcmp.gt.f32.partialorder %v3768, 0.2
      %vm4249 = vcmp.gt.f32.partialorder %v3769, 0.2
      %vm4250 = vcmp.gt.f32.partialorder %v3770, 0.2
      %vm4251 = vcmp.gt.f32.partialorder %v3771, 0.2
      %vm4252 = vcmp.gt.f32.partialorder %v3772, 0.2
      %vm4253 = vcmp.gt.f32.partialorder %v3773, 0.2
      %vm4254 = vcmp.gt.f32.partialorder %v3774, 0.2
      %vm4255 = vcmp.gt.f32.partialorder %v3775, 0.2
      %v4256 = vsel %vm4224, %v3744, %v4192
      %v4257 = vsel %vm4225, %v3745, %v4193
      %v4258 = vsel %vm4226, %v3746, %v4194
      %v4259 = vsel %vm4227, %v3747, %v4195
      %v4260 = vsel %vm4228, %v3748, %v4196
      %v4261 = vsel %vm4229, %v3749, %v4197
      %v4262 = vsel %vm4230, %v3750, %v4198
      %v4263 = vsel %vm4231, %v3751, %v4199
      %v4264 = vsel %vm4232, %v3752, %v4200
      %v4265 = vsel %vm4233, %v3753, %v4201
      %v4266 = vsel %vm4234, %v3754, %v4202
      %v4267 = vsel %vm4235, %v3755, %v4203
      %v4268 = vsel %vm4236, %v3756, %v4204
      %v4269 = vsel %vm4237, %v3757, %v4205
      %v4270 = vsel %vm4238, %v3758, %v4206
      %v4271 = vsel %vm4239, %v3759, %v4207
      %v4272 = vsel %vm4240, %v3760, %v4208
      %v4273 = vsel %vm4241, %v3761, %v4209
      %v4274 = vsel %vm4242, %v3762, %v4210
      %v4275 = vsel %vm4243, %v3763, %v4211
      %v4276 = vsel %vm4244, %v3764, %v4212
      %v4277 = vsel %vm4245, %v3765, %v4213
      %v4278 = vsel %vm4246, %v3766, %v4214
      %v4279 = vsel %vm4247, %v3767, %v4215
      %v4280 = vsel %vm4248, %v3768, %v4216
      %v4281 = vsel %vm4249, %v3769, %v4217
      %v4282 = vsel %vm4250, %v3770, %v4218
      %v4283 = vsel %vm4251, %v3771, %v4219
      %v4284 = vsel %vm4252, %v3772, %v4220
      %v4285 = vsel %vm4253, %v3773, %v4221
      %v4286 = vsel %vm4254, %v3774, %v4222
      %v4287 = vsel %vm4255, %v3775, %v4223
      %s4288 = scalar_lea.vmem %s2, 5
      %v4289 = vld [vmem:[%s4288] sm:$0x1]
      %s4290 = scalar_lea.vmem %s1, 768
      %v4291 = vld [vmem:[%s4290] sm:$0xff]
      %v4292 = vld [vmem:[%s4290 + $0x8] sm:$0xff]
      %v4293 = vld [vmem:[%s4290 + $0x10] sm:$0xff]
      %v4294 = vld [vmem:[%s4290 + $0x18] sm:$0xff]
      %v4295 = vld [vmem:[%s4290 + $0x20] sm:$0xff]
      %v4296 = vld [vmem:[%s4290 + $0x28] sm:$0xff]
      %v4297 = vld [vmem:[%s4290 + $0x30] sm:$0xff]
      %v4298 = vld [vmem:[%s4290 + $0x38] sm:$0xff]
      %v4299 = vld [vmem:[%s4290 + $0x40] sm:$0xff]
      %v4300 = vld [vmem:[%s4290 + $0x48] sm:$0xff]
      %v4301 = vld [vmem:[%s4290 + $0x50] sm:$0xff]
      %v4302 = vld [vmem:[%s4290 + $0x58] sm:$0xff]
      %v4303 = vld [vmem:[%s4290 + $0x60] sm:$0xff]
      %v4304 = vld [vmem:[%s4290 + $0x68] sm:$0xff]
      %v4305 = vld [vmem:[%s4290 + $0x70] sm:$0xff]
      %v4306 = vld [vmem:[%s4290 + $0x78] sm:$0xff]
      %v4308 = vlaneseq
      %v4309 = vshrl.u32 %v4308, 7
      %v4310 = vsub.s32 0, %v4309
      %v4311 = vrot.slane %v4289, %v4310
      %4313 = vmatprep.subr.mxu0 0.0
      %4314 = vmatpush1.msra.mxu0 %v4306
      %4315 = vmatprep.subr.mxu0 0.0
      %4316 = vmatpush1.msra.mxu0 %v4305
      %4317 = vmatprep.subr.mxu0 0.0
      %4318 = vmatpush1.msra.mxu0 %v4304
      %4319 = vmatprep.subr.mxu0 0.0
      %4320 = vmatpush1.msra.mxu0 %v4303
      %4321 = vmatprep.subr.mxu0 0.0
      %4322 = vmatpush1.msra.mxu0 %v4302
      %4323 = vmatprep.subr.mxu0 0.0
      %4324 = vmatpush1.msra.mxu0 %v4301
      %4325 = vmatprep.subr.mxu0 0.0
      %4326 = vmatpush1.msra.mxu0 %v4300
      %4327 = vmatprep.subr.mxu0 0.0
      %4328 = vmatpush1.msra.mxu0 %v4299
      %4329 = vmatprep.subr.mxu0 0.0
      %4330 = vmatpush1.msra.mxu0 %v4298
      %4331 = vmatprep.subr.mxu0 0.0
      %4332 = vmatpush1.msra.mxu0 %v4297
      %4333 = vmatprep.subr.mxu0 0.0
      %4334 = vmatpush1.msra.mxu0 %v4296
      %4335 = vmatprep.subr.mxu0 0.0
      %4336 = vmatpush1.msra.mxu0 %v4295
      %4337 = vmatprep.subr.mxu0 0.0
      %4338 = vmatpush1.msra.mxu0 %v4294
      %4339 = vmatprep.subr.mxu0 0.0
      %4340 = vmatpush1.msra.mxu0 %v4293
      %4341 = vmatprep.subr.mxu0 0.0
      %4342 = vmatpush1.msra.mxu0 %v4292
      %4343 = vmatprep.subr.mxu0 0.0
      %4344 = vmatpush1.msra.mxu0 %v4291
      %4345 = vmatprep.subr.mxu0 0.0
      %4346 = vmatpush2.msra.mxu0 0.0
      %4347 = vmatprep.subr.mxu0 0.0
      %4348 = vmatpush2.msra.mxu0 0.0
      %4349 = vmatprep.subr.mxu0 0.0
      %4350 = vmatpush2.msra.mxu0 0.0
      %4351 = vmatprep.subr.mxu0 0.0
      %4352 = vmatpush2.msra.mxu0 0.0
      %4353 = vmatprep.subr.mxu0 0.0
      %4354 = vmatpush2.msra.mxu0 0.0
      %4355 = vmatprep.subr.mxu0 0.0
      %4356 = vmatpush2.msra.mxu0 0.0
      %4357 = vmatprep.subr.mxu0 0.0
      %4358 = vmatpush2.msra.mxu0 0.0
      %4359 = vmatprep.subr.mxu0 0.0
      %4360 = vmatpush2.msra.mxu0 0.0
      %4361 = vmatprep.subr.mxu0 0.0
      %4362 = vmatpush2.msra.mxu0 0.0
      %4363 = vmatprep.subr.mxu0 0.0
      %4364 = vmatpush2.msra.mxu0 0.0
      %4365 = vmatprep.subr.mxu0 0.0
      %4366 = vmatpush2.msra.mxu0 0.0
      %4367 = vmatprep.subr.mxu0 0.0
      %4368 = vmatpush2.msra.mxu0 0.0
      %4369 = vmatprep.subr.mxu0 0.0
      %4370 = vmatpush2.msra.mxu0 0.0
      %4371 = vmatprep.subr.mxu0 0.0
      %4372 = vmatpush2.msra.mxu0 0.0
      %4373 = vmatprep.subr.mxu0 0.0
      %4374 = vmatpush2.msra.mxu0 0.0
      %4375 = vmatprep.subr.mxu0 0.0
      %4376 = vmatpush2.msra.mxu0 0.0
      %4377 = vmatprep.mubr.f32.mxu0 0.0
      %4378 = vmatmul.mubr.f32.gmra.mxu0 %v4256
      %v4379 = vpop.f32.mrf.mxu0
      %v4380 = vadd.f32 %v4311, %v4379
      %v4381 = vpop.f32.mrf.mxu0
      %4382 = vmatprep.mubr.f32.mxu0 0.0
      %4383 = vmatmul.mubr.f32.gmra.mxu0 %v4257
      %v4384 = vpop.f32.mrf.mxu0
      %v4385 = vadd.f32 %v4311, %v4384
      %v4386 = vpop.f32.mrf.mxu0
      %4387 = vmatprep.mubr.f32.mxu0 0.0
      %4388 = vmatmul.mubr.f32.gmra.mxu0 %v4258
      %v4389 = vpop.f32.mrf.mxu0
      %v4390 = vadd.f32 %v4311, %v4389
      %v4391 = vpop.f32.mrf.mxu0
      %4392 = vmatprep.mubr.f32.mxu0 0.0
      %4393 = vmatmul.mubr.f32.gmra.mxu0 %v4259
      %v4394 = vpop.f32.mrf.mxu0
      %v4395 = vadd.f32 %v4311, %v4394
      %v4396 = vpop.f32.mrf.mxu0
      %4397 = vmatprep.mubr.f32.mxu0 0.0
      %4398 = vmatmul.mubr.f32.gmra.mxu0 %v4260
      %v4399 = vpop.f32.mrf.mxu0
      %v4400 = vadd.f32 %v4311, %v4399
      %v4401 = vpop.f32.mrf.mxu0
      %4402 = vmatprep.mubr.f32.mxu0 0.0
      %4403 = vmatmul.mubr.f32.gmra.mxu0 %v4261
      %v4404 = vpop.f32.mrf.mxu0
      %v4405 = vadd.f32 %v4311, %v4404
      %v4406 = vpop.f32.mrf.mxu0
      %4407 = vmatprep.mubr.f32.mxu0 0.0
      %4408 = vmatmul.mubr.f32.gmra.mxu0 %v4262
      %v4409 = vpop.f32.mrf.mxu0
      %v4410 = vadd.f32 %v4311, %v4409
      %v4411 = vpop.f32.mrf.mxu0
      %4412 = vmatprep.mubr.f32.mxu0 0.0
      %4413 = vmatmul.mubr.f32.gmra.mxu0 %v4263
      %v4414 = vpop.f32.mrf.mxu0
      %v4415 = vadd.f32 %v4311, %v4414
      %v4416 = vpop.f32.mrf.mxu0
      %4417 = vmatprep.mubr.f32.mxu0 0.0
      %4418 = vmatmul.mubr.f32.gmra.mxu0 %v4264
      %v4419 = vpop.f32.mrf.mxu0
      %v4420 = vadd.f32 %v4311, %v4419
      %v4421 = vpop.f32.mrf.mxu0
      %4422 = vmatprep.mubr.f32.mxu0 0.0
      %4423 = vmatmul.mubr.f32.gmra.mxu0 %v4265
      %v4424 = vpop.f32.mrf.mxu0
      %v4425 = vadd.f32 %v4311, %v4424
      %v4426 = vpop.f32.mrf.mxu0
      %4427 = vmatprep.mubr.f32.mxu0 0.0
      %4428 = vmatmul.mubr.f32.gmra.mxu0 %v4266
      %v4429 = vpop.f32.mrf.mxu0
      %v4430 = vadd.f32 %v4311, %v4429
      %v4431 = vpop.f32.mrf.mxu0
      %4432 = vmatprep.mubr.f32.mxu0 0.0
      %4433 = vmatmul.mubr.f32.gmra.mxu0 %v4267
      %v4434 = vpop.f32.mrf.mxu0
      %v4435 = vadd.f32 %v4311, %v4434
      %v4436 = vpop.f32.mrf.mxu0
      %4437 = vmatprep.mubr.f32.mxu0 0.0
      %4438 = vmatmul.mubr.f32.gmra.mxu0 %v4268
      %v4439 = vpop.f32.mrf.mxu0
      %v4440 = vadd.f32 %v4311, %v4439
      %v4441 = vpop.f32.mrf.mxu0
      %4442 = vmatprep.mubr.f32.mxu0 0.0
      %4443 = vmatmul.mubr.f32.gmra.mxu0 %v4269
      %v4444 = vpop.f32.mrf.mxu0
      %v4445 = vadd.f32 %v4311, %v4444
      %v4446 = vpop.f32.mrf.mxu0
      %4447 = vmatprep.mubr.f32.mxu0 0.0
      %4448 = vmatmul.mubr.f32.gmra.mxu0 %v4270
      %v4449 = vpop.f32.mrf.mxu0
      %v4450 = vadd.f32 %v4311, %v4449
      %v4451 = vpop.f32.mrf.mxu0
      %4452 = vmatprep.mubr.f32.mxu0 0.0
      %4453 = vmatmul.mubr.f32.gmra.mxu0 %v4271
      %v4454 = vpop.f32.mrf.mxu0
      %v4455 = vadd.f32 %v4311, %v4454
      %v4456 = vpop.f32.mrf.mxu0
      %4457 = vmatprep.mubr.f32.mxu0 0.0
      %4458 = vmatmul.mubr.f32.gmra.mxu0 %v4272
      %v4459 = vpop.f32.mrf.mxu0
      %v4460 = vadd.f32 %v4311, %v4459
      %v4461 = vpop.f32.mrf.mxu0
      %4462 = vmatprep.mubr.f32.mxu0 0.0
      %4463 = vmatmul.mubr.f32.gmra.mxu0 %v4273
      %v4464 = vpop.f32.mrf.mxu0
      %v4465 = vadd.f32 %v4311, %v4464
      %v4466 = vpop.f32.mrf.mxu0
      %4467 = vmatprep.mubr.f32.mxu0 0.0
      %4468 = vmatmul.mubr.f32.gmra.mxu0 %v4274
      %v4469 = vpop.f32.mrf.mxu0
      %v4470 = vadd.f32 %v4311, %v4469
      %v4471 = vpop.f32.mrf.mxu0
      %4472 = vmatprep.mubr.f32.mxu0 0.0
      %4473 = vmatmul.mubr.f32.gmra.mxu0 %v4275
      %v4474 = vpop.f32.mrf.mxu0
      %v4475 = vadd.f32 %v4311, %v4474
      %v4476 = vpop.f32.mrf.mxu0
      %4477 = vmatprep.mubr.f32.mxu0 0.0
      %4478 = vmatmul.mubr.f32.gmra.mxu0 %v4276
      %v4479 = vpop.f32.mrf.mxu0
      %v4480 = vadd.f32 %v4311, %v4479
      %v4481 = vpop.f32.mrf.mxu0
      %4482 = vmatprep.mubr.f32.mxu0 0.0
      %4483 = vmatmul.mubr.f32.gmra.mxu0 %v4277
      %v4484 = vpop.f32.mrf.mxu0
      %v4485 = vadd.f32 %v4311, %v4484
      %v4486 = vpop.f32.mrf.mxu0
      %4487 = vmatprep.mubr.f32.mxu0 0.0
      %4488 = vmatmul.mubr.f32.gmra.mxu0 %v4278
      %v4489 = vpop.f32.mrf.mxu0
      %v4490 = vadd.f32 %v4311, %v4489
      %v4491 = vpop.f32.mrf.mxu0
      %4492 = vmatprep.mubr.f32.mxu0 0.0
      %4493 = vmatmul.mubr.f32.gmra.mxu0 %v4279
      %v4494 = vpop.f32.mrf.mxu0
      %v4495 = vadd.f32 %v4311, %v4494
      %v4496 = vpop.f32.mrf.mxu0
      %4497 = vmatprep.mubr.f32.mxu0 0.0
      %4498 = vmatmul.mubr.f32.gmra.mxu0 %v4280
      %v4499 = vpop.f32.mrf.mxu0
      %v4500 = vadd.f32 %v4311, %v4499
      %v4501 = vpop.f32.mrf.mxu0
      %4502 = vmatprep.mubr.f32.mxu0 0.0
      %4503 = vmatmul.mubr.f32.gmra.mxu0 %v4281
      %v4504 = vpop.f32.mrf.mxu0
      %v4505 = vadd.f32 %v4311, %v4504
      %v4506 = vpop.f32.mrf.mxu0
      %4507 = vmatprep.mubr.f32.mxu0 0.0
      %4508 = vmatmul.mubr.f32.gmra.mxu0 %v4282
      %v4509 = vpop.f32.mrf.mxu0
      %v4510 = vadd.f32 %v4311, %v4509
      %v4511 = vpop.f32.mrf.mxu0
      %4512 = vmatprep.mubr.f32.mxu0 0.0
      %4513 = vmatmul.mubr.f32.gmra.mxu0 %v4283
      %v4514 = vpop.f32.mrf.mxu0
      %v4515 = vadd.f32 %v4311, %v4514
      %v4516 = vpop.f32.mrf.mxu0
      %4517 = vmatprep.mubr.f32.mxu0 0.0
      %4518 = vmatmul.mubr.f32.gmra.mxu0 %v4284
      %v4519 = vpop.f32.mrf.mxu0
      %v4520 = vadd.f32 %v4311, %v4519
      %v4521 = vpop.f32.mrf.mxu0
      %4522 = vmatprep.mubr.f32.mxu0 0.0
      %4523 = vmatmul.mubr.f32.gmra.mxu0 %v4285
      %v4524 = vpop.f32.mrf.mxu0
      %v4525 = vadd.f32 %v4311, %v4524
      %v4526 = vpop.f32.mrf.mxu0
      %4527 = vmatprep.mubr.f32.mxu0 0.0
      %4528 = vmatmul.mubr.f32.gmra.mxu0 %v4286
      %v4529 = vpop.f32.mrf.mxu0
      %v4530 = vadd.f32 %v4311, %v4529
      %v4531 = vpop.f32.mrf.mxu0
      %4532 = vmatprep.mubr.f32.mxu0 0.0
      %4533 = vmatmul.mubr.f32.gmra.mxu0 %v4287
      %v4534 = vpop.f32.mrf.mxu0
      %v4535 = vadd.f32 %v4311, %v4534
      %v4536 = vpop.f32.mrf.mxu0
      %4537 = vdwg.mxu0
      %v4538 = vmin.f32 %v4380, 0.2
      %v4539 = vmin.f32 %v4385, 0.2
      %v4540 = vmin.f32 %v4390, 0.2
      %v4541 = vmin.f32 %v4395, 0.2
      %v4542 = vmin.f32 %v4400, 0.2
      %v4543 = vmin.f32 %v4405, 0.2
      %v4544 = vmin.f32 %v4410, 0.2
      %v4545 = vmin.f32 %v4415, 0.2
      %v4546 = vmin.f32 %v4420, 0.2
      %v4547 = vmin.f32 %v4425, 0.2
      %v4548 = vmin.f32 %v4430, 0.2
      %v4549 = vmin.f32 %v4435, 0.2
      %v4550 = vmin.f32 %v4440, 0.2
      %v4551 = vmin.f32 %v4445, 0.2
      %v4552 = vmin.f32 %v4450, 0.2
      %v4553 = vmin.f32 %v4455, 0.2
      %v4554 = vmin.f32 %v4460, 0.2
      %v4555 = vmin.f32 %v4465, 0.2
      %v4556 = vmin.f32 %v4470, 0.2
      %v4557 = vmin.f32 %v4475, 0.2
      %v4558 = vmin.f32 %v4480, 0.2
      %v4559 = vmin.f32 %v4485, 0.2
      %v4560 = vmin.f32 %v4490, 0.2
      %v4561 = vmin.f32 %v4495, 0.2
      %v4562 = vmin.f32 %v4500, 0.2
      %v4563 = vmin.f32 %v4505, 0.2
      %v4564 = vmin.f32 %v4510, 0.2
      %v4565 = vmin.f32 %v4515, 0.2
      %v4566 = vmin.f32 %v4520, 0.2
      %v4567 = vmin.f32 %v4525, 0.2
      %v4568 = vmin.f32 %v4530, 0.2
      %v4569 = vmin.f32 %v4535, 0.2
      %v4570 = vmul.f32 %v4538, 100.0
      %v4571 = vmul.f32 %v4539, 100.0
      %v4572 = vmul.f32 %v4540, 100.0
      %v4573 = vmul.f32 %v4541, 100.0
      %v4574 = vmul.f32 %v4542, 100.0
      %v4575 = vmul.f32 %v4543, 100.0
      %v4576 = vmul.f32 %v4544, 100.0
      %v4577 = vmul.f32 %v4545, 100.0
      %v4578 = vmul.f32 %v4546, 100.0
      %v4579 = vmul.f32 %v4547, 100.0
      %v4580 = vmul.f32 %v4548, 100.0
      %v4581 = vmul.f32 %v4549, 100.0
      %v4582 = vmul.f32 %v4550, 100.0
      %v4583 = vmul.f32 %v4551, 100.0
      %v4584 = vmul.f32 %v4552, 100.0
      %v4585 = vmul.f32 %v4553, 100.0
      %v4586 = vmul.f32 %v4554, 100.0
      %v4587 = vmul.f32 %v4555, 100.0
      %v4588 = vmul.f32 %v4556, 100.0
      %v4589 = vmul.f32 %v4557, 100.0
      %v4590 = vmul.f32 %v4558, 100.0
      %v4591 = vmul.f32 %v4559, 100.0
      %v4592 = vmul.f32 %v4560, 100.0
      %v4593 = vmul.f32 %v4561, 100.0
      %v4594 = vmul.f32 %v4562, 100.0
      %v4595 = vmul.f32 %v4563, 100.0
      %v4596 = vmul.f32 %v4564, 100.0
      %v4597 = vmul.f32 %v4565, 100.0
      %v4598 = vmul.f32 %v4566, 100.0
      %v4599 = vmul.f32 %v4567, 100.0
      %v4600 = vmul.f32 %v4568, 100.0
      %v4601 = vmul.f32 %v4569, 100.0
      %v4602 = vmul.f32 %v4570, 1.442695
      %v4603 = vpow.pop %v4602
      %v4604 = vmul.f32 %v4571, 1.442695
      %v4605 = vpow.pop %v4604
      %v4606 = vmul.f32 %v4572, 1.442695
      %v4607 = vpow.pop %v4606
      %v4608 = vmul.f32 %v4573, 1.442695
      %v4609 = vpow.pop %v4608
      %v4610 = vmul.f32 %v4574, 1.442695
      %v4611 = vpow.pop %v4610
      %v4612 = vmul.f32 %v4575, 1.442695
      %v4613 = vpow.pop %v4612
      %v4614 = vmul.f32 %v4576, 1.442695
      %v4615 = vpow.pop %v4614
      %v4616 = vmul.f32 %v4577, 1.442695
      %v4617 = vpow.pop %v4616
      %v4618 = vmul.f32 %v4578, 1.442695
      %v4619 = vpow.pop %v4618
      %v4620 = vmul.f32 %v4579, 1.442695
      %v4621 = vpow.pop %v4620
      %v4622 = vmul.f32 %v4580, 1.442695
      %v4623 = vpow.pop %v4622
      %v4624 = vmul.f32 %v4581, 1.442695
      %v4625 = vpow.pop %v4624
      %v4626 = vmul.f32 %v4582, 1.442695
      %v4627 = vpow.pop %v4626
      %v4628 = vmul.f32 %v4583, 1.442695
      %v4629 = vpow.pop %v4628
      %v4630 = vmul.f32 %v4584, 1.442695
      %v4631 = vpow.pop %v4630
      %v4632 = vmul.f32 %v4585, 1.442695
      %v4633 = vpow.pop %v4632
      %v4634 = vmul.f32 %v4586, 1.442695
      %v4635 = vpow.pop %v4634
      %v4636 = vmul.f32 %v4587, 1.442695
      %v4637 = vpow.pop %v4636
      %v4638 = vmul.f32 %v4588, 1.442695
      %v4639 = vpow.pop %v4638
      %v4640 = vmul.f32 %v4589, 1.442695
      %v4641 = vpow.pop %v4640
      %v4642 = vmul.f32 %v4590, 1.442695
      %v4643 = vpow.pop %v4642
      %v4644 = vmul.f32 %v4591, 1.442695
      %v4645 = vpow.pop %v4644
      %v4646 = vmul.f32 %v4592, 1.442695
      %v4647 = vpow.pop %v4646
      %v4648 = vmul.f32 %v4593, 1.442695
      %v4649 = vpow.pop %v4648
      %v4650 = vmul.f32 %v4594, 1.442695
      %v4651 = vpow.pop %v4650
      %v4652 = vmul.f32 %v4595, 1.442695
      %v4653 = vpow.pop %v4652
      %v4654 = vmul.f32 %v4596, 1.442695
      %v4655 = vpow.pop %v4654
      %v4656 = vmul.f32 %v4597, 1.442695
      %v4657 = vpow.pop %v4656
      %v4658 = vmul.f32 %v4598, 1.442695
      %v4659 = vpow.pop %v4658
      %v4660 = vmul.f32 %v4599, 1.442695
      %v4661 = vpow.pop %v4660
      %v4662 = vmul.f32 %v4600, 1.442695
      %v4663 = vpow.pop %v4662
      %v4664 = vmul.f32 %v4601, 1.442695
      %v4665 = vpow.pop %v4664
      %v4666 = vadd.f32 %v4603, 1.0
      %v4667 = vlog2.pop %v4666
      %v4668 = vmul.f32 %v4667, 0.6931472
      %v4669 = vmul.f32 -0.5, %v4603
      %v4670 = vadd.f32 %v4669, 1.0
      %v4671 = vmul.f32 %v4670, %v4603
      %v4672 = vand.u32 2147483647, %v4603
      %vm4673 = vcmp.lt.f32.partialorder %v4672, 0.0004427343
      %v4674 = vsel %vm4673, %v4671, %v4668
      %v4675 = vadd.f32 %v4605, 1.0
      %v4676 = vlog2.pop %v4675
      %v4677 = vmul.f32 %v4676, 0.6931472
      %v4678 = vmul.f32 -0.5, %v4605
      %v4679 = vadd.f32 %v4678, 1.0
      %v4680 = vmul.f32 %v4679, %v4605
      %v4681 = vand.u32 2147483647, %v4605
      %vm4682 = vcmp.lt.f32.partialorder %v4681, 0.0004427343
      %v4683 = vsel %vm4682, %v4680, %v4677
      %v4684 = vadd.f32 %v4607, 1.0
      %v4685 = vlog2.pop %v4684
      %v4686 = vmul.f32 %v4685, 0.6931472
      %v4687 = vmul.f32 -0.5, %v4607
      %v4688 = vadd.f32 %v4687, 1.0
      %v4689 = vmul.f32 %v4688, %v4607
      %v4690 = vand.u32 2147483647, %v4607
      %vm4691 = vcmp.lt.f32.partialorder %v4690, 0.0004427343
      %v4692 = vsel %vm4691, %v4689, %v4686
      %v4693 = vadd.f32 %v4609, 1.0
      %v4694 = vlog2.pop %v4693
      %v4695 = vmul.f32 %v4694, 0.6931472
      %v4696 = vmul.f32 -0.5, %v4609
      %v4697 = vadd.f32 %v4696, 1.0
      %v4698 = vmul.f32 %v4697, %v4609
      %v4699 = vand.u32 2147483647, %v4609
      %vm4700 = vcmp.lt.f32.partialorder %v4699, 0.0004427343
      %v4701 = vsel %vm4700, %v4698, %v4695
      %v4702 = vadd.f32 %v4611, 1.0
      %v4703 = vlog2.pop %v4702
      %v4704 = vmul.f32 %v4703, 0.6931472
      %v4705 = vmul.f32 -0.5, %v4611
      %v4706 = vadd.f32 %v4705, 1.0
      %v4707 = vmul.f32 %v4706, %v4611
      %v4708 = vand.u32 2147483647, %v4611
      %vm4709 = vcmp.lt.f32.partialorder %v4708, 0.0004427343
      %v4710 = vsel %vm4709, %v4707, %v4704
      %v4711 = vadd.f32 %v4613, 1.0
      %v4712 = vlog2.pop %v4711
      %v4713 = vmul.f32 %v4712, 0.6931472
      %v4714 = vmul.f32 -0.5, %v4613
      %v4715 = vadd.f32 %v4714, 1.0
      %v4716 = vmul.f32 %v4715, %v4613
      %v4717 = vand.u32 2147483647, %v4613
      %vm4718 = vcmp.lt.f32.partialorder %v4717, 0.0004427343
      %v4719 = vsel %vm4718, %v4716, %v4713
      %v4720 = vadd.f32 %v4615, 1.0
      %v4721 = vlog2.pop %v4720
      %v4722 = vmul.f32 %v4721, 0.6931472
      %v4723 = vmul.f32 -0.5, %v4615
      %v4724 = vadd.f32 %v4723, 1.0
      %v4725 = vmul.f32 %v4724, %v4615
      %v4726 = vand.u32 2147483647, %v4615
      %vm4727 = vcmp.lt.f32.partialorder %v4726, 0.0004427343
      %v4728 = vsel %vm4727, %v4725, %v4722
      %v4729 = vadd.f32 %v4617, 1.0
      %v4730 = vlog2.pop %v4729
      %v4731 = vmul.f32 %v4730, 0.6931472
      %v4732 = vmul.f32 -0.5, %v4617
      %v4733 = vadd.f32 %v4732, 1.0
      %v4734 = vmul.f32 %v4733, %v4617
      %v4735 = vand.u32 2147483647, %v4617
      %vm4736 = vcmp.lt.f32.partialorder %v4735, 0.0004427343
      %v4737 = vsel %vm4736, %v4734, %v4731
      %v4738 = vadd.f32 %v4619, 1.0
      %v4739 = vlog2.pop %v4738
      %v4740 = vmul.f32 %v4739, 0.6931472
      %v4741 = vmul.f32 -0.5, %v4619
      %v4742 = vadd.f32 %v4741, 1.0
      %v4743 = vmul.f32 %v4742, %v4619
      %v4744 = vand.u32 2147483647, %v4619
      %vm4745 = vcmp.lt.f32.partialorder %v4744, 0.0004427343
      %v4746 = vsel %vm4745, %v4743, %v4740
      %v4747 = vadd.f32 %v4621, 1.0
      %v4748 = vlog2.pop %v4747
      %v4749 = vmul.f32 %v4748, 0.6931472
      %v4750 = vmul.f32 -0.5, %v4621
      %v4751 = vadd.f32 %v4750, 1.0
      %v4752 = vmul.f32 %v4751, %v4621
      %v4753 = vand.u32 2147483647, %v4621
      %vm4754 = vcmp.lt.f32.partialorder %v4753, 0.0004427343
      %v4755 = vsel %vm4754, %v4752, %v4749
      %v4756 = vadd.f32 %v4623, 1.0
      %v4757 = vlog2.pop %v4756
      %v4758 = vmul.f32 %v4757, 0.6931472
      %v4759 = vmul.f32 -0.5, %v4623
      %v4760 = vadd.f32 %v4759, 1.0
      %v4761 = vmul.f32 %v4760, %v4623
      %v4762 = vand.u32 2147483647, %v4623
      %vm4763 = vcmp.lt.f32.partialorder %v4762, 0.0004427343
      %v4764 = vsel %vm4763, %v4761, %v4758
      %v4765 = vadd.f32 %v4625, 1.0
      %v4766 = vlog2.pop %v4765
      %v4767 = vmul.f32 %v4766, 0.6931472
      %v4768 = vmul.f32 -0.5, %v4625
      %v4769 = vadd.f32 %v4768, 1.0
      %v4770 = vmul.f32 %v4769, %v4625
      %v4771 = vand.u32 2147483647, %v4625
      %vm4772 = vcmp.lt.f32.partialorder %v4771, 0.0004427343
      %v4773 = vsel %vm4772, %v4770, %v4767
      %v4774 = vadd.f32 %v4627, 1.0
      %v4775 = vlog2.pop %v4774
      %v4776 = vmul.f32 %v4775, 0.6931472
      %v4777 = vmul.f32 -0.5, %v4627
      %v4778 = vadd.f32 %v4777, 1.0
      %v4779 = vmul.f32 %v4778, %v4627
      %v4780 = vand.u32 2147483647, %v4627
      %vm4781 = vcmp.lt.f32.partialorder %v4780, 0.0004427343
      %v4782 = vsel %vm4781, %v4779, %v4776
      %v4783 = vadd.f32 %v4629, 1.0
      %v4784 = vlog2.pop %v4783
      %v4785 = vmul.f32 %v4784, 0.6931472
      %v4786 = vmul.f32 -0.5, %v4629
      %v4787 = vadd.f32 %v4786, 1.0
      %v4788 = vmul.f32 %v4787, %v4629
      %v4789 = vand.u32 2147483647, %v4629
      %vm4790 = vcmp.lt.f32.partialorder %v4789, 0.0004427343
      %v4791 = vsel %vm4790, %v4788, %v4785
      %v4792 = vadd.f32 %v4631, 1.0
      %v4793 = vlog2.pop %v4792
      %v4794 = vmul.f32 %v4793, 0.6931472
      %v4795 = vmul.f32 -0.5, %v4631
      %v4796 = vadd.f32 %v4795, 1.0
      %v4797 = vmul.f32 %v4796, %v4631
      %v4798 = vand.u32 2147483647, %v4631
      %vm4799 = vcmp.lt.f32.partialorder %v4798, 0.0004427343
      %v4800 = vsel %vm4799, %v4797, %v4794
      %v4801 = vadd.f32 %v4633, 1.0
      %v4802 = vlog2.pop %v4801
      %v4803 = vmul.f32 %v4802, 0.6931472
      %v4804 = vmul.f32 -0.5, %v4633
      %v4805 = vadd.f32 %v4804, 1.0
      %v4806 = vmul.f32 %v4805, %v4633
      %v4807 = vand.u32 2147483647, %v4633
      %vm4808 = vcmp.lt.f32.partialorder %v4807, 0.0004427343
      %v4809 = vsel %vm4808, %v4806, %v4803
      %v4810 = vadd.f32 %v4635, 1.0
      %v4811 = vlog2.pop %v4810
      %v4812 = vmul.f32 %v4811, 0.6931472
      %v4813 = vmul.f32 -0.5, %v4635
      %v4814 = vadd.f32 %v4813, 1.0
      %v4815 = vmul.f32 %v4814, %v4635
      %v4816 = vand.u32 2147483647, %v4635
      %vm4817 = vcmp.lt.f32.partialorder %v4816, 0.0004427343
      %v4818 = vsel %vm4817, %v4815, %v4812
      %v4819 = vadd.f32 %v4637, 1.0
      %v4820 = vlog2.pop %v4819
      %v4821 = vmul.f32 %v4820, 0.6931472
      %v4822 = vmul.f32 -0.5, %v4637
      %v4823 = vadd.f32 %v4822, 1.0
      %v4824 = vmul.f32 %v4823, %v4637
      %v4825 = vand.u32 2147483647, %v4637
      %vm4826 = vcmp.lt.f32.partialorder %v4825, 0.0004427343
      %v4827 = vsel %vm4826, %v4824, %v4821
      %v4828 = vadd.f32 %v4639, 1.0
      %v4829 = vlog2.pop %v4828
      %v4830 = vmul.f32 %v4829, 0.6931472
      %v4831 = vmul.f32 -0.5, %v4639
      %v4832 = vadd.f32 %v4831, 1.0
      %v4833 = vmul.f32 %v4832, %v4639
      %v4834 = vand.u32 2147483647, %v4639
      %vm4835 = vcmp.lt.f32.partialorder %v4834, 0.0004427343
      %v4836 = vsel %vm4835, %v4833, %v4830
      %v4837 = vadd.f32 %v4641, 1.0
      %v4838 = vlog2.pop %v4837
      %v4839 = vmul.f32 %v4838, 0.6931472
      %v4840 = vmul.f32 -0.5, %v4641
      %v4841 = vadd.f32 %v4840, 1.0
      %v4842 = vmul.f32 %v4841, %v4641
      %v4843 = vand.u32 2147483647, %v4641
      %vm4844 = vcmp.lt.f32.partialorder %v4843, 0.0004427343
      %v4845 = vsel %vm4844, %v4842, %v4839
      %v4846 = vadd.f32 %v4643, 1.0
      %v4847 = vlog2.pop %v4846
      %v4848 = vmul.f32 %v4847, 0.6931472
      %v4849 = vmul.f32 -0.5, %v4643
      %v4850 = vadd.f32 %v4849, 1.0
      %v4851 = vmul.f32 %v4850, %v4643
      %v4852 = vand.u32 2147483647, %v4643
      %vm4853 = vcmp.lt.f32.partialorder %v4852, 0.0004427343
      %v4854 = vsel %vm4853, %v4851, %v4848
      %v4855 = vadd.f32 %v4645, 1.0
      %v4856 = vlog2.pop %v4855
      %v4857 = vmul.f32 %v4856, 0.6931472
      %v4858 = vmul.f32 -0.5, %v4645
      %v4859 = vadd.f32 %v4858, 1.0
      %v4860 = vmul.f32 %v4859, %v4645
      %v4861 = vand.u32 2147483647, %v4645
      %vm4862 = vcmp.lt.f32.partialorder %v4861, 0.0004427343
      %v4863 = vsel %vm4862, %v4860, %v4857
      %v4864 = vadd.f32 %v4647, 1.0
      %v4865 = vlog2.pop %v4864
      %v4866 = vmul.f32 %v4865, 0.6931472
      %v4867 = vmul.f32 -0.5, %v4647
      %v4868 = vadd.f32 %v4867, 1.0
      %v4869 = vmul.f32 %v4868, %v4647
      %v4870 = vand.u32 2147483647, %v4647
      %vm4871 = vcmp.lt.f32.partialorder %v4870, 0.0004427343
      %v4872 = vsel %vm4871, %v4869, %v4866
      %v4873 = vadd.f32 %v4649, 1.0
      %v4874 = vlog2.pop %v4873
      %v4875 = vmul.f32 %v4874, 0.6931472
      %v4876 = vmul.f32 -0.5, %v4649
      %v4877 = vadd.f32 %v4876, 1.0
      %v4878 = vmul.f32 %v4877, %v4649
      %v4879 = vand.u32 2147483647, %v4649
      %vm4880 = vcmp.lt.f32.partialorder %v4879, 0.0004427343
      %v4881 = vsel %vm4880, %v4878, %v4875
      %v4882 = vadd.f32 %v4651, 1.0
      %v4883 = vlog2.pop %v4882
      %v4884 = vmul.f32 %v4883, 0.6931472
      %v4885 = vmul.f32 -0.5, %v4651
      %v4886 = vadd.f32 %v4885, 1.0
      %v4887 = vmul.f32 %v4886, %v4651
      %v4888 = vand.u32 2147483647, %v4651
      %vm4889 = vcmp.lt.f32.partialorder %v4888, 0.0004427343
      %v4890 = vsel %vm4889, %v4887, %v4884
      %v4891 = vadd.f32 %v4653, 1.0
      %v4892 = vlog2.pop %v4891
      %v4893 = vmul.f32 %v4892, 0.6931472
      %v4894 = vmul.f32 -0.5, %v4653
      %v4895 = vadd.f32 %v4894, 1.0
      %v4896 = vmul.f32 %v4895, %v4653
      %v4897 = vand.u32 2147483647, %v4653
      %vm4898 = vcmp.lt.f32.partialorder %v4897, 0.0004427343
      %v4899 = vsel %vm4898, %v4896, %v4893
      %v4900 = vadd.f32 %v4655, 1.0
      %v4901 = vlog2.pop %v4900
      %v4902 = vmul.f32 %v4901, 0.6931472
      %v4903 = vmul.f32 -0.5, %v4655
      %v4904 = vadd.f32 %v4903, 1.0
      %v4905 = vmul.f32 %v4904, %v4655
      %v4906 = vand.u32 2147483647, %v4655
      %vm4907 = vcmp.lt.f32.partialorder %v4906, 0.0004427343
      %v4908 = vsel %vm4907, %v4905, %v4902
      %v4909 = vadd.f32 %v4657, 1.0
      %v4910 = vlog2.pop %v4909
      %v4911 = vmul.f32 %v4910, 0.6931472
      %v4912 = vmul.f32 -0.5, %v4657
      %v4913 = vadd.f32 %v4912, 1.0
      %v4914 = vmul.f32 %v4913, %v4657
      %v4915 = vand.u32 2147483647, %v4657
      %vm4916 = vcmp.lt.f32.partialorder %v4915, 0.0004427343
      %v4917 = vsel %vm4916, %v4914, %v4911
      %v4918 = vadd.f32 %v4659, 1.0
      %v4919 = vlog2.pop %v4918
      %v4920 = vmul.f32 %v4919, 0.6931472
      %v4921 = vmul.f32 -0.5, %v4659
      %v4922 = vadd.f32 %v4921, 1.0
      %v4923 = vmul.f32 %v4922, %v4659
      %v4924 = vand.u32 2147483647, %v4659
      %vm4925 = vcmp.lt.f32.partialorder %v4924, 0.0004427343
      %v4926 = vsel %vm4925, %v4923, %v4920
      %v4927 = vadd.f32 %v4661, 1.0
      %v4928 = vlog2.pop %v4927
      %v4929 = vmul.f32 %v4928, 0.6931472
      %v4930 = vmul.f32 -0.5, %v4661
      %v4931 = vadd.f32 %v4930, 1.0
      %v4932 = vmul.f32 %v4931, %v4661
      %v4933 = vand.u32 2147483647, %v4661
      %vm4934 = vcmp.lt.f32.partialorder %v4933, 0.0004427343
      %v4935 = vsel %vm4934, %v4932, %v4929
      %v4936 = vadd.f32 %v4663, 1.0
      %v4937 = vlog2.pop %v4936
      %v4938 = vmul.f32 %v4937, 0.6931472
      %v4939 = vmul.f32 -0.5, %v4663
      %v4940 = vadd.f32 %v4939, 1.0
      %v4941 = vmul.f32 %v4940, %v4663
      %v4942 = vand.u32 2147483647, %v4663
      %vm4943 = vcmp.lt.f32.partialorder %v4942, 0.0004427343
      %v4944 = vsel %vm4943, %v4941, %v4938
      %v4945 = vadd.f32 %v4665, 1.0
      %v4946 = vlog2.pop %v4945
      %v4947 = vmul.f32 %v4946, 0.6931472
      %v4948 = vmul.f32 -0.5, %v4665
      %v4949 = vadd.f32 %v4948, 1.0
      %v4950 = vmul.f32 %v4949, %v4665
      %v4951 = vand.u32 2147483647, %v4665
      %vm4952 = vcmp.lt.f32.partialorder %v4951, 0.0004427343
      %v4953 = vsel %vm4952, %v4950, %v4947
      %v4954 = vmul.f32 %v4674, 0.01
      %v4955 = vmul.f32 %v4683, 0.01
      %v4956 = vmul.f32 %v4692, 0.01
      %v4957 = vmul.f32 %v4701, 0.01
      %v4958 = vmul.f32 %v4710, 0.01
      %v4959 = vmul.f32 %v4719, 0.01
      %v4960 = vmul.f32 %v4728, 0.01
      %v4961 = vmul.f32 %v4737, 0.01
      %v4962 = vmul.f32 %v4746, 0.01
      %v4963 = vmul.f32 %v4755, 0.01
      %v4964 = vmul.f32 %v4764, 0.01
      %v4965 = vmul.f32 %v4773, 0.01
      %v4966 = vmul.f32 %v4782, 0.01
      %v4967 = vmul.f32 %v4791, 0.01
      %v4968 = vmul.f32 %v4800, 0.01
      %v4969 = vmul.f32 %v4809, 0.01
      %v4970 = vmul.f32 %v4818, 0.01
      %v4971 = vmul.f32 %v4827, 0.01
      %v4972 = vmul.f32 %v4836, 0.01
      %v4973 = vmul.f32 %v4845, 0.01
      %v4974 = vmul.f32 %v4854, 0.01
      %v4975 = vmul.f32 %v4863, 0.01
      %v4976 = vmul.f32 %v4872, 0.01
      %v4977 = vmul.f32 %v4881, 0.01
      %v4978 = vmul.f32 %v4890, 0.01
      %v4979 = vmul.f32 %v4899, 0.01
      %v4980 = vmul.f32 %v4908, 0.01
      %v4981 = vmul.f32 %v4917, 0.01
      %v4982 = vmul.f32 %v4926, 0.01
      %v4983 = vmul.f32 %v4935, 0.01
      %v4984 = vmul.f32 %v4944, 0.01
      %v4985 = vmul.f32 %v4953, 0.01
      %vm4986 = vcmp.gt.f32.partialorder %v4380, 0.2
      %vm4987 = vcmp.gt.f32.partialorder %v4385, 0.2
      %vm4988 = vcmp.gt.f32.partialorder %v4390, 0.2
      %vm4989 = vcmp.gt.f32.partialorder %v4395, 0.2
      %vm4990 = vcmp.gt.f32.partialorder %v4400, 0.2
      %vm4991 = vcmp.gt.f32.partialorder %v4405, 0.2
      %vm4992 = vcmp.gt.f32.partialorder %v4410, 0.2
      %vm4993 = vcmp.gt.f32.partialorder %v4415, 0.2
      %vm4994 = vcmp.gt.f32.partialorder %v4420, 0.2
      %vm4995 = vcmp.gt.f32.partialorder %v4425, 0.2
      %vm4996 = vcmp.gt.f32.partialorder %v4430, 0.2
      %vm4997 = vcmp.gt.f32.partialorder %v4435, 0.2
      %vm4998 = vcmp.gt.f32.partialorder %v4440, 0.2
      %vm4999 = vcmp.gt.f32.partialorder %v4445, 0.2
      %vm5000 = vcmp.gt.f32.partialorder %v4450, 0.2
      %vm5001 = vcmp.gt.f32.partialorder %v4455, 0.2
      %vm5002 = vcmp.gt.f32.partialorder %v4460, 0.2
      %vm5003 = vcmp.gt.f32.partialorder %v4465, 0.2
      %vm5004 = vcmp.gt.f32.partialorder %v4470, 0.2
      %vm5005 = vcmp.gt.f32.partialorder %v4475, 0.2
      %vm5006 = vcmp.gt.f32.partialorder %v4480, 0.2
      %vm5007 = vcmp.gt.f32.partialorder %v4485, 0.2
      %vm5008 = vcmp.gt.f32.partialorder %v4490, 0.2
      %vm5009 = vcmp.gt.f32.partialorder %v4495, 0.2
      %vm5010 = vcmp.gt.f32.partialorder %v4500, 0.2
      %vm5011 = vcmp.gt.f32.partialorder %v4505, 0.2
      %vm5012 = vcmp.gt.f32.partialorder %v4510, 0.2
      %vm5013 = vcmp.gt.f32.partialorder %v4515, 0.2
      %vm5014 = vcmp.gt.f32.partialorder %v4520, 0.2
      %vm5015 = vcmp.gt.f32.partialorder %v4525, 0.2
      %vm5016 = vcmp.gt.f32.partialorder %v4530, 0.2
      %vm5017 = vcmp.gt.f32.partialorder %v4535, 0.2
      %v5018 = vsel %vm4986, %v4380, %v4954
      %v5019 = vsel %vm4987, %v4385, %v4955
      %v5020 = vsel %vm4988, %v4390, %v4956
      %v5021 = vsel %vm4989, %v4395, %v4957
      %v5022 = vsel %vm4990, %v4400, %v4958
      %v5023 = vsel %vm4991, %v4405, %v4959
      %v5024 = vsel %vm4992, %v4410, %v4960
      %v5025 = vsel %vm4993, %v4415, %v4961
      %v5026 = vsel %vm4994, %v4420, %v4962
      %v5027 = vsel %vm4995, %v4425, %v4963
      %v5028 = vsel %vm4996, %v4430, %v4964
      %v5029 = vsel %vm4997, %v4435, %v4965
      %v5030 = vsel %vm4998, %v4440, %v4966
      %v5031 = vsel %vm4999, %v4445, %v4967
      %v5032 = vsel %vm5000, %v4450, %v4968
      %v5033 = vsel %vm5001, %v4455, %v4969
      %v5034 = vsel %vm5002, %v4460, %v4970
      %v5035 = vsel %vm5003, %v4465, %v4971
      %v5036 = vsel %vm5004, %v4470, %v4972
      %v5037 = vsel %vm5005, %v4475, %v4973
      %v5038 = vsel %vm5006, %v4480, %v4974
      %v5039 = vsel %vm5007, %v4485, %v4975
      %v5040 = vsel %vm5008, %v4490, %v4976
      %v5041 = vsel %vm5009, %v4495, %v4977
      %v5042 = vsel %vm5010, %v4500, %v4978
      %v5043 = vsel %vm5011, %v4505, %v4979
      %v5044 = vsel %vm5012, %v4510, %v4980
      %v5045 = vsel %vm5013, %v4515, %v4981
      %v5046 = vsel %vm5014, %v4520, %v4982
      %v5047 = vsel %vm5015, %v4525, %v4983
      %v5048 = vsel %vm5016, %v4530, %v4984
      %v5049 = vsel %vm5017, %v4535, %v4985
      %s5050 = scalar_lea.vmem %s2, 6
      %v5051 = vld [vmem:[%s5050] sm:$0x1]
      %s5052 = scalar_lea.vmem %s1, 896
      %v5053 = vld [vmem:[%s5052] sm:$0xff]
      %v5054 = vld [vmem:[%s5052 + $0x8] sm:$0xff]
      %v5055 = vld [vmem:[%s5052 + $0x10] sm:$0xff]
      %v5056 = vld [vmem:[%s5052 + $0x18] sm:$0xff]
      %v5057 = vld [vmem:[%s5052 + $0x20] sm:$0xff]
      %v5058 = vld [vmem:[%s5052 + $0x28] sm:$0xff]
      %v5059 = vld [vmem:[%s5052 + $0x30] sm:$0xff]
      %v5060 = vld [vmem:[%s5052 + $0x38] sm:$0xff]
      %v5061 = vld [vmem:[%s5052 + $0x40] sm:$0xff]
      %v5062 = vld [vmem:[%s5052 + $0x48] sm:$0xff]
      %v5063 = vld [vmem:[%s5052 + $0x50] sm:$0xff]
      %v5064 = vld [vmem:[%s5052 + $0x58] sm:$0xff]
      %v5065 = vld [vmem:[%s5052 + $0x60] sm:$0xff]
      %v5066 = vld [vmem:[%s5052 + $0x68] sm:$0xff]
      %v5067 = vld [vmem:[%s5052 + $0x70] sm:$0xff]
      %v5068 = vld [vmem:[%s5052 + $0x78] sm:$0xff]
      %v5070 = vlaneseq
      %v5071 = vshrl.u32 %v5070, 7
      %v5072 = vsub.s32 0, %v5071
      %v5073 = vrot.slane %v5051, %v5072
      %5075 = vmatprep.subr.mxu0 0.0
      %5076 = vmatpush1.msra.mxu0 %v5068
      %5077 = vmatprep.subr.mxu0 0.0
      %5078 = vmatpush1.msra.mxu0 %v5067
      %5079 = vmatprep.subr.mxu0 0.0
      %5080 = vmatpush1.msra.mxu0 %v5066
      %5081 = vmatprep.subr.mxu0 0.0
      %5082 = vmatpush1.msra.mxu0 %v5065
      %5083 = vmatprep.subr.mxu0 0.0
      %5084 = vmatpush1.msra.mxu0 %v5064
      %5085 = vmatprep.subr.mxu0 0.0
      %5086 = vmatpush1.msra.mxu0 %v5063
      %5087 = vmatprep.subr.mxu0 0.0
      %5088 = vmatpush1.msra.mxu0 %v5062
      %5089 = vmatprep.subr.mxu0 0.0
      %5090 = vmatpush1.msra.mxu0 %v5061
      %5091 = vmatprep.subr.mxu0 0.0
      %5092 = vmatpush1.msra.mxu0 %v5060
      %5093 = vmatprep.subr.mxu0 0.0
      %5094 = vmatpush1.msra.mxu0 %v5059
      %5095 = vmatprep.subr.mxu0 0.0
      %5096 = vmatpush1.msra.mxu0 %v5058
      %5097 = vmatprep.subr.mxu0 0.0
      %5098 = vmatpush1.msra.mxu0 %v5057
      %5099 = vmatprep.subr.mxu0 0.0
      %5100 = vmatpush1.msra.mxu0 %v5056
      %5101 = vmatprep.subr.mxu0 0.0
      %5102 = vmatpush1.msra.mxu0 %v5055
      %5103 = vmatprep.subr.mxu0 0.0
      %5104 = vmatpush1.msra.mxu0 %v5054
      %5105 = vmatprep.subr.mxu0 0.0
      %5106 = vmatpush1.msra.mxu0 %v5053
      %5107 = vmatprep.subr.mxu0 0.0
      %5108 = vmatpush2.msra.mxu0 0.0
      %5109 = vmatprep.subr.mxu0 0.0
      %5110 = vmatpush2.msra.mxu0 0.0
      %5111 = vmatprep.subr.mxu0 0.0
      %5112 = vmatpush2.msra.mxu0 0.0
      %5113 = vmatprep.subr.mxu0 0.0
      %5114 = vmatpush2.msra.mxu0 0.0
      %5115 = vmatprep.subr.mxu0 0.0
      %5116 = vmatpush2.msra.mxu0 0.0
      %5117 = vmatprep.subr.mxu0 0.0
      %5118 = vmatpush2.msra.mxu0 0.0
      %5119 = vmatprep.subr.mxu0 0.0
      %5120 = vmatpush2.msra.mxu0 0.0
      %5121 = vmatprep.subr.mxu0 0.0
      %5122 = vmatpush2.msra.mxu0 0.0
      %5123 = vmatprep.subr.mxu0 0.0
      %5124 = vmatpush2.msra.mxu0 0.0
      %5125 = vmatprep.subr.mxu0 0.0
      %5126 = vmatpush2.msra.mxu0 0.0
      %5127 = vmatprep.subr.mxu0 0.0
      %5128 = vmatpush2.msra.mxu0 0.0
      %5129 = vmatprep.subr.mxu0 0.0
      %5130 = vmatpush2.msra.mxu0 0.0
      %5131 = vmatprep.subr.mxu0 0.0
      %5132 = vmatpush2.msra.mxu0 0.0
      %5133 = vmatprep.subr.mxu0 0.0
      %5134 = vmatpush2.msra.mxu0 0.0
      %5135 = vmatprep.subr.mxu0 0.0
      %5136 = vmatpush2.msra.mxu0 0.0
      %5137 = vmatprep.subr.mxu0 0.0
      %5138 = vmatpush2.msra.mxu0 0.0
      %5139 = vmatprep.mubr.f32.mxu0 0.0
      %5140 = vmatmul.mubr.f32.gmra.mxu0 %v5018
      %v5141 = vpop.f32.mrf.mxu0
      %v5142 = vadd.f32 %v5073, %v5141
      %v5143 = vpop.f32.mrf.mxu0
      %5144 = vmatprep.mubr.f32.mxu0 0.0
      %5145 = vmatmul.mubr.f32.gmra.mxu0 %v5019
      %v5146 = vpop.f32.mrf.mxu0
      %v5147 = vadd.f32 %v5073, %v5146
      %v5148 = vpop.f32.mrf.mxu0
      %5149 = vmatprep.mubr.f32.mxu0 0.0
      %5150 = vmatmul.mubr.f32.gmra.mxu0 %v5020
      %v5151 = vpop.f32.mrf.mxu0
      %v5152 = vadd.f32 %v5073, %v5151
      %v5153 = vpop.f32.mrf.mxu0
      %5154 = vmatprep.mubr.f32.mxu0 0.0
      %5155 = vmatmul.mubr.f32.gmra.mxu0 %v5021
      %v5156 = vpop.f32.mrf.mxu0
      %v5157 = vadd.f32 %v5073, %v5156
      %v5158 = vpop.f32.mrf.mxu0
      %5159 = vmatprep.mubr.f32.mxu0 0.0
      %5160 = vmatmul.mubr.f32.gmra.mxu0 %v5022
      %v5161 = vpop.f32.mrf.mxu0
      %v5162 = vadd.f32 %v5073, %v5161
      %v5163 = vpop.f32.mrf.mxu0
      %5164 = vmatprep.mubr.f32.mxu0 0.0
      %5165 = vmatmul.mubr.f32.gmra.mxu0 %v5023
      %v5166 = vpop.f32.mrf.mxu0
      %v5167 = vadd.f32 %v5073, %v5166
      %v5168 = vpop.f32.mrf.mxu0
      %5169 = vmatprep.mubr.f32.mxu0 0.0
      %5170 = vmatmul.mubr.f32.gmra.mxu0 %v5024
      %v5171 = vpop.f32.mrf.mxu0
      %v5172 = vadd.f32 %v5073, %v5171
      %v5173 = vpop.f32.mrf.mxu0
      %5174 = vmatprep.mubr.f32.mxu0 0.0
      %5175 = vmatmul.mubr.f32.gmra.mxu0 %v5025
      %v5176 = vpop.f32.mrf.mxu0
      %v5177 = vadd.f32 %v5073, %v5176
      %v5178 = vpop.f32.mrf.mxu0
      %5179 = vmatprep.mubr.f32.mxu0 0.0
      %5180 = vmatmul.mubr.f32.gmra.mxu0 %v5026
      %v5181 = vpop.f32.mrf.mxu0
      %v5182 = vadd.f32 %v5073, %v5181
      %v5183 = vpop.f32.mrf.mxu0
      %5184 = vmatprep.mubr.f32.mxu0 0.0
      %5185 = vmatmul.mubr.f32.gmra.mxu0 %v5027
      %v5186 = vpop.f32.mrf.mxu0
      %v5187 = vadd.f32 %v5073, %v5186
      %v5188 = vpop.f32.mrf.mxu0
      %5189 = vmatprep.mubr.f32.mxu0 0.0
      %5190 = vmatmul.mubr.f32.gmra.mxu0 %v5028
      %v5191 = vpop.f32.mrf.mxu0
      %v5192 = vadd.f32 %v5073, %v5191
      %v5193 = vpop.f32.mrf.mxu0
      %5194 = vmatprep.mubr.f32.mxu0 0.0
      %5195 = vmatmul.mubr.f32.gmra.mxu0 %v5029
      %v5196 = vpop.f32.mrf.mxu0
      %v5197 = vadd.f32 %v5073, %v5196
      %v5198 = vpop.f32.mrf.mxu0
      %5199 = vmatprep.mubr.f32.mxu0 0.0
      %5200 = vmatmul.mubr.f32.gmra.mxu0 %v5030
      %v5201 = vpop.f32.mrf.mxu0
      %v5202 = vadd.f32 %v5073, %v5201
      %v5203 = vpop.f32.mrf.mxu0
      %5204 = vmatprep.mubr.f32.mxu0 0.0
      %5205 = vmatmul.mubr.f32.gmra.mxu0 %v5031
      %v5206 = vpop.f32.mrf.mxu0
      %v5207 = vadd.f32 %v5073, %v5206
      %v5208 = vpop.f32.mrf.mxu0
      %5209 = vmatprep.mubr.f32.mxu0 0.0
      %5210 = vmatmul.mubr.f32.gmra.mxu0 %v5032
      %v5211 = vpop.f32.mrf.mxu0
      %v5212 = vadd.f32 %v5073, %v5211
      %v5213 = vpop.f32.mrf.mxu0
      %5214 = vmatprep.mubr.f32.mxu0 0.0
      %5215 = vmatmul.mubr.f32.gmra.mxu0 %v5033
      %v5216 = vpop.f32.mrf.mxu0
      %v5217 = vadd.f32 %v5073, %v5216
      %v5218 = vpop.f32.mrf.mxu0
      %5219 = vmatprep.mubr.f32.mxu0 0.0
      %5220 = vmatmul.mubr.f32.gmra.mxu0 %v5034
      %v5221 = vpop.f32.mrf.mxu0
      %v5222 = vadd.f32 %v5073, %v5221
      %v5223 = vpop.f32.mrf.mxu0
      %5224 = vmatprep.mubr.f32.mxu0 0.0
      %5225 = vmatmul.mubr.f32.gmra.mxu0 %v5035
      %v5226 = vpop.f32.mrf.mxu0
      %v5227 = vadd.f32 %v5073, %v5226
      %v5228 = vpop.f32.mrf.mxu0
      %5229 = vmatprep.mubr.f32.mxu0 0.0
      %5230 = vmatmul.mubr.f32.gmra.mxu0 %v5036
      %v5231 = vpop.f32.mrf.mxu0
      %v5232 = vadd.f32 %v5073, %v5231
      %v5233 = vpop.f32.mrf.mxu0
      %5234 = vmatprep.mubr.f32.mxu0 0.0
      %5235 = vmatmul.mubr.f32.gmra.mxu0 %v5037
      %v5236 = vpop.f32.mrf.mxu0
      %v5237 = vadd.f32 %v5073, %v5236
      %v5238 = vpop.f32.mrf.mxu0
      %5239 = vmatprep.mubr.f32.mxu0 0.0
      %5240 = vmatmul.mubr.f32.gmra.mxu0 %v5038
      %v5241 = vpop.f32.mrf.mxu0
      %v5242 = vadd.f32 %v5073, %v5241
      %v5243 = vpop.f32.mrf.mxu0
      %5244 = vmatprep.mubr.f32.mxu0 0.0
      %5245 = vmatmul.mubr.f32.gmra.mxu0 %v5039
      %v5246 = vpop.f32.mrf.mxu0
      %v5247 = vadd.f32 %v5073, %v5246
      %v5248 = vpop.f32.mrf.mxu0
      %5249 = vmatprep.mubr.f32.mxu0 0.0
      %5250 = vmatmul.mubr.f32.gmra.mxu0 %v5040
      %v5251 = vpop.f32.mrf.mxu0
      %v5252 = vadd.f32 %v5073, %v5251
      %v5253 = vpop.f32.mrf.mxu0
      %5254 = vmatprep.mubr.f32.mxu0 0.0
      %5255 = vmatmul.mubr.f32.gmra.mxu0 %v5041
      %v5256 = vpop.f32.mrf.mxu0
      %v5257 = vadd.f32 %v5073, %v5256
      %v5258 = vpop.f32.mrf.mxu0
      %5259 = vmatprep.mubr.f32.mxu0 0.0
      %5260 = vmatmul.mubr.f32.gmra.mxu0 %v5042
      %v5261 = vpop.f32.mrf.mxu0
      %v5262 = vadd.f32 %v5073, %v5261
      %v5263 = vpop.f32.mrf.mxu0
      %5264 = vmatprep.mubr.f32.mxu0 0.0
      %5265 = vmatmul.mubr.f32.gmra.mxu0 %v5043
      %v5266 = vpop.f32.mrf.mxu0
      %v5267 = vadd.f32 %v5073, %v5266
      %v5268 = vpop.f32.mrf.mxu0
      %5269 = vmatprep.mubr.f32.mxu0 0.0
      %5270 = vmatmul.mubr.f32.gmra.mxu0 %v5044
      %v5271 = vpop.f32.mrf.mxu0
      %v5272 = vadd.f32 %v5073, %v5271
      %v5273 = vpop.f32.mrf.mxu0
      %5274 = vmatprep.mubr.f32.mxu0 0.0
      %5275 = vmatmul.mubr.f32.gmra.mxu0 %v5045
      %v5276 = vpop.f32.mrf.mxu0
      %v5277 = vadd.f32 %v5073, %v5276
      %v5278 = vpop.f32.mrf.mxu0
      %5279 = vmatprep.mubr.f32.mxu0 0.0
      %5280 = vmatmul.mubr.f32.gmra.mxu0 %v5046
      %v5281 = vpop.f32.mrf.mxu0
      %v5282 = vadd.f32 %v5073, %v5281
      %v5283 = vpop.f32.mrf.mxu0
      %5284 = vmatprep.mubr.f32.mxu0 0.0
      %5285 = vmatmul.mubr.f32.gmra.mxu0 %v5047
      %v5286 = vpop.f32.mrf.mxu0
      %v5287 = vadd.f32 %v5073, %v5286
      %v5288 = vpop.f32.mrf.mxu0
      %5289 = vmatprep.mubr.f32.mxu0 0.0
      %5290 = vmatmul.mubr.f32.gmra.mxu0 %v5048
      %v5291 = vpop.f32.mrf.mxu0
      %v5292 = vadd.f32 %v5073, %v5291
      %v5293 = vpop.f32.mrf.mxu0
      %5294 = vmatprep.mubr.f32.mxu0 0.0
      %5295 = vmatmul.mubr.f32.gmra.mxu0 %v5049
      %v5296 = vpop.f32.mrf.mxu0
      %v5297 = vadd.f32 %v5073, %v5296
      %v5298 = vpop.f32.mrf.mxu0
      %5299 = vdwg.mxu0
      %v5300 = vmin.f32 %v5142, 0.2
      %v5301 = vmin.f32 %v5147, 0.2
      %v5302 = vmin.f32 %v5152, 0.2
      %v5303 = vmin.f32 %v5157, 0.2
      %v5304 = vmin.f32 %v5162, 0.2
      %v5305 = vmin.f32 %v5167, 0.2
      %v5306 = vmin.f32 %v5172, 0.2
      %v5307 = vmin.f32 %v5177, 0.2
      %v5308 = vmin.f32 %v5182, 0.2
      %v5309 = vmin.f32 %v5187, 0.2
      %v5310 = vmin.f32 %v5192, 0.2
      %v5311 = vmin.f32 %v5197, 0.2
      %v5312 = vmin.f32 %v5202, 0.2
      %v5313 = vmin.f32 %v5207, 0.2
      %v5314 = vmin.f32 %v5212, 0.2
      %v5315 = vmin.f32 %v5217, 0.2
      %v5316 = vmin.f32 %v5222, 0.2
      %v5317 = vmin.f32 %v5227, 0.2
      %v5318 = vmin.f32 %v5232, 0.2
      %v5319 = vmin.f32 %v5237, 0.2
      %v5320 = vmin.f32 %v5242, 0.2
      %v5321 = vmin.f32 %v5247, 0.2
      %v5322 = vmin.f32 %v5252, 0.2
      %v5323 = vmin.f32 %v5257, 0.2
      %v5324 = vmin.f32 %v5262, 0.2
      %v5325 = vmin.f32 %v5267, 0.2
      %v5326 = vmin.f32 %v5272, 0.2
      %v5327 = vmin.f32 %v5277, 0.2
      %v5328 = vmin.f32 %v5282, 0.2
      %v5329 = vmin.f32 %v5287, 0.2
      %v5330 = vmin.f32 %v5292, 0.2
      %v5331 = vmin.f32 %v5297, 0.2
      %v5332 = vmul.f32 %v5300, 100.0
      %v5333 = vmul.f32 %v5301, 100.0
      %v5334 = vmul.f32 %v5302, 100.0
      %v5335 = vmul.f32 %v5303, 100.0
      %v5336 = vmul.f32 %v5304, 100.0
      %v5337 = vmul.f32 %v5305, 100.0
      %v5338 = vmul.f32 %v5306, 100.0
      %v5339 = vmul.f32 %v5307, 100.0
      %v5340 = vmul.f32 %v5308, 100.0
      %v5341 = vmul.f32 %v5309, 100.0
      %v5342 = vmul.f32 %v5310, 100.0
      %v5343 = vmul.f32 %v5311, 100.0
      %v5344 = vmul.f32 %v5312, 100.0
      %v5345 = vmul.f32 %v5313, 100.0
      %v5346 = vmul.f32 %v5314, 100.0
      %v5347 = vmul.f32 %v5315, 100.0
      %v5348 = vmul.f32 %v5316, 100.0
      %v5349 = vmul.f32 %v5317, 100.0
      %v5350 = vmul.f32 %v5318, 100.0
      %v5351 = vmul.f32 %v5319, 100.0
      %v5352 = vmul.f32 %v5320, 100.0
      %v5353 = vmul.f32 %v5321, 100.0
      %v5354 = vmul.f32 %v5322, 100.0
      %v5355 = vmul.f32 %v5323, 100.0
      %v5356 = vmul.f32 %v5324, 100.0
      %v5357 = vmul.f32 %v5325, 100.0
      %v5358 = vmul.f32 %v5326, 100.0
      %v5359 = vmul.f32 %v5327, 100.0
      %v5360 = vmul.f32 %v5328, 100.0
      %v5361 = vmul.f32 %v5329, 100.0
      %v5362 = vmul.f32 %v5330, 100.0
      %v5363 = vmul.f32 %v5331, 100.0
      %v5364 = vmul.f32 %v5332, 1.442695
      %v5365 = vpow.pop %v5364
      %v5366 = vmul.f32 %v5333, 1.442695
      %v5367 = vpow.pop %v5366
      %v5368 = vmul.f32 %v5334, 1.442695
      %v5369 = vpow.pop %v5368
      %v5370 = vmul.f32 %v5335, 1.442695
      %v5371 = vpow.pop %v5370
      %v5372 = vmul.f32 %v5336, 1.442695
      %v5373 = vpow.pop %v5372
      %v5374 = vmul.f32 %v5337, 1.442695
      %v5375 = vpow.pop %v5374
      %v5376 = vmul.f32 %v5338, 1.442695
      %v5377 = vpow.pop %v5376
      %v5378 = vmul.f32 %v5339, 1.442695
      %v5379 = vpow.pop %v5378
      %v5380 = vmul.f32 %v5340, 1.442695
      %v5381 = vpow.pop %v5380
      %v5382 = vmul.f32 %v5341, 1.442695
      %v5383 = vpow.pop %v5382
      %v5384 = vmul.f32 %v5342, 1.442695
      %v5385 = vpow.pop %v5384
      %v5386 = vmul.f32 %v5343, 1.442695
      %v5387 = vpow.pop %v5386
      %v5388 = vmul.f32 %v5344, 1.442695
      %v5389 = vpow.pop %v5388
      %v5390 = vmul.f32 %v5345, 1.442695
      %v5391 = vpow.pop %v5390
      %v5392 = vmul.f32 %v5346, 1.442695
      %v5393 = vpow.pop %v5392
      %v5394 = vmul.f32 %v5347, 1.442695
      %v5395 = vpow.pop %v5394
      %v5396 = vmul.f32 %v5348, 1.442695
      %v5397 = vpow.pop %v5396
      %v5398 = vmul.f32 %v5349, 1.442695
      %v5399 = vpow.pop %v5398
      %v5400 = vmul.f32 %v5350, 1.442695
      %v5401 = vpow.pop %v5400
      %v5402 = vmul.f32 %v5351, 1.442695
      %v5403 = vpow.pop %v5402
      %v5404 = vmul.f32 %v5352, 1.442695
      %v5405 = vpow.pop %v5404
      %v5406 = vmul.f32 %v5353, 1.442695
      %v5407 = vpow.pop %v5406
      %v5408 = vmul.f32 %v5354, 1.442695
      %v5409 = vpow.pop %v5408
      %v5410 = vmul.f32 %v5355, 1.442695
      %v5411 = vpow.pop %v5410
      %v5412 = vmul.f32 %v5356, 1.442695
      %v5413 = vpow.pop %v5412
      %v5414 = vmul.f32 %v5357, 1.442695
      %v5415 = vpow.pop %v5414
      %v5416 = vmul.f32 %v5358, 1.442695
      %v5417 = vpow.pop %v5416
      %v5418 = vmul.f32 %v5359, 1.442695
      %v5419 = vpow.pop %v5418
      %v5420 = vmul.f32 %v5360, 1.442695
      %v5421 = vpow.pop %v5420
      %v5422 = vmul.f32 %v5361, 1.442695
      %v5423 = vpow.pop %v5422
      %v5424 = vmul.f32 %v5362, 1.442695
      %v5425 = vpow.pop %v5424
      %v5426 = vmul.f32 %v5363, 1.442695
      %v5427 = vpow.pop %v5426
      %v5428 = vadd.f32 %v5365, 1.0
      %v5429 = vlog2.pop %v5428
      %v5430 = vmul.f32 %v5429, 0.6931472
      %v5431 = vmul.f32 -0.5, %v5365
      %v5432 = vadd.f32 %v5431, 1.0
      %v5433 = vmul.f32 %v5432, %v5365
      %v5434 = vand.u32 2147483647, %v5365
      %vm5435 = vcmp.lt.f32.partialorder %v5434, 0.0004427343
      %v5436 = vsel %vm5435, %v5433, %v5430
      %v5437 = vadd.f32 %v5367, 1.0
      %v5438 = vlog2.pop %v5437
      %v5439 = vmul.f32 %v5438, 0.6931472
      %v5440 = vmul.f32 -0.5, %v5367
      %v5441 = vadd.f32 %v5440, 1.0
      %v5442 = vmul.f32 %v5441, %v5367
      %v5443 = vand.u32 2147483647, %v5367
      %vm5444 = vcmp.lt.f32.partialorder %v5443, 0.0004427343
      %v5445 = vsel %vm5444, %v5442, %v5439
      %v5446 = vadd.f32 %v5369, 1.0
      %v5447 = vlog2.pop %v5446
      %v5448 = vmul.f32 %v5447, 0.6931472
      %v5449 = vmul.f32 -0.5, %v5369
      %v5450 = vadd.f32 %v5449, 1.0
      %v5451 = vmul.f32 %v5450, %v5369
      %v5452 = vand.u32 2147483647, %v5369
      %vm5453 = vcmp.lt.f32.partialorder %v5452, 0.0004427343
      %v5454 = vsel %vm5453, %v5451, %v5448
      %v5455 = vadd.f32 %v5371, 1.0
      %v5456 = vlog2.pop %v5455
      %v5457 = vmul.f32 %v5456, 0.6931472
      %v5458 = vmul.f32 -0.5, %v5371
      %v5459 = vadd.f32 %v5458, 1.0
      %v5460 = vmul.f32 %v5459, %v5371
      %v5461 = vand.u32 2147483647, %v5371
      %vm5462 = vcmp.lt.f32.partialorder %v5461, 0.0004427343
      %v5463 = vsel %vm5462, %v5460, %v5457
      %v5464 = vadd.f32 %v5373, 1.0
      %v5465 = vlog2.pop %v5464
      %v5466 = vmul.f32 %v5465, 0.6931472
      %v5467 = vmul.f32 -0.5, %v5373
      %v5468 = vadd.f32 %v5467, 1.0
      %v5469 = vmul.f32 %v5468, %v5373
      %v5470 = vand.u32 2147483647, %v5373
      %vm5471 = vcmp.lt.f32.partialorder %v5470, 0.0004427343
      %v5472 = vsel %vm5471, %v5469, %v5466
      %v5473 = vadd.f32 %v5375, 1.0
      %v5474 = vlog2.pop %v5473
      %v5475 = vmul.f32 %v5474, 0.6931472
      %v5476 = vmul.f32 -0.5, %v5375
      %v5477 = vadd.f32 %v5476, 1.0
      %v5478 = vmul.f32 %v5477, %v5375
      %v5479 = vand.u32 2147483647, %v5375
      %vm5480 = vcmp.lt.f32.partialorder %v5479, 0.0004427343
      %v5481 = vsel %vm5480, %v5478, %v5475
      %v5482 = vadd.f32 %v5377, 1.0
      %v5483 = vlog2.pop %v5482
      %v5484 = vmul.f32 %v5483, 0.6931472
      %v5485 = vmul.f32 -0.5, %v5377
      %v5486 = vadd.f32 %v5485, 1.0
      %v5487 = vmul.f32 %v5486, %v5377
      %v5488 = vand.u32 2147483647, %v5377
      %vm5489 = vcmp.lt.f32.partialorder %v5488, 0.0004427343
      %v5490 = vsel %vm5489, %v5487, %v5484
      %v5491 = vadd.f32 %v5379, 1.0
      %v5492 = vlog2.pop %v5491
      %v5493 = vmul.f32 %v5492, 0.6931472
      %v5494 = vmul.f32 -0.5, %v5379
      %v5495 = vadd.f32 %v5494, 1.0
      %v5496 = vmul.f32 %v5495, %v5379
      %v5497 = vand.u32 2147483647, %v5379
      %vm5498 = vcmp.lt.f32.partialorder %v5497, 0.0004427343
      %v5499 = vsel %vm5498, %v5496, %v5493
      %v5500 = vadd.f32 %v5381, 1.0
      %v5501 = vlog2.pop %v5500
      %v5502 = vmul.f32 %v5501, 0.6931472
      %v5503 = vmul.f32 -0.5, %v5381
      %v5504 = vadd.f32 %v5503, 1.0
      %v5505 = vmul.f32 %v5504, %v5381
      %v5506 = vand.u32 2147483647, %v5381
      %vm5507 = vcmp.lt.f32.partialorder %v5506, 0.0004427343
      %v5508 = vsel %vm5507, %v5505, %v5502
      %v5509 = vadd.f32 %v5383, 1.0
      %v5510 = vlog2.pop %v5509
      %v5511 = vmul.f32 %v5510, 0.6931472
      %v5512 = vmul.f32 -0.5, %v5383
      %v5513 = vadd.f32 %v5512, 1.0
      %v5514 = vmul.f32 %v5513, %v5383
      %v5515 = vand.u32 2147483647, %v5383
      %vm5516 = vcmp.lt.f32.partialorder %v5515, 0.0004427343
      %v5517 = vsel %vm5516, %v5514, %v5511
      %v5518 = vadd.f32 %v5385, 1.0
      %v5519 = vlog2.pop %v5518
      %v5520 = vmul.f32 %v5519, 0.6931472
      %v5521 = vmul.f32 -0.5, %v5385
      %v5522 = vadd.f32 %v5521, 1.0
      %v5523 = vmul.f32 %v5522, %v5385
      %v5524 = vand.u32 2147483647, %v5385
      %vm5525 = vcmp.lt.f32.partialorder %v5524, 0.0004427343
      %v5526 = vsel %vm5525, %v5523, %v5520
      %v5527 = vadd.f32 %v5387, 1.0
      %v5528 = vlog2.pop %v5527
      %v5529 = vmul.f32 %v5528, 0.6931472
      %v5530 = vmul.f32 -0.5, %v5387
      %v5531 = vadd.f32 %v5530, 1.0
      %v5532 = vmul.f32 %v5531, %v5387
      %v5533 = vand.u32 2147483647, %v5387
      %vm5534 = vcmp.lt.f32.partialorder %v5533, 0.0004427343
      %v5535 = vsel %vm5534, %v5532, %v5529
      %v5536 = vadd.f32 %v5389, 1.0
      %v5537 = vlog2.pop %v5536
      %v5538 = vmul.f32 %v5537, 0.6931472
      %v5539 = vmul.f32 -0.5, %v5389
      %v5540 = vadd.f32 %v5539, 1.0
      %v5541 = vmul.f32 %v5540, %v5389
      %v5542 = vand.u32 2147483647, %v5389
      %vm5543 = vcmp.lt.f32.partialorder %v5542, 0.0004427343
      %v5544 = vsel %vm5543, %v5541, %v5538
      %v5545 = vadd.f32 %v5391, 1.0
      %v5546 = vlog2.pop %v5545
      %v5547 = vmul.f32 %v5546, 0.6931472
      %v5548 = vmul.f32 -0.5, %v5391
      %v5549 = vadd.f32 %v5548, 1.0
      %v5550 = vmul.f32 %v5549, %v5391
      %v5551 = vand.u32 2147483647, %v5391
      %vm5552 = vcmp.lt.f32.partialorder %v5551, 0.0004427343
      %v5553 = vsel %vm5552, %v5550, %v5547
      %v5554 = vadd.f32 %v5393, 1.0
      %v5555 = vlog2.pop %v5554
      %v5556 = vmul.f32 %v5555, 0.6931472
      %v5557 = vmul.f32 -0.5, %v5393
      %v5558 = vadd.f32 %v5557, 1.0
      %v5559 = vmul.f32 %v5558, %v5393
      %v5560 = vand.u32 2147483647, %v5393
      %vm5561 = vcmp.lt.f32.partialorder %v5560, 0.0004427343
      %v5562 = vsel %vm5561, %v5559, %v5556
      %v5563 = vadd.f32 %v5395, 1.0
      %v5564 = vlog2.pop %v5563
      %v5565 = vmul.f32 %v5564, 0.6931472
      %v5566 = vmul.f32 -0.5, %v5395
      %v5567 = vadd.f32 %v5566, 1.0
      %v5568 = vmul.f32 %v5567, %v5395
      %v5569 = vand.u32 2147483647, %v5395
      %vm5570 = vcmp.lt.f32.partialorder %v5569, 0.0004427343
      %v5571 = vsel %vm5570, %v5568, %v5565
      %v5572 = vadd.f32 %v5397, 1.0
      %v5573 = vlog2.pop %v5572
      %v5574 = vmul.f32 %v5573, 0.6931472
      %v5575 = vmul.f32 -0.5, %v5397
      %v5576 = vadd.f32 %v5575, 1.0
      %v5577 = vmul.f32 %v5576, %v5397
      %v5578 = vand.u32 2147483647, %v5397
      %vm5579 = vcmp.lt.f32.partialorder %v5578, 0.0004427343
      %v5580 = vsel %vm5579, %v5577, %v5574
      %v5581 = vadd.f32 %v5399, 1.0
      %v5582 = vlog2.pop %v5581
      %v5583 = vmul.f32 %v5582, 0.6931472
      %v5584 = vmul.f32 -0.5, %v5399
      %v5585 = vadd.f32 %v5584, 1.0
      %v5586 = vmul.f32 %v5585, %v5399
      %v5587 = vand.u32 2147483647, %v5399
      %vm5588 = vcmp.lt.f32.partialorder %v5587, 0.0004427343
      %v5589 = vsel %vm5588, %v5586, %v5583
      %v5590 = vadd.f32 %v5401, 1.0
      %v5591 = vlog2.pop %v5590
      %v5592 = vmul.f32 %v5591, 0.6931472
      %v5593 = vmul.f32 -0.5, %v5401
      %v5594 = vadd.f32 %v5593, 1.0
      %v5595 = vmul.f32 %v5594, %v5401
      %v5596 = vand.u32 2147483647, %v5401
      %vm5597 = vcmp.lt.f32.partialorder %v5596, 0.0004427343
      %v5598 = vsel %vm5597, %v5595, %v5592
      %v5599 = vadd.f32 %v5403, 1.0
      %v5600 = vlog2.pop %v5599
      %v5601 = vmul.f32 %v5600, 0.6931472
      %v5602 = vmul.f32 -0.5, %v5403
      %v5603 = vadd.f32 %v5602, 1.0
      %v5604 = vmul.f32 %v5603, %v5403
      %v5605 = vand.u32 2147483647, %v5403
      %vm5606 = vcmp.lt.f32.partialorder %v5605, 0.0004427343
      %v5607 = vsel %vm5606, %v5604, %v5601
      %v5608 = vadd.f32 %v5405, 1.0
      %v5609 = vlog2.pop %v5608
      %v5610 = vmul.f32 %v5609, 0.6931472
      %v5611 = vmul.f32 -0.5, %v5405
      %v5612 = vadd.f32 %v5611, 1.0
      %v5613 = vmul.f32 %v5612, %v5405
      %v5614 = vand.u32 2147483647, %v5405
      %vm5615 = vcmp.lt.f32.partialorder %v5614, 0.0004427343
      %v5616 = vsel %vm5615, %v5613, %v5610
      %v5617 = vadd.f32 %v5407, 1.0
      %v5618 = vlog2.pop %v5617
      %v5619 = vmul.f32 %v5618, 0.6931472
      %v5620 = vmul.f32 -0.5, %v5407
      %v5621 = vadd.f32 %v5620, 1.0
      %v5622 = vmul.f32 %v5621, %v5407
      %v5623 = vand.u32 2147483647, %v5407
      %vm5624 = vcmp.lt.f32.partialorder %v5623, 0.0004427343
      %v5625 = vsel %vm5624, %v5622, %v5619
      %v5626 = vadd.f32 %v5409, 1.0
      %v5627 = vlog2.pop %v5626
      %v5628 = vmul.f32 %v5627, 0.6931472
      %v5629 = vmul.f32 -0.5, %v5409
      %v5630 = vadd.f32 %v5629, 1.0
      %v5631 = vmul.f32 %v5630, %v5409
      %v5632 = vand.u32 2147483647, %v5409
      %vm5633 = vcmp.lt.f32.partialorder %v5632, 0.0004427343
      %v5634 = vsel %vm5633, %v5631, %v5628
      %v5635 = vadd.f32 %v5411, 1.0
      %v5636 = vlog2.pop %v5635
      %v5637 = vmul.f32 %v5636, 0.6931472
      %v5638 = vmul.f32 -0.5, %v5411
      %v5639 = vadd.f32 %v5638, 1.0
      %v5640 = vmul.f32 %v5639, %v5411
      %v5641 = vand.u32 2147483647, %v5411
      %vm5642 = vcmp.lt.f32.partialorder %v5641, 0.0004427343
      %v5643 = vsel %vm5642, %v5640, %v5637
      %v5644 = vadd.f32 %v5413, 1.0
      %v5645 = vlog2.pop %v5644
      %v5646 = vmul.f32 %v5645, 0.6931472
      %v5647 = vmul.f32 -0.5, %v5413
      %v5648 = vadd.f32 %v5647, 1.0
      %v5649 = vmul.f32 %v5648, %v5413
      %v5650 = vand.u32 2147483647, %v5413
      %vm5651 = vcmp.lt.f32.partialorder %v5650, 0.0004427343
      %v5652 = vsel %vm5651, %v5649, %v5646
      %v5653 = vadd.f32 %v5415, 1.0
      %v5654 = vlog2.pop %v5653
      %v5655 = vmul.f32 %v5654, 0.6931472
      %v5656 = vmul.f32 -0.5, %v5415
      %v5657 = vadd.f32 %v5656, 1.0
      %v5658 = vmul.f32 %v5657, %v5415
      %v5659 = vand.u32 2147483647, %v5415
      %vm5660 = vcmp.lt.f32.partialorder %v5659, 0.0004427343
      %v5661 = vsel %vm5660, %v5658, %v5655
      %v5662 = vadd.f32 %v5417, 1.0
      %v5663 = vlog2.pop %v5662
      %v5664 = vmul.f32 %v5663, 0.6931472
      %v5665 = vmul.f32 -0.5, %v5417
      %v5666 = vadd.f32 %v5665, 1.0
      %v5667 = vmul.f32 %v5666, %v5417
      %v5668 = vand.u32 2147483647, %v5417
      %vm5669 = vcmp.lt.f32.partialorder %v5668, 0.0004427343
      %v5670 = vsel %vm5669, %v5667, %v5664
      %v5671 = vadd.f32 %v5419, 1.0
      %v5672 = vlog2.pop %v5671
      %v5673 = vmul.f32 %v5672, 0.6931472
      %v5674 = vmul.f32 -0.5, %v5419
      %v5675 = vadd.f32 %v5674, 1.0
      %v5676 = vmul.f32 %v5675, %v5419
      %v5677 = vand.u32 2147483647, %v5419
      %vm5678 = vcmp.lt.f32.partialorder %v5677, 0.0004427343
      %v5679 = vsel %vm5678, %v5676, %v5673
      %v5680 = vadd.f32 %v5421, 1.0
      %v5681 = vlog2.pop %v5680
      %v5682 = vmul.f32 %v5681, 0.6931472
      %v5683 = vmul.f32 -0.5, %v5421
      %v5684 = vadd.f32 %v5683, 1.0
      %v5685 = vmul.f32 %v5684, %v5421
      %v5686 = vand.u32 2147483647, %v5421
      %vm5687 = vcmp.lt.f32.partialorder %v5686, 0.0004427343
      %v5688 = vsel %vm5687, %v5685, %v5682
      %v5689 = vadd.f32 %v5423, 1.0
      %v5690 = vlog2.pop %v5689
      %v5691 = vmul.f32 %v5690, 0.6931472
      %v5692 = vmul.f32 -0.5, %v5423
      %v5693 = vadd.f32 %v5692, 1.0
      %v5694 = vmul.f32 %v5693, %v5423
      %v5695 = vand.u32 2147483647, %v5423
      %vm5696 = vcmp.lt.f32.partialorder %v5695, 0.0004427343
      %v5697 = vsel %vm5696, %v5694, %v5691
      %v5698 = vadd.f32 %v5425, 1.0
      %v5699 = vlog2.pop %v5698
      %v5700 = vmul.f32 %v5699, 0.6931472
      %v5701 = vmul.f32 -0.5, %v5425
      %v5702 = vadd.f32 %v5701, 1.0
      %v5703 = vmul.f32 %v5702, %v5425
      %v5704 = vand.u32 2147483647, %v5425
      %vm5705 = vcmp.lt.f32.partialorder %v5704, 0.0004427343
      %v5706 = vsel %vm5705, %v5703, %v5700
      %v5707 = vadd.f32 %v5427, 1.0
      %v5708 = vlog2.pop %v5707
      %v5709 = vmul.f32 %v5708, 0.6931472
      %v5710 = vmul.f32 -0.5, %v5427
      %v5711 = vadd.f32 %v5710, 1.0
      %v5712 = vmul.f32 %v5711, %v5427
      %v5713 = vand.u32 2147483647, %v5427
      %vm5714 = vcmp.lt.f32.partialorder %v5713, 0.0004427343
      %v5715 = vsel %vm5714, %v5712, %v5709
      %v5716 = vmul.f32 %v5436, 0.01
      %v5717 = vmul.f32 %v5445, 0.01
      %v5718 = vmul.f32 %v5454, 0.01
      %v5719 = vmul.f32 %v5463, 0.01
      %v5720 = vmul.f32 %v5472, 0.01
      %v5721 = vmul.f32 %v5481, 0.01
      %v5722 = vmul.f32 %v5490, 0.01
      %v5723 = vmul.f32 %v5499, 0.01
      %v5724 = vmul.f32 %v5508, 0.01
      %v5725 = vmul.f32 %v5517, 0.01
      %v5726 = vmul.f32 %v5526, 0.01
      %v5727 = vmul.f32 %v5535, 0.01
      %v5728 = vmul.f32 %v5544, 0.01
      %v5729 = vmul.f32 %v5553, 0.01
      %v5730 = vmul.f32 %v5562, 0.01
      %v5731 = vmul.f32 %v5571, 0.01
      %v5732 = vmul.f32 %v5580, 0.01
      %v5733 = vmul.f32 %v5589, 0.01
      %v5734 = vmul.f32 %v5598, 0.01
      %v5735 = vmul.f32 %v5607, 0.01
      %v5736 = vmul.f32 %v5616, 0.01
      %v5737 = vmul.f32 %v5625, 0.01
      %v5738 = vmul.f32 %v5634, 0.01
      %v5739 = vmul.f32 %v5643, 0.01
      %v5740 = vmul.f32 %v5652, 0.01
      %v5741 = vmul.f32 %v5661, 0.01
      %v5742 = vmul.f32 %v5670, 0.01
      %v5743 = vmul.f32 %v5679, 0.01
      %v5744 = vmul.f32 %v5688, 0.01
      %v5745 = vmul.f32 %v5697, 0.01
      %v5746 = vmul.f32 %v5706, 0.01
      %v5747 = vmul.f32 %v5715, 0.01
      %vm5748 = vcmp.gt.f32.partialorder %v5142, 0.2
      %vm5749 = vcmp.gt.f32.partialorder %v5147, 0.2
      %vm5750 = vcmp.gt.f32.partialorder %v5152, 0.2
      %vm5751 = vcmp.gt.f32.partialorder %v5157, 0.2
      %vm5752 = vcmp.gt.f32.partialorder %v5162, 0.2
      %vm5753 = vcmp.gt.f32.partialorder %v5167, 0.2
      %vm5754 = vcmp.gt.f32.partialorder %v5172, 0.2
      %vm5755 = vcmp.gt.f32.partialorder %v5177, 0.2
      %vm5756 = vcmp.gt.f32.partialorder %v5182, 0.2
      %vm5757 = vcmp.gt.f32.partialorder %v5187, 0.2
      %vm5758 = vcmp.gt.f32.partialorder %v5192, 0.2
      %vm5759 = vcmp.gt.f32.partialorder %v5197, 0.2
      %vm5760 = vcmp.gt.f32.partialorder %v5202, 0.2
      %vm5761 = vcmp.gt.f32.partialorder %v5207, 0.2
      %vm5762 = vcmp.gt.f32.partialorder %v5212, 0.2
      %vm5763 = vcmp.gt.f32.partialorder %v5217, 0.2
      %vm5764 = vcmp.gt.f32.partialorder %v5222, 0.2
      %vm5765 = vcmp.gt.f32.partialorder %v5227, 0.2
      %vm5766 = vcmp.gt.f32.partialorder %v5232, 0.2
      %vm5767 = vcmp.gt.f32.partialorder %v5237, 0.2
      %vm5768 = vcmp.gt.f32.partialorder %v5242, 0.2
      %vm5769 = vcmp.gt.f32.partialorder %v5247, 0.2
      %vm5770 = vcmp.gt.f32.partialorder %v5252, 0.2
      %vm5771 = vcmp.gt.f32.partialorder %v5257, 0.2
      %vm5772 = vcmp.gt.f32.partialorder %v5262, 0.2
      %vm5773 = vcmp.gt.f32.partialorder %v5267, 0.2
      %vm5774 = vcmp.gt.f32.partialorder %v5272, 0.2
      %vm5775 = vcmp.gt.f32.partialorder %v5277, 0.2
      %vm5776 = vcmp.gt.f32.partialorder %v5282, 0.2
      %vm5777 = vcmp.gt.f32.partialorder %v5287, 0.2
      %vm5778 = vcmp.gt.f32.partialorder %v5292, 0.2
      %vm5779 = vcmp.gt.f32.partialorder %v5297, 0.2
      %v5780 = vsel %vm5748, %v5142, %v5716
      %v5781 = vsel %vm5749, %v5147, %v5717
      %v5782 = vsel %vm5750, %v5152, %v5718
      %v5783 = vsel %vm5751, %v5157, %v5719
      %v5784 = vsel %vm5752, %v5162, %v5720
      %v5785 = vsel %vm5753, %v5167, %v5721
      %v5786 = vsel %vm5754, %v5172, %v5722
      %v5787 = vsel %vm5755, %v5177, %v5723
      %v5788 = vsel %vm5756, %v5182, %v5724
      %v5789 = vsel %vm5757, %v5187, %v5725
      %v5790 = vsel %vm5758, %v5192, %v5726
      %v5791 = vsel %vm5759, %v5197, %v5727
      %v5792 = vsel %vm5760, %v5202, %v5728
      %v5793 = vsel %vm5761, %v5207, %v5729
      %v5794 = vsel %vm5762, %v5212, %v5730
      %v5795 = vsel %vm5763, %v5217, %v5731
      %v5796 = vsel %vm5764, %v5222, %v5732
      %v5797 = vsel %vm5765, %v5227, %v5733
      %v5798 = vsel %vm5766, %v5232, %v5734
      %v5799 = vsel %vm5767, %v5237, %v5735
      %v5800 = vsel %vm5768, %v5242, %v5736
      %v5801 = vsel %vm5769, %v5247, %v5737
      %v5802 = vsel %vm5770, %v5252, %v5738
      %v5803 = vsel %vm5771, %v5257, %v5739
      %v5804 = vsel %vm5772, %v5262, %v5740
      %v5805 = vsel %vm5773, %v5267, %v5741
      %v5806 = vsel %vm5774, %v5272, %v5742
      %v5807 = vsel %vm5775, %v5277, %v5743
      %v5808 = vsel %vm5776, %v5282, %v5744
      %v5809 = vsel %vm5777, %v5287, %v5745
      %v5810 = vsel %vm5778, %v5292, %v5746
      %v5811 = vsel %vm5779, %v5297, %v5747
      %s5812 = scalar_lea.vmem %s2, 7
      %v5813 = vld [vmem:[%s5812] sm:$0x1]
      %s5814 = scalar_lea.vmem %s1, 1024
      %v5815 = vld [vmem:[%s5814] sm:$0xff]
      %v5816 = vld [vmem:[%s5814 + $0x8] sm:$0xff]
      %v5817 = vld [vmem:[%s5814 + $0x10] sm:$0xff]
      %v5818 = vld [vmem:[%s5814 + $0x18] sm:$0xff]
      %v5819 = vld [vmem:[%s5814 + $0x20] sm:$0xff]
      %v5820 = vld [vmem:[%s5814 + $0x28] sm:$0xff]
      %v5821 = vld [vmem:[%s5814 + $0x30] sm:$0xff]
      %v5822 = vld [vmem:[%s5814 + $0x38] sm:$0xff]
      %v5823 = vld [vmem:[%s5814 + $0x40] sm:$0xff]
      %v5824 = vld [vmem:[%s5814 + $0x48] sm:$0xff]
      %v5825 = vld [vmem:[%s5814 + $0x50] sm:$0xff]
      %v5826 = vld [vmem:[%s5814 + $0x58] sm:$0xff]
      %v5827 = vld [vmem:[%s5814 + $0x60] sm:$0xff]
      %v5828 = vld [vmem:[%s5814 + $0x68] sm:$0xff]
      %v5829 = vld [vmem:[%s5814 + $0x70] sm:$0xff]
      %v5830 = vld [vmem:[%s5814 + $0x78] sm:$0xff]
      %v5832 = vlaneseq
      %v5833 = vshrl.u32 %v5832, 7
      %v5834 = vsub.s32 0, %v5833
      %v5835 = vrot.slane %v5813, %v5834
      %5837 = vmatprep.subr.mxu0 0.0
      %5838 = vmatpush1.msra.mxu0 %v5830
      %5839 = vmatprep.subr.mxu0 0.0
      %5840 = vmatpush1.msra.mxu0 %v5829
      %5841 = vmatprep.subr.mxu0 0.0
      %5842 = vmatpush1.msra.mxu0 %v5828
      %5843 = vmatprep.subr.mxu0 0.0
      %5844 = vmatpush1.msra.mxu0 %v5827
      %5845 = vmatprep.subr.mxu0 0.0
      %5846 = vmatpush1.msra.mxu0 %v5826
      %5847 = vmatprep.subr.mxu0 0.0
      %5848 = vmatpush1.msra.mxu0 %v5825
      %5849 = vmatprep.subr.mxu0 0.0
      %5850 = vmatpush1.msra.mxu0 %v5824
      %5851 = vmatprep.subr.mxu0 0.0
      %5852 = vmatpush1.msra.mxu0 %v5823
      %5853 = vmatprep.subr.mxu0 0.0
      %5854 = vmatpush1.msra.mxu0 %v5822
      %5855 = vmatprep.subr.mxu0 0.0
      %5856 = vmatpush1.msra.mxu0 %v5821
      %5857 = vmatprep.subr.mxu0 0.0
      %5858 = vmatpush1.msra.mxu0 %v5820
      %5859 = vmatprep.subr.mxu0 0.0
      %5860 = vmatpush1.msra.mxu0 %v5819
      %5861 = vmatprep.subr.mxu0 0.0
      %5862 = vmatpush1.msra.mxu0 %v5818
      %5863 = vmatprep.subr.mxu0 0.0
      %5864 = vmatpush1.msra.mxu0 %v5817
      %5865 = vmatprep.subr.mxu0 0.0
      %5866 = vmatpush1.msra.mxu0 %v5816
      %5867 = vmatprep.subr.mxu0 0.0
      %5868 = vmatpush1.msra.mxu0 %v5815
      %5869 = vmatprep.subr.mxu0 0.0
      %5870 = vmatpush2.msra.mxu0 0.0
      %5871 = vmatprep.subr.mxu0 0.0
      %5872 = vmatpush2.msra.mxu0 0.0
      %5873 = vmatprep.subr.mxu0 0.0
      %5874 = vmatpush2.msra.mxu0 0.0
      %5875 = vmatprep.subr.mxu0 0.0
      %5876 = vmatpush2.msra.mxu0 0.0
      %5877 = vmatprep.subr.mxu0 0.0
      %5878 = vmatpush2.msra.mxu0 0.0
      %5879 = vmatprep.subr.mxu0 0.0
      %5880 = vmatpush2.msra.mxu0 0.0
      %5881 = vmatprep.subr.mxu0 0.0
      %5882 = vmatpush2.msra.mxu0 0.0
      %5883 = vmatprep.subr.mxu0 0.0
      %5884 = vmatpush2.msra.mxu0 0.0
      %5885 = vmatprep.subr.mxu0 0.0
      %5886 = vmatpush2.msra.mxu0 0.0
      %5887 = vmatprep.subr.mxu0 0.0
      %5888 = vmatpush2.msra.mxu0 0.0
      %5889 = vmatprep.subr.mxu0 0.0
      %5890 = vmatpush2.msra.mxu0 0.0
      %5891 = vmatprep.subr.mxu0 0.0
      %5892 = vmatpush2.msra.mxu0 0.0
      %5893 = vmatprep.subr.mxu0 0.0
      %5894 = vmatpush2.msra.mxu0 0.0
      %5895 = vmatprep.subr.mxu0 0.0
      %5896 = vmatpush2.msra.mxu0 0.0
      %5897 = vmatprep.subr.mxu0 0.0
      %5898 = vmatpush2.msra.mxu0 0.0
      %5899 = vmatprep.subr.mxu0 0.0
      %5900 = vmatpush2.msra.mxu0 0.0
      %5901 = vmatprep.mubr.f32.mxu0 0.0
      %5902 = vmatmul.mubr.f32.gmra.mxu0 %v5780
      %v5903 = vpop.f32.mrf.mxu0
      %v5904 = vadd.f32 %v5835, %v5903
      %v5905 = vpop.f32.mrf.mxu0
      %5906 = vmatprep.mubr.f32.mxu0 0.0
      %5907 = vmatmul.mubr.f32.gmra.mxu0 %v5781
      %v5908 = vpop.f32.mrf.mxu0
      %v5909 = vadd.f32 %v5835, %v5908
      %v5910 = vpop.f32.mrf.mxu0
      %5911 = vmatprep.mubr.f32.mxu0 0.0
      %5912 = vmatmul.mubr.f32.gmra.mxu0 %v5782
      %v5913 = vpop.f32.mrf.mxu0
      %v5914 = vadd.f32 %v5835, %v5913
      %v5915 = vpop.f32.mrf.mxu0
      %5916 = vmatprep.mubr.f32.mxu0 0.0
      %5917 = vmatmul.mubr.f32.gmra.mxu0 %v5783
      %v5918 = vpop.f32.mrf.mxu0
      %v5919 = vadd.f32 %v5835, %v5918
      %v5920 = vpop.f32.mrf.mxu0
      %5921 = vmatprep.mubr.f32.mxu0 0.0
      %5922 = vmatmul.mubr.f32.gmra.mxu0 %v5784
      %v5923 = vpop.f32.mrf.mxu0
      %v5924 = vadd.f32 %v5835, %v5923
      %v5925 = vpop.f32.mrf.mxu0
      %5926 = vmatprep.mubr.f32.mxu0 0.0
      %5927 = vmatmul.mubr.f32.gmra.mxu0 %v5785
      %v5928 = vpop.f32.mrf.mxu0
      %v5929 = vadd.f32 %v5835, %v5928
      %v5930 = vpop.f32.mrf.mxu0
      %5931 = vmatprep.mubr.f32.mxu0 0.0
      %5932 = vmatmul.mubr.f32.gmra.mxu0 %v5786
      %v5933 = vpop.f32.mrf.mxu0
      %v5934 = vadd.f32 %v5835, %v5933
      %v5935 = vpop.f32.mrf.mxu0
      %5936 = vmatprep.mubr.f32.mxu0 0.0
      %5937 = vmatmul.mubr.f32.gmra.mxu0 %v5787
      %v5938 = vpop.f32.mrf.mxu0
      %v5939 = vadd.f32 %v5835, %v5938
      %v5940 = vpop.f32.mrf.mxu0
      %5941 = vmatprep.mubr.f32.mxu0 0.0
      %5942 = vmatmul.mubr.f32.gmra.mxu0 %v5788
      %v5943 = vpop.f32.mrf.mxu0
      %v5944 = vadd.f32 %v5835, %v5943
      %v5945 = vpop.f32.mrf.mxu0
      %5946 = vmatprep.mubr.f32.mxu0 0.0
      %5947 = vmatmul.mubr.f32.gmra.mxu0 %v5789
      %v5948 = vpop.f32.mrf.mxu0
      %v5949 = vadd.f32 %v5835, %v5948
      %v5950 = vpop.f32.mrf.mxu0
      %5951 = vmatprep.mubr.f32.mxu0 0.0
      %5952 = vmatmul.mubr.f32.gmra.mxu0 %v5790
      %v5953 = vpop.f32.mrf.mxu0
      %v5954 = vadd.f32 %v5835, %v5953
      %v5955 = vpop.f32.mrf.mxu0
      %5956 = vmatprep.mubr.f32.mxu0 0.0
      %5957 = vmatmul.mubr.f32.gmra.mxu0 %v5791
      %v5958 = vpop.f32.mrf.mxu0
      %v5959 = vadd.f32 %v5835, %v5958
      %v5960 = vpop.f32.mrf.mxu0
      %5961 = vmatprep.mubr.f32.mxu0 0.0
      %5962 = vmatmul.mubr.f32.gmra.mxu0 %v5792
      %v5963 = vpop.f32.mrf.mxu0
      %v5964 = vadd.f32 %v5835, %v5963
      %v5965 = vpop.f32.mrf.mxu0
      %5966 = vmatprep.mubr.f32.mxu0 0.0
      %5967 = vmatmul.mubr.f32.gmra.mxu0 %v5793
      %v5968 = vpop.f32.mrf.mxu0
      %v5969 = vadd.f32 %v5835, %v5968
      %v5970 = vpop.f32.mrf.mxu0
      %5971 = vmatprep.mubr.f32.mxu0 0.0
      %5972 = vmatmul.mubr.f32.gmra.mxu0 %v5794
      %v5973 = vpop.f32.mrf.mxu0
      %v5974 = vadd.f32 %v5835, %v5973
      %v5975 = vpop.f32.mrf.mxu0
      %5976 = vmatprep.mubr.f32.mxu0 0.0
      %5977 = vmatmul.mubr.f32.gmra.mxu0 %v5795
      %v5978 = vpop.f32.mrf.mxu0
      %v5979 = vadd.f32 %v5835, %v5978
      %v5980 = vpop.f32.mrf.mxu0
      %5981 = vmatprep.mubr.f32.mxu0 0.0
      %5982 = vmatmul.mubr.f32.gmra.mxu0 %v5796
      %v5983 = vpop.f32.mrf.mxu0
      %v5984 = vadd.f32 %v5835, %v5983
      %v5985 = vpop.f32.mrf.mxu0
      %5986 = vmatprep.mubr.f32.mxu0 0.0
      %5987 = vmatmul.mubr.f32.gmra.mxu0 %v5797
      %v5988 = vpop.f32.mrf.mxu0
      %v5989 = vadd.f32 %v5835, %v5988
      %v5990 = vpop.f32.mrf.mxu0
      %5991 = vmatprep.mubr.f32.mxu0 0.0
      %5992 = vmatmul.mubr.f32.gmra.mxu0 %v5798
      %v5993 = vpop.f32.mrf.mxu0
      %v5994 = vadd.f32 %v5835, %v5993
      %v5995 = vpop.f32.mrf.mxu0
      %5996 = vmatprep.mubr.f32.mxu0 0.0
      %5997 = vmatmul.mubr.f32.gmra.mxu0 %v5799
      %v5998 = vpop.f32.mrf.mxu0
      %v5999 = vadd.f32 %v5835, %v5998
      %v6000 = vpop.f32.mrf.mxu0
      %6001 = vmatprep.mubr.f32.mxu0 0.0
      %6002 = vmatmul.mubr.f32.gmra.mxu0 %v5800
      %v6003 = vpop.f32.mrf.mxu0
      %v6004 = vadd.f32 %v5835, %v6003
      %v6005 = vpop.f32.mrf.mxu0
      %6006 = vmatprep.mubr.f32.mxu0 0.0
      %6007 = vmatmul.mubr.f32.gmra.mxu0 %v5801
      %v6008 = vpop.f32.mrf.mxu0
      %v6009 = vadd.f32 %v5835, %v6008
      %v6010 = vpop.f32.mrf.mxu0
      %6011 = vmatprep.mubr.f32.mxu0 0.0
      %6012 = vmatmul.mubr.f32.gmra.mxu0 %v5802
      %v6013 = vpop.f32.mrf.mxu0
      %v6014 = vadd.f32 %v5835, %v6013
      %v6015 = vpop.f32.mrf.mxu0
      %6016 = vmatprep.mubr.f32.mxu0 0.0
      %6017 = vmatmul.mubr.f32.gmra.mxu0 %v5803
      %v6018 = vpop.f32.mrf.mxu0
      %v6019 = vadd.f32 %v5835, %v6018
      %v6020 = vpop.f32.mrf.mxu0
      %6021 = vmatprep.mubr.f32.mxu0 0.0
      %6022 = vmatmul.mubr.f32.gmra.mxu0 %v5804
      %v6023 = vpop.f32.mrf.mxu0
      %v6024 = vadd.f32 %v5835, %v6023
      %v6025 = vpop.f32.mrf.mxu0
      %6026 = vmatprep.mubr.f32.mxu0 0.0
      %6027 = vmatmul.mubr.f32.gmra.mxu0 %v5805
      %v6028 = vpop.f32.mrf.mxu0
      %v6029 = vadd.f32 %v5835, %v6028
      %v6030 = vpop.f32.mrf.mxu0
      %6031 = vmatprep.mubr.f32.mxu0 0.0
      %6032 = vmatmul.mubr.f32.gmra.mxu0 %v5806
      %v6033 = vpop.f32.mrf.mxu0
      %v6034 = vadd.f32 %v5835, %v6033
      %v6035 = vpop.f32.mrf.mxu0
      %6036 = vmatprep.mubr.f32.mxu0 0.0
      %6037 = vmatmul.mubr.f32.gmra.mxu0 %v5807
      %v6038 = vpop.f32.mrf.mxu0
      %v6039 = vadd.f32 %v5835, %v6038
      %v6040 = vpop.f32.mrf.mxu0
      %6041 = vmatprep.mubr.f32.mxu0 0.0
      %6042 = vmatmul.mubr.f32.gmra.mxu0 %v5808
      %v6043 = vpop.f32.mrf.mxu0
      %v6044 = vadd.f32 %v5835, %v6043
      %v6045 = vpop.f32.mrf.mxu0
      %6046 = vmatprep.mubr.f32.mxu0 0.0
      %6047 = vmatmul.mubr.f32.gmra.mxu0 %v5809
      %v6048 = vpop.f32.mrf.mxu0
      %v6049 = vadd.f32 %v5835, %v6048
      %v6050 = vpop.f32.mrf.mxu0
      %6051 = vmatprep.mubr.f32.mxu0 0.0
      %6052 = vmatmul.mubr.f32.gmra.mxu0 %v5810
      %v6053 = vpop.f32.mrf.mxu0
      %v6054 = vadd.f32 %v5835, %v6053
      %v6055 = vpop.f32.mrf.mxu0
      %6056 = vmatprep.mubr.f32.mxu0 0.0
      %6057 = vmatmul.mubr.f32.gmra.mxu0 %v5811
      %v6058 = vpop.f32.mrf.mxu0
      %v6059 = vadd.f32 %v5835, %v6058
      %v6060 = vpop.f32.mrf.mxu0
      %6061 = vdwg.mxu0
      %v6062 = vmin.f32 %v5904, 0.2
      %v6063 = vmin.f32 %v5909, 0.2
      %v6064 = vmin.f32 %v5914, 0.2
      %v6065 = vmin.f32 %v5919, 0.2
      %v6066 = vmin.f32 %v5924, 0.2
      %v6067 = vmin.f32 %v5929, 0.2
      %v6068 = vmin.f32 %v5934, 0.2
      %v6069 = vmin.f32 %v5939, 0.2
      %v6070 = vmin.f32 %v5944, 0.2
      %v6071 = vmin.f32 %v5949, 0.2
      %v6072 = vmin.f32 %v5954, 0.2
      %v6073 = vmin.f32 %v5959, 0.2
      %v6074 = vmin.f32 %v5964, 0.2
      %v6075 = vmin.f32 %v5969, 0.2
      %v6076 = vmin.f32 %v5974, 0.2
      %v6077 = vmin.f32 %v5979, 0.2
      %v6078 = vmin.f32 %v5984, 0.2
      %v6079 = vmin.f32 %v5989, 0.2
      %v6080 = vmin.f32 %v5994, 0.2
      %v6081 = vmin.f32 %v5999, 0.2
      %v6082 = vmin.f32 %v6004, 0.2
      %v6083 = vmin.f32 %v6009, 0.2
      %v6084 = vmin.f32 %v6014, 0.2
      %v6085 = vmin.f32 %v6019, 0.2
      %v6086 = vmin.f32 %v6024, 0.2
      %v6087 = vmin.f32 %v6029, 0.2
      %v6088 = vmin.f32 %v6034, 0.2
      %v6089 = vmin.f32 %v6039, 0.2
      %v6090 = vmin.f32 %v6044, 0.2
      %v6091 = vmin.f32 %v6049, 0.2
      %v6092 = vmin.f32 %v6054, 0.2
      %v6093 = vmin.f32 %v6059, 0.2
      %v6094 = vmul.f32 %v6062, 100.0
      %v6095 = vmul.f32 %v6063, 100.0
      %v6096 = vmul.f32 %v6064, 100.0
      %v6097 = vmul.f32 %v6065, 100.0
      %v6098 = vmul.f32 %v6066, 100.0
      %v6099 = vmul.f32 %v6067, 100.0
      %v6100 = vmul.f32 %v6068, 100.0
      %v6101 = vmul.f32 %v6069, 100.0
      %v6102 = vmul.f32 %v6070, 100.0
      %v6103 = vmul.f32 %v6071, 100.0
      %v6104 = vmul.f32 %v6072, 100.0
      %v6105 = vmul.f32 %v6073, 100.0
      %v6106 = vmul.f32 %v6074, 100.0
      %v6107 = vmul.f32 %v6075, 100.0
      %v6108 = vmul.f32 %v6076, 100.0
      %v6109 = vmul.f32 %v6077, 100.0
      %v6110 = vmul.f32 %v6078, 100.0
      %v6111 = vmul.f32 %v6079, 100.0
      %v6112 = vmul.f32 %v6080, 100.0
      %v6113 = vmul.f32 %v6081, 100.0
      %v6114 = vmul.f32 %v6082, 100.0
      %v6115 = vmul.f32 %v6083, 100.0
      %v6116 = vmul.f32 %v6084, 100.0
      %v6117 = vmul.f32 %v6085, 100.0
      %v6118 = vmul.f32 %v6086, 100.0
      %v6119 = vmul.f32 %v6087, 100.0
      %v6120 = vmul.f32 %v6088, 100.0
      %v6121 = vmul.f32 %v6089, 100.0
      %v6122 = vmul.f32 %v6090, 100.0
      %v6123 = vmul.f32 %v6091, 100.0
      %v6124 = vmul.f32 %v6092, 100.0
      %v6125 = vmul.f32 %v6093, 100.0
      %v6126 = vmul.f32 %v6094, 1.442695
      %v6127 = vpow.pop %v6126
      %v6128 = vmul.f32 %v6095, 1.442695
      %v6129 = vpow.pop %v6128
      %v6130 = vmul.f32 %v6096, 1.442695
      %v6131 = vpow.pop %v6130
      %v6132 = vmul.f32 %v6097, 1.442695
      %v6133 = vpow.pop %v6132
      %v6134 = vmul.f32 %v6098, 1.442695
      %v6135 = vpow.pop %v6134
      %v6136 = vmul.f32 %v6099, 1.442695
      %v6137 = vpow.pop %v6136
      %v6138 = vmul.f32 %v6100, 1.442695
      %v6139 = vpow.pop %v6138
      %v6140 = vmul.f32 %v6101, 1.442695
      %v6141 = vpow.pop %v6140
      %v6142 = vmul.f32 %v6102, 1.442695
      %v6143 = vpow.pop %v6142
      %v6144 = vmul.f32 %v6103, 1.442695
      %v6145 = vpow.pop %v6144
      %v6146 = vmul.f32 %v6104, 1.442695
      %v6147 = vpow.pop %v6146
      %v6148 = vmul.f32 %v6105, 1.442695
      %v6149 = vpow.pop %v6148
      %v6150 = vmul.f32 %v6106, 1.442695
      %v6151 = vpow.pop %v6150
      %v6152 = vmul.f32 %v6107, 1.442695
      %v6153 = vpow.pop %v6152
      %v6154 = vmul.f32 %v6108, 1.442695
      %v6155 = vpow.pop %v6154
      %v6156 = vmul.f32 %v6109, 1.442695
      %v6157 = vpow.pop %v6156
      %v6158 = vmul.f32 %v6110, 1.442695
      %v6159 = vpow.pop %v6158
      %v6160 = vmul.f32 %v6111, 1.442695
      %v6161 = vpow.pop %v6160
      %v6162 = vmul.f32 %v6112, 1.442695
      %v6163 = vpow.pop %v6162
      %v6164 = vmul.f32 %v6113, 1.442695
      %v6165 = vpow.pop %v6164
      %v6166 = vmul.f32 %v6114, 1.442695
      %v6167 = vpow.pop %v6166
      %v6168 = vmul.f32 %v6115, 1.442695
      %v6169 = vpow.pop %v6168
      %v6170 = vmul.f32 %v6116, 1.442695
      %v6171 = vpow.pop %v6170
      %v6172 = vmul.f32 %v6117, 1.442695
      %v6173 = vpow.pop %v6172
      %v6174 = vmul.f32 %v6118, 1.442695
      %v6175 = vpow.pop %v6174
      %v6176 = vmul.f32 %v6119, 1.442695
      %v6177 = vpow.pop %v6176
      %v6178 = vmul.f32 %v6120, 1.442695
      %v6179 = vpow.pop %v6178
      %v6180 = vmul.f32 %v6121, 1.442695
      %v6181 = vpow.pop %v6180
      %v6182 = vmul.f32 %v6122, 1.442695
      %v6183 = vpow.pop %v6182
      %v6184 = vmul.f32 %v6123, 1.442695
      %v6185 = vpow.pop %v6184
      %v6186 = vmul.f32 %v6124, 1.442695
      %v6187 = vpow.pop %v6186
      %v6188 = vmul.f32 %v6125, 1.442695
      %v6189 = vpow.pop %v6188
      %v6190 = vadd.f32 %v6127, 1.0
      %v6191 = vlog2.pop %v6190
      %v6192 = vmul.f32 %v6191, 0.6931472
      %v6193 = vmul.f32 -0.5, %v6127
      %v6194 = vadd.f32 %v6193, 1.0
      %v6195 = vmul.f32 %v6194, %v6127
      %v6196 = vand.u32 2147483647, %v6127
      %vm6197 = vcmp.lt.f32.partialorder %v6196, 0.0004427343
      %v6198 = vsel %vm6197, %v6195, %v6192
      %v6199 = vadd.f32 %v6129, 1.0
      %v6200 = vlog2.pop %v6199
      %v6201 = vmul.f32 %v6200, 0.6931472
      %v6202 = vmul.f32 -0.5, %v6129
      %v6203 = vadd.f32 %v6202, 1.0
      %v6204 = vmul.f32 %v6203, %v6129
      %v6205 = vand.u32 2147483647, %v6129
      %vm6206 = vcmp.lt.f32.partialorder %v6205, 0.0004427343
      %v6207 = vsel %vm6206, %v6204, %v6201
      %v6208 = vadd.f32 %v6131, 1.0
      %v6209 = vlog2.pop %v6208
      %v6210 = vmul.f32 %v6209, 0.6931472
      %v6211 = vmul.f32 -0.5, %v6131
      %v6212 = vadd.f32 %v6211, 1.0
      %v6213 = vmul.f32 %v6212, %v6131
      %v6214 = vand.u32 2147483647, %v6131
      %vm6215 = vcmp.lt.f32.partialorder %v6214, 0.0004427343
      %v6216 = vsel %vm6215, %v6213, %v6210
      %v6217 = vadd.f32 %v6133, 1.0
      %v6218 = vlog2.pop %v6217
      %v6219 = vmul.f32 %v6218, 0.6931472
      %v6220 = vmul.f32 -0.5, %v6133
      %v6221 = vadd.f32 %v6220, 1.0
      %v6222 = vmul.f32 %v6221, %v6133
      %v6223 = vand.u32 2147483647, %v6133
      %vm6224 = vcmp.lt.f32.partialorder %v6223, 0.0004427343
      %v6225 = vsel %vm6224, %v6222, %v6219
      %v6226 = vadd.f32 %v6135, 1.0
      %v6227 = vlog2.pop %v6226
      %v6228 = vmul.f32 %v6227, 0.6931472
      %v6229 = vmul.f32 -0.5, %v6135
      %v6230 = vadd.f32 %v6229, 1.0
      %v6231 = vmul.f32 %v6230, %v6135
      %v6232 = vand.u32 2147483647, %v6135
      %vm6233 = vcmp.lt.f32.partialorder %v6232, 0.0004427343
      %v6234 = vsel %vm6233, %v6231, %v6228
      %v6235 = vadd.f32 %v6137, 1.0
      %v6236 = vlog2.pop %v6235
      %v6237 = vmul.f32 %v6236, 0.6931472
      %v6238 = vmul.f32 -0.5, %v6137
      %v6239 = vadd.f32 %v6238, 1.0
      %v6240 = vmul.f32 %v6239, %v6137
      %v6241 = vand.u32 2147483647, %v6137
      %vm6242 = vcmp.lt.f32.partialorder %v6241, 0.0004427343
      %v6243 = vsel %vm6242, %v6240, %v6237
      %v6244 = vadd.f32 %v6139, 1.0
      %v6245 = vlog2.pop %v6244
      %v6246 = vmul.f32 %v6245, 0.6931472
      %v6247 = vmul.f32 -0.5, %v6139
      %v6248 = vadd.f32 %v6247, 1.0
      %v6249 = vmul.f32 %v6248, %v6139
      %v6250 = vand.u32 2147483647, %v6139
      %vm6251 = vcmp.lt.f32.partialorder %v6250, 0.0004427343
      %v6252 = vsel %vm6251, %v6249, %v6246
      %v6253 = vadd.f32 %v6141, 1.0
      %v6254 = vlog2.pop %v6253
      %v6255 = vmul.f32 %v6254, 0.6931472
      %v6256 = vmul.f32 -0.5, %v6141
      %v6257 = vadd.f32 %v6256, 1.0
      %v6258 = vmul.f32 %v6257, %v6141
      %v6259 = vand.u32 2147483647, %v6141
      %vm6260 = vcmp.lt.f32.partialorder %v6259, 0.0004427343
      %v6261 = vsel %vm6260, %v6258, %v6255
      %v6262 = vadd.f32 %v6143, 1.0
      %v6263 = vlog2.pop %v6262
      %v6264 = vmul.f32 %v6263, 0.6931472
      %v6265 = vmul.f32 -0.5, %v6143
      %v6266 = vadd.f32 %v6265, 1.0
      %v6267 = vmul.f32 %v6266, %v6143
      %v6268 = vand.u32 2147483647, %v6143
      %vm6269 = vcmp.lt.f32.partialorder %v6268, 0.0004427343
      %v6270 = vsel %vm6269, %v6267, %v6264
      %v6271 = vadd.f32 %v6145, 1.0
      %v6272 = vlog2.pop %v6271
      %v6273 = vmul.f32 %v6272, 0.6931472
      %v6274 = vmul.f32 -0.5, %v6145
      %v6275 = vadd.f32 %v6274, 1.0
      %v6276 = vmul.f32 %v6275, %v6145
      %v6277 = vand.u32 2147483647, %v6145
      %vm6278 = vcmp.lt.f32.partialorder %v6277, 0.0004427343
      %v6279 = vsel %vm6278, %v6276, %v6273
      %v6280 = vadd.f32 %v6147, 1.0
      %v6281 = vlog2.pop %v6280
      %v6282 = vmul.f32 %v6281, 0.6931472
      %v6283 = vmul.f32 -0.5, %v6147
      %v6284 = vadd.f32 %v6283, 1.0
      %v6285 = vmul.f32 %v6284, %v6147
      %v6286 = vand.u32 2147483647, %v6147
      %vm6287 = vcmp.lt.f32.partialorder %v6286, 0.0004427343
      %v6288 = vsel %vm6287, %v6285, %v6282
      %v6289 = vadd.f32 %v6149, 1.0
      %v6290 = vlog2.pop %v6289
      %v6291 = vmul.f32 %v6290, 0.6931472
      %v6292 = vmul.f32 -0.5, %v6149
      %v6293 = vadd.f32 %v6292, 1.0
      %v6294 = vmul.f32 %v6293, %v6149
      %v6295 = vand.u32 2147483647, %v6149
      %vm6296 = vcmp.lt.f32.partialorder %v6295, 0.0004427343
      %v6297 = vsel %vm6296, %v6294, %v6291
      %v6298 = vadd.f32 %v6151, 1.0
      %v6299 = vlog2.pop %v6298
      %v6300 = vmul.f32 %v6299, 0.6931472
      %v6301 = vmul.f32 -0.5, %v6151
      %v6302 = vadd.f32 %v6301, 1.0
      %v6303 = vmul.f32 %v6302, %v6151
      %v6304 = vand.u32 2147483647, %v6151
      %vm6305 = vcmp.lt.f32.partialorder %v6304, 0.0004427343
      %v6306 = vsel %vm6305, %v6303, %v6300
      %v6307 = vadd.f32 %v6153, 1.0
      %v6308 = vlog2.pop %v6307
      %v6309 = vmul.f32 %v6308, 0.6931472
      %v6310 = vmul.f32 -0.5, %v6153
      %v6311 = vadd.f32 %v6310, 1.0
      %v6312 = vmul.f32 %v6311, %v6153
      %v6313 = vand.u32 2147483647, %v6153
      %vm6314 = vcmp.lt.f32.partialorder %v6313, 0.0004427343
      %v6315 = vsel %vm6314, %v6312, %v6309
      %v6316 = vadd.f32 %v6155, 1.0
      %v6317 = vlog2.pop %v6316
      %v6318 = vmul.f32 %v6317, 0.6931472
      %v6319 = vmul.f32 -0.5, %v6155
      %v6320 = vadd.f32 %v6319, 1.0
      %v6321 = vmul.f32 %v6320, %v6155
      %v6322 = vand.u32 2147483647, %v6155
      %vm6323 = vcmp.lt.f32.partialorder %v6322, 0.0004427343
      %v6324 = vsel %vm6323, %v6321, %v6318
      %v6325 = vadd.f32 %v6157, 1.0
      %v6326 = vlog2.pop %v6325
      %v6327 = vmul.f32 %v6326, 0.6931472
      %v6328 = vmul.f32 -0.5, %v6157
      %v6329 = vadd.f32 %v6328, 1.0
      %v6330 = vmul.f32 %v6329, %v6157
      %v6331 = vand.u32 2147483647, %v6157
      %vm6332 = vcmp.lt.f32.partialorder %v6331, 0.0004427343
      %v6333 = vsel %vm6332, %v6330, %v6327
      %v6334 = vadd.f32 %v6159, 1.0
      %v6335 = vlog2.pop %v6334
      %v6336 = vmul.f32 %v6335, 0.6931472
      %v6337 = vmul.f32 -0.5, %v6159
      %v6338 = vadd.f32 %v6337, 1.0
      %v6339 = vmul.f32 %v6338, %v6159
      %v6340 = vand.u32 2147483647, %v6159
      %vm6341 = vcmp.lt.f32.partialorder %v6340, 0.0004427343
      %v6342 = vsel %vm6341, %v6339, %v6336
      %v6343 = vadd.f32 %v6161, 1.0
      %v6344 = vlog2.pop %v6343
      %v6345 = vmul.f32 %v6344, 0.6931472
      %v6346 = vmul.f32 -0.5, %v6161
      %v6347 = vadd.f32 %v6346, 1.0
      %v6348 = vmul.f32 %v6347, %v6161
      %v6349 = vand.u32 2147483647, %v6161
      %vm6350 = vcmp.lt.f32.partialorder %v6349, 0.0004427343
      %v6351 = vsel %vm6350, %v6348, %v6345
      %v6352 = vadd.f32 %v6163, 1.0
      %v6353 = vlog2.pop %v6352
      %v6354 = vmul.f32 %v6353, 0.6931472
      %v6355 = vmul.f32 -0.5, %v6163
      %v6356 = vadd.f32 %v6355, 1.0
      %v6357 = vmul.f32 %v6356, %v6163
      %v6358 = vand.u32 2147483647, %v6163
      %vm6359 = vcmp.lt.f32.partialorder %v6358, 0.0004427343
      %v6360 = vsel %vm6359, %v6357, %v6354
      %v6361 = vadd.f32 %v6165, 1.0
      %v6362 = vlog2.pop %v6361
      %v6363 = vmul.f32 %v6362, 0.6931472
      %v6364 = vmul.f32 -0.5, %v6165
      %v6365 = vadd.f32 %v6364, 1.0
      %v6366 = vmul.f32 %v6365, %v6165
      %v6367 = vand.u32 2147483647, %v6165
      %vm6368 = vcmp.lt.f32.partialorder %v6367, 0.0004427343
      %v6369 = vsel %vm6368, %v6366, %v6363
      %v6370 = vadd.f32 %v6167, 1.0
      %v6371 = vlog2.pop %v6370
      %v6372 = vmul.f32 %v6371, 0.6931472
      %v6373 = vmul.f32 -0.5, %v6167
      %v6374 = vadd.f32 %v6373, 1.0
      %v6375 = vmul.f32 %v6374, %v6167
      %v6376 = vand.u32 2147483647, %v6167
      %vm6377 = vcmp.lt.f32.partialorder %v6376, 0.0004427343
      %v6378 = vsel %vm6377, %v6375, %v6372
      %v6379 = vadd.f32 %v6169, 1.0
      %v6380 = vlog2.pop %v6379
      %v6381 = vmul.f32 %v6380, 0.6931472
      %v6382 = vmul.f32 -0.5, %v6169
      %v6383 = vadd.f32 %v6382, 1.0
      %v6384 = vmul.f32 %v6383, %v6169
      %v6385 = vand.u32 2147483647, %v6169
      %vm6386 = vcmp.lt.f32.partialorder %v6385, 0.0004427343
      %v6387 = vsel %vm6386, %v6384, %v6381
      %v6388 = vadd.f32 %v6171, 1.0
      %v6389 = vlog2.pop %v6388
      %v6390 = vmul.f32 %v6389, 0.6931472
      %v6391 = vmul.f32 -0.5, %v6171
      %v6392 = vadd.f32 %v6391, 1.0
      %v6393 = vmul.f32 %v6392, %v6171
      %v6394 = vand.u32 2147483647, %v6171
      %vm6395 = vcmp.lt.f32.partialorder %v6394, 0.0004427343
      %v6396 = vsel %vm6395, %v6393, %v6390
      %v6397 = vadd.f32 %v6173, 1.0
      %v6398 = vlog2.pop %v6397
      %v6399 = vmul.f32 %v6398, 0.6931472
      %v6400 = vmul.f32 -0.5, %v6173
      %v6401 = vadd.f32 %v6400, 1.0
      %v6402 = vmul.f32 %v6401, %v6173
      %v6403 = vand.u32 2147483647, %v6173
      %vm6404 = vcmp.lt.f32.partialorder %v6403, 0.0004427343
      %v6405 = vsel %vm6404, %v6402, %v6399
      %v6406 = vadd.f32 %v6175, 1.0
      %v6407 = vlog2.pop %v6406
      %v6408 = vmul.f32 %v6407, 0.6931472
      %v6409 = vmul.f32 -0.5, %v6175
      %v6410 = vadd.f32 %v6409, 1.0
      %v6411 = vmul.f32 %v6410, %v6175
      %v6412 = vand.u32 2147483647, %v6175
      %vm6413 = vcmp.lt.f32.partialorder %v6412, 0.0004427343
      %v6414 = vsel %vm6413, %v6411, %v6408
      %v6415 = vadd.f32 %v6177, 1.0
      %v6416 = vlog2.pop %v6415
      %v6417 = vmul.f32 %v6416, 0.6931472
      %v6418 = vmul.f32 -0.5, %v6177
      %v6419 = vadd.f32 %v6418, 1.0
      %v6420 = vmul.f32 %v6419, %v6177
      %v6421 = vand.u32 2147483647, %v6177
      %vm6422 = vcmp.lt.f32.partialorder %v6421, 0.0004427343
      %v6423 = vsel %vm6422, %v6420, %v6417
      %v6424 = vadd.f32 %v6179, 1.0
      %v6425 = vlog2.pop %v6424
      %v6426 = vmul.f32 %v6425, 0.6931472
      %v6427 = vmul.f32 -0.5, %v6179
      %v6428 = vadd.f32 %v6427, 1.0
      %v6429 = vmul.f32 %v6428, %v6179
      %v6430 = vand.u32 2147483647, %v6179
      %vm6431 = vcmp.lt.f32.partialorder %v6430, 0.0004427343
      %v6432 = vsel %vm6431, %v6429, %v6426
      %v6433 = vadd.f32 %v6181, 1.0
      %v6434 = vlog2.pop %v6433
      %v6435 = vmul.f32 %v6434, 0.6931472
      %v6436 = vmul.f32 -0.5, %v6181
      %v6437 = vadd.f32 %v6436, 1.0
      %v6438 = vmul.f32 %v6437, %v6181
      %v6439 = vand.u32 2147483647, %v6181
      %vm6440 = vcmp.lt.f32.partialorder %v6439, 0.0004427343
      %v6441 = vsel %vm6440, %v6438, %v6435
      %v6442 = vadd.f32 %v6183, 1.0
      %v6443 = vlog2.pop %v6442
      %v6444 = vmul.f32 %v6443, 0.6931472
      %v6445 = vmul.f32 -0.5, %v6183
      %v6446 = vadd.f32 %v6445, 1.0
      %v6447 = vmul.f32 %v6446, %v6183
      %v6448 = vand.u32 2147483647, %v6183
      %vm6449 = vcmp.lt.f32.partialorder %v6448, 0.0004427343
      %v6450 = vsel %vm6449, %v6447, %v6444
      %v6451 = vadd.f32 %v6185, 1.0
      %v6452 = vlog2.pop %v6451
      %v6453 = vmul.f32 %v6452, 0.6931472
      %v6454 = vmul.f32 -0.5, %v6185
      %v6455 = vadd.f32 %v6454, 1.0
      %v6456 = vmul.f32 %v6455, %v6185
      %v6457 = vand.u32 2147483647, %v6185
      %vm6458 = vcmp.lt.f32.partialorder %v6457, 0.0004427343
      %v6459 = vsel %vm6458, %v6456, %v6453
      %v6460 = vadd.f32 %v6187, 1.0
      %v6461 = vlog2.pop %v6460
      %v6462 = vmul.f32 %v6461, 0.6931472
      %v6463 = vmul.f32 -0.5, %v6187
      %v6464 = vadd.f32 %v6463, 1.0
      %v6465 = vmul.f32 %v6464, %v6187
      %v6466 = vand.u32 2147483647, %v6187
      %vm6467 = vcmp.lt.f32.partialorder %v6466, 0.0004427343
      %v6468 = vsel %vm6467, %v6465, %v6462
      %v6469 = vadd.f32 %v6189, 1.0
      %v6470 = vlog2.pop %v6469
      %v6471 = vmul.f32 %v6470, 0.6931472
      %v6472 = vmul.f32 -0.5, %v6189
      %v6473 = vadd.f32 %v6472, 1.0
      %v6474 = vmul.f32 %v6473, %v6189
      %v6475 = vand.u32 2147483647, %v6189
      %vm6476 = vcmp.lt.f32.partialorder %v6475, 0.0004427343
      %v6477 = vsel %vm6476, %v6474, %v6471
      %v6478 = vmul.f32 %v6198, 0.01
      %v6479 = vmul.f32 %v6207, 0.01
      %v6480 = vmul.f32 %v6216, 0.01
      %v6481 = vmul.f32 %v6225, 0.01
      %v6482 = vmul.f32 %v6234, 0.01
      %v6483 = vmul.f32 %v6243, 0.01
      %v6484 = vmul.f32 %v6252, 0.01
      %v6485 = vmul.f32 %v6261, 0.01
      %v6486 = vmul.f32 %v6270, 0.01
      %v6487 = vmul.f32 %v6279, 0.01
      %v6488 = vmul.f32 %v6288, 0.01
      %v6489 = vmul.f32 %v6297, 0.01
      %v6490 = vmul.f32 %v6306, 0.01
      %v6491 = vmul.f32 %v6315, 0.01
      %v6492 = vmul.f32 %v6324, 0.01
      %v6493 = vmul.f32 %v6333, 0.01
      %v6494 = vmul.f32 %v6342, 0.01
      %v6495 = vmul.f32 %v6351, 0.01
      %v6496 = vmul.f32 %v6360, 0.01
      %v6497 = vmul.f32 %v6369, 0.01
      %v6498 = vmul.f32 %v6378, 0.01
      %v6499 = vmul.f32 %v6387, 0.01
      %v6500 = vmul.f32 %v6396, 0.01
      %v6501 = vmul.f32 %v6405, 0.01
      %v6502 = vmul.f32 %v6414, 0.01
      %v6503 = vmul.f32 %v6423, 0.01
      %v6504 = vmul.f32 %v6432, 0.01
      %v6505 = vmul.f32 %v6441, 0.01
      %v6506 = vmul.f32 %v6450, 0.01
      %v6507 = vmul.f32 %v6459, 0.01
      %v6508 = vmul.f32 %v6468, 0.01
      %v6509 = vmul.f32 %v6477, 0.01
      %vm6510 = vcmp.gt.f32.partialorder %v5904, 0.2
      %vm6511 = vcmp.gt.f32.partialorder %v5909, 0.2
      %vm6512 = vcmp.gt.f32.partialorder %v5914, 0.2
      %vm6513 = vcmp.gt.f32.partialorder %v5919, 0.2
      %vm6514 = vcmp.gt.f32.partialorder %v5924, 0.2
      %vm6515 = vcmp.gt.f32.partialorder %v5929, 0.2
      %vm6516 = vcmp.gt.f32.partialorder %v5934, 0.2
      %vm6517 = vcmp.gt.f32.partialorder %v5939, 0.2
      %vm6518 = vcmp.gt.f32.partialorder %v5944, 0.2
      %vm6519 = vcmp.gt.f32.partialorder %v5949, 0.2
      %vm6520 = vcmp.gt.f32.partialorder %v5954, 0.2
      %vm6521 = vcmp.gt.f32.partialorder %v5959, 0.2
      %vm6522 = vcmp.gt.f32.partialorder %v5964, 0.2
      %vm6523 = vcmp.gt.f32.partialorder %v5969, 0.2
      %vm6524 = vcmp.gt.f32.partialorder %v5974, 0.2
      %vm6525 = vcmp.gt.f32.partialorder %v5979, 0.2
      %vm6526 = vcmp.gt.f32.partialorder %v5984, 0.2
      %vm6527 = vcmp.gt.f32.partialorder %v5989, 0.2
      %vm6528 = vcmp.gt.f32.partialorder %v5994, 0.2
      %vm6529 = vcmp.gt.f32.partialorder %v5999, 0.2
      %vm6530 = vcmp.gt.f32.partialorder %v6004, 0.2
      %vm6531 = vcmp.gt.f32.partialorder %v6009, 0.2
      %vm6532 = vcmp.gt.f32.partialorder %v6014, 0.2
      %vm6533 = vcmp.gt.f32.partialorder %v6019, 0.2
      %vm6534 = vcmp.gt.f32.partialorder %v6024, 0.2
      %vm6535 = vcmp.gt.f32.partialorder %v6029, 0.2
      %vm6536 = vcmp.gt.f32.partialorder %v6034, 0.2
      %vm6537 = vcmp.gt.f32.partialorder %v6039, 0.2
      %vm6538 = vcmp.gt.f32.partialorder %v6044, 0.2
      %vm6539 = vcmp.gt.f32.partialorder %v6049, 0.2
      %vm6540 = vcmp.gt.f32.partialorder %v6054, 0.2
      %vm6541 = vcmp.gt.f32.partialorder %v6059, 0.2
      %v6542 = vsel %vm6510, %v5904, %v6478
      %v6543 = vsel %vm6511, %v5909, %v6479
      %v6544 = vsel %vm6512, %v5914, %v6480
      %v6545 = vsel %vm6513, %v5919, %v6481
      %v6546 = vsel %vm6514, %v5924, %v6482
      %v6547 = vsel %vm6515, %v5929, %v6483
      %v6548 = vsel %vm6516, %v5934, %v6484
      %v6549 = vsel %vm6517, %v5939, %v6485
      %v6550 = vsel %vm6518, %v5944, %v6486
      %v6551 = vsel %vm6519, %v5949, %v6487
      %v6552 = vsel %vm6520, %v5954, %v6488
      %v6553 = vsel %vm6521, %v5959, %v6489
      %v6554 = vsel %vm6522, %v5964, %v6490
      %v6555 = vsel %vm6523, %v5969, %v6491
      %v6556 = vsel %vm6524, %v5974, %v6492
      %v6557 = vsel %vm6525, %v5979, %v6493
      %v6558 = vsel %vm6526, %v5984, %v6494
      %v6559 = vsel %vm6527, %v5989, %v6495
      %v6560 = vsel %vm6528, %v5994, %v6496
      %v6561 = vsel %vm6529, %v5999, %v6497
      %v6562 = vsel %vm6530, %v6004, %v6498
      %v6563 = vsel %vm6531, %v6009, %v6499
      %v6564 = vsel %vm6532, %v6014, %v6500
      %v6565 = vsel %vm6533, %v6019, %v6501
      %v6566 = vsel %vm6534, %v6024, %v6502
      %v6567 = vsel %vm6535, %v6029, %v6503
      %v6568 = vsel %vm6536, %v6034, %v6504
      %v6569 = vsel %vm6537, %v6039, %v6505
      %v6570 = vsel %vm6538, %v6044, %v6506
      %v6571 = vsel %vm6539, %v6049, %v6507
      %v6572 = vsel %vm6540, %v6054, %v6508
      %v6573 = vsel %vm6541, %v6059, %v6509
      %s6574 = scalar_lea.vmem %s2, 8
      %v6575 = vld [vmem:[%s6574] sm:$0x1]
      %s6576 = scalar_lea.vmem %s1, 1152
      %v6577 = vld [vmem:[%s6576] sm:$0xff]
      %v6578 = vld [vmem:[%s6576 + $0x8] sm:$0xff]
      %v6579 = vld [vmem:[%s6576 + $0x10] sm:$0xff]
      %v6580 = vld [vmem:[%s6576 + $0x18] sm:$0xff]
      %v6581 = vld [vmem:[%s6576 + $0x20] sm:$0xff]
      %v6582 = vld [vmem:[%s6576 + $0x28] sm:$0xff]
      %v6583 = vld [vmem:[%s6576 + $0x30] sm:$0xff]
      %v6584 = vld [vmem:[%s6576 + $0x38] sm:$0xff]
      %v6585 = vld [vmem:[%s6576 + $0x40] sm:$0xff]
      %v6586 = vld [vmem:[%s6576 + $0x48] sm:$0xff]
      %v6587 = vld [vmem:[%s6576 + $0x50] sm:$0xff]
      %v6588 = vld [vmem:[%s6576 + $0x58] sm:$0xff]
      %v6589 = vld [vmem:[%s6576 + $0x60] sm:$0xff]
      %v6590 = vld [vmem:[%s6576 + $0x68] sm:$0xff]
      %v6591 = vld [vmem:[%s6576 + $0x70] sm:$0xff]
      %v6592 = vld [vmem:[%s6576 + $0x78] sm:$0xff]
      %v6594 = vlaneseq
      %v6595 = vshrl.u32 %v6594, 7
      %v6596 = vsub.s32 0, %v6595
      %v6597 = vrot.slane %v6575, %v6596
      %6599 = vmatprep.subr.mxu0 0.0
      %6600 = vmatpush1.msra.mxu0 %v6592
      %6601 = vmatprep.subr.mxu0 0.0
      %6602 = vmatpush1.msra.mxu0 %v6591
      %6603 = vmatprep.subr.mxu0 0.0
      %6604 = vmatpush1.msra.mxu0 %v6590
      %6605 = vmatprep.subr.mxu0 0.0
      %6606 = vmatpush1.msra.mxu0 %v6589
      %6607 = vmatprep.subr.mxu0 0.0
      %6608 = vmatpush1.msra.mxu0 %v6588
      %6609 = vmatprep.subr.mxu0 0.0
      %6610 = vmatpush1.msra.mxu0 %v6587
      %6611 = vmatprep.subr.mxu0 0.0
      %6612 = vmatpush1.msra.mxu0 %v6586
      %6613 = vmatprep.subr.mxu0 0.0
      %6614 = vmatpush1.msra.mxu0 %v6585
      %6615 = vmatprep.subr.mxu0 0.0
      %6616 = vmatpush1.msra.mxu0 %v6584
      %6617 = vmatprep.subr.mxu0 0.0
      %6618 = vmatpush1.msra.mxu0 %v6583
      %6619 = vmatprep.subr.mxu0 0.0
      %6620 = vmatpush1.msra.mxu0 %v6582
      %6621 = vmatprep.subr.mxu0 0.0
      %6622 = vmatpush1.msra.mxu0 %v6581
      %6623 = vmatprep.subr.mxu0 0.0
      %6624 = vmatpush1.msra.mxu0 %v6580
      %6625 = vmatprep.subr.mxu0 0.0
      %6626 = vmatpush1.msra.mxu0 %v6579
      %6627 = vmatprep.subr.mxu0 0.0
      %6628 = vmatpush1.msra.mxu0 %v6578
      %6629 = vmatprep.subr.mxu0 0.0
      %6630 = vmatpush1.msra.mxu0 %v6577
      %6631 = vmatprep.subr.mxu0 0.0
      %6632 = vmatpush2.msra.mxu0 0.0
      %6633 = vmatprep.subr.mxu0 0.0
      %6634 = vmatpush2.msra.mxu0 0.0
      %6635 = vmatprep.subr.mxu0 0.0
      %6636 = vmatpush2.msra.mxu0 0.0
      %6637 = vmatprep.subr.mxu0 0.0
      %6638 = vmatpush2.msra.mxu0 0.0
      %6639 = vmatprep.subr.mxu0 0.0
      %6640 = vmatpush2.msra.mxu0 0.0
      %6641 = vmatprep.subr.mxu0 0.0
      %6642 = vmatpush2.msra.mxu0 0.0
      %6643 = vmatprep.subr.mxu0 0.0
      %6644 = vmatpush2.msra.mxu0 0.0
      %6645 = vmatprep.subr.mxu0 0.0
      %6646 = vmatpush2.msra.mxu0 0.0
      %6647 = vmatprep.subr.mxu0 0.0
      %6648 = vmatpush2.msra.mxu0 0.0
      %6649 = vmatprep.subr.mxu0 0.0
      %6650 = vmatpush2.msra.mxu0 0.0
      %6651 = vmatprep.subr.mxu0 0.0
      %6652 = vmatpush2.msra.mxu0 0.0
      %6653 = vmatprep.subr.mxu0 0.0
      %6654 = vmatpush2.msra.mxu0 0.0
      %6655 = vmatprep.subr.mxu0 0.0
      %6656 = vmatpush2.msra.mxu0 0.0
      %6657 = vmatprep.subr.mxu0 0.0
      %6658 = vmatpush2.msra.mxu0 0.0
      %6659 = vmatprep.subr.mxu0 0.0
      %6660 = vmatpush2.msra.mxu0 0.0
      %6661 = vmatprep.subr.mxu0 0.0
      %6662 = vmatpush2.msra.mxu0 0.0
      %6663 = vmatprep.mubr.f32.mxu0 0.0
      %6664 = vmatmul.mubr.f32.gmra.mxu0 %v6542
      %v6665 = vpop.f32.mrf.mxu0
      %v6666 = vadd.f32 %v6597, %v6665
      %v6667 = vpop.f32.mrf.mxu0
      %6668 = vmatprep.mubr.f32.mxu0 0.0
      %6669 = vmatmul.mubr.f32.gmra.mxu0 %v6543
      %v6670 = vpop.f32.mrf.mxu0
      %v6671 = vadd.f32 %v6597, %v6670
      %v6672 = vpop.f32.mrf.mxu0
      %6673 = vmatprep.mubr.f32.mxu0 0.0
      %6674 = vmatmul.mubr.f32.gmra.mxu0 %v6544
      %v6675 = vpop.f32.mrf.mxu0
      %v6676 = vadd.f32 %v6597, %v6675
      %v6677 = vpop.f32.mrf.mxu0
      %6678 = vmatprep.mubr.f32.mxu0 0.0
      %6679 = vmatmul.mubr.f32.gmra.mxu0 %v6545
      %v6680 = vpop.f32.mrf.mxu0
      %v6681 = vadd.f32 %v6597, %v6680
      %v6682 = vpop.f32.mrf.mxu0
      %6683 = vmatprep.mubr.f32.mxu0 0.0
      %6684 = vmatmul.mubr.f32.gmra.mxu0 %v6546
      %v6685 = vpop.f32.mrf.mxu0
      %v6686 = vadd.f32 %v6597, %v6685
      %v6687 = vpop.f32.mrf.mxu0
      %6688 = vmatprep.mubr.f32.mxu0 0.0
      %6689 = vmatmul.mubr.f32.gmra.mxu0 %v6547
      %v6690 = vpop.f32.mrf.mxu0
      %v6691 = vadd.f32 %v6597, %v6690
      %v6692 = vpop.f32.mrf.mxu0
      %6693 = vmatprep.mubr.f32.mxu0 0.0
      %6694 = vmatmul.mubr.f32.gmra.mxu0 %v6548
      %v6695 = vpop.f32.mrf.mxu0
      %v6696 = vadd.f32 %v6597, %v6695
      %v6697 = vpop.f32.mrf.mxu0
      %6698 = vmatprep.mubr.f32.mxu0 0.0
      %6699 = vmatmul.mubr.f32.gmra.mxu0 %v6549
      %v6700 = vpop.f32.mrf.mxu0
      %v6701 = vadd.f32 %v6597, %v6700
      %v6702 = vpop.f32.mrf.mxu0
      %6703 = vmatprep.mubr.f32.mxu0 0.0
      %6704 = vmatmul.mubr.f32.gmra.mxu0 %v6550
      %v6705 = vpop.f32.mrf.mxu0
      %v6706 = vadd.f32 %v6597, %v6705
      %v6707 = vpop.f32.mrf.mxu0
      %6708 = vmatprep.mubr.f32.mxu0 0.0
      %6709 = vmatmul.mubr.f32.gmra.mxu0 %v6551
      %v6710 = vpop.f32.mrf.mxu0
      %v6711 = vadd.f32 %v6597, %v6710
      %v6712 = vpop.f32.mrf.mxu0
      %6713 = vmatprep.mubr.f32.mxu0 0.0
      %6714 = vmatmul.mubr.f32.gmra.mxu0 %v6552
      %v6715 = vpop.f32.mrf.mxu0
      %v6716 = vadd.f32 %v6597, %v6715
      %v6717 = vpop.f32.mrf.mxu0
      %6718 = vmatprep.mubr.f32.mxu0 0.0
      %6719 = vmatmul.mubr.f32.gmra.mxu0 %v6553
      %v6720 = vpop.f32.mrf.mxu0
      %v6721 = vadd.f32 %v6597, %v6720
      %v6722 = vpop.f32.mrf.mxu0
      %6723 = vmatprep.mubr.f32.mxu0 0.0
      %6724 = vmatmul.mubr.f32.gmra.mxu0 %v6554
      %v6725 = vpop.f32.mrf.mxu0
      %v6726 = vadd.f32 %v6597, %v6725
      %v6727 = vpop.f32.mrf.mxu0
      %6728 = vmatprep.mubr.f32.mxu0 0.0
      %6729 = vmatmul.mubr.f32.gmra.mxu0 %v6555
      %v6730 = vpop.f32.mrf.mxu0
      %v6731 = vadd.f32 %v6597, %v6730
      %v6732 = vpop.f32.mrf.mxu0
      %6733 = vmatprep.mubr.f32.mxu0 0.0
      %6734 = vmatmul.mubr.f32.gmra.mxu0 %v6556
      %v6735 = vpop.f32.mrf.mxu0
      %v6736 = vadd.f32 %v6597, %v6735
      %v6737 = vpop.f32.mrf.mxu0
      %6738 = vmatprep.mubr.f32.mxu0 0.0
      %6739 = vmatmul.mubr.f32.gmra.mxu0 %v6557
      %v6740 = vpop.f32.mrf.mxu0
      %v6741 = vadd.f32 %v6597, %v6740
      %v6742 = vpop.f32.mrf.mxu0
      %6743 = vmatprep.mubr.f32.mxu0 0.0
      %6744 = vmatmul.mubr.f32.gmra.mxu0 %v6558
      %v6745 = vpop.f32.mrf.mxu0
      %v6746 = vadd.f32 %v6597, %v6745
      %v6747 = vpop.f32.mrf.mxu0
      %6748 = vmatprep.mubr.f32.mxu0 0.0
      %6749 = vmatmul.mubr.f32.gmra.mxu0 %v6559
      %v6750 = vpop.f32.mrf.mxu0
      %v6751 = vadd.f32 %v6597, %v6750
      %v6752 = vpop.f32.mrf.mxu0
      %6753 = vmatprep.mubr.f32.mxu0 0.0
      %6754 = vmatmul.mubr.f32.gmra.mxu0 %v6560
      %v6755 = vpop.f32.mrf.mxu0
      %v6756 = vadd.f32 %v6597, %v6755
      %v6757 = vpop.f32.mrf.mxu0
      %6758 = vmatprep.mubr.f32.mxu0 0.0
      %6759 = vmatmul.mubr.f32.gmra.mxu0 %v6561
      %v6760 = vpop.f32.mrf.mxu0
      %v6761 = vadd.f32 %v6597, %v6760
      %v6762 = vpop.f32.mrf.mxu0
      %6763 = vmatprep.mubr.f32.mxu0 0.0
      %6764 = vmatmul.mubr.f32.gmra.mxu0 %v6562
      %v6765 = vpop.f32.mrf.mxu0
      %v6766 = vadd.f32 %v6597, %v6765
      %v6767 = vpop.f32.mrf.mxu0
      %6768 = vmatprep.mubr.f32.mxu0 0.0
      %6769 = vmatmul.mubr.f32.gmra.mxu0 %v6563
      %v6770 = vpop.f32.mrf.mxu0
      %v6771 = vadd.f32 %v6597, %v6770
      %v6772 = vpop.f32.mrf.mxu0
      %6773 = vmatprep.mubr.f32.mxu0 0.0
      %6774 = vmatmul.mubr.f32.gmra.mxu0 %v6564
      %v6775 = vpop.f32.mrf.mxu0
      %v6776 = vadd.f32 %v6597, %v6775
      %v6777 = vpop.f32.mrf.mxu0
      %6778 = vmatprep.mubr.f32.mxu0 0.0
      %6779 = vmatmul.mubr.f32.gmra.mxu0 %v6565
      %v6780 = vpop.f32.mrf.mxu0
      %v6781 = vadd.f32 %v6597, %v6780
      %v6782 = vpop.f32.mrf.mxu0
      %6783 = vmatprep.mubr.f32.mxu0 0.0
      %6784 = vmatmul.mubr.f32.gmra.mxu0 %v6566
      %v6785 = vpop.f32.mrf.mxu0
      %v6786 = vadd.f32 %v6597, %v6785
      %v6787 = vpop.f32.mrf.mxu0
      %6788 = vmatprep.mubr.f32.mxu0 0.0
      %6789 = vmatmul.mubr.f32.gmra.mxu0 %v6567
      %v6790 = vpop.f32.mrf.mxu0
      %v6791 = vadd.f32 %v6597, %v6790
      %v6792 = vpop.f32.mrf.mxu0
      %6793 = vmatprep.mubr.f32.mxu0 0.0
      %6794 = vmatmul.mubr.f32.gmra.mxu0 %v6568
      %v6795 = vpop.f32.mrf.mxu0
      %v6796 = vadd.f32 %v6597, %v6795
      %v6797 = vpop.f32.mrf.mxu0
      %6798 = vmatprep.mubr.f32.mxu0 0.0
      %6799 = vmatmul.mubr.f32.gmra.mxu0 %v6569
      %v6800 = vpop.f32.mrf.mxu0
      %v6801 = vadd.f32 %v6597, %v6800
      %v6802 = vpop.f32.mrf.mxu0
      %6803 = vmatprep.mubr.f32.mxu0 0.0
      %6804 = vmatmul.mubr.f32.gmra.mxu0 %v6570
      %v6805 = vpop.f32.mrf.mxu0
      %v6806 = vadd.f32 %v6597, %v6805
      %v6807 = vpop.f32.mrf.mxu0
      %6808 = vmatprep.mubr.f32.mxu0 0.0
      %6809 = vmatmul.mubr.f32.gmra.mxu0 %v6571
      %v6810 = vpop.f32.mrf.mxu0
      %v6811 = vadd.f32 %v6597, %v6810
      %v6812 = vpop.f32.mrf.mxu0
      %6813 = vmatprep.mubr.f32.mxu0 0.0
      %6814 = vmatmul.mubr.f32.gmra.mxu0 %v6572
      %v6815 = vpop.f32.mrf.mxu0
      %v6816 = vadd.f32 %v6597, %v6815
      %v6817 = vpop.f32.mrf.mxu0
      %6818 = vmatprep.mubr.f32.mxu0 0.0
      %6819 = vmatmul.mubr.f32.gmra.mxu0 %v6573
      %v6820 = vpop.f32.mrf.mxu0
      %v6821 = vadd.f32 %v6597, %v6820
      %v6822 = vpop.f32.mrf.mxu0
      %6823 = vdwg.mxu0
      %v6824 = vand.u32 2147483647, %v174
      %v6825 = vand.u32 2147483647, %v175
      %v6826 = vand.u32 2147483647, %v176
      %v6827 = vand.u32 2147483647, %v177
      %v6828 = vand.u32 2147483647, %v178
      %v6829 = vand.u32 2147483647, %v179
      %v6830 = vand.u32 2147483647, %v180
      %v6831 = vand.u32 2147483647, %v181
      %v6832 = vand.u32 2147483647, %v182
      %v6833 = vand.u32 2147483647, %v183
      %v6834 = vand.u32 2147483647, %v184
      %v6835 = vand.u32 2147483647, %v185
      %v6836 = vand.u32 2147483647, %v186
      %v6837 = vand.u32 2147483647, %v187
      %v6838 = vand.u32 2147483647, %v188
      %v6839 = vand.u32 2147483647, %v189
      %v6840 = vand.u32 2147483647, %v190
      %v6841 = vand.u32 2147483647, %v191
      %v6842 = vand.u32 2147483647, %v192
      %v6843 = vand.u32 2147483647, %v193
      %v6844 = vand.u32 2147483647, %v194
      %v6845 = vand.u32 2147483647, %v195
      %v6846 = vand.u32 2147483647, %v196
      %v6847 = vand.u32 2147483647, %v197
      %v6848 = vand.u32 2147483647, %v198
      %v6849 = vand.u32 2147483647, %v199
      %v6850 = vand.u32 2147483647, %v200
      %v6851 = vand.u32 2147483647, %v201
      %v6852 = vand.u32 2147483647, %v202
      %v6853 = vand.u32 2147483647, %v203
      %v6854 = vand.u32 2147483647, %v204
      %v6855 = vand.u32 2147483647, %v205
      %vm6856 = vcmp.le.f32.partialorder %v6824, 1.0
      %vm6857 = vcmp.le.f32.partialorder %v6825, 1.0
      %vm6858 = vcmp.le.f32.partialorder %v6826, 1.0
      %vm6859 = vcmp.le.f32.partialorder %v6827, 1.0
      %vm6860 = vcmp.le.f32.partialorder %v6828, 1.0
      %vm6861 = vcmp.le.f32.partialorder %v6829, 1.0
      %vm6862 = vcmp.le.f32.partialorder %v6830, 1.0
      %vm6863 = vcmp.le.f32.partialorder %v6831, 1.0
      %vm6864 = vcmp.le.f32.partialorder %v6832, 1.0
      %vm6865 = vcmp.le.f32.partialorder %v6833, 1.0
      %vm6866 = vcmp.le.f32.partialorder %v6834, 1.0
      %vm6867 = vcmp.le.f32.partialorder %v6835, 1.0
      %vm6868 = vcmp.le.f32.partialorder %v6836, 1.0
      %vm6869 = vcmp.le.f32.partialorder %v6837, 1.0
      %vm6870 = vcmp.le.f32.partialorder %v6838, 1.0
      %vm6871 = vcmp.le.f32.partialorder %v6839, 1.0
      %vm6872 = vcmp.le.f32.partialorder %v6840, 1.0
      %vm6873 = vcmp.le.f32.partialorder %v6841, 1.0
      %vm6874 = vcmp.le.f32.partialorder %v6842, 1.0
      %vm6875 = vcmp.le.f32.partialorder %v6843, 1.0
      %vm6876 = vcmp.le.f32.partialorder %v6844, 1.0
      %vm6877 = vcmp.le.f32.partialorder %v6845, 1.0
      %vm6878 = vcmp.le.f32.partialorder %v6846, 1.0
      %vm6879 = vcmp.le.f32.partialorder %v6847, 1.0
      %vm6880 = vcmp.le.f32.partialorder %v6848, 1.0
      %vm6881 = vcmp.le.f32.partialorder %v6849, 1.0
      %vm6882 = vcmp.le.f32.partialorder %v6850, 1.0
      %vm6883 = vcmp.le.f32.partialorder %v6851, 1.0
      %vm6884 = vcmp.le.f32.partialorder %v6852, 1.0
      %vm6885 = vcmp.le.f32.partialorder %v6853, 1.0
      %vm6886 = vcmp.le.f32.partialorder %v6854, 1.0
      %vm6887 = vcmp.le.f32.partialorder %v6855, 1.0
      %v6888 = vsel %vm6856, 1.0, 0.0
      %v6889 = vsel %vm6857, 1.0, 0.0
      %v6890 = vsel %vm6858, 1.0, 0.0
      %v6891 = vsel %vm6859, 1.0, 0.0
      %v6892 = vsel %vm6860, 1.0, 0.0
      %v6893 = vsel %vm6861, 1.0, 0.0
      %v6894 = vsel %vm6862, 1.0, 0.0
      %v6895 = vsel %vm6863, 1.0, 0.0
      %v6896 = vsel %vm6864, 1.0, 0.0
      %v6897 = vsel %vm6865, 1.0, 0.0
      %v6898 = vsel %vm6866, 1.0, 0.0
      %v6899 = vsel %vm6867, 1.0, 0.0
      %v6900 = vsel %vm6868, 1.0, 0.0
      %v6901 = vsel %vm6869, 1.0, 0.0
      %v6902 = vsel %vm6870, 1.0, 0.0
      %v6903 = vsel %vm6871, 1.0, 0.0
      %v6904 = vsel %vm6872, 1.0, 0.0
      %v6905 = vsel %vm6873, 1.0, 0.0
      %v6906 = vsel %vm6874, 1.0, 0.0
      %v6907 = vsel %vm6875, 1.0, 0.0
      %v6908 = vsel %vm6876, 1.0, 0.0
      %v6909 = vsel %vm6877, 1.0, 0.0
      %v6910 = vsel %vm6878, 1.0, 0.0
      %v6911 = vsel %vm6879, 1.0, 0.0
      %v6912 = vsel %vm6880, 1.0, 0.0
      %v6913 = vsel %vm6881, 1.0, 0.0
      %v6914 = vsel %vm6882, 1.0, 0.0
      %v6915 = vsel %vm6883, 1.0, 0.0
      %v6916 = vsel %vm6884, 1.0, 0.0
      %v6917 = vsel %vm6885, 1.0, 0.0
      %v6918 = vsel %vm6886, 1.0, 0.0
      %v6919 = vsel %vm6887, 1.0, 0.0
      %vm6920 = vcmask 89152
      %v6921 = vsel %vm6920, %v6888, inf
      %6922 = vmin.xlane.f32.xlu0 %v6921
      %v6923 = vpop.xlane.xlu0 %6922
      %v6924 = vsel %vm6920, %v6889, inf
      %6925 = vmin.xlane.f32.xlu0 %v6924
      %v6926 = vpop.xlane.xlu0 %6925
      %v6927 = vsel %vm6920, %v6890, inf
      %6928 = vmin.xlane.f32.xlu0 %v6927
      %v6929 = vpop.xlane.xlu0 %6928
      %v6930 = vsel %vm6920, %v6891, inf
      %6931 = vmin.xlane.f32.xlu0 %v6930
      %v6932 = vpop.xlane.xlu0 %6931
      %v6933 = vsel %vm6920, %v6892, inf
      %6934 = vmin.xlane.f32.xlu0 %v6933
      %v6935 = vpop.xlane.xlu0 %6934
      %v6936 = vsel %vm6920, %v6893, inf
      %6937 = vmin.xlane.f32.xlu0 %v6936
      %v6938 = vpop.xlane.xlu0 %6937
      %v6939 = vsel %vm6920, %v6894, inf
      %6940 = vmin.xlane.f32.xlu0 %v6939
      %v6941 = vpop.xlane.xlu0 %6940
      %v6942 = vsel %vm6920, %v6895, inf
      %6943 = vmin.xlane.f32.xlu0 %v6942
      %v6944 = vpop.xlane.xlu0 %6943
      %v6945 = vsel %vm6920, %v6896, inf
      %6946 = vmin.xlane.f32.xlu0 %v6945
      %v6947 = vpop.xlane.xlu0 %6946
      %v6948 = vsel %vm6920, %v6897, inf
      %6949 = vmin.xlane.f32.xlu0 %v6948
      %v6950 = vpop.xlane.xlu0 %6949
      %v6951 = vsel %vm6920, %v6898, inf
      %6952 = vmin.xlane.f32.xlu0 %v6951
      %v6953 = vpop.xlane.xlu0 %6952
      %v6954 = vsel %vm6920, %v6899, inf
      %6955 = vmin.xlane.f32.xlu0 %v6954
      %v6956 = vpop.xlane.xlu0 %6955
      %v6957 = vsel %vm6920, %v6900, inf
      %6958 = vmin.xlane.f32.xlu0 %v6957
      %v6959 = vpop.xlane.xlu0 %6958
      %v6960 = vsel %vm6920, %v6901, inf
      %6961 = vmin.xlane.f32.xlu0 %v6960
      %v6962 = vpop.xlane.xlu0 %6961
      %v6963 = vsel %vm6920, %v6902, inf
      %6964 = vmin.xlane.f32.xlu0 %v6963
      %v6965 = vpop.xlane.xlu0 %6964
      %v6966 = vsel %vm6920, %v6903, inf
      %6967 = vmin.xlane.f32.xlu0 %v6966
      %v6968 = vpop.xlane.xlu0 %6967
      %v6969 = vsel %vm6920, %v6904, inf
      %6970 = vmin.xlane.f32.xlu0 %v6969
      %v6971 = vpop.xlane.xlu0 %6970
      %v6972 = vsel %vm6920, %v6905, inf
      %6973 = vmin.xlane.f32.xlu0 %v6972
      %v6974 = vpop.xlane.xlu0 %6973
      %v6975 = vsel %vm6920, %v6906, inf
      %6976 = vmin.xlane.f32.xlu0 %v6975
      %v6977 = vpop.xlane.xlu0 %6976
      %v6978 = vsel %vm6920, %v6907, inf
      %6979 = vmin.xlane.f32.xlu0 %v6978
      %v6980 = vpop.xlane.xlu0 %6979
      %v6981 = vsel %vm6920, %v6908, inf
      %6982 = vmin.xlane.f32.xlu0 %v6981
      %v6983 = vpop.xlane.xlu0 %6982
      %v6984 = vsel %vm6920, %v6909, inf
      %6985 = vmin.xlane.f32.xlu0 %v6984
      %v6986 = vpop.xlane.xlu0 %6985
      %v6987 = vsel %vm6920, %v6910, inf
      %6988 = vmin.xlane.f32.xlu0 %v6987
      %v6989 = vpop.xlane.xlu0 %6988
      %v6990 = vsel %vm6920, %v6911, inf
      %6991 = vmin.xlane.f32.xlu0 %v6990
      %v6992 = vpop.xlane.xlu0 %6991
      %v6993 = vsel %vm6920, %v6912, inf
      %6994 = vmin.xlane.f32.xlu0 %v6993
      %v6995 = vpop.xlane.xlu0 %6994
      %v6996 = vsel %vm6920, %v6913, inf
      %6997 = vmin.xlane.f32.xlu0 %v6996
      %v6998 = vpop.xlane.xlu0 %6997
      %v6999 = vsel %vm6920, %v6914, inf
      %7000 = vmin.xlane.f32.xlu0 %v6999
      %v7001 = vpop.xlane.xlu0 %7000
      %v7002 = vsel %vm6920, %v6915, inf
      %7003 = vmin.xlane.f32.xlu0 %v7002
      %v7004 = vpop.xlane.xlu0 %7003
      %v7005 = vsel %vm6920, %v6916, inf
      %7006 = vmin.xlane.f32.xlu0 %v7005
      %v7007 = vpop.xlane.xlu0 %7006
      %v7008 = vsel %vm6920, %v6917, inf
      %7009 = vmin.xlane.f32.xlu0 %v7008
      %v7010 = vpop.xlane.xlu0 %7009
      %v7011 = vsel %vm6920, %v6918, inf
      %7012 = vmin.xlane.f32.xlu0 %v7011
      %v7013 = vpop.xlane.xlu0 %7012
      %v7014 = vsel %vm6920, %v6919, inf
      %7015 = vmin.xlane.f32.xlu0 %v7014
      %v7016 = vpop.xlane.xlu0 %7015
      %v7017 = vmul.f32 %v6923, %v6666
      %v7018 = vmul.f32 %v6926, %v6671
      %v7019 = vmul.f32 %v6929, %v6676
      %v7020 = vmul.f32 %v6932, %v6681
      %v7021 = vmul.f32 %v6935, %v6686
      %v7022 = vmul.f32 %v6938, %v6691
      %v7023 = vmul.f32 %v6941, %v6696
      %v7024 = vmul.f32 %v6944, %v6701
      %v7025 = vmul.f32 %v6947, %v6706
      %v7026 = vmul.f32 %v6950, %v6711
      %v7027 = vmul.f32 %v6953, %v6716
      %v7028 = vmul.f32 %v6956, %v6721
      %v7029 = vmul.f32 %v6959, %v6726
      %v7030 = vmul.f32 %v6962, %v6731
      %v7031 = vmul.f32 %v6965, %v6736
      %v7032 = vmul.f32 %v6968, %v6741
      %v7033 = vmul.f32 %v6971, %v6746
      %v7034 = vmul.f32 %v6974, %v6751
      %v7035 = vmul.f32 %v6977, %v6756
      %v7036 = vmul.f32 %v6980, %v6761
      %v7037 = vmul.f32 %v6983, %v6766
      %v7038 = vmul.f32 %v6986, %v6771
      %v7039 = vmul.f32 %v6989, %v6776
      %v7040 = vmul.f32 %v6992, %v6781
      %v7041 = vmul.f32 %v6995, %v6786
      %v7042 = vmul.f32 %v6998, %v6791
      %v7043 = vmul.f32 %v7001, %v6796
      %v7044 = vmul.f32 %v7004, %v6801
      %v7045 = vmul.f32 %v7007, %v6806
      %v7046 = vmul.f32 %v7010, %v6811
      %v7047 = vmul.f32 %v7013, %v6816
      %v7048 = vmul.f32 %v7016, %v6821
      %v7049 = vsub.f32 1.0, %v6923
      %v7050 = vsub.f32 1.0, %v6926
      %v7051 = vsub.f32 1.0, %v6929
      %v7052 = vsub.f32 1.0, %v6932
      %v7053 = vsub.f32 1.0, %v6935
      %v7054 = vsub.f32 1.0, %v6938
      %v7055 = vsub.f32 1.0, %v6941
      %v7056 = vsub.f32 1.0, %v6944
      %v7057 = vsub.f32 1.0, %v6947
      %v7058 = vsub.f32 1.0, %v6950
      %v7059 = vsub.f32 1.0, %v6953
      %v7060 = vsub.f32 1.0, %v6956
      %v7061 = vsub.f32 1.0, %v6959
      %v7062 = vsub.f32 1.0, %v6962
      %v7063 = vsub.f32 1.0, %v6965
      %v7064 = vsub.f32 1.0, %v6968
      %v7065 = vsub.f32 1.0, %v6971
      %v7066 = vsub.f32 1.0, %v6974
      %v7067 = vsub.f32 1.0, %v6977
      %v7068 = vsub.f32 1.0, %v6980
      %v7069 = vsub.f32 1.0, %v6983
      %v7070 = vsub.f32 1.0, %v6986
      %v7071 = vsub.f32 1.0, %v6989
      %v7072 = vsub.f32 1.0, %v6992
      %v7073 = vsub.f32 1.0, %v6995
      %v7074 = vsub.f32 1.0, %v6998
      %v7075 = vsub.f32 1.0, %v7001
      %v7076 = vsub.f32 1.0, %v7004
      %v7077 = vsub.f32 1.0, %v7007
      %v7078 = vsub.f32 1.0, %v7010
      %v7079 = vsub.f32 1.0, %v7013
      %v7080 = vsub.f32 1.0, %v7016
      %v7081 = vmul.f32 %v7049, 0.3
      %v7082 = vmul.f32 %v7050, 0.3
      %v7083 = vmul.f32 %v7051, 0.3
      %v7084 = vmul.f32 %v7052, 0.3
      %v7085 = vmul.f32 %v7053, 0.3
      %v7086 = vmul.f32 %v7054, 0.3
      %v7087 = vmul.f32 %v7055, 0.3
      %v7088 = vmul.f32 %v7056, 0.3
      %v7089 = vmul.f32 %v7057, 0.3
      %v7090 = vmul.f32 %v7058, 0.3
      %v7091 = vmul.f32 %v7059, 0.3
      %v7092 = vmul.f32 %v7060, 0.3
      %v7093 = vmul.f32 %v7061, 0.3
      %v7094 = vmul.f32 %v7062, 0.3
      %v7095 = vmul.f32 %v7063, 0.3
      %v7096 = vmul.f32 %v7064, 0.3
      %v7097 = vmul.f32 %v7065, 0.3
      %v7098 = vmul.f32 %v7066, 0.3
      %v7099 = vmul.f32 %v7067, 0.3
      %v7100 = vmul.f32 %v7068, 0.3
      %v7101 = vmul.f32 %v7069, 0.3
      %v7102 = vmul.f32 %v7070, 0.3
      %v7103 = vmul.f32 %v7071, 0.3
      %v7104 = vmul.f32 %v7072, 0.3
      %v7105 = vmul.f32 %v7073, 0.3
      %v7106 = vmul.f32 %v7074, 0.3
      %v7107 = vmul.f32 %v7075, 0.3
      %v7108 = vmul.f32 %v7076, 0.3
      %v7109 = vmul.f32 %v7077, 0.3
      %v7110 = vmul.f32 %v7078, 0.3
      %v7111 = vmul.f32 %v7079, 0.3
      %v7112 = vmul.f32 %v7080, 0.3
      %v7113 = vadd.f32 %v7017, %v7081
      %v7114 = vadd.f32 %v7018, %v7082
      %v7115 = vadd.f32 %v7019, %v7083
      %v7116 = vadd.f32 %v7020, %v7084
      %v7117 = vadd.f32 %v7021, %v7085
      %v7118 = vadd.f32 %v7022, %v7086
      %v7119 = vadd.f32 %v7023, %v7087
      %v7120 = vadd.f32 %v7024, %v7088
      %v7121 = vadd.f32 %v7025, %v7089
      %v7122 = vadd.f32 %v7026, %v7090
      %v7123 = vadd.f32 %v7027, %v7091
      %v7124 = vadd.f32 %v7028, %v7092
      %v7125 = vadd.f32 %v7029, %v7093
      %v7126 = vadd.f32 %v7030, %v7094
      %v7127 = vadd.f32 %v7031, %v7095
      %v7128 = vadd.f32 %v7032, %v7096
      %v7129 = vadd.f32 %v7033, %v7097
      %v7130 = vadd.f32 %v7034, %v7098
      %v7131 = vadd.f32 %v7035, %v7099
      %v7132 = vadd.f32 %v7036, %v7100
      %v7133 = vadd.f32 %v7037, %v7101
      %v7134 = vadd.f32 %v7038, %v7102
      %v7135 = vadd.f32 %v7039, %v7103
      %v7136 = vadd.f32 %v7040, %v7104
      %v7137 = vadd.f32 %v7041, %v7105
      %v7138 = vadd.f32 %v7042, %v7106
      %v7139 = vadd.f32 %v7043, %v7107
      %v7140 = vadd.f32 %v7044, %v7108
      %v7141 = vadd.f32 %v7045, %v7109
      %v7142 = vadd.f32 %v7046, %v7110
      %v7143 = vadd.f32 %v7047, %v7111
      %v7144 = vadd.f32 %v7048, %v7112
      %vm7145 = vcmask 64512
      %7146 = vst.msk [vmem:[%s172] sm:$0xff] %vm7145, %v7113
      %7147 = vst.msk [vmem:[%s172 + $0x8] sm:$0xff] %vm7145, %v7114
      %7148 = vst.msk [vmem:[%s172 + $0x10] sm:$0xff] %vm7145, %v7115
      %7149 = vst.msk [vmem:[%s172 + $0x18] sm:$0xff] %vm7145, %v7116
      %7150 = vst.msk [vmem:[%s172 + $0x20] sm:$0xff] %vm7145, %v7117
      %7151 = vst.msk [vmem:[%s172 + $0x28] sm:$0xff] %vm7145, %v7118
      %7152 = vst.msk [vmem:[%s172 + $0x30] sm:$0xff] %vm7145, %v7119
      %7153 = vst.msk [vmem:[%s172 + $0x38] sm:$0xff] %vm7145, %v7120
      %7154 = vst.msk [vmem:[%s172 + $0x40] sm:$0xff] %vm7145, %v7121
      %7155 = vst.msk [vmem:[%s172 + $0x48] sm:$0xff] %vm7145, %v7122
      %7156 = vst.msk [vmem:[%s172 + $0x50] sm:$0xff] %vm7145, %v7123
      %7157 = vst.msk [vmem:[%s172 + $0x58] sm:$0xff] %vm7145, %v7124
      %7158 = vst.msk [vmem:[%s172 + $0x60] sm:$0xff] %vm7145, %v7125
      %7159 = vst.msk [vmem:[%s172 + $0x68] sm:$0xff] %vm7145, %v7126
      %7160 = vst.msk [vmem:[%s172 + $0x70] sm:$0xff] %vm7145, %v7127
      %7161 = vst.msk [vmem:[%s172 + $0x78] sm:$0xff] %vm7145, %v7128
      %7162 = vst.msk [vmem:[%s172 + $0x80] sm:$0xff] %vm7145, %v7129
      %7163 = vst.msk [vmem:[%s172 + $0x88] sm:$0xff] %vm7145, %v7130
      %7164 = vst.msk [vmem:[%s172 + $0x90] sm:$0xff] %vm7145, %v7131
      %7165 = vst.msk [vmem:[%s172 + $0x98] sm:$0xff] %vm7145, %v7132
      %7166 = vst.msk [vmem:[%s172 + $0xa0] sm:$0xff] %vm7145, %v7133
      %7167 = vst.msk [vmem:[%s172 + $0xa8] sm:$0xff] %vm7145, %v7134
      %7168 = vst.msk [vmem:[%s172 + $0xb0] sm:$0xff] %vm7145, %v7135
      %7169 = vst.msk [vmem:[%s172 + $0xb8] sm:$0xff] %vm7145, %v7136
      %7170 = vst.msk [vmem:[%s172 + $0xc0] sm:$0xff] %vm7145, %v7137
      %7171 = vst.msk [vmem:[%s172 + $0xc8] sm:$0xff] %vm7145, %v7138
      %7172 = vst.msk [vmem:[%s172 + $0xd0] sm:$0xff] %vm7145, %v7139
      %7173 = vst.msk [vmem:[%s172 + $0xd8] sm:$0xff] %vm7145, %v7140
      %7174 = vst.msk [vmem:[%s172 + $0xe0] sm:$0xff] %vm7145, %v7141
      %7175 = vst.msk [vmem:[%s172 + $0xe8] sm:$0xff] %vm7145, %v7142
      %7176 = vst.msk [vmem:[%s172 + $0xf0] sm:$0xff] %vm7145, %v7143
      %7177 = vst.msk [vmem:[%s172 + $0xf8] sm:$0xff] %vm7145, %v7144
      %s7178 = smul.u32 32, %s14
      %p7179 = scmp.lt.s32.totalorder %s7178, 63
      %s7180 = scalar_select %p7179, %s7178, 63
      %s7181 = smul.addr %s7180, 8
      %s7182 = scalar_lea.vmem %s3, %s7181
      // Predicated region
      $region33: #{forward.1} parent=31 // pred_check
        %p7183 = pneg %p100
      $region34: #{forward.1} parent=31 // pred_check_branch
        %7185 = sbr.rel (%p7183) target = $region36
      $region35: #{forward.1} parent=31 // pred_region
        %s7186 = smul.u32 32, %s14
      $region36: #{forward.1} parent=31 // pred_fallthru
        _
    $region32: #{forward.1} parent=5 // pred_fallthru
      _
    %p7187 = scmp.le.s32.totalorder 2, %s9
    // Predicated region
    $region37: #{forward.1} parent=5 // pred_check
      %p7188 = pneg %p7187
    $region38: #{forward.1} parent=5 // pred_check_branch
      %7190 = sbr.rel (%p7188) target = $region40
    $region39: #{forward.1} parent=5 // pred_region
      %s7191 = ssub.s32 %s9, 2
      // Predicated region
      $region41: #{forward.1} parent=39 // pred_check
        %p7192 = pneg %p106
      $region42: #{forward.1} parent=39 // pred_check_branch
        %7194 = sbr.rel (%p7192) target = $region44
      $region43: #{forward.1} parent=39 // pred_region
        %s7195 = smul.u32 32, %s15
        %p7196 = scmp.lt.s32.totalorder %s7195, 63
        %s7197 = scalar_select %p7196, %s7195, 63
        %s7198 = smul.addr %s7197, 8
        %s7199 = scalar_lea.vmem %s3, %s7198
      $region44: #{forward.1} parent=39 // pred_fallthru
        _
    $region40: #{forward.1} parent=5 // pred_fallthru
      _
  $region6: #{forward.1} parent=0 // loop_footer
    %s13 = sadd.s32 1, %s9
  $region7: #{forward.1} parent=0 // loop_footer_branch
    %8 = sbr.rel target = $region3
  $region8: #{forward.1} parent=0 // loop_exit
    _

</llo_original>
